<compile_context>
chip_gen: v7x
topology: tpu7x:2x2x1
jax: 0.10.0
libtpu: 0.0.40
codegen_flags: <defaults>
</compile_context>

<pallas_src>
import functools

import jax
import jax.numpy as jnp
from jax.experimental import pallas as pl
from jax.experimental.pallas import tpu as pltpu


# ---------------------------------------------------------------------------
# Small helpers
# ---------------------------------------------------------------------------
def _round_up(n, m):
    return ((n + m - 1) // m) * m


def _vmem_limit(est_bytes):
    """Scoped-VMEM request: explicit estimate, never below the 32 MiB default,
    clamped to (physical VMEM - 8 MiB) for the local device (56 MiB on v7x)."""
    try:
        cap = int(pltpu.get_tpu_info().vmem_capacity_bytes)
    except Exception:                      # conservative fallback (v7x-sized)
        cap = 64 << 20
    hi = max(cap - (8 << 20), 32 << 20)
    return int(min(max(int(est_bytes), 32 << 20), hi))


def _permute_gates(a):
    """PyTorch LSTM gate order (i, f, g, o) -> kernel order (i, f, o, g) so the
    kernel applies one wide sigmoid to [:, :3H] and one tanh to [:, 3H:]."""
    h = a.shape[-1] // 4
    return jnp.concatenate([a[..., :2 * h], a[..., 3 * h:], a[..., 2 * h:3 * h]],
                           axis=-1)


# ---------------------------------------------------------------------------
# Kernel 1: affine + tanh + layer-0 LSTM input projection (row-tiled matmuls)
# ---------------------------------------------------------------------------
def affine_ih0_kernel(x_ref, waff_ref, baff_ref, wih0_ref, bih0_ref, o_ref):
    # h0 = tanh(x @ W_aff + b_aff)
    h0 = jnp.tanh(
        jnp.dot(x_ref[...].astype(waff_ref.dtype), waff_ref[...],
                preferred_element_type=jnp.float32) + baff_ref[...])
    # Layer-0 input projection hoisted out of the recurrence (bias folded in).
    o_ref[...] = (
        jnp.dot(h0.astype(wih0_ref.dtype), wih0_ref[...],
                preferred_element_type=jnp.float32) + bih0_ref[...]
    ).astype(o_ref.dtype)


def _affine_ih0(x2d, w_aff, b_aff, w_ih0, b_ih0, *, tm, out_dtype):
    """x2d: (M, Fp) time-major rows -> (M, 4H) layer-0 gate pre-activations."""
    M, F = x2d.shape
    H = w_aff.shape[1]
    G = w_ih0.shape[1]                      # 4H
    wsz = jnp.dtype(w_aff.dtype).itemsize
    osz = jnp.dtype(out_dtype).itemsize

    tm = min(tm, _round_up(M, 8))
    Mp = _round_up(M, tm)
    if Mp != M:
        x2d = jnp.pad(x2d, ((0, Mp - M), (0, 0)))

    est = 2 * (4 * tm * F + wsz * F * H + 4 * H + wsz * H * G + 4 * G
               + osz * tm * G) + (4 << 20)

    out = pl.pallas_call(
        affine_ih0_kernel,
        out_shape=jax.ShapeDtypeStruct((Mp, G), out_dtype),
        grid_spec=pltpu.PrefetchScalarGridSpec(
            num_scalar_prefetch=0,
            grid=(Mp // tm,),
            in_specs=[
                pl.BlockSpec((tm, F), lambda i: (i, 0)),
                pl.BlockSpec((F, H), lambda i: (0, 0)),
                pl.BlockSpec((1, H), lambda i: (0, 0)),
                pl.BlockSpec((H, G), lambda i: (0, 0)),
                pl.BlockSpec((1, G), lambda i: (0, 0)),
            ],
            out_specs=pl.BlockSpec((tm, G), lambda i: (i, 0)),
        ),
        compiler_params=pltpu.CompilerParams(
            dimension_semantics=("parallel",),
            vmem_limit_bytes=_vmem_limit(est)),
    )(x2d, w_aff, b_aff, w_ih0, b_ih0)
    return out[:M] if Mp != M else out


# ---------------------------------------------------------------------------
# Kernel 2: fused 3-layer LSTM + classification head, chunked over time
# ---------------------------------------------------------------------------
def fused_lstm_head_kernel(ih0_ref, wih1_hbm, wih2_hbm,
                           whh0_hbm, whh1_hbm, whh2_hbm,
                           b1_ref, b2_ref, wcls_ref, bcls_ref,
                           out_ref,
                           h_scr, c_scr, hs_scr, ih_scr, w_scr, w_sem,
                           *, tt, batch, hidden):
    """Grid axis 0 = time chunks (sequential).  Rows are time-major:
    row (t, b) == t * batch + b within the chunk.  batch is padded to a
    multiple of 8, so every per-step row slice is sublane aligned."""
    H = hidden
    chunk = pl.program_id(0)
    w_srcs = (wih1_hbm, wih2_hbm, whh0_hbm, whh1_hbm, whh2_hbm)

    @pl.when(chunk == 0)
    def _init():
        h_scr[...] = jnp.zeros_like(h_scr)
        c_scr[...] = jnp.zeros_like(c_scr)
        # Constant weights: DMA HBM -> persistent VMEM scratch exactly once
        # (single-buffered for the whole kernel; overlapped async copies).
        for idx, src in enumerate(w_srcs):
            pltpu.make_async_copy(src, w_scr.at[idx], w_sem.at[idx]).start()
        for idx, src in enumerate(w_srcs):
            pltpu.make_async_copy(src, w_scr.at[idx], w_sem.at[idx]).wait()

    UNROLL = 8                        # tt is always a multiple of 8

    def recur(layer, gates_ref, whh_view, dst_ref):
        """tt recurrent steps of one layer.  gates_ref already holds the
        x_t @ W_ih + b term, so only h @ W_hh is per-step work."""
        w_hh = whh_view[...]          # hoisted: one VMEM read per chunk

        def outer(o, carry):
            h, c = carry
            for u in range(UNROLL):   # manual partial unroll (bounded ranges)
                t = o * UNROLL + u
                rows = pl.ds(pl.multiple_of(t * batch, batch), batch)
                gates = gates_ref[rows, :].astype(jnp.float32) + jnp.dot(
                    h.astype(w_hh.dtype), w_hh,
                    preferred_element_type=jnp.float32)
                # Permuted gate order (i, f, o, g): one wide sigmoid + one tanh.
                sig = jax.nn.sigmoid(gates[:, :3 * H])
                i_g = sig[:, :H]
                f_g = sig[:, H:2 * H]
                o_g = sig[:, 2 * H:]
                g_g = jnp.tanh(gates[:, 3 * H:])
                c = f_g * c + i_g * g_g
                h = o_g * jnp.tanh(c)
                dst_ref[rows, :] = h
            return (h, c)

        h, c = jax.lax.fori_loop(0, tt // UNROLL, outer,
                                 (h_scr[layer], c_scr[layer]))
        h_scr[layer] = h
        c_scr[layer] = c

    # --- layer 0: input projection precomputed by kernel 1 ------------------
    recur(0, ih0_ref, w_scr.at[2], hs_scr)

    # --- layer 1: chunk-level input projection (one MXU matmul per chunk) ---
    ih_scr[...] = jnp.dot(hs_scr[...].astype(w_scr.dtype), w_scr[0],
                          preferred_element_type=jnp.float32) + b1_ref[...]
    recur(1, ih_scr, w_scr.at[3], hs_scr)

    # --- layer 2 -------------------------------------------------------------
    ih_scr[...] = jnp.dot(hs_scr[...].astype(w_scr.dtype), w_scr[1],
                          preferred_element_type=jnp.float32) + b2_ref[...]
    recur(2, ih_scr, w_scr.at[4], hs_scr)

    # --- classification head fused in; 128-lane-padded (lane-dense) output --
    out_ref[...] = (jnp.dot(hs_scr[...].astype(wcls_ref.dtype), wcls_ref[...],
                            preferred_element_type=jnp.float32)
                    + bcls_ref[...]).astype(out_ref.dtype)


def _fused_lstm_head(ih0, w_ih1, w_ih2, w_hh0, w_hh1, w_hh2,
                     b1, b2, w_cls_p, b_cls_p, *, batch, tt):
    """ih0: (Tp*Bp, 4H) time-major layer-0 gate pre-activations.
    Returns (Tp*Bp, O_pad) logits (time-major, lane-padded)."""
    MB, G = ih0.shape
    H = w_hh0.shape[0]
    O_pad = w_cls_p.shape[1]
    rows = tt * batch
    n_chunks = MB // rows
    wsz = jnp.dtype(w_hh0.dtype).itemsize
    isz = jnp.dtype(ih0.dtype).itemsize

    est = (2 * (isz * rows * G + 4 * 2 * G + wsz * H * O_pad + 4 * O_pad
                + 4 * rows * O_pad)                       # pipelined blocks
           + 5 * wsz * H * G                              # resident weights (1x)
           + 4 * (2 * 3 * batch * H + rows * H + rows * G)  # state + scratch
           + (4 << 20))

    kernel = functools.partial(fused_lstm_head_kernel,
                               tt=tt, batch=batch, hidden=H)
    return pl.pallas_call(
        kernel,
        out_shape=jax.ShapeDtypeStruct((MB, O_pad), jnp.float32),
        grid_spec=pltpu.PrefetchScalarGridSpec(
            num_scalar_prefetch=0,
            grid=(n_chunks,),
            in_specs=[
                pl.BlockSpec((rows, G), lambda c: (c, 0)),     # ih0 chunk
                pl.BlockSpec(memory_space=pl.ANY),             # W_ih1 (HBM)
                pl.BlockSpec(memory_space=pl.ANY),             # W_ih2 (HBM)
                pl.BlockSpec(memory_space=pl.ANY),             # W_hh0 (HBM)
                pl.BlockSpec(memory_space=pl.ANY),             # W_hh1 (HBM)
                pl.BlockSpec(memory_space=pl.ANY),             # W_hh2 (HBM)
                pl.BlockSpec((1, G), lambda c: (0, 0)),        # b1
                pl.BlockSpec((1, G), lambda c: (0, 0)),        # b2
                pl.BlockSpec((H, O_pad), lambda c: (0, 0)),    # W_cls (padded)
                pl.BlockSpec((1, O_pad), lambda c: (0, 0)),    # b_cls (padded)
            ],
            out_specs=pl.BlockSpec((rows, O_pad), lambda c: (c, 0)),
            scratch_shapes=[
                pltpu.VMEM((3, batch, H), jnp.float32),        # h state
                pltpu.VMEM((3, batch, H), jnp.float32),        # c state
                pltpu.VMEM((rows, H), jnp.float32),            # per-chunk layer out
                pltpu.VMEM((rows, G), jnp.float32),            # per-chunk input proj
                pltpu.VMEM((5, H, G), w_hh0.dtype),            # resident weights
                pltpu.SemaphoreType.DMA((5,)),                 # weight-load sems
            ],
        ),
        compiler_params=pltpu.CompilerParams(
            dimension_semantics=("arbitrary",),     # recurrence is sequential
            vmem_limit_bytes=_vmem_limit(est)),
    )(ih0, w_ih1, w_ih2, w_hh0, w_hh1, w_hh2, b1, b2, w_cls_p, b_cls_p)


# ---------------------------------------------------------------------------
# Parameter construction (deterministic, PyTorch-style uniform init)
# ---------------------------------------------------------------------------
def init_params(key, input_size, hidden_size, output_size, num_layers=3,
                dtype=jnp.float32):
    """Weights stored pre-transposed as (in_features, out_features), PyTorch
    gate order (i, f, g, o).  `dtype` applies to the weight matrices only
    (jnp.bfloat16 recommended in production: halves weight VMEM/DMA and cuts
    MXU passes ~3x; biases and all accumulation stay f32)."""
    def mat(k, shape, bound):
        return jax.random.uniform(k, shape, jnp.float32, -bound, bound).astype(dtype)

    def vec(k, shape, bound):
        return jax.random.uniform(k, shape, jnp.float32, -bound, bound)

    keys = jax.random.split(key, 4 + 4 * num_layers)
    ki = iter(keys)
    params = {}

    b_in = 1.0 / float(input_size) ** 0.5
    params["w_aff"] = mat(next(ki), (input_size, hidden_size), b_in)
    params["b_aff"] = vec(next(ki), (1, hidden_size), b_in)

    b_h = 1.0 / float(hidden_size) ** 0.5
    params["lstm"] = []
    for _ in range(num_layers):
        w_ih_t = mat(next(ki), (hidden_size, 4 * hidden_size), b_h)
        w_hh_t = mat(next(ki), (hidden_size, 4 * hidden_size), b_h)
        b_ih = vec(next(ki), (1, 4 * hidden_size), b_h)
        b_hh = vec(next(ki), (1, 4 * hidden_size), b_h)
        params["lstm"].append((w_ih_t, w_hh_t, b_ih + b_hh))

    params["w_cls"] = mat(next(ki), (hidden_size, output_size), b_h)
    params["b_cls"] = vec(next(ki), (1, output_size), b_h)
    return params


# ---------------------------------------------------------------------------
# Full forward pass (Pallas hot path; transposes/pads/slices are glue)
# ---------------------------------------------------------------------------
@functools.partial(jax.jit, static_argnames=("tt", "tm"))
def pr_network_forward(x, params, *, tt=32, tm=512):
    B, T, F = x.shape
    w_aff, b_aff = params["w_aff"], params["b_aff"]
    (w_ih0, w_hh0, b0), (w_ih1, w_hh1, b1), (w_ih2, w_hh2, b2) = params["lstm"]
    w_cls, b_cls = params["w_cls"], params["b_cls"]
    O = w_cls.shape[1]
    w_dtype = w_aff.dtype

    # Gate permutation (i, f, g, o) -> (i, f, o, g) so the kernel applies one
    # contiguous sigmoid slab and one tanh slab per step.
    w_ih0, w_hh0, b0 = _permute_gates(w_ih0), _permute_gates(w_hh0), _permute_gates(b0)
    w_ih1, w_hh1, b1 = _permute_gates(w_ih1), _permute_gates(w_hh1), _permute_gates(b1)
    w_ih2, w_hh2, b2 = _permute_gates(w_ih2), _permute_gates(w_hh2), _permute_gates(b2)

    # Time chunking (tt timesteps per sequential grid step), batch padded to a
    # multiple of 8 sublanes, features padded to 128 lanes.
    tt = max(8, (min(tt, _round_up(T, 8)) // 8) * 8)
    Tp = _round_up(T, tt)
    Bp = _round_up(B, 8)
    Fp = _round_up(F, 128)
    x = jnp.pad(x, ((0, Bp - B), (0, Tp - T), (0, Fp - F)))
    w_aff_p = jnp.pad(w_aff, ((0, Fp - F), (0, 0)))

    # Time-major flatten: row (t, b) -> t * Bp + b, so each chunk is contiguous.
    xT = jnp.transpose(x, (1, 0, 2)).reshape(Tp * Bp, Fp)

    # Kernel 1: affine + tanh + layer-0 input projection, all timesteps at once.
    # ih0 intermediate stored in the weight dtype (bf16 halves HBM traffic).
    ih0 = _affine_ih0(xT, w_aff_p, b_aff, w_ih0, b0, tm=tm, out_dtype=w_dtype)

    # Kernel 2: fused 3-layer LSTM recurrence + classification head.
    O_pad = _round_up(O, 128)
    w_cls_p = jnp.pad(w_cls, ((0, 0), (0, O_pad - O)))
    b_cls_p = jnp.pad(b_cls, ((0, 0), (0, O_pad - O)))
    logits = _fused_lstm_head(ih0, w_ih1, w_ih2, w_hh0, w_hh1, w_hh2,
                              b1, b2, w_cls_p, b_cls_p, batch=Bp, tt=tt)

    logits = logits.reshape(Tp, Bp, O_pad)[:T, :B, :O]
    return jnp.transpose(logits, (1, 0, 2))                        # (B, T, O)


# ---------------------------------------------------------------------------
# Pure-JAX reference (for correctness check; PyTorch gate order i,f,g,o)
# ---------------------------------------------------------------------------
def pr_network_reference(x, params):
    up = lambda a: a.astype(jnp.float32)
    h = jnp.tanh(x @ up(params["w_aff"]) + params["b_aff"])

    def lstm_ref(seq, w_ih_t, w_hh_t, bias):
        B, _, _ = seq.shape
        H = w_hh_t.shape[0]

        def step(carry, x_t):
            h_prev, c_prev = carry
            gates = x_t @ up(w_ih_t) + h_prev @ up(w_hh_t) + bias
            i_g = jax.nn.sigmoid(gates[:, 0:H])
            f_g = jax.nn.sigmoid(gates[:, H:2 * H])
            g_g = jnp.tanh(gates[:, 2 * H:3 * H])
            o_g = jax.nn.sigmoid(gates[:, 3 * H:4 * H])
            c = f_g * c_prev + i_g * g_g
            hh = o_g * jnp.tanh(c)
            return (hh, c), hh

        init = (jnp.zeros((B, H), jnp.float32), jnp.zeros((B, H), jnp.float32))
        _, outs = jax.lax.scan(step, init, jnp.swapaxes(seq, 0, 1))
        return jnp.swapaxes(outs, 0, 1)

    for (w_ih_t, w_hh_t, bias) in params["lstm"]:
        h = lstm_ref(h, w_ih_t, w_hh_t, bias)
    return h @ up(params["w_cls"]) + params["b_cls"]


# ---------------------------------------------------------------------------
if __name__ == "__main__":
    # Small shapes consistent with the module (input=23*5=115 features).
    B, T = 2, 8
    INPUT_SIZE = 23 * 5      # 115
    HIDDEN_SIZE = 128        # scaled down from 512 for the smoke test
    OUTPUT_SIZE = 43

    key = jax.random.PRNGKey(0)
    k_x, k_p = jax.random.split(key)
    x = jax.random.normal(k_x, (B, T, INPUT_SIZE), jnp.float32)

    # --- f32 weights: tight correctness check -------------------------------
    params = init_params(k_p, INPUT_SIZE, HIDDEN_SIZE, OUTPUT_SIZE,
                         dtype=jnp.float32)
    logits = jax.block_until_ready(pr_network_forward(x, params))
    ref = pr_network_reference(x, params)
    assert logits.shape == (B, T, OUTPUT_SIZE), logits.shape
    err_f32 = float(jnp.max(jnp.abs(logits - ref)))
    assert jnp.allclose(logits, ref, rtol=2e-4, atol=2e-4), err_f32

    # --- bf16 weights (recommended production config): loose check ----------
    params_bf16 = init_params(k_p, INPUT_SIZE, HIDDEN_SIZE, OUTPUT_SIZE,
                              dtype=jnp.bfloat16)
    logits_bf16 = jax.block_until_ready(pr_network_forward(x, params_bf16))
    ref_bf16 = pr_network_reference(x, params_bf16)
    err_bf16 = float(jnp.max(jnp.abs(logits_bf16 - ref_bf16)))
    assert jnp.allclose(logits_bf16, ref_bf16, rtol=1e-1, atol=1e-1), err_bf16

    print("KERNEL_OK")
</pallas_src>

<mosaic_0001>
module attributes {stable_mosaic.version = 11 : i64} {
  func.func @affine_ih0_kernel(%arg0: i32, %arg1: memref<64x128xf32, #tpu.memory_space<vmem>>, %arg2: memref<128x128xf32, #tpu.memory_space<vmem>>, %arg3: memref<1x128xf32, #tpu.memory_space<vmem>>, %arg4: memref<128x512xf32, #tpu.memory_space<vmem>>, %arg5: memref<1x512xf32, #tpu.memory_space<vmem>>, %arg6: memref<64x512xf32, #tpu.memory_space<vmem>>) attributes {dimension_semantics = [#tpu.dimension_semantics<parallel>], iteration_bounds = array<i64: 1>, scalar_prefetch = 0 : i64, scratch_operands = 0 : i64, tpu.core_type = #tpu.core_type<tc>, window_params = [{transform_indices = @transform_0, window_bounds = array<i64: 64, 128>}, {pipeline_mode = #tpu.pipeline_mode<synchronous>, transform_indices = @transform_1, window_bounds = array<i64: 128, 128>}, {pipeline_mode = #tpu.pipeline_mode<synchronous>, transform_indices = @transform_2, window_bounds = array<i64: 1, 128>}, {pipeline_mode = #tpu.pipeline_mode<synchronous>, transform_indices = @transform_3, window_bounds = array<i64: 128, 512>}, {pipeline_mode = #tpu.pipeline_mode<synchronous>, transform_indices = @transform_4, window_bounds = array<i64: 1, 512>}, {transform_indices = @transform_5, window_bounds = array<i64: 64, 512>}]} {
    %c0 = arith.constant 0 : index
    %c0_0 = arith.constant 0 : index
    %0 = vector.load %arg1[%c0, %c0_0] : memref<64x128xf32, #tpu.memory_space<vmem>>, vector<64x128xf32>
    %c0_1 = arith.constant 0 : index
    %c0_2 = arith.constant 0 : index
    %1 = vector.load %arg2[%c0_1, %c0_2] : memref<128x128xf32, #tpu.memory_space<vmem>>, vector<128x128xf32>
    %cst = arith.constant dense<0.000000e+00> : vector<64x128xf32>
    %2 = tpu.matmul %0, %1, %cst {dimension_numbers = #tpu.dot_dimension_numbers<[1], [0], [0], [1], [0, 0, 1, 1], [], []>} : vector<64x128xf32>, vector<128x128xf32>, vector<64x128xf32> -> vector<64x128xf32>
    %c0_3 = arith.constant 0 : index
    %c0_4 = arith.constant 0 : index
    %3 = vector.load %arg3[%c0_3, %c0_4] : memref<1x128xf32, #tpu.memory_space<vmem>>, vector<1x128xf32>
    %4 = vector.broadcast %3 : vector<1x128xf32> to vector<64x128xf32>
    %5 = arith.addf %2, %4 : vector<64x128xf32>
    %6 = math.tanh %5 : vector<64x128xf32>
    %c0_5 = arith.constant 0 : index
    %c0_6 = arith.constant 0 : index
    %7 = vector.load %arg4[%c0_5, %c0_6] : memref<128x512xf32, #tpu.memory_space<vmem>>, vector<128x512xf32>
    %cst_7 = arith.constant dense<0.000000e+00> : vector<64x512xf32>
    %8 = tpu.matmul %6, %7, %cst_7 {dimension_numbers = #tpu.dot_dimension_numbers<[1], [0], [0], [1], [0, 0, 1, 1], [], []>} : vector<64x128xf32>, vector<128x512xf32>, vector<64x512xf32> -> vector<64x512xf32>
    %c0_8 = arith.constant 0 : index
    %c0_9 = arith.constant 0 : index
    %9 = vector.load %arg5[%c0_8, %c0_9] : memref<1x512xf32, #tpu.memory_space<vmem>>, vector<1x512xf32>
    %10 = vector.broadcast %9 : vector<1x512xf32> to vector<64x512xf32>
    %11 = arith.addf %8, %10 : vector<64x512xf32>
    %c0_10 = arith.constant 0 : index
    %c0_11 = arith.constant 0 : index
    %12 = vector.load %arg6[%c0_10, %c0_11] : memref<64x512xf32, #tpu.memory_space<vmem>>, vector<64x512xf32>
    tpu.vector_store %arg6[%c0_10, %c0_11], %11 {strides = array<i32>} : memref<64x512xf32, #tpu.memory_space<vmem>>, vector<64x512xf32>,
    return
  }
  func.func @transform_0(%arg0: i32) -> (i32, i32) {
    %c0_i32 = arith.constant 0 : i32
    %c0_i32_0 = arith.constant 0 : i32
    return %arg0, %c0_i32 : i32, i32
  }
  func.func @transform_1(%arg0: i32) -> (i32, i32) {
    %c0_i32 = arith.constant 0 : i32
    %c0_i32_0 = arith.constant 0 : i32
    %c0_i32_1 = arith.constant 0 : i32
    return %c0_i32, %c0_i32_0 : i32, i32
  }
  func.func @transform_2(%arg0: i32) -> (i32, i32) {
    %c0_i32 = arith.constant 0 : i32
    %c0_i32_0 = arith.constant 0 : i32
    %c0_i32_1 = arith.constant 0 : i32
    return %c0_i32, %c0_i32_0 : i32, i32
  }
  func.func @transform_3(%arg0: i32) -> (i32, i32) {
    %c0_i32 = arith.constant 0 : i32
    %c0_i32_0 = arith.constant 0 : i32
    %c0_i32_1 = arith.constant 0 : i32
    return %c0_i32, %c0_i32_0 : i32, i32
  }
  func.func @transform_4(%arg0: i32) -> (i32, i32) {
    %c0_i32 = arith.constant 0 : i32
    %c0_i32_0 = arith.constant 0 : i32
    %c0_i32_1 = arith.constant 0 : i32
    return %c0_i32, %c0_i32_0 : i32, i32
  }
  func.func @transform_5(%arg0: i32) -> (i32, i32) {
    %c0_i32 = arith.constant 0 : i32
    %c0_i32_0 = arith.constant 0 : i32
    return %arg0, %c0_i32 : i32, i32
  }
}

module attributes {stable_mosaic.version = 11 : i64} {
  func.func @fused_lstm_head_kernel(%arg0: i32, %arg1: memref<64x512xf32, #tpu.memory_space<vmem>>, %arg2: memref<128x512xf32, #tpu.memory_space<any>>, %arg3: memref<128x512xf32, #tpu.memory_space<any>>, %arg4: memref<128x512xf32, #tpu.memory_space<any>>, %arg5: memref<128x512xf32, #tpu.memory_space<any>>, %arg6: memref<128x512xf32, #tpu.memory_space<any>>, %arg7: memref<1x512xf32, #tpu.memory_space<vmem>>, %arg8: memref<1x512xf32, #tpu.memory_space<vmem>>, %arg9: memref<128x128xf32, #tpu.memory_space<vmem>>, %arg10: memref<1x128xf32, #tpu.memory_space<vmem>>, %arg11: memref<64x128xf32, #tpu.memory_space<vmem>>, %arg12: memref<3x8x128xf32, #tpu.memory_space<vmem>>, %arg13: memref<3x8x128xf32, #tpu.memory_space<vmem>>, %arg14: memref<64x128xf32, #tpu.memory_space<vmem>>, %arg15: memref<64x512xf32, #tpu.memory_space<vmem>>, %arg16: memref<5x128x512xf32, #tpu.memory_space<vmem>>, %arg17: memref<5x!tpu.dma_semaphore, #tpu.memory_space<semaphore_mem>>) attributes {dimension_semantics = [#tpu.dimension_semantics<arbitrary>], iteration_bounds = array<i64: 1>, scalar_prefetch = 0 : i64, scratch_operands = 6 : i64, tpu.core_type = #tpu.core_type<tc>, window_params = [{transform_indices = @transform_0, window_bounds = array<i64: 64, 512>}, {}, {}, {}, {}, {}, {pipeline_mode = #tpu.pipeline_mode<synchronous>, transform_indices = @transform_6, window_bounds = array<i64: 1, 512>}, {pipeline_mode = #tpu.pipeline_mode<synchronous>, transform_indices = @transform_7, window_bounds = array<i64: 1, 512>}, {pipeline_mode = #tpu.pipeline_mode<synchronous>, transform_indices = @transform_8, window_bounds = array<i64: 128, 128>}, {pipeline_mode = #tpu.pipeline_mode<synchronous>, transform_indices = @transform_9, window_bounds = array<i64: 1, 128>}, {transform_indices = @transform_10, window_bounds = array<i64: 64, 128>}]} {
    %c0_i32 = arith.constant 0 : i32
    %0 = arith.cmpi eq, %arg0, %c0_i32 : i32
    %1 = arith.extui %0 : i1 to i32
    %c0_i32_0 = arith.constant 0 : i32
    %2 = arith.cmpi ne, %1, %c0_i32_0 : i32
    scf.if %2 {
      %cst_235 = arith.constant 0.000000e+00 : f32
      %686 = vector.broadcast %cst_235 : f32 to vector<3x8x128xf32>
      %c0_236 = arith.constant 0 : index
      %c0_237 = arith.constant 0 : index
      %c0_238 = arith.constant 0 : index
      %687 = vector.load %arg12[%c0_236, %c0_237, %c0_238] : memref<3x8x128xf32, #tpu.memory_space<vmem>>, vector<3x8x128xf32>
      tpu.vector_store %arg12[%c0_236, %c0_237, %c0_238], %686 {strides = array<i32>} : memref<3x8x128xf32, #tpu.memory_space<vmem>>, vector<3x8x128xf32>,
      %cst_239 = arith.constant 0.000000e+00 : f32
      %688 = vector.broadcast %cst_239 : f32 to vector<3x8x128xf32>
      %c0_240 = arith.constant 0 : index
      %c0_241 = arith.constant 0 : index
      %c0_242 = arith.constant 0 : index
      %689 = vector.load %arg13[%c0_240, %c0_241, %c0_242] : memref<3x8x128xf32, #tpu.memory_space<vmem>>, vector<3x8x128xf32>
      tpu.vector_store %arg13[%c0_240, %c0_241, %c0_242], %688 {strides = array<i32>} : memref<3x8x128xf32, #tpu.memory_space<vmem>>, vector<3x8x128xf32>,
      %c0_i32_243 = arith.constant 0 : i32
      %c0_i32_244 = arith.constant 0 : i32
      %c0_i32_245 = arith.constant 0 : i32
      %c0_i32_246 = arith.constant 0 : i32
      %690 = tpu.memref_slice %arg16[%c0_i32_243, %c0_i32_245, %c0_i32_246] : memref<5x128x512xf32, #tpu.memory_space<vmem>> -> memref<1x128x512xf32, #tpu.memory_space<vmem>>
      %691 = tpu.memref_squeeze %690 : memref<1x128x512xf32, #tpu.memory_space<vmem>> -> memref<128x512xf32, #tpu.memory_space<vmem>>
      %692 = tpu.memref_slice %arg17[%c0_i32_244] : memref<5x!tpu.dma_semaphore, #tpu.memory_space<semaphore_mem>> -> memref<1x!tpu.dma_semaphore, #tpu.memory_space<semaphore_mem>>
      %693 = tpu.memref_squeeze %692 : memref<1x!tpu.dma_semaphore, #tpu.memory_space<semaphore_mem>> -> memref<!tpu.dma_semaphore, #tpu.memory_space<semaphore_mem>>
      tpu.enqueue_dma source(%arg2 : memref<128x512xf32, #tpu.memory_space<any>>) target(%691 : memref<128x512xf32, #tpu.memory_space<vmem>>) target_semaphore(%693 : memref<!tpu.dma_semaphore, #tpu.memory_space<semaphore_mem>>)
      %c1_i32_247 = arith.constant 1 : i32
      %c1_i32_248 = arith.constant 1 : i32
      %c0_i32_249 = arith.constant 0 : i32
      %c0_i32_250 = arith.constant 0 : i32
      %694 = tpu.memref_slice %arg16[%c1_i32_247, %c0_i32_249, %c0_i32_250] : memref<5x128x512xf32, #tpu.memory_space<vmem>> -> memref<1x128x512xf32, #tpu.memory_space<vmem>>
      %695 = tpu.memref_squeeze %694 : memref<1x128x512xf32, #tpu.memory_space<vmem>> -> memref<128x512xf32, #tpu.memory_space<vmem>>
      %696 = tpu.memref_slice %arg17[%c1_i32_248] : memref<5x!tpu.dma_semaphore, #tpu.memory_space<semaphore_mem>> -> memref<1x!tpu.dma_semaphore, #tpu.memory_space<semaphore_mem>>
      %697 = tpu.memref_squeeze %696 : memref<1x!tpu.dma_semaphore, #tpu.memory_space<semaphore_mem>> -> memref<!tpu.dma_semaphore, #tpu.memory_space<semaphore_mem>>
      tpu.enqueue_dma source(%arg3 : memref<128x512xf32, #tpu.memory_space<any>>) target(%695 : memref<128x512xf32, #tpu.memory_space<vmem>>) target_semaphore(%697 : memref<!tpu.dma_semaphore, #tpu.memory_space<semaphore_mem>>)
      %c2_i32_251 = arith.constant 2 : i32
      %c2_i32_252 = arith.constant 2 : i32
      %c0_i32_253 = arith.constant 0 : i32
      %c0_i32_254 = arith.constant 0 : i32
      %698 = tpu.memref_slice %arg16[%c2_i32_251, %c0_i32_253, %c0_i32_254] : memref<5x128x512xf32, #tpu.memory_space<vmem>> -> memref<1x128x512xf32, #tpu.memory_space<vmem>>
      %699 = tpu.memref_squeeze %698 : memref<1x128x512xf32, #tpu.memory_space<vmem>> -> memref<128x512xf32, #tpu.memory_space<vmem>>
      %700 = tpu.memref_slice %arg17[%c2_i32_252] : memref<5x!tpu.dma_semaphore, #tpu.memory_space<semaphore_mem>> -> memref<1x!tpu.dma_semaphore, #tpu.memory_space<semaphore_mem>>
      %701 = tpu.memref_squeeze %700 : memref<1x!tpu.dma_semaphore, #tpu.memory_space<semaphore_mem>> -> memref<!tpu.dma_semaphore, #tpu.memory_space<semaphore_mem>>
      tpu.enqueue_dma source(%arg4 : memref<128x512xf32, #tpu.memory_space<any>>) target(%699 : memref<128x512xf32, #tpu.memory_space<vmem>>) target_semaphore(%701 : memref<!tpu.dma_semaphore, #tpu.memory_space<semaphore_mem>>)
      %c3_i32_255 = arith.constant 3 : i32
      %c3_i32_256 = arith.constant 3 : i32
      %c0_i32_257 = arith.constant 0 : i32
      %c0_i32_258 = arith.constant 0 : i32
      %702 = tpu.memref_slice %arg16[%c3_i32_255, %c0_i32_257, %c0_i32_258] : memref<5x128x512xf32, #tpu.memory_space<vmem>> -> memref<1x128x512xf32, #tpu.memory_space<vmem>>
      %703 = tpu.memref_squeeze %702 : memref<1x128x512xf32, #tpu.memory_space<vmem>> -> memref<128x512xf32, #tpu.memory_space<vmem>>
      %704 = tpu.memref_slice %arg17[%c3_i32_256] : memref<5x!tpu.dma_semaphore, #tpu.memory_space<semaphore_mem>> -> memref<1x!tpu.dma_semaphore, #tpu.memory_space<semaphore_mem>>
      %705 = tpu.memref_squeeze %704 : memref<1x!tpu.dma_semaphore, #tpu.memory_space<semaphore_mem>> -> memref<!tpu.dma_semaphore, #tpu.memory_space<semaphore_mem>>
      tpu.enqueue_dma source(%arg5 : memref<128x512xf32, #tpu.memory_space<any>>) target(%703 : memref<128x512xf32, #tpu.memory_space<vmem>>) target_semaphore(%705 : memref<!tpu.dma_semaphore, #tpu.memory_space<semaphore_mem>>)
      %c4_i32_259 = arith.constant 4 : i32
      %c4_i32_260 = arith.constant 4 : i32
      %c0_i32_261 = arith.constant 0 : i32
      %c0_i32_262 = arith.constant 0 : i32
      %706 = tpu.memref_slice %arg16[%c4_i32_259, %c0_i32_261, %c0_i32_262] : memref<5x128x512xf32, #tpu.memory_space<vmem>> -> memref<1x128x512xf32, #tpu.memory_space<vmem>>
      %707 = tpu.memref_squeeze %706 : memref<1x128x512xf32, #tpu.memory_space<vmem>> -> memref<128x512xf32, #tpu.memory_space<vmem>>
      %708 = tpu.memref_slice %arg17[%c4_i32_260] : memref<5x!tpu.dma_semaphore, #tpu.memory_space<semaphore_mem>> -> memref<1x!tpu.dma_semaphore, #tpu.memory_space<semaphore_mem>>
      %709 = tpu.memref_squeeze %708 : memref<1x!tpu.dma_semaphore, #tpu.memory_space<semaphore_mem>> -> memref<!tpu.dma_semaphore, #tpu.memory_space<semaphore_mem>>
      tpu.enqueue_dma source(%arg6 : memref<128x512xf32, #tpu.memory_space<any>>) target(%707 : memref<128x512xf32, #tpu.memory_space<vmem>>) target_semaphore(%709 : memref<!tpu.dma_semaphore, #tpu.memory_space<semaphore_mem>>)
      %c0_i32_263 = arith.constant 0 : i32
      %c0_i32_264 = arith.constant 0 : i32
      %c0_i32_265 = arith.constant 0 : i32
      %c0_i32_266 = arith.constant 0 : i32
      %710 = tpu.memref_slice %arg16[%c0_i32_263, %c0_i32_265, %c0_i32_266] : memref<5x128x512xf32, #tpu.memory_space<vmem>> -> memref<1x128x512xf32, #tpu.memory_space<vmem>>
      %711 = tpu.memref_squeeze %710 : memref<1x128x512xf32, #tpu.memory_space<vmem>> -> memref<128x512xf32, #tpu.memory_space<vmem>>
      %712 = tpu.memref_slice %arg17[%c0_i32_264] : memref<5x!tpu.dma_semaphore, #tpu.memory_space<semaphore_mem>> -> memref<1x!tpu.dma_semaphore, #tpu.memory_space<semaphore_mem>>
      %713 = tpu.memref_squeeze %712 : memref<1x!tpu.dma_semaphore, #tpu.memory_space<semaphore_mem>> -> memref<!tpu.dma_semaphore, #tpu.memory_space<semaphore_mem>>
      tpu.wait_dma2 semaphore(%713 : memref<!tpu.dma_semaphore, #tpu.memory_space<semaphore_mem>>) src(%arg2 : memref<128x512xf32, #tpu.memory_space<any>>) dst(%711 : memref<128x512xf32, #tpu.memory_space<vmem>>)
      %c1_i32_267 = arith.constant 1 : i32
      %c1_i32_268 = arith.constant 1 : i32
      %c0_i32_269 = arith.constant 0 : i32
      %c0_i32_270 = arith.constant 0 : i32
      %714 = tpu.memref_slice %arg16[%c1_i32_267, %c0_i32_269, %c0_i32_270] : memref<5x128x512xf32, #tpu.memory_space<vmem>> -> memref<1x128x512xf32, #tpu.memory_space<vmem>>
      %715 = tpu.memref_squeeze %714 : memref<1x128x512xf32, #tpu.memory_space<vmem>> -> memref<128x512xf32, #tpu.memory_space<vmem>>
      %716 = tpu.memref_slice %arg17[%c1_i32_268] : memref<5x!tpu.dma_semaphore, #tpu.memory_space<semaphore_mem>> -> memref<1x!tpu.dma_semaphore, #tpu.memory_space<semaphore_mem>>
      %717 = tpu.memref_squeeze %716 : memref<1x!tpu.dma_semaphore, #tpu.memory_space<semaphore_mem>> -> memref<!tpu.dma_semaphore, #tpu.memory_space<semaphore_mem>>
      tpu.wait_dma2 semaphore(%717 : memref<!tpu.dma_semaphore, #tpu.memory_space<semaphore_mem>>) src(%arg3 : memref<128x512xf32, #tpu.memory_space<any>>) dst(%715 : memref<128x512xf32, #tpu.memory_space<vmem>>)
      %c2_i32_271 = arith.constant 2 : i32
      %c2_i32_272 = arith.constant 2 : i32
      %c0_i32_273 = arith.constant 0 : i32
      %c0_i32_274 = arith.constant 0 : i32
      %718 = tpu.memref_slice %arg16[%c2_i32_271, %c0_i32_273, %c0_i32_274] : memref<5x128x512xf32, #tpu.memory_space<vmem>> -> memref<1x128x512xf32, #tpu.memory_space<vmem>>
      %719 = tpu.memref_squeeze %718 : memref<1x128x512xf32, #tpu.memory_space<vmem>> -> memref<128x512xf32, #tpu.memory_space<vmem>>
      %720 = tpu.memref_slice %arg17[%c2_i32_272] : memref<5x!tpu.dma_semaphore, #tpu.memory_space<semaphore_mem>> -> memref<1x!tpu.dma_semaphore, #tpu.memory_space<semaphore_mem>>
      %721 = tpu.memref_squeeze %720 : memref<1x!tpu.dma_semaphore, #tpu.memory_space<semaphore_mem>> -> memref<!tpu.dma_semaphore, #tpu.memory_space<semaphore_mem>>
      tpu.wait_dma2 semaphore(%721 : memref<!tpu.dma_semaphore, #tpu.memory_space<semaphore_mem>>) src(%arg4 : memref<128x512xf32, #tpu.memory_space<any>>) dst(%719 : memref<128x512xf32, #tpu.memory_space<vmem>>)
      %c3_i32_275 = arith.constant 3 : i32
      %c3_i32_276 = arith.constant 3 : i32
      %c0_i32_277 = arith.constant 0 : i32
      %c0_i32_278 = arith.constant 0 : i32
      %722 = tpu.memref_slice %arg16[%c3_i32_275, %c0_i32_277, %c0_i32_278] : memref<5x128x512xf32, #tpu.memory_space<vmem>> -> memref<1x128x512xf32, #tpu.memory_space<vmem>>
      %723 = tpu.memref_squeeze %722 : memref<1x128x512xf32, #tpu.memory_space<vmem>> -> memref<128x512xf32, #tpu.memory_space<vmem>>
      %724 = tpu.memref_slice %arg17[%c3_i32_276] : memref<5x!tpu.dma_semaphore, #tpu.memory_space<semaphore_mem>> -> memref<1x!tpu.dma_semaphore, #tpu.memory_space<semaphore_mem>>
      %725 = tpu.memref_squeeze %724 : memref<1x!tpu.dma_semaphore, #tpu.memory_space<semaphore_mem>> -> memref<!tpu.dma_semaphore, #tpu.memory_space<semaphore_mem>>
      tpu.wait_dma2 semaphore(%725 : memref<!tpu.dma_semaphore, #tpu.memory_space<semaphore_mem>>) src(%arg5 : memref<128x512xf32, #tpu.memory_space<any>>) dst(%723 : memref<128x512xf32, #tpu.memory_space<vmem>>)
      %c4_i32_279 = arith.constant 4 : i32
      %c4_i32_280 = arith.constant 4 : i32
      %c0_i32_281 = arith.constant 0 : i32
      %c0_i32_282 = arith.constant 0 : i32
      %726 = tpu.memref_slice %arg16[%c4_i32_279, %c0_i32_281, %c0_i32_282] : memref<5x128x512xf32, #tpu.memory_space<vmem>> -> memref<1x128x512xf32, #tpu.memory_space<vmem>>
      %727 = tpu.memref_squeeze %726 : memref<1x128x512xf32, #tpu.memory_space<vmem>> -> memref<128x512xf32, #tpu.memory_space<vmem>>
      %728 = tpu.memref_slice %arg17[%c4_i32_280] : memref<5x!tpu.dma_semaphore, #tpu.memory_space<semaphore_mem>> -> memref<1x!tpu.dma_semaphore, #tpu.memory_space<semaphore_mem>>
      %729 = tpu.memref_squeeze %728 : memref<1x!tpu.dma_semaphore, #tpu.memory_space<semaphore_mem>> -> memref<!tpu.dma_semaphore, #tpu.memory_space<semaphore_mem>>
      tpu.wait_dma2 semaphore(%729 : memref<!tpu.dma_semaphore, #tpu.memory_space<semaphore_mem>>) src(%arg6 : memref<128x512xf32, #tpu.memory_space<any>>) dst(%727 : memref<128x512xf32, #tpu.memory_space<vmem>>)
    } else {
    }
    %c2 = arith.constant 2 : index
    %c0 = arith.constant 0 : index
    %c0_1 = arith.constant 0 : index
    %3 = vector.load %arg16[%c2, %c0, %c0_1] : memref<5x128x512xf32, #tpu.memory_space<vmem>>, vector<1x128x512xf32>
    %4 = vector.shape_cast %3 : vector<1x128x512xf32> to vector<128x512xf32>
    %c0_2 = arith.constant 0 : index
    %c0_3 = arith.constant 0 : index
    %c0_4 = arith.constant 0 : index
    %5 = vector.load %arg12[%c0_2, %c0_3, %c0_4] : memref<3x8x128xf32, #tpu.memory_space<vmem>>, vector<1x8x128xf32>
    %6 = vector.shape_cast %5 : vector<1x8x128xf32> to vector<8x128xf32>
    %c0_5 = arith.constant 0 : index
    %c0_6 = arith.constant 0 : index
    %c0_7 = arith.constant 0 : index
    %7 = vector.load %arg13[%c0_5, %c0_6, %c0_7] : memref<3x8x128xf32, #tpu.memory_space<vmem>>, vector<1x8x128xf32>
    %8 = vector.shape_cast %7 : vector<1x8x128xf32> to vector<8x128xf32>
    %c0_i32_8 = arith.constant 0 : i32
    %c8_i32 = arith.constant 8 : i32
    %9 = arith.muli %c0_i32_8, %c8_i32 : i32
    %c0_i32_9 = arith.constant 0 : i32
    %10 = arith.addi %9, %c0_i32_9 : i32
    %c8_i32_10 = arith.constant 8 : i32
    %11 = arith.muli %10, %c8_i32_10 : i32
    %12 = tpu.assume_multiple %11, 8 : i32
    %13 = arith.index_cast %12 : i32 to index
    %c0_11 = arith.constant 0 : index
    %14 = vector.load %arg1[%13, %c0_11] : memref<64x512xf32, #tpu.memory_space<vmem>>, vector<8x512xf32>
    %cst = arith.constant dense<0.000000e+00> : vector<8x512xf32>
    %15 = tpu.matmul %6, %4, %cst {dimension_numbers = #tpu.dot_dimension_numbers<[1], [0], [0], [1], [0, 0, 1, 1], [], []>} : vector<8x128xf32>, vector<128x512xf32>, vector<8x512xf32> -> vector<8x512xf32>
    %16 = arith.addf %14, %15 : vector<8x512xf32>
    %17 = vector.extract_strided_slice %16 {offsets = [0, 0], sizes = [8, 384], strides = [1, 1]} : vector<8x512xf32> to vector<8x384xf32>
    %18 = arith.negf %17 : vector<8x384xf32>
    %19 = math.exp %18 : vector<8x384xf32>
    %cst_12 = arith.constant 1.000000e+00 : f32
    %20 = vector.broadcast %cst_12 : f32 to vector<8x384xf32>
    %21 = arith.addf %20, %19 : vector<8x384xf32>
    %22 = arith.divf %20, %21 : vector<8x384xf32>
    %23 = vector.extract_strided_slice %22 {offsets = [0, 0], sizes = [8, 128], strides = [1, 1]} : vector<8x384xf32> to vector<8x128xf32>
    %24 = vector.extract_strided_slice %22 {offsets = [0, 128], sizes = [8, 128], strides = [1, 1]} : vector<8x384xf32> to vector<8x128xf32>
    %25 = vector.extract_strided_slice %22 {offsets = [0, 256], sizes = [8, 128], strides = [1, 1]} : vector<8x384xf32> to vector<8x128xf32>
    %26 = vector.extract_strided_slice %16 {offsets = [0, 384], sizes = [8, 128], strides = [1, 1]} : vector<8x512xf32> to vector<8x128xf32>
    %27 = math.tanh %26 : vector<8x128xf32>
    %28 = arith.mulf %24, %8 : vector<8x128xf32>
    %29 = arith.mulf %23, %27 : vector<8x128xf32>
    %30 = arith.addf %28, %29 : vector<8x128xf32>
    %31 = math.tanh %30 : vector<8x128xf32>
    %32 = arith.mulf %25, %31 : vector<8x128xf32>
    %33 = arith.index_cast %12 : i32 to index
    %c0_13 = arith.constant 0 : index
    %34 = vector.load %arg14[%33, %c0_13] : memref<64x128xf32, #tpu.memory_space<vmem>>, vector<8x128xf32>
    tpu.vector_store %arg14[%33, %c0_13], %32 {strides = array<i32>} : memref<64x128xf32, #tpu.memory_space<vmem>>, vector<8x128xf32>,
    %c8_i32_14 = arith.constant 8 : i32
    %35 = arith.muli %c0_i32_8, %c8_i32_14 : i32
    %c1_i32 = arith.constant 1 : i32
    %36 = arith.addi %35, %c1_i32 : i32
    %c8_i32_15 = arith.constant 8 : i32
    %37 = arith.muli %36, %c8_i32_15 : i32
    %38 = tpu.assume_multiple %37, 8 : i32
    %39 = arith.index_cast %38 : i32 to index
    %c0_16 = arith.constant 0 : index
    %40 = vector.load %arg1[%39, %c0_16] : memref<64x512xf32, #tpu.memory_space<vmem>>, vector<8x512xf32>
    %cst_17 = arith.constant dense<0.000000e+00> : vector<8x512xf32>
    %41 = tpu.matmul %32, %4, %cst_17 {dimension_numbers = #tpu.dot_dimension_numbers<[1], [0], [0], [1], [0, 0, 1, 1], [], []>} : vector<8x128xf32>, vector<128x512xf32>, vector<8x512xf32> -> vector<8x512xf32>
    %42 = arith.addf %40, %41 : vector<8x512xf32>
    %43 = vector.extract_strided_slice %42 {offsets = [0, 0], sizes = [8, 384], strides = [1, 1]} : vector<8x512xf32> to vector<8x384xf32>
    %44 = arith.negf %43 : vector<8x384xf32>
    %45 = math.exp %44 : vector<8x384xf32>
    %cst_18 = arith.constant 1.000000e+00 : f32
    %46 = vector.broadcast %cst_18 : f32 to vector<8x384xf32>
    %47 = arith.addf %46, %45 : vector<8x384xf32>
    %48 = arith.divf %46, %47 : vector<8x384xf32>
    %49 = vector.extract_strided_slice %48 {offsets = [0, 0], sizes = [8, 128], strides = [1, 1]} : vector<8x384xf32> to vector<8x128xf32>
    %50 = vector.extract_strided_slice %48 {offsets = [0, 128], sizes = [8, 128], strides = [1, 1]} : vector<8x384xf32> to vector<8x128xf32>
    %51 = vector.extract_strided_slice %48 {offsets = [0, 256], sizes = [8, 128], strides = [1, 1]} : vector<8x384xf32> to vector<8x128xf32>
    %52 = vector.extract_strided_slice %42 {offsets = [0, 384], sizes = [8, 128], strides = [1, 1]} : vector<8x512xf32> to vector<8x128xf32>
    %53 = math.tanh %52 : vector<8x128xf32>
    %54 = arith.mulf %50, %30 : vector<8x128xf32>
    %55 = arith.mulf %49, %53 : vector<8x128xf32>
    %56 = arith.addf %54, %55 : vector<8x128xf32>
    %57 = math.tanh %56 : vector<8x128xf32>
    %58 = arith.mulf %51, %57 : vector<8x128xf32>
    %59 = arith.index_cast %38 : i32 to index
    %c0_19 = arith.constant 0 : index
    %60 = vector.load %arg14[%59, %c0_19] : memref<64x128xf32, #tpu.memory_space<vmem>>, vector<8x128xf32>
    tpu.vector_store %arg14[%59, %c0_19], %58 {strides = array<i32>} : memref<64x128xf32, #tpu.memory_space<vmem>>, vector<8x128xf32>,
    %c8_i32_20 = arith.constant 8 : i32
    %61 = arith.muli %c0_i32_8, %c8_i32_20 : i32
    %c2_i32 = arith.constant 2 : i32
    %62 = arith.addi %61, %c2_i32 : i32
    %c8_i32_21 = arith.constant 8 : i32
    %63 = arith.muli %62, %c8_i32_21 : i32
    %64 = tpu.assume_multiple %63, 8 : i32
    %65 = arith.index_cast %64 : i32 to index
    %c0_22 = arith.constant 0 : index
    %66 = vector.load %arg1[%65, %c0_22] : memref<64x512xf32, #tpu.memory_space<vmem>>, vector<8x512xf32>
    %cst_23 = arith.constant dense<0.000000e+00> : vector<8x512xf32>
    %67 = tpu.matmul %58, %4, %cst_23 {dimension_numbers = #tpu.dot_dimension_numbers<[1], [0], [0], [1], [0, 0, 1, 1], [], []>} : vector<8x128xf32>, vector<128x512xf32>, vector<8x512xf32> -> vector<8x512xf32>
    %68 = arith.addf %66, %67 : vector<8x512xf32>
    %69 = vector.extract_strided_slice %68 {offsets = [0, 0], sizes = [8, 384], strides = [1, 1]} : vector<8x512xf32> to vector<8x384xf32>
    %70 = arith.negf %69 : vector<8x384xf32>
    %71 = math.exp %70 : vector<8x384xf32>
    %cst_24 = arith.constant 1.000000e+00 : f32
    %72 = vector.broadcast %cst_24 : f32 to vector<8x384xf32>
    %73 = arith.addf %72, %71 : vector<8x384xf32>
    %74 = arith.divf %72, %73 : vector<8x384xf32>
    %75 = vector.extract_strided_slice %74 {offsets = [0, 0], sizes = [8, 128], strides = [1, 1]} : vector<8x384xf32> to vector<8x128xf32>
    %76 = vector.extract_strided_slice %74 {offsets = [0, 128], sizes = [8, 128], strides = [1, 1]} : vector<8x384xf32> to vector<8x128xf32>
    %77 = vector.extract_strided_slice %74 {offsets = [0, 256], sizes = [8, 128], strides = [1, 1]} : vector<8x384xf32> to vector<8x128xf32>
    %78 = vector.extract_strided_slice %68 {offsets = [0, 384], sizes = [8, 128], strides = [1, 1]} : vector<8x512xf32> to vector<8x128xf32>
    %79 = math.tanh %78 : vector<8x128xf32>
    %80 = arith.mulf %76, %56 : vector<8x128xf32>
    %81 = arith.mulf %75, %79 : vector<8x128xf32>
    %82 = arith.addf %80, %81 : vector<8x128xf32>
    %83 = math.tanh %82 : vector<8x128xf32>
    %84 = arith.mulf %77, %83 : vector<8x128xf32>
    %85 = arith.index_cast %64 : i32 to index
    %c0_25 = arith.constant 0 : index
    %86 = vector.load %arg14[%85, %c0_25] : memref<64x128xf32, #tpu.memory_space<vmem>>, vector<8x128xf32>
    tpu.vector_store %arg14[%85, %c0_25], %84 {strides = array<i32>} : memref<64x128xf32, #tpu.memory_space<vmem>>, vector<8x128xf32>,
    %c8_i32_26 = arith.constant 8 : i32
    %87 = arith.muli %c0_i32_8, %c8_i32_26 : i32
    %c3_i32 = arith.constant 3 : i32
    %88 = arith.addi %87, %c3_i32 : i32
    %c8_i32_27 = arith.constant 8 : i32
    %89 = arith.muli %88, %c8_i32_27 : i32
    %90 = tpu.assume_multiple %89, 8 : i32
    %91 = arith.index_cast %90 : i32 to index
    %c0_28 = arith.constant 0 : index
    %92 = vector.load %arg1[%91, %c0_28] : memref<64x512xf32, #tpu.memory_space<vmem>>, vector<8x512xf32>
    %cst_29 = arith.constant dense<0.000000e+00> : vector<8x512xf32>
    %93 = tpu.matmul %84, %4, %cst_29 {dimension_numbers = #tpu.dot_dimension_numbers<[1], [0], [0], [1], [0, 0, 1, 1], [], []>} : vector<8x128xf32>, vector<128x512xf32>, vector<8x512xf32> -> vector<8x512xf32>
    %94 = arith.addf %92, %93 : vector<8x512xf32>
    %95 = vector.extract_strided_slice %94 {offsets = [0, 0], sizes = [8, 384], strides = [1, 1]} : vector<8x512xf32> to vector<8x384xf32>
    %96 = arith.negf %95 : vector<8x384xf32>
    %97 = math.exp %96 : vector<8x384xf32>
    %cst_30 = arith.constant 1.000000e+00 : f32
    %98 = vector.broadcast %cst_30 : f32 to vector<8x384xf32>
    %99 = arith.addf %98, %97 : vector<8x384xf32>
    %100 = arith.divf %98, %99 : vector<8x384xf32>
    %101 = vector.extract_strided_slice %100 {offsets = [0, 0], sizes = [8, 128], strides = [1, 1]} : vector<8x384xf32> to vector<8x128xf32>
    %102 = vector.extract_strided_slice %100 {offsets = [0, 128], sizes = [8, 128], strides = [1, 1]} : vector<8x384xf32> to vector<8x128xf32>
    %103 = vector.extract_strided_slice %100 {offsets = [0, 256], sizes = [8, 128], strides = [1, 1]} : vector<8x384xf32> to vector<8x128xf32>
    %104 = vector.extract_strided_slice %94 {offsets = [0, 384], sizes = [8, 128], strides = [1, 1]} : vector<8x512xf32> to vector<8x128xf32>
    %105 = math.tanh %104 : vector<8x128xf32>
    %106 = arith.mulf %102, %82 : vector<8x128xf32>
    %107 = arith.mulf %101, %105 : vector<8x128xf32>
    %108 = arith.addf %106, %107 : vector<8x128xf32>
    %109 = math.tanh %108 : vector<8x128xf32>
    %110 = arith.mulf %103, %109 : vector<8x128xf32>
    %111 = arith.index_cast %90 : i32 to index
    %c0_31 = arith.constant 0 : index
    %112 = vector.load %arg14[%111, %c0_31] : memref<64x128xf32, #tpu.memory_space<vmem>>, vector<8x128xf32>
    tpu.vector_store %arg14[%111, %c0_31], %110 {strides = array<i32>} : memref<64x128xf32, #tpu.memory_space<vmem>>, vector<8x128xf32>,
    %c8_i32_32 = arith.constant 8 : i32
    %113 = arith.muli %c0_i32_8, %c8_i32_32 : i32
    %c4_i32 = arith.constant 4 : i32
    %114 = arith.addi %113, %c4_i32 : i32
    %c8_i32_33 = arith.constant 8 : i32
    %115 = arith.muli %114, %c8_i32_33 : i32
    %116 = tpu.assume_multiple %115, 8 : i32
    %117 = arith.index_cast %116 : i32 to index
    %c0_34 = arith.constant 0 : index
    %118 = vector.load %arg1[%117, %c0_34] : memref<64x512xf32, #tpu.memory_space<vmem>>, vector<8x512xf32>
    %cst_35 = arith.constant dense<0.000000e+00> : vector<8x512xf32>
    %119 = tpu.matmul %110, %4, %cst_35 {dimension_numbers = #tpu.dot_dimension_numbers<[1], [0], [0], [1], [0, 0, 1, 1], [], []>} : vector<8x128xf32>, vector<128x512xf32>, vector<8x512xf32> -> vector<8x512xf32>
    %120 = arith.addf %118, %119 : vector<8x512xf32>
    %121 = vector.extract_strided_slice %120 {offsets = [0, 0], sizes = [8, 384], strides = [1, 1]} : vector<8x512xf32> to vector<8x384xf32>
    %122 = arith.negf %121 : vector<8x384xf32>
    %123 = math.exp %122 : vector<8x384xf32>
    %cst_36 = arith.constant 1.000000e+00 : f32
    %124 = vector.broadcast %cst_36 : f32 to vector<8x384xf32>
    %125 = arith.addf %124, %123 : vector<8x384xf32>
    %126 = arith.divf %124, %125 : vector<8x384xf32>
    %127 = vector.extract_strided_slice %126 {offsets = [0, 0], sizes = [8, 128], strides = [1, 1]} : vector<8x384xf32> to vector<8x128xf32>
    %128 = vector.extract_strided_slice %126 {offsets = [0, 128], sizes = [8, 128], strides = [1, 1]} : vector<8x384xf32> to vector<8x128xf32>
    %129 = vector.extract_strided_slice %126 {offsets = [0, 256], sizes = [8, 128], strides = [1, 1]} : vector<8x384xf32> to vector<8x128xf32>
    %130 = vector.extract_strided_slice %120 {offsets = [0, 384], sizes = [8, 128], strides = [1, 1]} : vector<8x512xf32> to vector<8x128xf32>
    %131 = math.tanh %130 : vector<8x128xf32>
    %132 = arith.mulf %128, %108 : vector<8x128xf32>
    %133 = arith.mulf %127, %131 : vector<8x128xf32>
    %134 = arith.addf %132, %133 : vector<8x128xf32>
    %135 = math.tanh %134 : vector<8x128xf32>
    %136 = arith.mulf %129, %135 : vector<8x128xf32>
    %137 = arith.index_cast %116 : i32 to index
    %c0_37 = arith.constant 0 : index
    %138 = vector.load %arg14[%137, %c0_37] : memref<64x128xf32, #tpu.memory_space<vmem>>, vector<8x128xf32>
    tpu.vector_store %arg14[%137, %c0_37], %136 {strides = array<i32>} : memref<64x128xf32, #tpu.memory_space<vmem>>, vector<8x128xf32>,
    %c8_i32_38 = arith.constant 8 : i32
    %139 = arith.muli %c0_i32_8, %c8_i32_38 : i32
    %c5_i32 = arith.constant 5 : i32
    %140 = arith.addi %139, %c5_i32 : i32
    %c8_i32_39 = arith.constant 8 : i32
    %141 = arith.muli %140, %c8_i32_39 : i32
    %142 = tpu.assume_multiple %141, 8 : i32
    %143 = arith.index_cast %142 : i32 to index
    %c0_40 = arith.constant 0 : index
    %144 = vector.load %arg1[%143, %c0_40] : memref<64x512xf32, #tpu.memory_space<vmem>>, vector<8x512xf32>
    %cst_41 = arith.constant dense<0.000000e+00> : vector<8x512xf32>
    %145 = tpu.matmul %136, %4, %cst_41 {dimension_numbers = #tpu.dot_dimension_numbers<[1], [0], [0], [1], [0, 0, 1, 1], [], []>} : vector<8x128xf32>, vector<128x512xf32>, vector<8x512xf32> -> vector<8x512xf32>
    %146 = arith.addf %144, %145 : vector<8x512xf32>
    %147 = vector.extract_strided_slice %146 {offsets = [0, 0], sizes = [8, 384], strides = [1, 1]} : vector<8x512xf32> to vector<8x384xf32>
    %148 = arith.negf %147 : vector<8x384xf32>
    %149 = math.exp %148 : vector<8x384xf32>
    %cst_42 = arith.constant 1.000000e+00 : f32
    %150 = vector.broadcast %cst_42 : f32 to vector<8x384xf32>
    %151 = arith.addf %150, %149 : vector<8x384xf32>
    %152 = arith.divf %150, %151 : vector<8x384xf32>
    %153 = vector.extract_strided_slice %152 {offsets = [0, 0], sizes = [8, 128], strides = [1, 1]} : vector<8x384xf32> to vector<8x128xf32>
    %154 = vector.extract_strided_slice %152 {offsets = [0, 128], sizes = [8, 128], strides = [1, 1]} : vector<8x384xf32> to vector<8x128xf32>
    %155 = vector.extract_strided_slice %152 {offsets = [0, 256], sizes = [8, 128], strides = [1, 1]} : vector<8x384xf32> to vector<8x128xf32>
    %156 = vector.extract_strided_slice %146 {offsets = [0, 384], sizes = [8, 128], strides = [1, 1]} : vector<8x512xf32> to vector<8x128xf32>
    %157 = math.tanh %156 : vector<8x128xf32>
    %158 = arith.mulf %154, %134 : vector<8x128xf32>
    %159 = arith.mulf %153, %157 : vector<8x128xf32>
    %160 = arith.addf %158, %159 : vector<8x128xf32>
    %161 = math.tanh %160 : vector<8x128xf32>
    %162 = arith.mulf %155, %161 : vector<8x128xf32>
    %163 = arith.index_cast %142 : i32 to index
    %c0_43 = arith.constant 0 : index
    %164 = vector.load %arg14[%163, %c0_43] : memref<64x128xf32, #tpu.memory_space<vmem>>, vector<8x128xf32>
    tpu.vector_store %arg14[%163, %c0_43], %162 {strides = array<i32>} : memref<64x128xf32, #tpu.memory_space<vmem>>, vector<8x128xf32>,
    %c8_i32_44 = arith.constant 8 : i32
    %165 = arith.muli %c0_i32_8, %c8_i32_44 : i32
    %c6_i32 = arith.constant 6 : i32
    %166 = arith.addi %165, %c6_i32 : i32
    %c8_i32_45 = arith.constant 8 : i32
    %167 = arith.muli %166, %c8_i32_45 : i32
    %168 = tpu.assume_multiple %167, 8 : i32
    %169 = arith.index_cast %168 : i32 to index
    %c0_46 = arith.constant 0 : index
    %170 = vector.load %arg1[%169, %c0_46] : memref<64x512xf32, #tpu.memory_space<vmem>>, vector<8x512xf32>
    %cst_47 = arith.constant dense<0.000000e+00> : vector<8x512xf32>
    %171 = tpu.matmul %162, %4, %cst_47 {dimension_numbers = #tpu.dot_dimension_numbers<[1], [0], [0], [1], [0, 0, 1, 1], [], []>} : vector<8x128xf32>, vector<128x512xf32>, vector<8x512xf32> -> vector<8x512xf32>
    %172 = arith.addf %170, %171 : vector<8x512xf32>
    %173 = vector.extract_strided_slice %172 {offsets = [0, 0], sizes = [8, 384], strides = [1, 1]} : vector<8x512xf32> to vector<8x384xf32>
    %174 = arith.negf %173 : vector<8x384xf32>
    %175 = math.exp %174 : vector<8x384xf32>
    %cst_48 = arith.constant 1.000000e+00 : f32
    %176 = vector.broadcast %cst_48 : f32 to vector<8x384xf32>
    %177 = arith.addf %176, %175 : vector<8x384xf32>
    %178 = arith.divf %176, %177 : vector<8x384xf32>
    %179 = vector.extract_strided_slice %178 {offsets = [0, 0], sizes = [8, 128], strides = [1, 1]} : vector<8x384xf32> to vector<8x128xf32>
    %180 = vector.extract_strided_slice %178 {offsets = [0, 128], sizes = [8, 128], strides = [1, 1]} : vector<8x384xf32> to vector<8x128xf32>
    %181 = vector.extract_strided_slice %178 {offsets = [0, 256], sizes = [8, 128], strides = [1, 1]} : vector<8x384xf32> to vector<8x128xf32>
    %182 = vector.extract_strided_slice %172 {offsets = [0, 384], sizes = [8, 128], strides = [1, 1]} : vector<8x512xf32> to vector<8x128xf32>
    %183 = math.tanh %182 : vector<8x128xf32>
    %184 = arith.mulf %180, %160 : vector<8x128xf32>
    %185 = arith.mulf %179, %183 : vector<8x128xf32>
    %186 = arith.addf %184, %185 : vector<8x128xf32>
    %187 = math.tanh %186 : vector<8x128xf32>
    %188 = arith.mulf %181, %187 : vector<8x128xf32>
    %189 = arith.index_cast %168 : i32 to index
    %c0_49 = arith.constant 0 : index
    %190 = vector.load %arg14[%189, %c0_49] : memref<64x128xf32, #tpu.memory_space<vmem>>, vector<8x128xf32>
    tpu.vector_store %arg14[%189, %c0_49], %188 {strides = array<i32>} : memref<64x128xf32, #tpu.memory_space<vmem>>, vector<8x128xf32>,
    %c8_i32_50 = arith.constant 8 : i32
    %191 = arith.muli %c0_i32_8, %c8_i32_50 : i32
    %c7_i32 = arith.constant 7 : i32
    %192 = arith.addi %191, %c7_i32 : i32
    %c8_i32_51 = arith.constant 8 : i32
    %193 = arith.muli %192, %c8_i32_51 : i32
    %194 = tpu.assume_multiple %193, 8 : i32
    %195 = arith.index_cast %194 : i32 to index
    %c0_52 = arith.constant 0 : index
    %196 = vector.load %arg1[%195, %c0_52] : memref<64x512xf32, #tpu.memory_space<vmem>>, vector<8x512xf32>
    %cst_53 = arith.constant dense<0.000000e+00> : vector<8x512xf32>
    %197 = tpu.matmul %188, %4, %cst_53 {dimension_numbers = #tpu.dot_dimension_numbers<[1], [0], [0], [1], [0, 0, 1, 1], [], []>} : vector<8x128xf32>, vector<128x512xf32>, vector<8x512xf32> -> vector<8x512xf32>
    %198 = arith.addf %196, %197 : vector<8x512xf32>
    %199 = vector.extract_strided_slice %198 {offsets = [0, 0], sizes = [8, 384], strides = [1, 1]} : vector<8x512xf32> to vector<8x384xf32>
    %200 = arith.negf %199 : vector<8x384xf32>
    %201 = math.exp %200 : vector<8x384xf32>
    %cst_54 = arith.constant 1.000000e+00 : f32
    %202 = vector.broadcast %cst_54 : f32 to vector<8x384xf32>
    %203 = arith.addf %202, %201 : vector<8x384xf32>
    %204 = arith.divf %202, %203 : vector<8x384xf32>
    %205 = vector.extract_strided_slice %204 {offsets = [0, 0], sizes = [8, 128], strides = [1, 1]} : vector<8x384xf32> to vector<8x128xf32>
    %206 = vector.extract_strided_slice %204 {offsets = [0, 128], sizes = [8, 128], strides = [1, 1]} : vector<8x384xf32> to vector<8x128xf32>
    %207 = vector.extract_strided_slice %204 {offsets = [0, 256], sizes = [8, 128], strides = [1, 1]} : vector<8x384xf32> to vector<8x128xf32>
    %208 = vector.extract_strided_slice %198 {offsets = [0, 384], sizes = [8, 128], strides = [1, 1]} : vector<8x512xf32> to vector<8x128xf32>
    %209 = math.tanh %208 : vector<8x128xf32>
    %210 = arith.mulf %206, %186 : vector<8x128xf32>
    %211 = arith.mulf %205, %209 : vector<8x128xf32>
    %212 = arith.addf %210, %211 : vector<8x128xf32>
    %213 = math.tanh %212 : vector<8x128xf32>
    %214 = arith.mulf %207, %213 : vector<8x128xf32>
    %215 = arith.index_cast %194 : i32 to index
    %c0_55 = arith.constant 0 : index
    %216 = vector.load %arg14[%215, %c0_55] : memref<64x128xf32, #tpu.memory_space<vmem>>, vector<8x128xf32>
    tpu.vector_store %arg14[%215, %c0_55], %214 {strides = array<i32>} : memref<64x128xf32, #tpu.memory_space<vmem>>, vector<8x128xf32>,
    %c1_i32_56 = arith.constant 1 : i32
    %c0_57 = arith.constant 0 : index
    %c0_58 = arith.constant 0 : index
    %c0_59 = arith.constant 0 : index
    %217 = vector.load %arg12[%c0_57, %c0_58, %c0_59] : memref<3x8x128xf32, #tpu.memory_space<vmem>>, vector<1x8x128xf32>
    %218 = vector.shape_cast %217 : vector<1x8x128xf32> to vector<8x128xf32>
    %219 = vector.shape_cast %214 : vector<8x128xf32> to vector<1x8x128xf32>
    tpu.vector_store %arg12[%c0_57, %c0_58, %c0_59], %219 {strides = array<i32>} : memref<3x8x128xf32, #tpu.memory_space<vmem>>, vector<1x8x128xf32>,
    %c0_60 = arith.constant 0 : index
    %c0_61 = arith.constant 0 : index
    %c0_62 = arith.constant 0 : index
    %220 = vector.load %arg13[%c0_60, %c0_61, %c0_62] : memref<3x8x128xf32, #tpu.memory_space<vmem>>, vector<1x8x128xf32>
    %221 = vector.shape_cast %220 : vector<1x8x128xf32> to vector<8x128xf32>
    %222 = vector.shape_cast %212 : vector<8x128xf32> to vector<1x8x128xf32>
    tpu.vector_store %arg13[%c0_60, %c0_61, %c0_62], %222 {strides = array<i32>} : memref<3x8x128xf32, #tpu.memory_space<vmem>>, vector<1x8x128xf32>,
    %c0_63 = arith.constant 0 : index
    %c0_64 = arith.constant 0 : index
    %223 = vector.load %arg14[%c0_63, %c0_64] : memref<64x128xf32, #tpu.memory_space<vmem>>, vector<64x128xf32>
    %c0_65 = arith.constant 0 : index
    %c0_66 = arith.constant 0 : index
    %c0_67 = arith.constant 0 : index
    %224 = vector.load %arg16[%c0_65, %c0_66, %c0_67] : memref<5x128x512xf32, #tpu.memory_space<vmem>>, vector<1x128x512xf32>
    %225 = vector.shape_cast %224 : vector<1x128x512xf32> to vector<128x512xf32>
    %cst_68 = arith.constant dense<0.000000e+00> : vector<64x512xf32>
    %226 = tpu.matmul %223, %225, %cst_68 {dimension_numbers = #tpu.dot_dimension_numbers<[1], [0], [0], [1], [0, 0, 1, 1], [], []>} : vector<64x128xf32>, vector<128x512xf32>, vector<64x512xf32> -> vector<64x512xf32>
    %c0_69 = arith.constant 0 : index
    %c0_70 = arith.constant 0 : index
    %227 = vector.load %arg7[%c0_69, %c0_70] : memref<1x512xf32, #tpu.memory_space<vmem>>, vector<1x512xf32>
    %228 = vector.broadcast %227 : vector<1x512xf32> to vector<64x512xf32>
    %229 = arith.addf %226, %228 : vector<64x512xf32>
    %c0_71 = arith.constant 0 : index
    %c0_72 = arith.constant 0 : index
    %230 = vector.load %arg15[%c0_71, %c0_72] : memref<64x512xf32, #tpu.memory_space<vmem>>, vector<64x512xf32>
    tpu.vector_store %arg15[%c0_71, %c0_72], %229 {strides = array<i32>} : memref<64x512xf32, #tpu.memory_space<vmem>>, vector<64x512xf32>,
    %c3 = arith.constant 3 : index
    %c0_73 = arith.constant 0 : index
    %c0_74 = arith.constant 0 : index
    %231 = vector.load %arg16[%c3, %c0_73, %c0_74] : memref<5x128x512xf32, #tpu.memory_space<vmem>>, vector<1x128x512xf32>
    %232 = vector.shape_cast %231 : vector<1x128x512xf32> to vector<128x512xf32>
    %c1 = arith.constant 1 : index
    %c0_75 = arith.constant 0 : index
    %c0_76 = arith.constant 0 : index
    %233 = vector.load %arg12[%c1, %c0_75, %c0_76] : memref<3x8x128xf32, #tpu.memory_space<vmem>>, vector<1x8x128xf32>
    %234 = vector.shape_cast %233 : vector<1x8x128xf32> to vector<8x128xf32>
    %c1_77 = arith.constant 1 : index
    %c0_78 = arith.constant 0 : index
    %c0_79 = arith.constant 0 : index
    %235 = vector.load %arg13[%c1_77, %c0_78, %c0_79] : memref<3x8x128xf32, #tpu.memory_space<vmem>>, vector<1x8x128xf32>
    %236 = vector.shape_cast %235 : vector<1x8x128xf32> to vector<8x128xf32>
    %c0_i32_80 = arith.constant 0 : i32
    %c8_i32_81 = arith.constant 8 : i32
    %237 = arith.muli %c0_i32_80, %c8_i32_81 : i32
    %c0_i32_82 = arith.constant 0 : i32
    %238 = arith.addi %237, %c0_i32_82 : i32
    %c8_i32_83 = arith.constant 8 : i32
    %239 = arith.muli %238, %c8_i32_83 : i32
    %240 = tpu.assume_multiple %239, 8 : i32
    %241 = arith.index_cast %240 : i32 to index
    %c0_84 = arith.constant 0 : index
    %242 = vector.load %arg15[%241, %c0_84] : memref<64x512xf32, #tpu.memory_space<vmem>>, vector<8x512xf32>
    %cst_85 = arith.constant dense<0.000000e+00> : vector<8x512xf32>
    %243 = tpu.matmul %234, %232, %cst_85 {dimension_numbers = #tpu.dot_dimension_numbers<[1], [0], [0], [1], [0, 0, 1, 1], [], []>} : vector<8x128xf32>, vector<128x512xf32>, vector<8x512xf32> -> vector<8x512xf32>
    %244 = arith.addf %242, %243 : vector<8x512xf32>
    %245 = vector.extract_strided_slice %244 {offsets = [0, 0], sizes = [8, 384], strides = [1, 1]} : vector<8x512xf32> to vector<8x384xf32>
    %246 = arith.negf %245 : vector<8x384xf32>
    %247 = math.exp %246 : vector<8x384xf32>
    %cst_86 = arith.constant 1.000000e+00 : f32
    %248 = vector.broadcast %cst_86 : f32 to vector<8x384xf32>
    %249 = arith.addf %248, %247 : vector<8x384xf32>
    %250 = arith.divf %248, %249 : vector<8x384xf32>
    %251 = vector.extract_strided_slice %250 {offsets = [0, 0], sizes = [8, 128], strides = [1, 1]} : vector<8x384xf32> to vector<8x128xf32>
    %252 = vector.extract_strided_slice %250 {offsets = [0, 128], sizes = [8, 128], strides = [1, 1]} : vector<8x384xf32> to vector<8x128xf32>
    %253 = vector.extract_strided_slice %250 {offsets = [0, 256], sizes = [8, 128], strides = [1, 1]} : vector<8x384xf32> to vector<8x128xf32>
    %254 = vector.extract_strided_slice %244 {offsets = [0, 384], sizes = [8, 128], strides = [1, 1]} : vector<8x512xf32> to vector<8x128xf32>
    %255 = math.tanh %254 : vector<8x128xf32>
    %256 = arith.mulf %252, %236 : vector<8x128xf32>
    %257 = arith.mulf %251, %255 : vector<8x128xf32>
    %258 = arith.addf %256, %257 : vector<8x128xf32>
    %259 = math.tanh %258 : vector<8x128xf32>
    %260 = arith.mulf %253, %259 : vector<8x128xf32>
    %261 = arith.index_cast %240 : i32 to index
    %c0_87 = arith.constant 0 : index
    %262 = vector.load %arg14[%261, %c0_87] : memref<64x128xf32, #tpu.memory_space<vmem>>, vector<8x128xf32>
    tpu.vector_store %arg14[%261, %c0_87], %260 {strides = array<i32>} : memref<64x128xf32, #tpu.memory_space<vmem>>, vector<8x128xf32>,
    %c8_i32_88 = arith.constant 8 : i32
    %263 = arith.muli %c0_i32_80, %c8_i32_88 : i32
    %c1_i32_89 = arith.constant 1 : i32
    %264 = arith.addi %263, %c1_i32_89 : i32
    %c8_i32_90 = arith.constant 8 : i32
    %265 = arith.muli %264, %c8_i32_90 : i32
    %266 = tpu.assume_multiple %265, 8 : i32
    %267 = arith.index_cast %266 : i32 to index
    %c0_91 = arith.constant 0 : index
    %268 = vector.load %arg15[%267, %c0_91] : memref<64x512xf32, #tpu.memory_space<vmem>>, vector<8x512xf32>
    %cst_92 = arith.constant dense<0.000000e+00> : vector<8x512xf32>
    %269 = tpu.matmul %260, %232, %cst_92 {dimension_numbers = #tpu.dot_dimension_numbers<[1], [0], [0], [1], [0, 0, 1, 1], [], []>} : vector<8x128xf32>, vector<128x512xf32>, vector<8x512xf32> -> vector<8x512xf32>
    %270 = arith.addf %268, %269 : vector<8x512xf32>
    %271 = vector.extract_strided_slice %270 {offsets = [0, 0], sizes = [8, 384], strides = [1, 1]} : vector<8x512xf32> to vector<8x384xf32>
    %272 = arith.negf %271 : vector<8x384xf32>
    %273 = math.exp %272 : vector<8x384xf32>
    %cst_93 = arith.constant 1.000000e+00 : f32
    %274 = vector.broadcast %cst_93 : f32 to vector<8x384xf32>
    %275 = arith.addf %274, %273 : vector<8x384xf32>
    %276 = arith.divf %274, %275 : vector<8x384xf32>
    %277 = vector.extract_strided_slice %276 {offsets = [0, 0], sizes = [8, 128], strides = [1, 1]} : vector<8x384xf32> to vector<8x128xf32>
    %278 = vector.extract_strided_slice %276 {offsets = [0, 128], sizes = [8, 128], strides = [1, 1]} : vector<8x384xf32> to vector<8x128xf32>
    %279 = vector.extract_strided_slice %276 {offsets = [0, 256], sizes = [8, 128], strides = [1, 1]} : vector<8x384xf32> to vector<8x128xf32>
    %280 = vector.extract_strided_slice %270 {offsets = [0, 384], sizes = [8, 128], strides = [1, 1]} : vector<8x512xf32> to vector<8x128xf32>
    %281 = math.tanh %280 : vector<8x128xf32>
    %282 = arith.mulf %278, %258 : vector<8x128xf32>
    %283 = arith.mulf %277, %281 : vector<8x128xf32>
    %284 = arith.addf %282, %283 : vector<8x128xf32>
    %285 = math.tanh %284 : vector<8x128xf32>
    %286 = arith.mulf %279, %285 : vector<8x128xf32>
    %287 = arith.index_cast %266 : i32 to index
    %c0_94 = arith.constant 0 : index
    %288 = vector.load %arg14[%287, %c0_94] : memref<64x128xf32, #tpu.memory_space<vmem>>, vector<8x128xf32>
    tpu.vector_store %arg14[%287, %c0_94], %286 {strides = array<i32>} : memref<64x128xf32, #tpu.memory_space<vmem>>, vector<8x128xf32>,
    %c8_i32_95 = arith.constant 8 : i32
    %289 = arith.muli %c0_i32_80, %c8_i32_95 : i32
    %c2_i32_96 = arith.constant 2 : i32
    %290 = arith.addi %289, %c2_i32_96 : i32
    %c8_i32_97 = arith.constant 8 : i32
    %291 = arith.muli %290, %c8_i32_97 : i32
    %292 = tpu.assume_multiple %291, 8 : i32
    %293 = arith.index_cast %292 : i32 to index
    %c0_98 = arith.constant 0 : index
    %294 = vector.load %arg15[%293, %c0_98] : memref<64x512xf32, #tpu.memory_space<vmem>>, vector<8x512xf32>
    %cst_99 = arith.constant dense<0.000000e+00> : vector<8x512xf32>
    %295 = tpu.matmul %286, %232, %cst_99 {dimension_numbers = #tpu.dot_dimension_numbers<[1], [0], [0], [1], [0, 0, 1, 1], [], []>} : vector<8x128xf32>, vector<128x512xf32>, vector<8x512xf32> -> vector<8x512xf32>
    %296 = arith.addf %294, %295 : vector<8x512xf32>
    %297 = vector.extract_strided_slice %296 {offsets = [0, 0], sizes = [8, 384], strides = [1, 1]} : vector<8x512xf32> to vector<8x384xf32>
    %298 = arith.negf %297 : vector<8x384xf32>
    %299 = math.exp %298 : vector<8x384xf32>
    %cst_100 = arith.constant 1.000000e+00 : f32
    %300 = vector.broadcast %cst_100 : f32 to vector<8x384xf32>
    %301 = arith.addf %300, %299 : vector<8x384xf32>
    %302 = arith.divf %300, %301 : vector<8x384xf32>
    %303 = vector.extract_strided_slice %302 {offsets = [0, 0], sizes = [8, 128], strides = [1, 1]} : vector<8x384xf32> to vector<8x128xf32>
    %304 = vector.extract_strided_slice %302 {offsets = [0, 128], sizes = [8, 128], strides = [1, 1]} : vector<8x384xf32> to vector<8x128xf32>
    %305 = vector.extract_strided_slice %302 {offsets = [0, 256], sizes = [8, 128], strides = [1, 1]} : vector<8x384xf32> to vector<8x128xf32>
    %306 = vector.extract_strided_slice %296 {offsets = [0, 384], sizes = [8, 128], strides = [1, 1]} : vector<8x512xf32> to vector<8x128xf32>
    %307 = math.tanh %306 : vector<8x128xf32>
    %308 = arith.mulf %304, %284 : vector<8x128xf32>
    %309 = arith.mulf %303, %307 : vector<8x128xf32>
    %310 = arith.addf %308, %309 : vector<8x128xf32>
    %311 = math.tanh %310 : vector<8x128xf32>
    %312 = arith.mulf %305, %311 : vector<8x128xf32>
    %313 = arith.index_cast %292 : i32 to index
    %c0_101 = arith.constant 0 : index
    %314 = vector.load %arg14[%313, %c0_101] : memref<64x128xf32, #tpu.memory_space<vmem>>, vector<8x128xf32>
    tpu.vector_store %arg14[%313, %c0_101], %312 {strides = array<i32>} : memref<64x128xf32, #tpu.memory_space<vmem>>, vector<8x128xf32>,
    %c8_i32_102 = arith.constant 8 : i32
    %315 = arith.muli %c0_i32_80, %c8_i32_102 : i32
    %c3_i32_103 = arith.constant 3 : i32
    %316 = arith.addi %315, %c3_i32_103 : i32
    %c8_i32_104 = arith.constant 8 : i32
    %317 = arith.muli %316, %c8_i32_104 : i32
    %318 = tpu.assume_multiple %317, 8 : i32
    %319 = arith.index_cast %318 : i32 to index
    %c0_105 = arith.constant 0 : index
    %320 = vector.load %arg15[%319, %c0_105] : memref<64x512xf32, #tpu.memory_space<vmem>>, vector<8x512xf32>
    %cst_106 = arith.constant dense<0.000000e+00> : vector<8x512xf32>
    %321 = tpu.matmul %312, %232, %cst_106 {dimension_numbers = #tpu.dot_dimension_numbers<[1], [0], [0], [1], [0, 0, 1, 1], [], []>} : vector<8x128xf32>, vector<128x512xf32>, vector<8x512xf32> -> vector<8x512xf32>
    %322 = arith.addf %320, %321 : vector<8x512xf32>
    %323 = vector.extract_strided_slice %322 {offsets = [0, 0], sizes = [8, 384], strides = [1, 1]} : vector<8x512xf32> to vector<8x384xf32>
    %324 = arith.negf %323 : vector<8x384xf32>
    %325 = math.exp %324 : vector<8x384xf32>
    %cst_107 = arith.constant 1.000000e+00 : f32
    %326 = vector.broadcast %cst_107 : f32 to vector<8x384xf32>
    %327 = arith.addf %326, %325 : vector<8x384xf32>
    %328 = arith.divf %326, %327 : vector<8x384xf32>
    %329 = vector.extract_strided_slice %328 {offsets = [0, 0], sizes = [8, 128], strides = [1, 1]} : vector<8x384xf32> to vector<8x128xf32>
    %330 = vector.extract_strided_slice %328 {offsets = [0, 128], sizes = [8, 128], strides = [1, 1]} : vector<8x384xf32> to vector<8x128xf32>
    %331 = vector.extract_strided_slice %328 {offsets = [0, 256], sizes = [8, 128], strides = [1, 1]} : vector<8x384xf32> to vector<8x128xf32>
    %332 = vector.extract_strided_slice %322 {offsets = [0, 384], sizes = [8, 128], strides = [1, 1]} : vector<8x512xf32> to vector<8x128xf32>
    %333 = math.tanh %332 : vector<8x128xf32>
    %334 = arith.mulf %330, %310 : vector<8x128xf32>
    %335 = arith.mulf %329, %333 : vector<8x128xf32>
    %336 = arith.addf %334, %335 : vector<8x128xf32>
    %337 = math.tanh %336 : vector<8x128xf32>
    %338 = arith.mulf %331, %337 : vector<8x128xf32>
    %339 = arith.index_cast %318 : i32 to index
    %c0_108 = arith.constant 0 : index
    %340 = vector.load %arg14[%339, %c0_108] : memref<64x128xf32, #tpu.memory_space<vmem>>, vector<8x128xf32>
    tpu.vector_store %arg14[%339, %c0_108], %338 {strides = array<i32>} : memref<64x128xf32, #tpu.memory_space<vmem>>, vector<8x128xf32>,
    %c8_i32_109 = arith.constant 8 : i32
    %341 = arith.muli %c0_i32_80, %c8_i32_109 : i32
    %c4_i32_110 = arith.constant 4 : i32
    %342 = arith.addi %341, %c4_i32_110 : i32
    %c8_i32_111 = arith.constant 8 : i32
    %343 = arith.muli %342, %c8_i32_111 : i32
    %344 = tpu.assume_multiple %343, 8 : i32
    %345 = arith.index_cast %344 : i32 to index
    %c0_112 = arith.constant 0 : index
    %346 = vector.load %arg15[%345, %c0_112] : memref<64x512xf32, #tpu.memory_space<vmem>>, vector<8x512xf32>
    %cst_113 = arith.constant dense<0.000000e+00> : vector<8x512xf32>
    %347 = tpu.matmul %338, %232, %cst_113 {dimension_numbers = #tpu.dot_dimension_numbers<[1], [0], [0], [1], [0, 0, 1, 1], [], []>} : vector<8x128xf32>, vector<128x512xf32>, vector<8x512xf32> -> vector<8x512xf32>
    %348 = arith.addf %346, %347 : vector<8x512xf32>
    %349 = vector.extract_strided_slice %348 {offsets = [0, 0], sizes = [8, 384], strides = [1, 1]} : vector<8x512xf32> to vector<8x384xf32>
    %350 = arith.negf %349 : vector<8x384xf32>
    %351 = math.exp %350 : vector<8x384xf32>
    %cst_114 = arith.constant 1.000000e+00 : f32
    %352 = vector.broadcast %cst_114 : f32 to vector<8x384xf32>
    %353 = arith.addf %352, %351 : vector<8x384xf32>
    %354 = arith.divf %352, %353 : vector<8x384xf32>
    %355 = vector.extract_strided_slice %354 {offsets = [0, 0], sizes = [8, 128], strides = [1, 1]} : vector<8x384xf32> to vector<8x128xf32>
    %356 = vector.extract_strided_slice %354 {offsets = [0, 128], sizes = [8, 128], strides = [1, 1]} : vector<8x384xf32> to vector<8x128xf32>
    %357 = vector.extract_strided_slice %354 {offsets = [0, 256], sizes = [8, 128], strides = [1, 1]} : vector<8x384xf32> to vector<8x128xf32>
    %358 = vector.extract_strided_slice %348 {offsets = [0, 384], sizes = [8, 128], strides = [1, 1]} : vector<8x512xf32> to vector<8x128xf32>
    %359 = math.tanh %358 : vector<8x128xf32>
    %360 = arith.mulf %356, %336 : vector<8x128xf32>
    %361 = arith.mulf %355, %359 : vector<8x128xf32>
    %362 = arith.addf %360, %361 : vector<8x128xf32>
    %363 = math.tanh %362 : vector<8x128xf32>
    %364 = arith.mulf %357, %363 : vector<8x128xf32>
    %365 = arith.index_cast %344 : i32 to index
    %c0_115 = arith.constant 0 : index
    %366 = vector.load %arg14[%365, %c0_115] : memref<64x128xf32, #tpu.memory_space<vmem>>, vector<8x128xf32>
    tpu.vector_store %arg14[%365, %c0_115], %364 {strides = array<i32>} : memref<64x128xf32, #tpu.memory_space<vmem>>, vector<8x128xf32>,
    %c8_i32_116 = arith.constant 8 : i32
    %367 = arith.muli %c0_i32_80, %c8_i32_116 : i32
    %c5_i32_117 = arith.constant 5 : i32
    %368 = arith.addi %367, %c5_i32_117 : i32
    %c8_i32_118 = arith.constant 8 : i32
    %369 = arith.muli %368, %c8_i32_118 : i32
    %370 = tpu.assume_multiple %369, 8 : i32
    %371 = arith.index_cast %370 : i32 to index
    %c0_119 = arith.constant 0 : index
    %372 = vector.load %arg15[%371, %c0_119] : memref<64x512xf32, #tpu.memory_space<vmem>>, vector<8x512xf32>
    %cst_120 = arith.constant dense<0.000000e+00> : vector<8x512xf32>
    %373 = tpu.matmul %364, %232, %cst_120 {dimension_numbers = #tpu.dot_dimension_numbers<[1], [0], [0], [1], [0, 0, 1, 1], [], []>} : vector<8x128xf32>, vector<128x512xf32>, vector<8x512xf32> -> vector<8x512xf32>
    %374 = arith.addf %372, %373 : vector<8x512xf32>
    %375 = vector.extract_strided_slice %374 {offsets = [0, 0], sizes = [8, 384], strides = [1, 1]} : vector<8x512xf32> to vector<8x384xf32>
    %376 = arith.negf %375 : vector<8x384xf32>
    %377 = math.exp %376 : vector<8x384xf32>
    %cst_121 = arith.constant 1.000000e+00 : f32
    %378 = vector.broadcast %cst_121 : f32 to vector<8x384xf32>
    %379 = arith.addf %378, %377 : vector<8x384xf32>
    %380 = arith.divf %378, %379 : vector<8x384xf32>
    %381 = vector.extract_strided_slice %380 {offsets = [0, 0], sizes = [8, 128], strides = [1, 1]} : vector<8x384xf32> to vector<8x128xf32>
    %382 = vector.extract_strided_slice %380 {offsets = [0, 128], sizes = [8, 128], strides = [1, 1]} : vector<8x384xf32> to vector<8x128xf32>
    %383 = vector.extract_strided_slice %380 {offsets = [0, 256], sizes = [8, 128], strides = [1, 1]} : vector<8x384xf32> to vector<8x128xf32>
    %384 = vector.extract_strided_slice %374 {offsets = [0, 384], sizes = [8, 128], strides = [1, 1]} : vector<8x512xf32> to vector<8x128xf32>
    %385 = math.tanh %384 : vector<8x128xf32>
    %386 = arith.mulf %382, %362 : vector<8x128xf32>
    %387 = arith.mulf %381, %385 : vector<8x128xf32>
    %388 = arith.addf %386, %387 : vector<8x128xf32>
    %389 = math.tanh %388 : vector<8x128xf32>
    %390 = arith.mulf %383, %389 : vector<8x128xf32>
    %391 = arith.index_cast %370 : i32 to index
    %c0_122 = arith.constant 0 : index
    %392 = vector.load %arg14[%391, %c0_122] : memref<64x128xf32, #tpu.memory_space<vmem>>, vector<8x128xf32>
    tpu.vector_store %arg14[%391, %c0_122], %390 {strides = array<i32>} : memref<64x128xf32, #tpu.memory_space<vmem>>, vector<8x128xf32>,
    %c8_i32_123 = arith.constant 8 : i32
    %393 = arith.muli %c0_i32_80, %c8_i32_123 : i32
    %c6_i32_124 = arith.constant 6 : i32
    %394 = arith.addi %393, %c6_i32_124 : i32
    %c8_i32_125 = arith.constant 8 : i32
    %395 = arith.muli %394, %c8_i32_125 : i32
    %396 = tpu.assume_multiple %395, 8 : i32
    %397 = arith.index_cast %396 : i32 to index
    %c0_126 = arith.constant 0 : index
    %398 = vector.load %arg15[%397, %c0_126] : memref<64x512xf32, #tpu.memory_space<vmem>>, vector<8x512xf32>
    %cst_127 = arith.constant dense<0.000000e+00> : vector<8x512xf32>
    %399 = tpu.matmul %390, %232, %cst_127 {dimension_numbers = #tpu.dot_dimension_numbers<[1], [0], [0], [1], [0, 0, 1, 1], [], []>} : vector<8x128xf32>, vector<128x512xf32>, vector<8x512xf32> -> vector<8x512xf32>
    %400 = arith.addf %398, %399 : vector<8x512xf32>
    %401 = vector.extract_strided_slice %400 {offsets = [0, 0], sizes = [8, 384], strides = [1, 1]} : vector<8x512xf32> to vector<8x384xf32>
    %402 = arith.negf %401 : vector<8x384xf32>
    %403 = math.exp %402 : vector<8x384xf32>
    %cst_128 = arith.constant 1.000000e+00 : f32
    %404 = vector.broadcast %cst_128 : f32 to vector<8x384xf32>
    %405 = arith.addf %404, %403 : vector<8x384xf32>
    %406 = arith.divf %404, %405 : vector<8x384xf32>
    %407 = vector.extract_strided_slice %406 {offsets = [0, 0], sizes = [8, 128], strides = [1, 1]} : vector<8x384xf32> to vector<8x128xf32>
    %408 = vector.extract_strided_slice %406 {offsets = [0, 128], sizes = [8, 128], strides = [1, 1]} : vector<8x384xf32> to vector<8x128xf32>
    %409 = vector.extract_strided_slice %406 {offsets = [0, 256], sizes = [8, 128], strides = [1, 1]} : vector<8x384xf32> to vector<8x128xf32>
    %410 = vector.extract_strided_slice %400 {offsets = [0, 384], sizes = [8, 128], strides = [1, 1]} : vector<8x512xf32> to vector<8x128xf32>
    %411 = math.tanh %410 : vector<8x128xf32>
    %412 = arith.mulf %408, %388 : vector<8x128xf32>
    %413 = arith.mulf %407, %411 : vector<8x128xf32>
    %414 = arith.addf %412, %413 : vector<8x128xf32>
    %415 = math.tanh %414 : vector<8x128xf32>
    %416 = arith.mulf %409, %415 : vector<8x128xf32>
    %417 = arith.index_cast %396 : i32 to index
    %c0_129 = arith.constant 0 : index
    %418 = vector.load %arg14[%417, %c0_129] : memref<64x128xf32, #tpu.memory_space<vmem>>, vector<8x128xf32>
    tpu.vector_store %arg14[%417, %c0_129], %416 {strides = array<i32>} : memref<64x128xf32, #tpu.memory_space<vmem>>, vector<8x128xf32>,
    %c8_i32_130 = arith.constant 8 : i32
    %419 = arith.muli %c0_i32_80, %c8_i32_130 : i32
    %c7_i32_131 = arith.constant 7 : i32
    %420 = arith.addi %419, %c7_i32_131 : i32
    %c8_i32_132 = arith.constant 8 : i32
    %421 = arith.muli %420, %c8_i32_132 : i32
    %422 = tpu.assume_multiple %421, 8 : i32
    %423 = arith.index_cast %422 : i32 to index
    %c0_133 = arith.constant 0 : index
    %424 = vector.load %arg15[%423, %c0_133] : memref<64x512xf32, #tpu.memory_space<vmem>>, vector<8x512xf32>
    %cst_134 = arith.constant dense<0.000000e+00> : vector<8x512xf32>
    %425 = tpu.matmul %416, %232, %cst_134 {dimension_numbers = #tpu.dot_dimension_numbers<[1], [0], [0], [1], [0, 0, 1, 1], [], []>} : vector<8x128xf32>, vector<128x512xf32>, vector<8x512xf32> -> vector<8x512xf32>
    %426 = arith.addf %424, %425 : vector<8x512xf32>
    %427 = vector.extract_strided_slice %426 {offsets = [0, 0], sizes = [8, 384], strides = [1, 1]} : vector<8x512xf32> to vector<8x384xf32>
    %428 = arith.negf %427 : vector<8x384xf32>
    %429 = math.exp %428 : vector<8x384xf32>
    %cst_135 = arith.constant 1.000000e+00 : f32
    %430 = vector.broadcast %cst_135 : f32 to vector<8x384xf32>
    %431 = arith.addf %430, %429 : vector<8x384xf32>
    %432 = arith.divf %430, %431 : vector<8x384xf32>
    %433 = vector.extract_strided_slice %432 {offsets = [0, 0], sizes = [8, 128], strides = [1, 1]} : vector<8x384xf32> to vector<8x128xf32>
    %434 = vector.extract_strided_slice %432 {offsets = [0, 128], sizes = [8, 128], strides = [1, 1]} : vector<8x384xf32> to vector<8x128xf32>
    %435 = vector.extract_strided_slice %432 {offsets = [0, 256], sizes = [8, 128], strides = [1, 1]} : vector<8x384xf32> to vector<8x128xf32>
    %436 = vector.extract_strided_slice %426 {offsets = [0, 384], sizes = [8, 128], strides = [1, 1]} : vector<8x512xf32> to vector<8x128xf32>
    %437 = math.tanh %436 : vector<8x128xf32>
    %438 = arith.mulf %434, %414 : vector<8x128xf32>
    %439 = arith.mulf %433, %437 : vector<8x128xf32>
    %440 = arith.addf %438, %439 : vector<8x128xf32>
    %441 = math.tanh %440 : vector<8x128xf32>
    %442 = arith.mulf %435, %441 : vector<8x128xf32>
    %443 = arith.index_cast %422 : i32 to index
    %c0_136 = arith.constant 0 : index
    %444 = vector.load %arg14[%443, %c0_136] : memref<64x128xf32, #tpu.memory_space<vmem>>, vector<8x128xf32>
    tpu.vector_store %arg14[%443, %c0_136], %442 {strides = array<i32>} : memref<64x128xf32, #tpu.memory_space<vmem>>, vector<8x128xf32>,
    %c1_i32_137 = arith.constant 1 : i32
    %c1_138 = arith.constant 1 : index
    %c0_139 = arith.constant 0 : index
    %c0_140 = arith.constant 0 : index
    %445 = vector.load %arg12[%c1_138, %c0_139, %c0_140] : memref<3x8x128xf32, #tpu.memory_space<vmem>>, vector<1x8x128xf32>
    %446 = vector.shape_cast %445 : vector<1x8x128xf32> to vector<8x128xf32>
    %447 = vector.shape_cast %442 : vector<8x128xf32> to vector<1x8x128xf32>
    tpu.vector_store %arg12[%c1_138, %c0_139, %c0_140], %447 {strides = array<i32>} : memref<3x8x128xf32, #tpu.memory_space<vmem>>, vector<1x8x128xf32>,
    %c1_141 = arith.constant 1 : index
    %c0_142 = arith.constant 0 : index
    %c0_143 = arith.constant 0 : index
    %448 = vector.load %arg13[%c1_141, %c0_142, %c0_143] : memref<3x8x128xf32, #tpu.memory_space<vmem>>, vector<1x8x128xf32>
    %449 = vector.shape_cast %448 : vector<1x8x128xf32> to vector<8x128xf32>
    %450 = vector.shape_cast %440 : vector<8x128xf32> to vector<1x8x128xf32>
    tpu.vector_store %arg13[%c1_141, %c0_142, %c0_143], %450 {strides = array<i32>} : memref<3x8x128xf32, #tpu.memory_space<vmem>>, vector<1x8x128xf32>,
    %c0_144 = arith.constant 0 : index
    %c0_145 = arith.constant 0 : index
    %451 = vector.load %arg14[%c0_144, %c0_145] : memref<64x128xf32, #tpu.memory_space<vmem>>, vector<64x128xf32>
    %c1_146 = arith.constant 1 : index
    %c0_147 = arith.constant 0 : index
    %c0_148 = arith.constant 0 : index
    %452 = vector.load %arg16[%c1_146, %c0_147, %c0_148] : memref<5x128x512xf32, #tpu.memory_space<vmem>>, vector<1x128x512xf32>
    %453 = vector.shape_cast %452 : vector<1x128x512xf32> to vector<128x512xf32>
    %cst_149 = arith.constant dense<0.000000e+00> : vector<64x512xf32>
    %454 = tpu.matmul %451, %453, %cst_149 {dimension_numbers = #tpu.dot_dimension_numbers<[1], [0], [0], [1], [0, 0, 1, 1], [], []>} : vector<64x128xf32>, vector<128x512xf32>, vector<64x512xf32> -> vector<64x512xf32>
    %c0_150 = arith.constant 0 : index
    %c0_151 = arith.constant 0 : index
    %455 = vector.load %arg8[%c0_150, %c0_151] : memref<1x512xf32, #tpu.memory_space<vmem>>, vector<1x512xf32>
    %456 = vector.broadcast %455 : vector<1x512xf32> to vector<64x512xf32>
    %457 = arith.addf %454, %456 : vector<64x512xf32>
    %c0_152 = arith.constant 0 : index
    %c0_153 = arith.constant 0 : index
    %458 = vector.load %arg15[%c0_152, %c0_153] : memref<64x512xf32, #tpu.memory_space<vmem>>, vector<64x512xf32>
    tpu.vector_store %arg15[%c0_152, %c0_153], %457 {strides = array<i32>} : memref<64x512xf32, #tpu.memory_space<vmem>>, vector<64x512xf32>,
    %c4 = arith.constant 4 : index
    %c0_154 = arith.constant 0 : index
    %c0_155 = arith.constant 0 : index
    %459 = vector.load %arg16[%c4, %c0_154, %c0_155] : memref<5x128x512xf32, #tpu.memory_space<vmem>>, vector<1x128x512xf32>
    %460 = vector.shape_cast %459 : vector<1x128x512xf32> to vector<128x512xf32>
    %c2_156 = arith.constant 2 : index
    %c0_157 = arith.constant 0 : index
    %c0_158 = arith.constant 0 : index
    %461 = vector.load %arg12[%c2_156, %c0_157, %c0_158] : memref<3x8x128xf32, #tpu.memory_space<vmem>>, vector<1x8x128xf32>
    %462 = vector.shape_cast %461 : vector<1x8x128xf32> to vector<8x128xf32>
    %c2_159 = arith.constant 2 : index
    %c0_160 = arith.constant 0 : index
    %c0_161 = arith.constant 0 : index
    %463 = vector.load %arg13[%c2_159, %c0_160, %c0_161] : memref<3x8x128xf32, #tpu.memory_space<vmem>>, vector<1x8x128xf32>
    %464 = vector.shape_cast %463 : vector<1x8x128xf32> to vector<8x128xf32>
    %c0_i32_162 = arith.constant 0 : i32
    %c8_i32_163 = arith.constant 8 : i32
    %465 = arith.muli %c0_i32_162, %c8_i32_163 : i32
    %c0_i32_164 = arith.constant 0 : i32
    %466 = arith.addi %465, %c0_i32_164 : i32
    %c8_i32_165 = arith.constant 8 : i32
    %467 = arith.muli %466, %c8_i32_165 : i32
    %468 = tpu.assume_multiple %467, 8 : i32
    %469 = arith.index_cast %468 : i32 to index
    %c0_166 = arith.constant 0 : index
    %470 = vector.load %arg15[%469, %c0_166] : memref<64x512xf32, #tpu.memory_space<vmem>>, vector<8x512xf32>
    %cst_167 = arith.constant dense<0.000000e+00> : vector<8x512xf32>
    %471 = tpu.matmul %462, %460, %cst_167 {dimension_numbers = #tpu.dot_dimension_numbers<[1], [0], [0], [1], [0, 0, 1, 1], [], []>} : vector<8x128xf32>, vector<128x512xf32>, vector<8x512xf32> -> vector<8x512xf32>
    %472 = arith.addf %470, %471 : vector<8x512xf32>
    %473 = vector.extract_strided_slice %472 {offsets = [0, 0], sizes = [8, 384], strides = [1, 1]} : vector<8x512xf32> to vector<8x384xf32>
    %474 = arith.negf %473 : vector<8x384xf32>
    %475 = math.exp %474 : vector<8x384xf32>
    %cst_168 = arith.constant 1.000000e+00 : f32
    %476 = vector.broadcast %cst_168 : f32 to vector<8x384xf32>
    %477 = arith.addf %476, %475 : vector<8x384xf32>
    %478 = arith.divf %476, %477 : vector<8x384xf32>
    %479 = vector.extract_strided_slice %478 {offsets = [0, 0], sizes = [8, 128], strides = [1, 1]} : vector<8x384xf32> to vector<8x128xf32>
    %480 = vector.extract_strided_slice %478 {offsets = [0, 128], sizes = [8, 128], strides = [1, 1]} : vector<8x384xf32> to vector<8x128xf32>
    %481 = vector.extract_strided_slice %478 {offsets = [0, 256], sizes = [8, 128], strides = [1, 1]} : vector<8x384xf32> to vector<8x128xf32>
    %482 = vector.extract_strided_slice %472 {offsets = [0, 384], sizes = [8, 128], strides = [1, 1]} : vector<8x512xf32> to vector<8x128xf32>
    %483 = math.tanh %482 : vector<8x128xf32>
    %484 = arith.mulf %480, %464 : vector<8x128xf32>
    %485 = arith.mulf %479, %483 : vector<8x128xf32>
    %486 = arith.addf %484, %485 : vector<8x128xf32>
    %487 = math.tanh %486 : vector<8x128xf32>
    %488 = arith.mulf %481, %487 : vector<8x128xf32>
    %489 = arith.index_cast %468 : i32 to index
    %c0_169 = arith.constant 0 : index
    %490 = vector.load %arg14[%489, %c0_169] : memref<64x128xf32, #tpu.memory_space<vmem>>, vector<8x128xf32>
    tpu.vector_store %arg14[%489, %c0_169], %488 {strides = array<i32>} : memref<64x128xf32, #tpu.memory_space<vmem>>, vector<8x128xf32>,
    %c8_i32_170 = arith.constant 8 : i32
    %491 = arith.muli %c0_i32_162, %c8_i32_170 : i32
    %c1_i32_171 = arith.constant 1 : i32
    %492 = arith.addi %491, %c1_i32_171 : i32
    %c8_i32_172 = arith.constant 8 : i32
    %493 = arith.muli %492, %c8_i32_172 : i32
    %494 = tpu.assume_multiple %493, 8 : i32
    %495 = arith.index_cast %494 : i32 to index
    %c0_173 = arith.constant 0 : index
    %496 = vector.load %arg15[%495, %c0_173] : memref<64x512xf32, #tpu.memory_space<vmem>>, vector<8x512xf32>
    %cst_174 = arith.constant dense<0.000000e+00> : vector<8x512xf32>
    %497 = tpu.matmul %488, %460, %cst_174 {dimension_numbers = #tpu.dot_dimension_numbers<[1], [0], [0], [1], [0, 0, 1, 1], [], []>} : vector<8x128xf32>, vector<128x512xf32>, vector<8x512xf32> -> vector<8x512xf32>
    %498 = arith.addf %496, %497 : vector<8x512xf32>
    %499 = vector.extract_strided_slice %498 {offsets = [0, 0], sizes = [8, 384], strides = [1, 1]} : vector<8x512xf32> to vector<8x384xf32>
    %500 = arith.negf %499 : vector<8x384xf32>
    %501 = math.exp %500 : vector<8x384xf32>
    %cst_175 = arith.constant 1.000000e+00 : f32
    %502 = vector.broadcast %cst_175 : f32 to vector<8x384xf32>
    %503 = arith.addf %502, %501 : vector<8x384xf32>
    %504 = arith.divf %502, %503 : vector<8x384xf32>
    %505 = vector.extract_strided_slice %504 {offsets = [0, 0], sizes = [8, 128], strides = [1, 1]} : vector<8x384xf32> to vector<8x128xf32>
    %506 = vector.extract_strided_slice %504 {offsets = [0, 128], sizes = [8, 128], strides = [1, 1]} : vector<8x384xf32> to vector<8x128xf32>
    %507 = vector.extract_strided_slice %504 {offsets = [0, 256], sizes = [8, 128], strides = [1, 1]} : vector<8x384xf32> to vector<8x128xf32>
    %508 = vector.extract_strided_slice %498 {offsets = [0, 384], sizes = [8, 128], strides = [1, 1]} : vector<8x512xf32> to vector<8x128xf32>
    %509 = math.tanh %508 : vector<8x128xf32>
    %510 = arith.mulf %506, %486 : vector<8x128xf32>
    %511 = arith.mulf %505, %509 : vector<8x128xf32>
    %512 = arith.addf %510, %511 : vector<8x128xf32>
    %513 = math.tanh %512 : vector<8x128xf32>
    %514 = arith.mulf %507, %513 : vector<8x128xf32>
    %515 = arith.index_cast %494 : i32 to index
    %c0_176 = arith.constant 0 : index
    %516 = vector.load %arg14[%515, %c0_176] : memref<64x128xf32, #tpu.memory_space<vmem>>, vector<8x128xf32>
    tpu.vector_store %arg14[%515, %c0_176], %514 {strides = array<i32>} : memref<64x128xf32, #tpu.memory_space<vmem>>, vector<8x128xf32>,
    %c8_i32_177 = arith.constant 8 : i32
    %517 = arith.muli %c0_i32_162, %c8_i32_177 : i32
    %c2_i32_178 = arith.constant 2 : i32
    %518 = arith.addi %517, %c2_i32_178 : i32
    %c8_i32_179 = arith.constant 8 : i32
    %519 = arith.muli %518, %c8_i32_179 : i32
    %520 = tpu.assume_multiple %519, 8 : i32
    %521 = arith.index_cast %520 : i32 to index
    %c0_180 = arith.constant 0 : index
    %522 = vector.load %arg15[%521, %c0_180] : memref<64x512xf32, #tpu.memory_space<vmem>>, vector<8x512xf32>
    %cst_181 = arith.constant dense<0.000000e+00> : vector<8x512xf32>
    %523 = tpu.matmul %514, %460, %cst_181 {dimension_numbers = #tpu.dot_dimension_numbers<[1], [0], [0], [1], [0, 0, 1, 1], [], []>} : vector<8x128xf32>, vector<128x512xf32>, vector<8x512xf32> -> vector<8x512xf32>
    %524 = arith.addf %522, %523 : vector<8x512xf32>
    %525 = vector.extract_strided_slice %524 {offsets = [0, 0], sizes = [8, 384], strides = [1, 1]} : vector<8x512xf32> to vector<8x384xf32>
    %526 = arith.negf %525 : vector<8x384xf32>
    %527 = math.exp %526 : vector<8x384xf32>
    %cst_182 = arith.constant 1.000000e+00 : f32
    %528 = vector.broadcast %cst_182 : f32 to vector<8x384xf32>
    %529 = arith.addf %528, %527 : vector<8x384xf32>
    %530 = arith.divf %528, %529 : vector<8x384xf32>
    %531 = vector.extract_strided_slice %530 {offsets = [0, 0], sizes = [8, 128], strides = [1, 1]} : vector<8x384xf32> to vector<8x128xf32>
    %532 = vector.extract_strided_slice %530 {offsets = [0, 128], sizes = [8, 128], strides = [1, 1]} : vector<8x384xf32> to vector<8x128xf32>
    %533 = vector.extract_strided_slice %530 {offsets = [0, 256], sizes = [8, 128], strides = [1, 1]} : vector<8x384xf32> to vector<8x128xf32>
    %534 = vector.extract_strided_slice %524 {offsets = [0, 384], sizes = [8, 128], strides = [1, 1]} : vector<8x512xf32> to vector<8x128xf32>
    %535 = math.tanh %534 : vector<8x128xf32>
    %536 = arith.mulf %532, %512 : vector<8x128xf32>
    %537 = arith.mulf %531, %535 : vector<8x128xf32>
    %538 = arith.addf %536, %537 : vector<8x128xf32>
    %539 = math.tanh %538 : vector<8x128xf32>
    %540 = arith.mulf %533, %539 : vector<8x128xf32>
    %541 = arith.index_cast %520 : i32 to index
    %c0_183 = arith.constant 0 : index
    %542 = vector.load %arg14[%541, %c0_183] : memref<64x128xf32, #tpu.memory_space<vmem>>, vector<8x128xf32>
    tpu.vector_store %arg14[%541, %c0_183], %540 {strides = array<i32>} : memref<64x128xf32, #tpu.memory_space<vmem>>, vector<8x128xf32>,
    %c8_i32_184 = arith.constant 8 : i32
    %543 = arith.muli %c0_i32_162, %c8_i32_184 : i32
    %c3_i32_185 = arith.constant 3 : i32
    %544 = arith.addi %543, %c3_i32_185 : i32
    %c8_i32_186 = arith.constant 8 : i32
    %545 = arith.muli %544, %c8_i32_186 : i32
    %546 = tpu.assume_multiple %545, 8 : i32
    %547 = arith.index_cast %546 : i32 to index
    %c0_187 = arith.constant 0 : index
    %548 = vector.load %arg15[%547, %c0_187] : memref<64x512xf32, #tpu.memory_space<vmem>>, vector<8x512xf32>
    %cst_188 = arith.constant dense<0.000000e+00> : vector<8x512xf32>
    %549 = tpu.matmul %540, %460, %cst_188 {dimension_numbers = #tpu.dot_dimension_numbers<[1], [0], [0], [1], [0, 0, 1, 1], [], []>} : vector<8x128xf32>, vector<128x512xf32>, vector<8x512xf32> -> vector<8x512xf32>
    %550 = arith.addf %548, %549 : vector<8x512xf32>
    %551 = vector.extract_strided_slice %550 {offsets = [0, 0], sizes = [8, 384], strides = [1, 1]} : vector<8x512xf32> to vector<8x384xf32>
    %552 = arith.negf %551 : vector<8x384xf32>
    %553 = math.exp %552 : vector<8x384xf32>
    %cst_189 = arith.constant 1.000000e+00 : f32
    %554 = vector.broadcast %cst_189 : f32 to vector<8x384xf32>
    %555 = arith.addf %554, %553 : vector<8x384xf32>
    %556 = arith.divf %554, %555 : vector<8x384xf32>
    %557 = vector.extract_strided_slice %556 {offsets = [0, 0], sizes = [8, 128], strides = [1, 1]} : vector<8x384xf32> to vector<8x128xf32>
    %558 = vector.extract_strided_slice %556 {offsets = [0, 128], sizes = [8, 128], strides = [1, 1]} : vector<8x384xf32> to vector<8x128xf32>
    %559 = vector.extract_strided_slice %556 {offsets = [0, 256], sizes = [8, 128], strides = [1, 1]} : vector<8x384xf32> to vector<8x128xf32>
    %560 = vector.extract_strided_slice %550 {offsets = [0, 384], sizes = [8, 128], strides = [1, 1]} : vector<8x512xf32> to vector<8x128xf32>
    %561 = math.tanh %560 : vector<8x128xf32>
    %562 = arith.mulf %558, %538 : vector<8x128xf32>
    %563 = arith.mulf %557, %561 : vector<8x128xf32>
    %564 = arith.addf %562, %563 : vector<8x128xf32>
    %565 = math.tanh %564 : vector<8x128xf32>
    %566 = arith.mulf %559, %565 : vector<8x128xf32>
    %567 = arith.index_cast %546 : i32 to index
    %c0_190 = arith.constant 0 : index
    %568 = vector.load %arg14[%567, %c0_190] : memref<64x128xf32, #tpu.memory_space<vmem>>, vector<8x128xf32>
    tpu.vector_store %arg14[%567, %c0_190], %566 {strides = array<i32>} : memref<64x128xf32, #tpu.memory_space<vmem>>, vector<8x128xf32>,
    %c8_i32_191 = arith.constant 8 : i32
    %569 = arith.muli %c0_i32_162, %c8_i32_191 : i32
    %c4_i32_192 = arith.constant 4 : i32
    %570 = arith.addi %569, %c4_i32_192 : i32
    %c8_i32_193 = arith.constant 8 : i32
    %571 = arith.muli %570, %c8_i32_193 : i32
    %572 = tpu.assume_multiple %571, 8 : i32
    %573 = arith.index_cast %572 : i32 to index
    %c0_194 = arith.constant 0 : index
    %574 = vector.load %arg15[%573, %c0_194] : memref<64x512xf32, #tpu.memory_space<vmem>>, vector<8x512xf32>
    %cst_195 = arith.constant dense<0.000000e+00> : vector<8x512xf32>
    %575 = tpu.matmul %566, %460, %cst_195 {dimension_numbers = #tpu.dot_dimension_numbers<[1], [0], [0], [1], [0, 0, 1, 1], [], []>} : vector<8x128xf32>, vector<128x512xf32>, vector<8x512xf32> -> vector<8x512xf32>
    %576 = arith.addf %574, %575 : vector<8x512xf32>
    %577 = vector.extract_strided_slice %576 {offsets = [0, 0], sizes = [8, 384], strides = [1, 1]} : vector<8x512xf32> to vector<8x384xf32>
    %578 = arith.negf %577 : vector<8x384xf32>
    %579 = math.exp %578 : vector<8x384xf32>
    %cst_196 = arith.constant 1.000000e+00 : f32
    %580 = vector.broadcast %cst_196 : f32 to vector<8x384xf32>
    %581 = arith.addf %580, %579 : vector<8x384xf32>
    %582 = arith.divf %580, %581 : vector<8x384xf32>
    %583 = vector.extract_strided_slice %582 {offsets = [0, 0], sizes = [8, 128], strides = [1, 1]} : vector<8x384xf32> to vector<8x128xf32>
    %584 = vector.extract_strided_slice %582 {offsets = [0, 128], sizes = [8, 128], strides = [1, 1]} : vector<8x384xf32> to vector<8x128xf32>
    %585 = vector.extract_strided_slice %582 {offsets = [0, 256], sizes = [8, 128], strides = [1, 1]} : vector<8x384xf32> to vector<8x128xf32>
    %586 = vector.extract_strided_slice %576 {offsets = [0, 384], sizes = [8, 128], strides = [1, 1]} : vector<8x512xf32> to vector<8x128xf32>
    %587 = math.tanh %586 : vector<8x128xf32>
    %588 = arith.mulf %584, %564 : vector<8x128xf32>
    %589 = arith.mulf %583, %587 : vector<8x128xf32>
    %590 = arith.addf %588, %589 : vector<8x128xf32>
    %591 = math.tanh %590 : vector<8x128xf32>
    %592 = arith.mulf %585, %591 : vector<8x128xf32>
    %593 = arith.index_cast %572 : i32 to index
    %c0_197 = arith.constant 0 : index
    %594 = vector.load %arg14[%593, %c0_197] : memref<64x128xf32, #tpu.memory_space<vmem>>, vector<8x128xf32>
    tpu.vector_store %arg14[%593, %c0_197], %592 {strides = array<i32>} : memref<64x128xf32, #tpu.memory_space<vmem>>, vector<8x128xf32>,
    %c8_i32_198 = arith.constant 8 : i32
    %595 = arith.muli %c0_i32_162, %c8_i32_198 : i32
    %c5_i32_199 = arith.constant 5 : i32
    %596 = arith.addi %595, %c5_i32_199 : i32
    %c8_i32_200 = arith.constant 8 : i32
    %597 = arith.muli %596, %c8_i32_200 : i32
    %598 = tpu.assume_multiple %597, 8 : i32
    %599 = arith.index_cast %598 : i32 to index
    %c0_201 = arith.constant 0 : index
    %600 = vector.load %arg15[%599, %c0_201] : memref<64x512xf32, #tpu.memory_space<vmem>>, vector<8x512xf32>
    %cst_202 = arith.constant dense<0.000000e+00> : vector<8x512xf32>
    %601 = tpu.matmul %592, %460, %cst_202 {dimension_numbers = #tpu.dot_dimension_numbers<[1], [0], [0], [1], [0, 0, 1, 1], [], []>} : vector<8x128xf32>, vector<128x512xf32>, vector<8x512xf32> -> vector<8x512xf32>
    %602 = arith.addf %600, %601 : vector<8x512xf32>
    %603 = vector.extract_strided_slice %602 {offsets = [0, 0], sizes = [8, 384], strides = [1, 1]} : vector<8x512xf32> to vector<8x384xf32>
    %604 = arith.negf %603 : vector<8x384xf32>
    %605 = math.exp %604 : vector<8x384xf32>
    %cst_203 = arith.constant 1.000000e+00 : f32
    %606 = vector.broadcast %cst_203 : f32 to vector<8x384xf32>
    %607 = arith.addf %606, %605 : vector<8x384xf32>
    %608 = arith.divf %606, %607 : vector<8x384xf32>
    %609 = vector.extract_strided_slice %608 {offsets = [0, 0], sizes = [8, 128], strides = [1, 1]} : vector<8x384xf32> to vector<8x128xf32>
    %610 = vector.extract_strided_slice %608 {offsets = [0, 128], sizes = [8, 128], strides = [1, 1]} : vector<8x384xf32> to vector<8x128xf32>
    %611 = vector.extract_strided_slice %608 {offsets = [0, 256], sizes = [8, 128], strides = [1, 1]} : vector<8x384xf32> to vector<8x128xf32>
    %612 = vector.extract_strided_slice %602 {offsets = [0, 384], sizes = [8, 128], strides = [1, 1]} : vector<8x512xf32> to vector<8x128xf32>
    %613 = math.tanh %612 : vector<8x128xf32>
    %614 = arith.mulf %610, %590 : vector<8x128xf32>
    %615 = arith.mulf %609, %613 : vector<8x128xf32>
    %616 = arith.addf %614, %615 : vector<8x128xf32>
    %617 = math.tanh %616 : vector<8x128xf32>
    %618 = arith.mulf %611, %617 : vector<8x128xf32>
    %619 = arith.index_cast %598 : i32 to index
    %c0_204 = arith.constant 0 : index
    %620 = vector.load %arg14[%619, %c0_204] : memref<64x128xf32, #tpu.memory_space<vmem>>, vector<8x128xf32>
    tpu.vector_store %arg14[%619, %c0_204], %618 {strides = array<i32>} : memref<64x128xf32, #tpu.memory_space<vmem>>, vector<8x128xf32>,
    %c8_i32_205 = arith.constant 8 : i32
    %621 = arith.muli %c0_i32_162, %c8_i32_205 : i32
    %c6_i32_206 = arith.constant 6 : i32
    %622 = arith.addi %621, %c6_i32_206 : i32
    %c8_i32_207 = arith.constant 8 : i32
    %623 = arith.muli %622, %c8_i32_207 : i32
    %624 = tpu.assume_multiple %623, 8 : i32
    %625 = arith.index_cast %624 : i32 to index
    %c0_208 = arith.constant 0 : index
    %626 = vector.load %arg15[%625, %c0_208] : memref<64x512xf32, #tpu.memory_space<vmem>>, vector<8x512xf32>
    %cst_209 = arith.constant dense<0.000000e+00> : vector<8x512xf32>
    %627 = tpu.matmul %618, %460, %cst_209 {dimension_numbers = #tpu.dot_dimension_numbers<[1], [0], [0], [1], [0, 0, 1, 1], [], []>} : vector<8x128xf32>, vector<128x512xf32>, vector<8x512xf32> -> vector<8x512xf32>
    %628 = arith.addf %626, %627 : vector<8x512xf32>
    %629 = vector.extract_strided_slice %628 {offsets = [0, 0], sizes = [8, 384], strides = [1, 1]} : vector<8x512xf32> to vector<8x384xf32>
    %630 = arith.negf %629 : vector<8x384xf32>
    %631 = math.exp %630 : vector<8x384xf32>
    %cst_210 = arith.constant 1.000000e+00 : f32
    %632 = vector.broadcast %cst_210 : f32 to vector<8x384xf32>
    %633 = arith.addf %632, %631 : vector<8x384xf32>
    %634 = arith.divf %632, %633 : vector<8x384xf32>
    %635 = vector.extract_strided_slice %634 {offsets = [0, 0], sizes = [8, 128], strides = [1, 1]} : vector<8x384xf32> to vector<8x128xf32>
    %636 = vector.extract_strided_slice %634 {offsets = [0, 128], sizes = [8, 128], strides = [1, 1]} : vector<8x384xf32> to vector<8x128xf32>
    %637 = vector.extract_strided_slice %634 {offsets = [0, 256], sizes = [8, 128], strides = [1, 1]} : vector<8x384xf32> to vector<8x128xf32>
    %638 = vector.extract_strided_slice %628 {offsets = [0, 384], sizes = [8, 128], strides = [1, 1]} : vector<8x512xf32> to vector<8x128xf32>
    %639 = math.tanh %638 : vector<8x128xf32>
    %640 = arith.mulf %636, %616 : vector<8x128xf32>
    %641 = arith.mulf %635, %639 : vector<8x128xf32>
    %642 = arith.addf %640, %641 : vector<8x128xf32>
    %643 = math.tanh %642 : vector<8x128xf32>
    %644 = arith.mulf %637, %643 : vector<8x128xf32>
    %645 = arith.index_cast %624 : i32 to index
    %c0_211 = arith.constant 0 : index
    %646 = vector.load %arg14[%645, %c0_211] : memref<64x128xf32, #tpu.memory_space<vmem>>, vector<8x128xf32>
    tpu.vector_store %arg14[%645, %c0_211], %644 {strides = array<i32>} : memref<64x128xf32, #tpu.memory_space<vmem>>, vector<8x128xf32>,
    %c8_i32_212 = arith.constant 8 : i32
    %647 = arith.muli %c0_i32_162, %c8_i32_212 : i32
    %c7_i32_213 = arith.constant 7 : i32
    %648 = arith.addi %647, %c7_i32_213 : i32
    %c8_i32_214 = arith.constant 8 : i32
    %649 = arith.muli %648, %c8_i32_214 : i32
    %650 = tpu.assume_multiple %649, 8 : i32
    %651 = arith.index_cast %650 : i32 to index
    %c0_215 = arith.constant 0 : index
    %652 = vector.load %arg15[%651, %c0_215] : memref<64x512xf32, #tpu.memory_space<vmem>>, vector<8x512xf32>
    %cst_216 = arith.constant dense<0.000000e+00> : vector<8x512xf32>
    %653 = tpu.matmul %644, %460, %cst_216 {dimension_numbers = #tpu.dot_dimension_numbers<[1], [0], [0], [1], [0, 0, 1, 1], [], []>} : vector<8x128xf32>, vector<128x512xf32>, vector<8x512xf32> -> vector<8x512xf32>
    %654 = arith.addf %652, %653 : vector<8x512xf32>
    %655 = vector.extract_strided_slice %654 {offsets = [0, 0], sizes = [8, 384], strides = [1, 1]} : vector<8x512xf32> to vector<8x384xf32>
    %656 = arith.negf %655 : vector<8x384xf32>
    %657 = math.exp %656 : vector<8x384xf32>
    %cst_217 = arith.constant 1.000000e+00 : f32
    %658 = vector.broadcast %cst_217 : f32 to vector<8x384xf32>
    %659 = arith.addf %658, %657 : vector<8x384xf32>
    %660 = arith.divf %658, %659 : vector<8x384xf32>
    %661 = vector.extract_strided_slice %660 {offsets = [0, 0], sizes = [8, 128], strides = [1, 1]} : vector<8x384xf32> to vector<8x128xf32>
    %662 = vector.extract_strided_slice %660 {offsets = [0, 128], sizes = [8, 128], strides = [1, 1]} : vector<8x384xf32> to vector<8x128xf32>
    %663 = vector.extract_strided_slice %660 {offsets = [0, 256], sizes = [8, 128], strides = [1, 1]} : vector<8x384xf32> to vector<8x128xf32>
    %664 = vector.extract_strided_slice %654 {offsets = [0, 384], sizes = [8, 128], strides = [1, 1]} : vector<8x512xf32> to vector<8x128xf32>
    %665 = math.tanh %664 : vector<8x128xf32>
    %666 = arith.mulf %662, %642 : vector<8x128xf32>
    %667 = arith.mulf %661, %665 : vector<8x128xf32>
    %668 = arith.addf %666, %667 : vector<8x128xf32>
    %669 = math.tanh %668 : vector<8x128xf32>
    %670 = arith.mulf %663, %669 : vector<8x128xf32>
    %671 = arith.index_cast %650 : i32 to index
    %c0_218 = arith.constant 0 : index
    %672 = vector.load %arg14[%671, %c0_218] : memref<64x128xf32, #tpu.memory_space<vmem>>, vector<8x128xf32>
    tpu.vector_store %arg14[%671, %c0_218], %670 {strides = array<i32>} : memref<64x128xf32, #tpu.memory_space<vmem>>, vector<8x128xf32>,
    %c1_i32_219 = arith.constant 1 : i32
    %c2_220 = arith.constant 2 : index
    %c0_221 = arith.constant 0 : index
    %c0_222 = arith.constant 0 : index
    %673 = vector.load %arg12[%c2_220, %c0_221, %c0_222] : memref<3x8x128xf32, #tpu.memory_space<vmem>>, vector<1x8x128xf32>
    %674 = vector.shape_cast %673 : vector<1x8x128xf32> to vector<8x128xf32>
    %675 = vector.shape_cast %670 : vector<8x128xf32> to vector<1x8x128xf32>
    tpu.vector_store %arg12[%c2_220, %c0_221, %c0_222], %675 {strides = array<i32>} : memref<3x8x128xf32, #tpu.memory_space<vmem>>, vector<1x8x128xf32>,
    %c2_223 = arith.constant 2 : index
    %c0_224 = arith.constant 0 : index
    %c0_225 = arith.constant 0 : index
    %676 = vector.load %arg13[%c2_223, %c0_224, %c0_225] : memref<3x8x128xf32, #tpu.memory_space<vmem>>, vector<1x8x128xf32>
    %677 = vector.shape_cast %676 : vector<1x8x128xf32> to vector<8x128xf32>
    %678 = vector.shape_cast %668 : vector<8x128xf32> to vector<1x8x128xf32>
    tpu.vector_store %arg13[%c2_223, %c0_224, %c0_225], %678 {strides = array<i32>} : memref<3x8x128xf32, #tpu.memory_space<vmem>>, vector<1x8x128xf32>,
    %c0_226 = arith.constant 0 : index
    %c0_227 = arith.constant 0 : index
    %679 = vector.load %arg14[%c0_226, %c0_227] : memref<64x128xf32, #tpu.memory_space<vmem>>, vector<64x128xf32>
    %c0_228 = arith.constant 0 : index
    %c0_229 = arith.constant 0 : index
    %680 = vector.load %arg9[%c0_228, %c0_229] : memref<128x128xf32, #tpu.memory_space<vmem>>, vector<128x128xf32>
    %cst_230 = arith.constant dense<0.000000e+00> : vector<64x128xf32>
    %681 = tpu.matmul %679, %680, %cst_230 {dimension_numbers = #tpu.dot_dimension_numbers<[1], [0], [0], [1], [0, 0, 1, 1], [], []>} : vector<64x128xf32>, vector<128x128xf32>, vector<64x128xf32> -> vector<64x128xf32>
    %c0_231 = arith.constant 0 : index
    %c0_232 = arith.constant 0 : index
    %682 = vector.load %arg10[%c0_231, %c0_232] : memref<1x128xf32, #tpu.memory_space<vmem>>, vector<1x128xf32>
    %683 = vector.broadcast %682 : vector<1x128xf32> to vector<64x128xf32>
    %684 = arith.addf %681, %683 : vector<64x128xf32>
    %c0_233 = arith.constant 0 : index
    %c0_234 = arith.constant 0 : index
    %685 = vector.load %arg11[%c0_233, %c0_234] : memref<64x128xf32, #tpu.memory_space<vmem>>, vector<64x128xf32>
    tpu.vector_store %arg11[%c0_233, %c0_234], %684 {strides = array<i32>} : memref<64x128xf32, #tpu.memory_space<vmem>>, vector<64x128xf32>,
    return
  }
  func.func @transform_0(%arg0: i32) -> (i32, i32) {
    %c0_i32 = arith.constant 0 : i32
    %c0_i32_0 = arith.constant 0 : i32
    return %arg0, %c0_i32 : i32, i32
  }
  func.func @transform_6(%arg0: i32) -> (i32, i32) {
    %c0_i32 = arith.constant 0 : i32
    %c0_i32_0 = arith.constant 0 : i32
    %c0_i32_1 = arith.constant 0 : i32
    return %c0_i32, %c0_i32_0 : i32, i32
  }
  func.func @transform_7(%arg0: i32) -> (i32, i32) {
    %c0_i32 = arith.constant 0 : i32
    %c0_i32_0 = arith.constant 0 : i32
    %c0_i32_1 = arith.constant 0 : i32
    return %c0_i32, %c0_i32_0 : i32, i32
  }
  func.func @transform_8(%arg0: i32) -> (i32, i32) {
    %c0_i32 = arith.constant 0 : i32
    %c0_i32_0 = arith.constant 0 : i32
    %c0_i32_1 = arith.constant 0 : i32
    return %c0_i32, %c0_i32_0 : i32, i32
  }
  func.func @transform_9(%arg0: i32) -> (i32, i32) {
    %c0_i32 = arith.constant 0 : i32
    %c0_i32_0 = arith.constant 0 : i32
    %c0_i32_1 = arith.constant 0 : i32
    return %c0_i32, %c0_i32_0 : i32, i32
  }
  func.func @transform_10(%arg0: i32) -> (i32, i32) {
    %c0_i32 = arith.constant 0 : i32
    %c0_i32_0 = arith.constant 0 : i32
    return %arg0, %c0_i32 : i32, i32
  }
}

</mosaic_0001>

<llo_original>
// kernel: pr_network_forward.2
$region0: #{pr_network_forward.2}
  #allocation0 [shape = 'u32[]', space=smem, size = 0x4, offset = 0x4, fixed_abs, tag = 'smem constant byte address 0x4 - core index']
  #allocation1 [shape = 'u32[144,128]{1,0:T(1,128)}', space=vmem, size = 0x12000, scoped, tag = 'internal scratch']
  %s0 = inlined_call_operand.vmem [shape: f32[64,128], index: 0, kind: input, shape index: {}]
  %s1 = inlined_call_operand.vmem [shape: f32[128,128], index: 1, kind: input, shape index: {}]
  %s2 = inlined_call_operand.vmem [shape: f32[1,128], index: 2, kind: input, shape index: {}]
  %s3 = inlined_call_operand.vmem [shape: f32[128,512], index: 3, kind: input, shape index: {}]
  %s4 = inlined_call_operand.vmem [shape: f32[1,512], index: 4, kind: input, shape index: {}]
  %s5 = inlined_call_operand.vmem [shape: f32[64,512], index: 5, kind: output, shape index: {}]
  %s6 = sld [smem:[#allocation0]]
  $region30: #{pr_network_forward.2} parent=0
    _
  %s8 = ssub.s32 1, %s6
  %s9 = scalar_select 0, %s8, %s6
  // Predicated region
  $region2: #{pr_network_forward.2} parent=0 // pred_check
    _
  $region3: #{pr_network_forward.2} parent=0 // pred_check_branch
    %11 = sbr.rel (0) target = $region5
  $region4: #{pr_network_forward.2} parent=0 // pred_region
    _
  $region5: #{pr_network_forward.2} parent=0 // pred_fallthru
    _
  // Predicated region
  $region6: #{pr_network_forward.2} parent=0 // pred_check
    _
  $region7: #{pr_network_forward.2} parent=0 // pred_check_branch
    %13 = sbr.rel (0) target = $region9
  $region8: #{pr_network_forward.2} parent=0 // pred_region
    _
  $region9: #{pr_network_forward.2} parent=0 // pred_fallthru
    _
  // Predicated region
  $region10: #{pr_network_forward.2} parent=0 // pred_check
    _
  $region11: #{pr_network_forward.2} parent=0 // pred_check_branch
    %15 = sbr.rel (0) target = $region13
  $region12: #{pr_network_forward.2} parent=0 // pred_region
    _
  $region13: #{pr_network_forward.2} parent=0 // pred_fallthru
    _
  // Predicated region
  $region14: #{pr_network_forward.2} parent=0 // pred_check
    _
  $region15: #{pr_network_forward.2} parent=0 // pred_check_branch
    %17 = sbr.rel (0) target = $region17
  $region16: #{pr_network_forward.2} parent=0 // pred_region
    _
  $region17: #{pr_network_forward.2} parent=0 // pred_fallthru
    _
  // Predicated region
  $region18: #{pr_network_forward.2} parent=0 // pred_check
    _
  $region19: #{pr_network_forward.2} parent=0 // pred_check_branch
    %19 = sbr.rel (0) target = $region21
  $region20: #{pr_network_forward.2} parent=0 // pred_region
    _
  $region21: #{pr_network_forward.2} parent=0 // pred_fallthru
    _
  %v20 = vld [vmem:[%s0] sm:$0xff]
  %v21 = vld [vmem:[%s0 + $0x8] sm:$0xff]
  %v22 = vld [vmem:[%s0 + $0x10] sm:$0xff]
  %v23 = vld [vmem:[%s0 + $0x18] sm:$0xff]
  %v24 = vld [vmem:[%s0 + $0x20] sm:$0xff]
  %v25 = vld [vmem:[%s0 + $0x28] sm:$0xff]
  %v26 = vld [vmem:[%s0 + $0x30] sm:$0xff]
  %v27 = vld [vmem:[%s0 + $0x38] sm:$0xff]
  %v28 = vld [vmem:[%s1] sm:$0xff]
  %v29 = vld [vmem:[%s1 + $0x8] sm:$0xff]
  %v30 = vld [vmem:[%s1 + $0x10] sm:$0xff]
  %v31 = vld [vmem:[%s1 + $0x18] sm:$0xff]
  %v32 = vld [vmem:[%s1 + $0x20] sm:$0xff]
  %v33 = vld [vmem:[%s1 + $0x28] sm:$0xff]
  %v34 = vld [vmem:[%s1 + $0x30] sm:$0xff]
  %v35 = vld [vmem:[%s1 + $0x38] sm:$0xff]
  %v36 = vld [vmem:[%s1 + $0x40] sm:$0xff]
  %v37 = vld [vmem:[%s1 + $0x48] sm:$0xff]
  %v38 = vld [vmem:[%s1 + $0x50] sm:$0xff]
  %v39 = vld [vmem:[%s1 + $0x58] sm:$0xff]
  %v40 = vld [vmem:[%s1 + $0x60] sm:$0xff]
  %v41 = vld [vmem:[%s1 + $0x68] sm:$0xff]
  %v42 = vld [vmem:[%s1 + $0x70] sm:$0xff]
  %v43 = vld [vmem:[%s1 + $0x78] sm:$0xff]
  %v44 = vld [vmem:[%s2] sm:$0x1]
  %v46 = vlaneseq
  %v47 = vshrl.u32 %v46, 7
  %v48 = vsub.s32 0, %v47
  %v49 = vrot.slane %v44, %v48
  %51 = vmatprep.subr.mxu0 0.0
  %52 = vmatpush1.msra.mxu0 %v28
  %53 = vmatprep.subr.mxu0 0.0
  %54 = vmatpush1.msra.mxu0 %v29
  %55 = vmatprep.subr.mxu0 0.0
  %56 = vmatpush1.msra.mxu0 %v30
  %57 = vmatprep.subr.mxu0 0.0
  %58 = vmatpush1.msra.mxu0 %v31
  %59 = vmatprep.subr.mxu0 0.0
  %60 = vmatpush1.msra.mxu0 %v32
  %61 = vmatprep.subr.mxu0 0.0
  %62 = vmatpush1.msra.mxu0 %v33
  %63 = vmatprep.subr.mxu0 0.0
  %64 = vmatpush1.msra.mxu0 %v34
  %65 = vmatprep.subr.mxu0 0.0
  %66 = vmatpush1.msra.mxu0 %v35
  %67 = vmatprep.subr.mxu0 0.0
  %68 = vmatpush1.msra.mxu0 %v36
  %69 = vmatprep.subr.mxu0 0.0
  %70 = vmatpush1.msra.mxu0 %v37
  %71 = vmatprep.subr.mxu0 0.0
  %72 = vmatpush1.msra.mxu0 %v38
  %73 = vmatprep.subr.mxu0 0.0
  %74 = vmatpush1.msra.mxu0 %v39
  %75 = vmatprep.subr.mxu0 0.0
  %76 = vmatpush1.msra.mxu0 %v40
  %77 = vmatprep.subr.mxu0 0.0
  %78 = vmatpush1.msra.mxu0 %v41
  %79 = vmatprep.subr.mxu0 0.0
  %80 = vmatpush1.msra.mxu0 %v42
  %81 = vmatprep.subr.mxu0 0.0
  %82 = vmatpush1.msra.mxu0 %v43
  %83 = vmatprep.subr.mxu0 0.0
  %84 = vmatpush1.msra.mxu0 0.0
  %85 = vmatprep.subr.mxu0 0.0
  %86 = vmatpush1.msra.mxu0 0.0
  %87 = vmatprep.subr.mxu0 0.0
  %88 = vmatpush1.msra.mxu0 0.0
  %89 = vmatprep.subr.mxu0 0.0
  %90 = vmatpush1.msra.mxu0 0.0
  %91 = vmatprep.subr.mxu0 0.0
  %92 = vmatpush1.msra.mxu0 0.0
  %93 = vmatprep.subr.mxu0 0.0
  %94 = vmatpush1.msra.mxu0 0.0
  %95 = vmatprep.subr.mxu0 0.0
  %96 = vmatpush1.msra.mxu0 0.0
  %97 = vmatprep.subr.mxu0 0.0
  %98 = vmatpush1.msra.mxu0 0.0
  %99 = vmatprep.subr.mxu0 0.0
  %100 = vmatpush1.msra.mxu0 0.0
  %101 = vmatprep.subr.mxu0 0.0
  %102 = vmatpush1.msra.mxu0 0.0
  %103 = vmatprep.subr.mxu0 0.0
  %104 = vmatpush1.msra.mxu0 0.0
  %105 = vmatprep.subr.mxu0 0.0
  %106 = vmatpush1.msra.mxu0 0.0
  %107 = vmatprep.subr.mxu0 0.0
  %108 = vmatpush1.msra.mxu0 0.0
  %109 = vmatprep.subr.mxu0 0.0
  %110 = vmatpush1.msra.mxu0 0.0
  %111 = vmatprep.subr.mxu0 0.0
  %112 = vmatpush1.msra.mxu0 0.0
  %113 = vmatprep.subr.mxu0 0.0
  %114 = vmatpush1.msra.mxu0 0.0
  %115 = vmatprep.mubr.f32.mxu0 0.0
  %116 = vmatmul.mubr.f32.gmra.mrb[0].mxu0 %v20
  %v117 = vpop.f32.mrb[0].mxu0
  %v118 = vadd.f32 %v49, %v117
  %v119 = vpop.f32.mrb[0].mxu0
  %120 = vmatprep.mubr.f32.mxu0 0.0
  %121 = vmatmul.mubr.f32.gmra.mrb[0].mxu0 %v21
  %v122 = vpop.f32.mrb[0].mxu0
  %v123 = vadd.f32 %v49, %v122
  %v124 = vpop.f32.mrb[0].mxu0
  %125 = vmatprep.mubr.f32.mxu0 0.0
  %126 = vmatmul.mubr.f32.gmra.mrb[0].mxu0 %v22
  %v127 = vpop.f32.mrb[0].mxu0
  %v128 = vadd.f32 %v49, %v127
  %v129 = vpop.f32.mrb[0].mxu0
  %130 = vmatprep.mubr.f32.mxu0 0.0
  %131 = vmatmul.mubr.f32.gmra.mrb[0].mxu0 %v23
  %v132 = vpop.f32.mrb[0].mxu0
  %v133 = vadd.f32 %v49, %v132
  %v134 = vpop.f32.mrb[0].mxu0
  %135 = vmatprep.mubr.f32.mxu0 0.0
  %136 = vmatmul.mubr.f32.gmra.mrb[0].mxu0 %v24
  %v137 = vpop.f32.mrb[0].mxu0
  %v138 = vadd.f32 %v49, %v137
  %v139 = vpop.f32.mrb[0].mxu0
  %140 = vmatprep.mubr.f32.mxu0 0.0
  %141 = vmatmul.mubr.f32.gmra.mrb[0].mxu0 %v25
  %v142 = vpop.f32.mrb[0].mxu0
  %v143 = vadd.f32 %v49, %v142
  %v144 = vpop.f32.mrb[0].mxu0
  %145 = vmatprep.mubr.f32.mxu0 0.0
  %146 = vmatmul.mubr.f32.gmra.mrb[0].mxu0 %v26
  %v147 = vpop.f32.mrb[0].mxu0
  %v148 = vadd.f32 %v49, %v147
  %v149 = vpop.f32.mrb[0].mxu0
  %150 = vmatprep.mubr.f32.mxu0 0.0
  %151 = vmatmul.mubr.f32.gmra.mrb[0].mxu0 %v27
  %v152 = vpop.f32.mrb[0].mxu0
  %v153 = vadd.f32 %v49, %v152
  %v154 = vpop.f32.mrb[0].mxu0
  %155 = vdwg.mxu0
  %v156 = vtanh.pop %v118
  %v157 = vtanh.pop %v123
  %v158 = vtanh.pop %v128
  %v159 = vtanh.pop %v133
  %v160 = vtanh.pop %v138
  %v161 = vtanh.pop %v143
  %v162 = vtanh.pop %v148
  %v163 = vtanh.pop %v153
  %v164 = vld [vmem:[%s3] sm:$0xff]
  %v165 = vld [vmem:[%s3 + $0x8] sm:$0xff]
  %v166 = vld [vmem:[%s3 + $0x10] sm:$0xff]
  %v167 = vld [vmem:[%s3 + $0x18] sm:$0xff]
  %v168 = vld [vmem:[%s3 + $0x20] sm:$0xff]
  %v169 = vld [vmem:[%s3 + $0x28] sm:$0xff]
  %v170 = vld [vmem:[%s3 + $0x30] sm:$0xff]
  %v171 = vld [vmem:[%s3 + $0x38] sm:$0xff]
  %v172 = vld [vmem:[%s3 + $0x40] sm:$0xff]
  %v173 = vld [vmem:[%s3 + $0x48] sm:$0xff]
  %v174 = vld [vmem:[%s3 + $0x50] sm:$0xff]
  %v175 = vld [vmem:[%s3 + $0x58] sm:$0xff]
  %v176 = vld [vmem:[%s3 + $0x60] sm:$0xff]
  %v177 = vld [vmem:[%s3 + $0x68] sm:$0xff]
  %v178 = vld [vmem:[%s3 + $0x70] sm:$0xff]
  %v179 = vld [vmem:[%s3 + $0x78] sm:$0xff]
  %v180 = vld [vmem:[%s3 + $0x80] sm:$0xff]
  %v181 = vld [vmem:[%s3 + $0x88] sm:$0xff]
  %v182 = vld [vmem:[%s3 + $0x90] sm:$0xff]
  %v183 = vld [vmem:[%s3 + $0x98] sm:$0xff]
  %v184 = vld [vmem:[%s3 + $0xa0] sm:$0xff]
  %v185 = vld [vmem:[%s3 + $0xa8] sm:$0xff]
  %v186 = vld [vmem:[%s3 + $0xb0] sm:$0xff]
  %v187 = vld [vmem:[%s3 + $0xb8] sm:$0xff]
  %v188 = vld [vmem:[%s3 + $0xc0] sm:$0xff]
  %v189 = vld [vmem:[%s3 + $0xc8] sm:$0xff]
  %v190 = vld [vmem:[%s3 + $0xd0] sm:$0xff]
  %v191 = vld [vmem:[%s3 + $0xd8] sm:$0xff]
  %v192 = vld [vmem:[%s3 + $0xe0] sm:$0xff]
  %v193 = vld [vmem:[%s3 + $0xe8] sm:$0xff]
  %v194 = vld [vmem:[%s3 + $0xf0] sm:$0xff]
  %v195 = vld [vmem:[%s3 + $0xf8] sm:$0xff]
  %v196 = vld [vmem:[%s3 + $0x100] sm:$0xff]
  %v197 = vld [vmem:[%s3 + $0x108] sm:$0xff]
  %v198 = vld [vmem:[%s3 + $0x110] sm:$0xff]
  %v199 = vld [vmem:[%s3 + $0x118] sm:$0xff]
  %v200 = vld [vmem:[%s3 + $0x120] sm:$0xff]
  %v201 = vld [vmem:[%s3 + $0x128] sm:$0xff]
  %v202 = vld [vmem:[%s3 + $0x130] sm:$0xff]
  %v203 = vld [vmem:[%s3 + $0x138] sm:$0xff]
  %v204 = vld [vmem:[%s3 + $0x140] sm:$0xff]
  %v205 = vld [vmem:[%s3 + $0x148] sm:$0xff]
  %v206 = vld [vmem:[%s3 + $0x150] sm:$0xff]
  %v207 = vld [vmem:[%s3 + $0x158] sm:$0xff]
  %v208 = vld [vmem:[%s3 + $0x160] sm:$0xff]
  %v209 = vld [vmem:[%s3 + $0x168] sm:$0xff]
  %v210 = vld [vmem:[%s3 + $0x170] sm:$0xff]
  %v211 = vld [vmem:[%s3 + $0x178] sm:$0xff]
  %v212 = vld [vmem:[%s3 + $0x180] sm:$0xff]
  %v213 = vld [vmem:[%s3 + $0x188] sm:$0xff]
  %v214 = vld [vmem:[%s3 + $0x190] sm:$0xff]
  %v215 = vld [vmem:[%s3 + $0x198] sm:$0xff]
  %v216 = vld [vmem:[%s3 + $0x1a0] sm:$0xff]
  %v217 = vld [vmem:[%s3 + $0x1a8] sm:$0xff]
  %v218 = vld [vmem:[%s3 + $0x1b0] sm:$0xff]
  %v219 = vld [vmem:[%s3 + $0x1b8] sm:$0xff]
  %v220 = vld [vmem:[%s3 + $0x1c0] sm:$0xff]
  %v221 = vld [vmem:[%s3 + $0x1c8] sm:$0xff]
  %v222 = vld [vmem:[%s3 + $0x1d0] sm:$0xff]
  %v223 = vld [vmem:[%s3 + $0x1d8] sm:$0xff]
  %v224 = vld [vmem:[%s3 + $0x1e0] sm:$0xff]
  %v225 = vld [vmem:[%s3 + $0x1e8] sm:$0xff]
  %v226 = vld [vmem:[%s3 + $0x1f0] sm:$0xff]
  %v227 = vld [vmem:[%s3 + $0x1f8] sm:$0xff]
  %v228 = vld [vmem:[%s4] sm:$0xf]
  %v230 = vlaneseq
  %v231 = vshrl.u32 %v230, 7
  %v232 = vsub.s32 0, %v231
  %v233 = vrot.slane %v228, %v232
  %v234 = vlaneseq
  %v235 = vshrl.u32 %v234, 7
  %v236 = vsub.s32 1, %v235
  %v237 = vrot.slane %v228, %v236
  %v238 = vlaneseq
  %v239 = vshrl.u32 %v238, 7
  %v240 = vsub.s32 2, %v239
  %v241 = vrot.slane %v228, %v240
  %v242 = vlaneseq
  %v243 = vshrl.u32 %v242, 7
  %v244 = vsub.s32 3, %v243
  %v245 = vrot.slane %v228, %v244
  %250 = vmatprep.subr.mxu0 %v165
  %251 = vmatpush1.msra.mxu0 %v164
  %252 = vmatprep.subr.mxu0 %v169
  %253 = vmatpush1.msra.mxu0 %v168
  %254 = vmatprep.subr.mxu0 %v173
  %255 = vmatpush1.msra.mxu0 %v172
  %256 = vmatprep.subr.mxu0 %v177
  %257 = vmatpush1.msra.mxu0 %v176
  %258 = vmatprep.subr.mxu0 %v181
  %259 = vmatpush1.msra.mxu0 %v180
  %260 = vmatprep.subr.mxu0 %v185
  %261 = vmatpush1.msra.mxu0 %v184
  %262 = vmatprep.subr.mxu0 %v189
  %263 = vmatpush1.msra.mxu0 %v188
  %264 = vmatprep.subr.mxu0 %v193
  %265 = vmatpush1.msra.mxu0 %v192
  %266 = vmatprep.subr.mxu0 %v197
  %267 = vmatpush1.msra.mxu0 %v196
  %268 = vmatprep.subr.mxu0 %v201
  %269 = vmatpush1.msra.mxu0 %v200
  %270 = vmatprep.subr.mxu0 %v205
  %271 = vmatpush1.msra.mxu0 %v204
  %272 = vmatprep.subr.mxu0 %v209
  %273 = vmatpush1.msra.mxu0 %v208
  %274 = vmatprep.subr.mxu0 %v213
  %275 = vmatpush1.msra.mxu0 %v212
  %276 = vmatprep.subr.mxu0 %v217
  %277 = vmatpush1.msra.mxu0 %v216
  %278 = vmatprep.subr.mxu0 %v221
  %279 = vmatpush1.msra.mxu0 %v220
  %280 = vmatprep.subr.mxu0 %v225
  %281 = vmatpush1.msra.mxu0 %v224
  %282 = vmatprep.subr.mxu0 0.0
  %283 = vmatpush1.msra.mxu0 0.0
  %284 = vmatprep.subr.mxu0 0.0
  %285 = vmatpush1.msra.mxu0 0.0
  %286 = vmatprep.subr.mxu0 0.0
  %287 = vmatpush1.msra.mxu0 0.0
  %288 = vmatprep.subr.mxu0 0.0
  %289 = vmatpush1.msra.mxu0 0.0
  %290 = vmatprep.subr.mxu0 0.0
  %291 = vmatpush1.msra.mxu0 0.0
  %292 = vmatprep.subr.mxu0 0.0
  %293 = vmatpush1.msra.mxu0 0.0
  %294 = vmatprep.subr.mxu0 0.0
  %295 = vmatpush1.msra.mxu0 0.0
  %296 = vmatprep.subr.mxu0 0.0
  %297 = vmatpush1.msra.mxu0 0.0
  %298 = vmatprep.subr.mxu0 0.0
  %299 = vmatpush1.msra.mxu0 0.0
  %300 = vmatprep.subr.mxu0 0.0
  %301 = vmatpush1.msra.mxu0 0.0
  %302 = vmatprep.subr.mxu0 0.0
  %303 = vmatpush1.msra.mxu0 0.0
  %304 = vmatprep.subr.mxu0 0.0
  %305 = vmatpush1.msra.mxu0 0.0
  %306 = vmatprep.subr.mxu0 0.0
  %307 = vmatpush1.msra.mxu0 0.0
  %308 = vmatprep.subr.mxu0 0.0
  %309 = vmatpush1.msra.mxu0 0.0
  %310 = vmatprep.subr.mxu0 0.0
  %311 = vmatpush1.msra.mxu0 0.0
  %312 = vmatprep.subr.mxu0 0.0
  %313 = vmatpush1.msra.mxu0 0.0
  %314 = vmatprep.mubr.f32.mxu0 0.0
  %315 = vmatmul.mubr.f32.gmra.mrb[0].mxu0 %v156
  %v316 = vpop.f32.mrb[0].mxu0
  %v317 = vadd.f32 %v233, %v316
  %v318 = vpop.f32.mrb[0].mxu0
  %v319 = vadd.f32 %v237, %v318
  %320 = vmatprep.mubr.f32.mxu0 0.0
  %321 = vmatmul.mubr.f32.gmra.mrb[0].mxu0 %v157
  %v322 = vpop.f32.mrb[0].mxu0
  %v323 = vadd.f32 %v233, %v322
  %v324 = vpop.f32.mrb[0].mxu0
  %v325 = vadd.f32 %v237, %v324
  %326 = vmatprep.mubr.f32.mxu0 0.0
  %327 = vmatmul.mubr.f32.gmra.mrb[0].mxu0 %v158
  %v328 = vpop.f32.mrb[0].mxu0
  %v329 = vadd.f32 %v233, %v328
  %v330 = vpop.f32.mrb[0].mxu0
  %v331 = vadd.f32 %v237, %v330
  %332 = vmatprep.mubr.f32.mxu0 0.0
  %333 = vmatmul.mubr.f32.gmra.mrb[0].mxu0 %v159
  %v334 = vpop.f32.mrb[0].mxu0
  %v335 = vadd.f32 %v233, %v334
  %v336 = vpop.f32.mrb[0].mxu0
  %v337 = vadd.f32 %v237, %v336
  %338 = vmatprep.mubr.f32.mxu0 0.0
  %339 = vmatmul.mubr.f32.gmra.mrb[0].mxu0 %v160
  %v340 = vpop.f32.mrb[0].mxu0
  %v341 = vadd.f32 %v233, %v340
  %v342 = vpop.f32.mrb[0].mxu0
  %v343 = vadd.f32 %v237, %v342
  %344 = vmatprep.mubr.f32.mxu0 0.0
  %345 = vmatmul.mubr.f32.gmra.mrb[0].mxu0 %v161
  %v346 = vpop.f32.mrb[0].mxu0
  %v347 = vadd.f32 %v233, %v346
  %v348 = vpop.f32.mrb[0].mxu0
  %v349 = vadd.f32 %v237, %v348
  %350 = vmatprep.mubr.f32.mxu0 0.0
  %351 = vmatmul.mubr.f32.gmra.mrb[0].mxu0 %v162
  %v352 = vpop.f32.mrb[0].mxu0
  %v353 = vadd.f32 %v233, %v352
  %v354 = vpop.f32.mrb[0].mxu0
  %v355 = vadd.f32 %v237, %v354
  %356 = vmatprep.mubr.f32.mxu0 0.0
  %357 = vmatmul.mubr.f32.gmra.mrb[0].mxu0 %v163
  %v358 = vpop.f32.mrb[0].mxu0
  %v359 = vadd.f32 %v233, %v358
  %v360 = vpop.f32.mrb[0].mxu0
  %v361 = vadd.f32 %v237, %v360
  %362 = vdwg.mxu0
  %363 = vmatprep.subr.mxu0 %v167
  %364 = vmatpush1.msra.mxu0 %v166
  %365 = vmatprep.subr.mxu0 %v171
  %366 = vmatpush1.msra.mxu0 %v170
  %367 = vmatprep.subr.mxu0 %v175
  %368 = vmatpush1.msra.mxu0 %v174
  %369 = vmatprep.subr.mxu0 %v179
  %370 = vmatpush1.msra.mxu0 %v178
  %371 = vmatprep.subr.mxu0 %v183
  %372 = vmatpush1.msra.mxu0 %v182
  %373 = vmatprep.subr.mxu0 %v187
  %374 = vmatpush1.msra.mxu0 %v186
  %375 = vmatprep.subr.mxu0 %v191
  %376 = vmatpush1.msra.mxu0 %v190
  %377 = vmatprep.subr.mxu0 %v195
  %378 = vmatpush1.msra.mxu0 %v194
  %379 = vmatprep.subr.mxu0 %v199
  %380 = vmatpush1.msra.mxu0 %v198
  %381 = vmatprep.subr.mxu0 %v203
  %382 = vmatpush1.msra.mxu0 %v202
  %383 = vmatprep.subr.mxu0 %v207
  %384 = vmatpush1.msra.mxu0 %v206
  %385 = vmatprep.subr.mxu0 %v211
  %386 = vmatpush1.msra.mxu0 %v210
  %387 = vmatprep.subr.mxu0 %v215
  %388 = vmatpush1.msra.mxu0 %v214
  %389 = vmatprep.subr.mxu0 %v219
  %390 = vmatpush1.msra.mxu0 %v218
  %391 = vmatprep.subr.mxu0 %v223
  %392 = vmatpush1.msra.mxu0 %v222
  %393 = vmatprep.subr.mxu0 %v227
  %394 = vmatpush1.msra.mxu0 %v226
  %395 = vmatprep.subr.mxu0 0.0
  %396 = vmatpush1.msra.mxu0 0.0
  %397 = vmatprep.subr.mxu0 0.0
  %398 = vmatpush1.msra.mxu0 0.0
  %399 = vmatprep.subr.mxu0 0.0
  %400 = vmatpush1.msra.mxu0 0.0
  %401 = vmatprep.subr.mxu0 0.0
  %402 = vmatpush1.msra.mxu0 0.0
  %403 = vmatprep.subr.mxu0 0.0
  %404 = vmatpush1.msra.mxu0 0.0
  %405 = vmatprep.subr.mxu0 0.0
  %406 = vmatpush1.msra.mxu0 0.0
  %407 = vmatprep.subr.mxu0 0.0
  %408 = vmatpush1.msra.mxu0 0.0
  %409 = vmatprep.subr.mxu0 0.0
  %410 = vmatpush1.msra.mxu0 0.0
  %411 = vmatprep.subr.mxu0 0.0
  %412 = vmatpush1.msra.mxu0 0.0
  %413 = vmatprep.subr.mxu0 0.0
  %414 = vmatpush1.msra.mxu0 0.0
  %415 = vmatprep.subr.mxu0 0.0
  %416 = vmatpush1.msra.mxu0 0.0
  %417 = vmatprep.subr.mxu0 0.0
  %418 = vmatpush1.msra.mxu0 0.0
  %419 = vmatprep.subr.mxu0 0.0
  %420 = vmatpush1.msra.mxu0 0.0
  %421 = vmatprep.subr.mxu0 0.0
  %422 = vmatpush1.msra.mxu0 0.0
  %423 = vmatprep.subr.mxu0 0.0
  %424 = vmatpush1.msra.mxu0 0.0
  %425 = vmatprep.subr.mxu0 0.0
  %426 = vmatpush1.msra.mxu0 0.0
  %427 = vmatprep.mubr.f32.mxu0 0.0
  %428 = vmatmul.mubr.f32.gmra.mrb[0].mxu0 %v156
  %v429 = vpop.f32.mrb[0].mxu0
  %v430 = vadd.f32 %v241, %v429
  %v431 = vpop.f32.mrb[0].mxu0
  %v432 = vadd.f32 %v245, %v431
  %433 = vmatprep.mubr.f32.mxu0 0.0
  %434 = vmatmul.mubr.f32.gmra.mrb[0].mxu0 %v157
  %v435 = vpop.f32.mrb[0].mxu0
  %v436 = vadd.f32 %v241, %v435
  %v437 = vpop.f32.mrb[0].mxu0
  %v438 = vadd.f32 %v245, %v437
  %439 = vmatprep.mubr.f32.mxu0 0.0
  %440 = vmatmul.mubr.f32.gmra.mrb[0].mxu0 %v158
  %v441 = vpop.f32.mrb[0].mxu0
  %v442 = vadd.f32 %v241, %v441
  %v443 = vpop.f32.mrb[0].mxu0
  %v444 = vadd.f32 %v245, %v443
  %445 = vmatprep.mubr.f32.mxu0 0.0
  %446 = vmatmul.mubr.f32.gmra.mrb[0].mxu0 %v159
  %v447 = vpop.f32.mrb[0].mxu0
  %v448 = vadd.f32 %v241, %v447
  %v449 = vpop.f32.mrb[0].mxu0
  %v450 = vadd.f32 %v245, %v449
  %451 = vmatprep.mubr.f32.mxu0 0.0
  %452 = vmatmul.mubr.f32.gmra.mrb[0].mxu0 %v160
  %v453 = vpop.f32.mrb[0].mxu0
  %v454 = vadd.f32 %v241, %v453
  %v455 = vpop.f32.mrb[0].mxu0
  %v456 = vadd.f32 %v245, %v455
  %457 = vmatprep.mubr.f32.mxu0 0.0
  %458 = vmatmul.mubr.f32.gmra.mrb[0].mxu0 %v161
  %v459 = vpop.f32.mrb[0].mxu0
  %v460 = vadd.f32 %v241, %v459
  %v461 = vpop.f32.mrb[0].mxu0
  %v462 = vadd.f32 %v245, %v461
  %463 = vmatprep.mubr.f32.mxu0 0.0
  %464 = vmatmul.mubr.f32.gmra.mrb[0].mxu0 %v162
  %v465 = vpop.f32.mrb[0].mxu0
  %v466 = vadd.f32 %v241, %v465
  %v467 = vpop.f32.mrb[0].mxu0
  %v468 = vadd.f32 %v245, %v467
  %469 = vmatprep.mubr.f32.mxu0 0.0
  %470 = vmatmul.mubr.f32.gmra.mrb[0].mxu0 %v163
  %v471 = vpop.f32.mrb[0].mxu0
  %v472 = vadd.f32 %v241, %v471
  %v473 = vpop.f32.mrb[0].mxu0
  %v474 = vadd.f32 %v245, %v473
  %475 = vdwg.mxu0
  %476 = vst [vmem:[%s5] sm:$0xff] %v317
  %477 = vst [vmem:[%s5 + $0x8] sm:$0xff] %v319
  %478 = vst [vmem:[%s5 + $0x10] sm:$0xff] %v430
  %479 = vst [vmem:[%s5 + $0x18] sm:$0xff] %v432
  %480 = vst [vmem:[%s5 + $0x20] sm:$0xff] %v323
  %481 = vst [vmem:[%s5 + $0x28] sm:$0xff] %v325
  %482 = vst [vmem:[%s5 + $0x30] sm:$0xff] %v436
  %483 = vst [vmem:[%s5 + $0x38] sm:$0xff] %v438
  %484 = vst [vmem:[%s5 + $0x40] sm:$0xff] %v329
  %485 = vst [vmem:[%s5 + $0x48] sm:$0xff] %v331
  %486 = vst [vmem:[%s5 + $0x50] sm:$0xff] %v442
  %487 = vst [vmem:[%s5 + $0x58] sm:$0xff] %v444
  %488 = vst [vmem:[%s5 + $0x60] sm:$0xff] %v335
  %489 = vst [vmem:[%s5 + $0x68] sm:$0xff] %v337
  %490 = vst [vmem:[%s5 + $0x70] sm:$0xff] %v448
  %491 = vst [vmem:[%s5 + $0x78] sm:$0xff] %v450
  %492 = vst [vmem:[%s5 + $0x80] sm:$0xff] %v341
  %493 = vst [vmem:[%s5 + $0x88] sm:$0xff] %v343
  %494 = vst [vmem:[%s5 + $0x90] sm:$0xff] %v454
  %495 = vst [vmem:[%s5 + $0x98] sm:$0xff] %v456
  %496 = vst [vmem:[%s5 + $0xa0] sm:$0xff] %v347
  %497 = vst [vmem:[%s5 + $0xa8] sm:$0xff] %v349
  %498 = vst [vmem:[%s5 + $0xb0] sm:$0xff] %v460
  %499 = vst [vmem:[%s5 + $0xb8] sm:$0xff] %v462
  %500 = vst [vmem:[%s5 + $0xc0] sm:$0xff] %v353
  %501 = vst [vmem:[%s5 + $0xc8] sm:$0xff] %v355
  %502 = vst [vmem:[%s5 + $0xd0] sm:$0xff] %v466
  %503 = vst [vmem:[%s5 + $0xd8] sm:$0xff] %v468
  %504 = vst [vmem:[%s5 + $0xe0] sm:$0xff] %v359
  %505 = vst [vmem:[%s5 + $0xe8] sm:$0xff] %v361
  %506 = vst [vmem:[%s5 + $0xf0] sm:$0xff] %v472
  %507 = vst [vmem:[%s5 + $0xf8] sm:$0xff] %v474
  // Predicated region
  $region22: #{pr_network_forward.2} parent=0 // pred_check
    _
  $region23: #{pr_network_forward.2} parent=0 // pred_check_branch
    %509 = sbr.rel (0) target = $region25
  $region24: #{pr_network_forward.2} parent=0 // pred_region
    _
  $region25: #{pr_network_forward.2} parent=0 // pred_fallthru
    _
  // Predicated region
  $region26: #{pr_network_forward.2} parent=0 // pred_check
    _
  $region27: #{pr_network_forward.2} parent=0 // pred_check_branch
    %511 = sbr.rel (0) target = $region29
  $region28: #{pr_network_forward.2} parent=0 // pred_region
    _
  $region29: #{pr_network_forward.2} parent=0 // pred_fallthru
    _

// kernel: pr_network_forward.3
$region0: #{pr_network_forward.3}
  #allocation0 [shape = 'u32[]', space=smem, size = 0x4, offset = 0x4, fixed_abs, tag = 'smem constant byte address 0x4 - core index']
  #allocation1 [shape = 'u32[144,128]{1,0:T(1,128)}', space=vmem, size = 0x12000, scoped, tag = 'internal scratch']
  #allocation2 [shape = 'f32[3,8,128]{2,1,0:T(8,128)}', space=vmem, size = 0x3000, scoped, tag = 'scratch operand']
  #allocation3 [shape = 'f32[3,8,128]{2,1,0:T(8,128)}', space=vmem, size = 0x3000, scoped, tag = 'scratch operand']
  #allocation4 [shape = 'f32[64,128]{1,0:T(8,128)}', space=vmem, size = 0x8000, scoped, tag = 'scratch operand']
  #allocation5 [shape = 'f32[64,512]{1,0:T(8,128)}', space=vmem, size = 0x20000, scoped, tag = 'scratch operand']
  #allocation6 [shape = 'f32[5,128,512]{2,1,0:T(8,128)}', space=vmem, size = 0x140000, scoped, tag = 'scratch operand']
  #allocation7 [shape = 's32[5]{0}', space=sflag, size = 0x14, scoped, tag = 'scratch operand']
  #allocation8 [shape = 's32[]', space=sflag, size = 0x4, offset = 0, fixed_abs, tag = 'sflag constant byte address 0x0 - dummy sync flag']
  #allocation9 [shape = 's32[]', space=sflag, size = 0x4, offset = 0, fixed_abs, tag = 'sflag constant byte address 0x0 - dummy sync flag']
  #allocation10 [shape = 's32[]', space=sflag, size = 0x4, offset = 0, fixed_abs, tag = 'sflag constant byte address 0x0 - dummy sync flag']
  #allocation11 [shape = 's32[]', space=sflag, size = 0x4, offset = 0, fixed_abs, tag = 'sflag constant byte address 0x0 - dummy sync flag']
  #allocation12 [shape = 's32[]', space=sflag, size = 0x4, offset = 0, fixed_abs, tag = 'sflag constant byte address 0x0 - dummy sync flag']
  %s0 = inlined_call_operand.vmem [shape: f32[64,512], index: 0, kind: input, shape index: {}]
  %s1 = inlined_call_operand.vmem [shape: f32[128,512], index: 1, kind: input, shape index: {}]
  %s2 = inlined_call_operand.vmem [shape: f32[128,512], index: 2, kind: input, shape index: {}]
  %s3 = inlined_call_operand.vmem [shape: f32[128,512], index: 3, kind: input, shape index: {}]
  %s4 = inlined_call_operand.vmem [shape: f32[128,512], index: 4, kind: input, shape index: {}]
  %s5 = inlined_call_operand.vmem [shape: f32[128,512], index: 5, kind: input, shape index: {}]
  %s6 = inlined_call_operand.vmem [shape: f32[1,512], index: 6, kind: input, shape index: {}]
  %s7 = inlined_call_operand.vmem [shape: f32[1,512], index: 7, kind: input, shape index: {}]
  %s8 = inlined_call_operand.vmem [shape: f32[128,128], index: 8, kind: input, shape index: {}]
  %s9 = inlined_call_operand.vmem [shape: f32[1,128], index: 9, kind: input, shape index: {}]
  %s10 = inlined_call_operand.vmem [shape: f32[64,128], index: 10, kind: output, shape index: {}]
  %s11 = sld [smem:[#allocation0]]
  $region204: #{pr_network_forward.3} parent=0
    _
  %s13 = ssub.s32 1, %s11
  %s14 = scalar_select 0, %s13, %s11
  // Predicated region
  $region2: #{pr_network_forward.3} parent=0 // pred_check
    _
  $region3: #{pr_network_forward.3} parent=0 // pred_check_branch
    %16 = sbr.rel (0) target = $region5
  $region4: #{pr_network_forward.3} parent=0 // pred_region
    _
  $region5: #{pr_network_forward.3} parent=0 // pred_fallthru
    _
  // Predicated region
  $region6: #{pr_network_forward.3} parent=0 // pred_check
    _
  $region7: #{pr_network_forward.3} parent=0 // pred_check_branch
    %18 = sbr.rel (0) target = $region9
  $region8: #{pr_network_forward.3} parent=0 // pred_region
    _
  $region9: #{pr_network_forward.3} parent=0 // pred_fallthru
    _
  // Predicated region
  $region10: #{pr_network_forward.3} parent=0 // pred_check
    _
  $region11: #{pr_network_forward.3} parent=0 // pred_check_branch
    %20 = sbr.rel (0) target = $region13
  $region12: #{pr_network_forward.3} parent=0 // pred_region
    _
  $region13: #{pr_network_forward.3} parent=0 // pred_fallthru
    _
  // Predicated region
  $region14: #{pr_network_forward.3} parent=0 // pred_check
    _
  $region15: #{pr_network_forward.3} parent=0 // pred_check_branch
    %22 = sbr.rel (0) target = $region17
  $region16: #{pr_network_forward.3} parent=0 // pred_region
    _
  $region17: #{pr_network_forward.3} parent=0 // pred_fallthru
    _
  // Predicated region
  $region18: #{pr_network_forward.3} parent=0 // pred_check
    _
  $region19: #{pr_network_forward.3} parent=0 // pred_check_branch
    %24 = sbr.rel (0) target = $region21
  $region20: #{pr_network_forward.3} parent=0 // pred_region
    _
  $region21: #{pr_network_forward.3} parent=0 // pred_fallthru
    _
  %p25 = scmp.eq.s32.totalorder 0, 0
  // Predicated region
  $region22: #{pr_network_forward.3} parent=0 // pred_check
    %p26 = pneg %p25
  $region23: #{pr_network_forward.3} parent=0 // pred_check_branch
    %28 = sbr.rel (%p26) target = $region25
  $region24: #{pr_network_forward.3} parent=0 // pred_region
    %29 = vst [vmem:[#allocation2] sm:$0xff] 0.0
    %30 = vst [vmem:[#allocation2 + $0x8] sm:$0xff] 0.0
    %31 = vst [vmem:[#allocation2 + $0x10] sm:$0xff] 0.0
    %32 = vst [vmem:[#allocation3] sm:$0xff] 0.0
    %33 = vst [vmem:[#allocation3 + $0x8] sm:$0xff] 0.0
    %34 = vst [vmem:[#allocation3 + $0x10] sm:$0xff] 0.0
    %p36 = scmp.lt.u32.totalorder 512, 8
    %p37 = pneg %p36
    // Predicated region
    $region26: #{pr_network_forward.3} parent=24 // pred_check
      _
    $region27: #{pr_network_forward.3} parent=24 // pred_check_branch
      %39 = sbr.rel (%p36) target = $region29
    $region28: #{pr_network_forward.3} parent=24 // pred_region
      %s54 = sand.u32 512, 7
      %p55 = scmp.eq.s32.totalorder %s54, 0
      // Predicated region
      $region41: #{pr_network_forward.3} parent=28 // pred_check
        %p56 = pneg %p55
      $region42: #{pr_network_forward.3} parent=28 // pred_check_branch
        %58 = sbr.rel (%p56) target = $region44
      $region43: #{pr_network_forward.3} parent=28 // pred_region
        loop: start=0, step=1, limit=1
        $region45: #{pr_network_forward.3} parent=43 // loop_pre_header
          _
        $region46: #{pr_network_forward.3} parent=43 // loop_header
          %s60 = sphi 0, %s64
          %p61 = scmp.ge.s32.totalorder %s60, 1
          %s65 = sphi %s1, %s1
          %s66 = sphi [#allocation6], [#allocation6]
        $region47: #{pr_network_forward.3} parent=43 // loop_header_branch
          %63 = sbr.rel (%p61) target = $region51
        $region48: #{pr_network_forward.3} parent=43 // loop_body
          %v67 = vld [vmem:[%s65] sm:$0xff]
          %68 = vst [vmem:[%s66] sm:$0xff] %v67
          %v69 = vld [vmem:[%s65 + $0x8] sm:$0xff]
          %70 = vst [vmem:[%s66 + $0x8] sm:$0xff] %v69
          %v71 = vld [vmem:[%s65 + $0x10] sm:$0xff]
          %72 = vst [vmem:[%s66 + $0x10] sm:$0xff] %v71
          %v73 = vld [vmem:[%s65 + $0x18] sm:$0xff]
          %74 = vst [vmem:[%s66 + $0x18] sm:$0xff] %v73
          %v75 = vld [vmem:[%s65 + $0x20] sm:$0xff]
          %76 = vst [vmem:[%s66 + $0x20] sm:$0xff] %v75
          %v77 = vld [vmem:[%s65 + $0x28] sm:$0xff]
          %78 = vst [vmem:[%s66 + $0x28] sm:$0xff] %v77
          %v79 = vld [vmem:[%s65 + $0x30] sm:$0xff]
          %80 = vst [vmem:[%s66 + $0x30] sm:$0xff] %v79
          %v81 = vld [vmem:[%s65 + $0x38] sm:$0xff]
          %82 = vst [vmem:[%s66 + $0x38] sm:$0xff] %v81
          %v83 = vld [vmem:[%s65 + $0x40] sm:$0xff]
          %84 = vst [vmem:[%s66 + $0x40] sm:$0xff] %v83
          %v85 = vld [vmem:[%s65 + $0x48] sm:$0xff]
          %86 = vst [vmem:[%s66 + $0x48] sm:$0xff] %v85
          %v87 = vld [vmem:[%s65 + $0x50] sm:$0xff]
          %88 = vst [vmem:[%s66 + $0x50] sm:$0xff] %v87
          %v89 = vld [vmem:[%s65 + $0x58] sm:$0xff]
          %90 = vst [vmem:[%s66 + $0x58] sm:$0xff] %v89
          %v91 = vld [vmem:[%s65 + $0x60] sm:$0xff]
          %92 = vst [vmem:[%s66 + $0x60] sm:$0xff] %v91
          %v93 = vld [vmem:[%s65 + $0x68] sm:$0xff]
          %94 = vst [vmem:[%s66 + $0x68] sm:$0xff] %v93
          %v95 = vld [vmem:[%s65 + $0x70] sm:$0xff]
          %96 = vst [vmem:[%s66 + $0x70] sm:$0xff] %v95
          %v97 = vld [vmem:[%s65 + $0x78] sm:$0xff]
          %98 = vst [vmem:[%s66 + $0x78] sm:$0xff] %v97
          %v99 = vld [vmem:[%s65 + $0x80] sm:$0xff]
          %100 = vst [vmem:[%s66 + $0x80] sm:$0xff] %v99
          %v101 = vld [vmem:[%s65 + $0x88] sm:$0xff]
          %102 = vst [vmem:[%s66 + $0x88] sm:$0xff] %v101
          %v103 = vld [vmem:[%s65 + $0x90] sm:$0xff]
          %104 = vst [vmem:[%s66 + $0x90] sm:$0xff] %v103
          %v105 = vld [vmem:[%s65 + $0x98] sm:$0xff]
          %106 = vst [vmem:[%s66 + $0x98] sm:$0xff] %v105
          %v107 = vld [vmem:[%s65 + $0xa0] sm:$0xff]
          %108 = vst [vmem:[%s66 + $0xa0] sm:$0xff] %v107
          %v109 = vld [vmem:[%s65 + $0xa8] sm:$0xff]
          %110 = vst [vmem:[%s66 + $0xa8] sm:$0xff] %v109
          %v111 = vld [vmem:[%s65 + $0xb0] sm:$0xff]
          %112 = vst [vmem:[%s66 + $0xb0] sm:$0xff] %v111
          %v113 = vld [vmem:[%s65 + $0xb8] sm:$0xff]
          %114 = vst [vmem:[%s66 + $0xb8] sm:$0xff] %v113
          %v115 = vld [vmem:[%s65 + $0xc0] sm:$0xff]
          %116 = vst [vmem:[%s66 + $0xc0] sm:$0xff] %v115
          %v117 = vld [vmem:[%s65 + $0xc8] sm:$0xff]
          %118 = vst [vmem:[%s66 + $0xc8] sm:$0xff] %v117
          %v119 = vld [vmem:[%s65 + $0xd0] sm:$0xff]
          %120 = vst [vmem:[%s66 + $0xd0] sm:$0xff] %v119
          %v121 = vld [vmem:[%s65 + $0xd8] sm:$0xff]
          %122 = vst [vmem:[%s66 + $0xd8] sm:$0xff] %v121
          %v123 = vld [vmem:[%s65 + $0xe0] sm:$0xff]
          %124 = vst [vmem:[%s66 + $0xe0] sm:$0xff] %v123
          %v125 = vld [vmem:[%s65 + $0xe8] sm:$0xff]
          %126 = vst [vmem:[%s66 + $0xe8] sm:$0xff] %v125
          %v127 = vld [vmem:[%s65 + $0xf0] sm:$0xff]
          %128 = vst [vmem:[%s66 + $0xf0] sm:$0xff] %v127
          %v129 = vld [vmem:[%s65 + $0xf8] sm:$0xff]
          %130 = vst [vmem:[%s66 + $0xf8] sm:$0xff] %v129
          %v131 = vld [vmem:[%s65 + $0x100] sm:$0xff]
          %132 = vst [vmem:[%s66 + $0x100] sm:$0xff] %v131
          %v133 = vld [vmem:[%s65 + $0x108] sm:$0xff]
          %134 = vst [vmem:[%s66 + $0x108] sm:$0xff] %v133
          %v135 = vld [vmem:[%s65 + $0x110] sm:$0xff]
          %136 = vst [vmem:[%s66 + $0x110] sm:$0xff] %v135
          %v137 = vld [vmem:[%s65 + $0x118] sm:$0xff]
          %138 = vst [vmem:[%s66 + $0x118] sm:$0xff] %v137
          %v139 = vld [vmem:[%s65 + $0x120] sm:$0xff]
          %140 = vst [vmem:[%s66 + $0x120] sm:$0xff] %v139
          %v141 = vld [vmem:[%s65 + $0x128] sm:$0xff]
          %142 = vst [vmem:[%s66 + $0x128] sm:$0xff] %v141
          %v143 = vld [vmem:[%s65 + $0x130] sm:$0xff]
          %144 = vst [vmem:[%s66 + $0x130] sm:$0xff] %v143
          %v145 = vld [vmem:[%s65 + $0x138] sm:$0xff]
          %146 = vst [vmem:[%s66 + $0x138] sm:$0xff] %v145
          %v147 = vld [vmem:[%s65 + $0x140] sm:$0xff]
          %148 = vst [vmem:[%s66 + $0x140] sm:$0xff] %v147
          %v149 = vld [vmem:[%s65 + $0x148] sm:$0xff]
          %150 = vst [vmem:[%s66 + $0x148] sm:$0xff] %v149
          %v151 = vld [vmem:[%s65 + $0x150] sm:$0xff]
          %152 = vst [vmem:[%s66 + $0x150] sm:$0xff] %v151
          %v153 = vld [vmem:[%s65 + $0x158] sm:$0xff]
          %154 = vst [vmem:[%s66 + $0x158] sm:$0xff] %v153
          %v155 = vld [vmem:[%s65 + $0x160] sm:$0xff]
          %156 = vst [vmem:[%s66 + $0x160] sm:$0xff] %v155
          %v157 = vld [vmem:[%s65 + $0x168] sm:$0xff]
          %158 = vst [vmem:[%s66 + $0x168] sm:$0xff] %v157
          %v159 = vld [vmem:[%s65 + $0x170] sm:$0xff]
          %160 = vst [vmem:[%s66 + $0x170] sm:$0xff] %v159
          %v161 = vld [vmem:[%s65 + $0x178] sm:$0xff]
          %162 = vst [vmem:[%s66 + $0x178] sm:$0xff] %v161
          %v163 = vld [vmem:[%s65 + $0x180] sm:$0xff]
          %164 = vst [vmem:[%s66 + $0x180] sm:$0xff] %v163
          %v165 = vld [vmem:[%s65 + $0x188] sm:$0xff]
          %166 = vst [vmem:[%s66 + $0x188] sm:$0xff] %v165
          %v167 = vld [vmem:[%s65 + $0x190] sm:$0xff]
          %168 = vst [vmem:[%s66 + $0x190] sm:$0xff] %v167
          %v169 = vld [vmem:[%s65 + $0x198] sm:$0xff]
          %170 = vst [vmem:[%s66 + $0x198] sm:$0xff] %v169
          %v171 = vld [vmem:[%s65 + $0x1a0] sm:$0xff]
          %172 = vst [vmem:[%s66 + $0x1a0] sm:$0xff] %v171
          %v173 = vld [vmem:[%s65 + $0x1a8] sm:$0xff]
          %174 = vst [vmem:[%s66 + $0x1a8] sm:$0xff] %v173
          %v175 = vld [vmem:[%s65 + $0x1b0] sm:$0xff]
          %176 = vst [vmem:[%s66 + $0x1b0] sm:$0xff] %v175
          %v177 = vld [vmem:[%s65 + $0x1b8] sm:$0xff]
          %178 = vst [vmem:[%s66 + $0x1b8] sm:$0xff] %v177
          %v179 = vld [vmem:[%s65 + $0x1c0] sm:$0xff]
          %180 = vst [vmem:[%s66 + $0x1c0] sm:$0xff] %v179
          %v181 = vld [vmem:[%s65 + $0x1c8] sm:$0xff]
          %182 = vst [vmem:[%s66 + $0x1c8] sm:$0xff] %v181
          %v183 = vld [vmem:[%s65 + $0x1d0] sm:$0xff]
          %184 = vst [vmem:[%s66 + $0x1d0] sm:$0xff] %v183
          %v185 = vld [vmem:[%s65 + $0x1d8] sm:$0xff]
          %186 = vst [vmem:[%s66 + $0x1d8] sm:$0xff] %v185
          %v187 = vld [vmem:[%s65 + $0x1e0] sm:$0xff]
          %188 = vst [vmem:[%s66 + $0x1e0] sm:$0xff] %v187
          %v189 = vld [vmem:[%s65 + $0x1e8] sm:$0xff]
          %190 = vst [vmem:[%s66 + $0x1e8] sm:$0xff] %v189
          %v191 = vld [vmem:[%s65 + $0x1f0] sm:$0xff]
          %192 = vst [vmem:[%s66 + $0x1f0] sm:$0xff] %v191
          %v193 = vld [vmem:[%s65 + $0x1f8] sm:$0xff]
          %194 = vst [vmem:[%s66 + $0x1f8] sm:$0xff] %v193
        $region49: #{pr_network_forward.3} parent=43 // loop_footer
          %s64 = sadd.s32 1, %s60
        $region50: #{pr_network_forward.3} parent=43 // loop_footer_branch
          %59 = sbr.rel target = $region46
        $region51: #{pr_network_forward.3} parent=43 // loop_exit
          _
      $region44: #{pr_network_forward.3} parent=28 // pred_fallthru
        _
      %p195 = pneg %p55
      // Predicated region
      $region52: #{pr_network_forward.3} parent=28 // pred_check
        _
      $region53: #{pr_network_forward.3} parent=28 // pred_check_branch
        %197 = sbr.rel (%p55) target = $region55
      $region54: #{pr_network_forward.3} parent=28 // pred_region
        %s198 = sand.u32 512, 7
      $region55: #{pr_network_forward.3} parent=28 // pred_fallthru
        _
    $region29: #{pr_network_forward.3} parent=24 // pred_fallthru
      _
    // Predicated region
    $region30: #{pr_network_forward.3} parent=24 // pred_check
      %p40 = pneg %p36
    $region31: #{pr_network_forward.3} parent=24 // pred_check_branch
      %42 = sbr.rel (%p40) target = $region33
    $region32: #{pr_network_forward.3} parent=24 // pred_region
      %s43 = sshllo.u32 0, 512
      loop: start=0, step=1, limit=1
      $region34: #{pr_network_forward.3} parent=32 // loop_pre_header
        _
      $region35: #{pr_network_forward.3} parent=32 // loop_header
        %s45 = sphi 0, %s49
        %p46 = scmp.ge.s32.totalorder %s45, 1
        %s50 = sphi %s1, %s1
        %s51 = sphi [#allocation6], [#allocation6]
      $region36: #{pr_network_forward.3} parent=32 // loop_header_branch
        %48 = sbr.rel (%p46) target = $region40
      $region37: #{pr_network_forward.3} parent=32 // loop_body
        %v52 = vld [vmem:[%s50] sm:%s43]
        %53 = vst [vmem:[%s51] sm:%s43] %v52
      $region38: #{pr_network_forward.3} parent=32 // loop_footer
        %s49 = sadd.s32 1, %s45
      $region39: #{pr_network_forward.3} parent=32 // loop_footer_branch
        %44 = sbr.rel target = $region35
      $region40: #{pr_network_forward.3} parent=32 // loop_exit
        _
    $region33: #{pr_network_forward.3} parent=24 // pred_fallthru
      _
    // Predicated region
    $region56: #{pr_network_forward.3} parent=24 // pred_check
      _
    $region57: #{pr_network_forward.3} parent=24 // pred_check_branch
      %201 = sbr.rel (0) target = $region59
    $region58: #{pr_network_forward.3} parent=24 // pred_region
      %202 = vsyncadd [#allocation7], 8192
    $region59: #{pr_network_forward.3} parent=24 // pred_fallthru
      _
    %s203 = scalar_lea.vmem [#allocation6], 512
    %s204 = scalar_lea.sflag [#allocation7], 1
    %p206 = scmp.lt.u32.totalorder 512, 8
    %p207 = pneg %p206
    // Predicated region
    $region60: #{pr_network_forward.3} parent=24 // pred_check
      _
    $region61: #{pr_network_forward.3} parent=24 // pred_check_branch
      %209 = sbr.rel (%p206) target = $region63
    $region62: #{pr_network_forward.3} parent=24 // pred_region
      %s224 = sand.u32 512, 7
      %p225 = scmp.eq.s32.totalorder %s224, 0
      // Predicated region
      $region75: #{pr_network_forward.3} parent=62 // pred_check
        %p226 = pneg %p225
      $region76: #{pr_network_forward.3} parent=62 // pred_check_branch
        %228 = sbr.rel (%p226) target = $region78
      $region77: #{pr_network_forward.3} parent=62 // pred_region
        loop: start=0, step=1, limit=1
        $region79: #{pr_network_forward.3} parent=77 // loop_pre_header
          _
        $region80: #{pr_network_forward.3} parent=77 // loop_header
          %s230 = sphi 0, %s234
          %p231 = scmp.ge.s32.totalorder %s230, 1
          %s235 = sphi %s2, %s2
          %s236 = sphi %s203, %s203
        $region81: #{pr_network_forward.3} parent=77 // loop_header_branch
          %233 = sbr.rel (%p231) target = $region85
        $region82: #{pr_network_forward.3} parent=77 // loop_body
          %v237 = vld [vmem:[%s235] sm:$0xff]
          %238 = vst [vmem:[%s236] sm:$0xff] %v237
          %v239 = vld [vmem:[%s235 + $0x8] sm:$0xff]
          %240 = vst [vmem:[%s236 + $0x8] sm:$0xff] %v239
          %v241 = vld [vmem:[%s235 + $0x10] sm:$0xff]
          %242 = vst [vmem:[%s236 + $0x10] sm:$0xff] %v241
          %v243 = vld [vmem:[%s235 + $0x18] sm:$0xff]
          %244 = vst [vmem:[%s236 + $0x18] sm:$0xff] %v243
          %v245 = vld [vmem:[%s235 + $0x20] sm:$0xff]
          %246 = vst [vmem:[%s236 + $0x20] sm:$0xff] %v245
          %v247 = vld [vmem:[%s235 + $0x28] sm:$0xff]
          %248 = vst [vmem:[%s236 + $0x28] sm:$0xff] %v247
          %v249 = vld [vmem:[%s235 + $0x30] sm:$0xff]
          %250 = vst [vmem:[%s236 + $0x30] sm:$0xff] %v249
          %v251 = vld [vmem:[%s235 + $0x38] sm:$0xff]
          %252 = vst [vmem:[%s236 + $0x38] sm:$0xff] %v251
          %v253 = vld [vmem:[%s235 + $0x40] sm:$0xff]
          %254 = vst [vmem:[%s236 + $0x40] sm:$0xff] %v253
          %v255 = vld [vmem:[%s235 + $0x48] sm:$0xff]
          %256 = vst [vmem:[%s236 + $0x48] sm:$0xff] %v255
          %v257 = vld [vmem:[%s235 + $0x50] sm:$0xff]
          %258 = vst [vmem:[%s236 + $0x50] sm:$0xff] %v257
          %v259 = vld [vmem:[%s235 + $0x58] sm:$0xff]
          %260 = vst [vmem:[%s236 + $0x58] sm:$0xff] %v259
          %v261 = vld [vmem:[%s235 + $0x60] sm:$0xff]
          %262 = vst [vmem:[%s236 + $0x60] sm:$0xff] %v261
          %v263 = vld [vmem:[%s235 + $0x68] sm:$0xff]
          %264 = vst [vmem:[%s236 + $0x68] sm:$0xff] %v263
          %v265 = vld [vmem:[%s235 + $0x70] sm:$0xff]
          %266 = vst [vmem:[%s236 + $0x70] sm:$0xff] %v265
          %v267 = vld [vmem:[%s235 + $0x78] sm:$0xff]
          %268 = vst [vmem:[%s236 + $0x78] sm:$0xff] %v267
          %v269 = vld [vmem:[%s235 + $0x80] sm:$0xff]
          %270 = vst [vmem:[%s236 + $0x80] sm:$0xff] %v269
          %v271 = vld [vmem:[%s235 + $0x88] sm:$0xff]
          %272 = vst [vmem:[%s236 + $0x88] sm:$0xff] %v271
          %v273 = vld [vmem:[%s235 + $0x90] sm:$0xff]
          %274 = vst [vmem:[%s236 + $0x90] sm:$0xff] %v273
          %v275 = vld [vmem:[%s235 + $0x98] sm:$0xff]
          %276 = vst [vmem:[%s236 + $0x98] sm:$0xff] %v275
          %v277 = vld [vmem:[%s235 + $0xa0] sm:$0xff]
          %278 = vst [vmem:[%s236 + $0xa0] sm:$0xff] %v277
          %v279 = vld [vmem:[%s235 + $0xa8] sm:$0xff]
          %280 = vst [vmem:[%s236 + $0xa8] sm:$0xff] %v279
          %v281 = vld [vmem:[%s235 + $0xb0] sm:$0xff]
          %282 = vst [vmem:[%s236 + $0xb0] sm:$0xff] %v281
          %v283 = vld [vmem:[%s235 + $0xb8] sm:$0xff]
          %284 = vst [vmem:[%s236 + $0xb8] sm:$0xff] %v283
          %v285 = vld [vmem:[%s235 + $0xc0] sm:$0xff]
          %286 = vst [vmem:[%s236 + $0xc0] sm:$0xff] %v285
          %v287 = vld [vmem:[%s235 + $0xc8] sm:$0xff]
          %288 = vst [vmem:[%s236 + $0xc8] sm:$0xff] %v287
          %v289 = vld [vmem:[%s235 + $0xd0] sm:$0xff]
          %290 = vst [vmem:[%s236 + $0xd0] sm:$0xff] %v289
          %v291 = vld [vmem:[%s235 + $0xd8] sm:$0xff]
          %292 = vst [vmem:[%s236 + $0xd8] sm:$0xff] %v291
          %v293 = vld [vmem:[%s235 + $0xe0] sm:$0xff]
          %294 = vst [vmem:[%s236 + $0xe0] sm:$0xff] %v293
          %v295 = vld [vmem:[%s235 + $0xe8] sm:$0xff]
          %296 = vst [vmem:[%s236 + $0xe8] sm:$0xff] %v295
          %v297 = vld [vmem:[%s235 + $0xf0] sm:$0xff]
          %298 = vst [vmem:[%s236 + $0xf0] sm:$0xff] %v297
          %v299 = vld [vmem:[%s235 + $0xf8] sm:$0xff]
          %300 = vst [vmem:[%s236 + $0xf8] sm:$0xff] %v299
          %v301 = vld [vmem:[%s235 + $0x100] sm:$0xff]
          %302 = vst [vmem:[%s236 + $0x100] sm:$0xff] %v301
          %v303 = vld [vmem:[%s235 + $0x108] sm:$0xff]
          %304 = vst [vmem:[%s236 + $0x108] sm:$0xff] %v303
          %v305 = vld [vmem:[%s235 + $0x110] sm:$0xff]
          %306 = vst [vmem:[%s236 + $0x110] sm:$0xff] %v305
          %v307 = vld [vmem:[%s235 + $0x118] sm:$0xff]
          %308 = vst [vmem:[%s236 + $0x118] sm:$0xff] %v307
          %v309 = vld [vmem:[%s235 + $0x120] sm:$0xff]
          %310 = vst [vmem:[%s236 + $0x120] sm:$0xff] %v309
          %v311 = vld [vmem:[%s235 + $0x128] sm:$0xff]
          %312 = vst [vmem:[%s236 + $0x128] sm:$0xff] %v311
          %v313 = vld [vmem:[%s235 + $0x130] sm:$0xff]
          %314 = vst [vmem:[%s236 + $0x130] sm:$0xff] %v313
          %v315 = vld [vmem:[%s235 + $0x138] sm:$0xff]
          %316 = vst [vmem:[%s236 + $0x138] sm:$0xff] %v315
          %v317 = vld [vmem:[%s235 + $0x140] sm:$0xff]
          %318 = vst [vmem:[%s236 + $0x140] sm:$0xff] %v317
          %v319 = vld [vmem:[%s235 + $0x148] sm:$0xff]
          %320 = vst [vmem:[%s236 + $0x148] sm:$0xff] %v319
          %v321 = vld [vmem:[%s235 + $0x150] sm:$0xff]
          %322 = vst [vmem:[%s236 + $0x150] sm:$0xff] %v321
          %v323 = vld [vmem:[%s235 + $0x158] sm:$0xff]
          %324 = vst [vmem:[%s236 + $0x158] sm:$0xff] %v323
          %v325 = vld [vmem:[%s235 + $0x160] sm:$0xff]
          %326 = vst [vmem:[%s236 + $0x160] sm:$0xff] %v325
          %v327 = vld [vmem:[%s235 + $0x168] sm:$0xff]
          %328 = vst [vmem:[%s236 + $0x168] sm:$0xff] %v327
          %v329 = vld [vmem:[%s235 + $0x170] sm:$0xff]
          %330 = vst [vmem:[%s236 + $0x170] sm:$0xff] %v329
          %v331 = vld [vmem:[%s235 + $0x178] sm:$0xff]
          %332 = vst [vmem:[%s236 + $0x178] sm:$0xff] %v331
          %v333 = vld [vmem:[%s235 + $0x180] sm:$0xff]
          %334 = vst [vmem:[%s236 + $0x180] sm:$0xff] %v333
          %v335 = vld [vmem:[%s235 + $0x188] sm:$0xff]
          %336 = vst [vmem:[%s236 + $0x188] sm:$0xff] %v335
          %v337 = vld [vmem:[%s235 + $0x190] sm:$0xff]
          %338 = vst [vmem:[%s236 + $0x190] sm:$0xff] %v337
          %v339 = vld [vmem:[%s235 + $0x198] sm:$0xff]
          %340 = vst [vmem:[%s236 + $0x198] sm:$0xff] %v339
          %v341 = vld [vmem:[%s235 + $0x1a0] sm:$0xff]
          %342 = vst [vmem:[%s236 + $0x1a0] sm:$0xff] %v341
          %v343 = vld [vmem:[%s235 + $0x1a8] sm:$0xff]
          %344 = vst [vmem:[%s236 + $0x1a8] sm:$0xff] %v343
          %v345 = vld [vmem:[%s235 + $0x1b0] sm:$0xff]
          %346 = vst [vmem:[%s236 + $0x1b0] sm:$0xff] %v345
          %v347 = vld [vmem:[%s235 + $0x1b8] sm:$0xff]
          %348 = vst [vmem:[%s236 + $0x1b8] sm:$0xff] %v347
          %v349 = vld [vmem:[%s235 + $0x1c0] sm:$0xff]
          %350 = vst [vmem:[%s236 + $0x1c0] sm:$0xff] %v349
          %v351 = vld [vmem:[%s235 + $0x1c8] sm:$0xff]
          %352 = vst [vmem:[%s236 + $0x1c8] sm:$0xff] %v351
          %v353 = vld [vmem:[%s235 + $0x1d0] sm:$0xff]
          %354 = vst [vmem:[%s236 + $0x1d0] sm:$0xff] %v353
          %v355 = vld [vmem:[%s235 + $0x1d8] sm:$0xff]
          %356 = vst [vmem:[%s236 + $0x1d8] sm:$0xff] %v355
          %v357 = vld [vmem:[%s235 + $0x1e0] sm:$0xff]
          %358 = vst [vmem:[%s236 + $0x1e0] sm:$0xff] %v357
          %v359 = vld [vmem:[%s235 + $0x1e8] sm:$0xff]
          %360 = vst [vmem:[%s236 + $0x1e8] sm:$0xff] %v359
          %v361 = vld [vmem:[%s235 + $0x1f0] sm:$0xff]
          %362 = vst [vmem:[%s236 + $0x1f0] sm:$0xff] %v361
          %v363 = vld [vmem:[%s235 + $0x1f8] sm:$0xff]
          %364 = vst [vmem:[%s236 + $0x1f8] sm:$0xff] %v363
        $region83: #{pr_network_forward.3} parent=77 // loop_footer
          %s234 = sadd.s32 1, %s230
        $region84: #{pr_network_forward.3} parent=77 // loop_footer_branch
          %229 = sbr.rel target = $region80
        $region85: #{pr_network_forward.3} parent=77 // loop_exit
          _
      $region78: #{pr_network_forward.3} parent=62 // pred_fallthru
        _
      %p365 = pneg %p225
      // Predicated region
      $region86: #{pr_network_forward.3} parent=62 // pred_check
        _
      $region87: #{pr_network_forward.3} parent=62 // pred_check_branch
        %367 = sbr.rel (%p225) target = $region89
      $region88: #{pr_network_forward.3} parent=62 // pred_region
        %s368 = sand.u32 512, 7
      $region89: #{pr_network_forward.3} parent=62 // pred_fallthru
        _
    $region63: #{pr_network_forward.3} parent=24 // pred_fallthru
      _
    // Predicated region
    $region64: #{pr_network_forward.3} parent=24 // pred_check
      %p210 = pneg %p206
    $region65: #{pr_network_forward.3} parent=24 // pred_check_branch
      %212 = sbr.rel (%p210) target = $region67
    $region66: #{pr_network_forward.3} parent=24 // pred_region
      %s213 = sshllo.u32 0, 512
      loop: start=0, step=1, limit=1
      $region68: #{pr_network_forward.3} parent=66 // loop_pre_header
        _
      $region69: #{pr_network_forward.3} parent=66 // loop_header
        %s215 = sphi 0, %s219
        %p216 = scmp.ge.s32.totalorder %s215, 1
        %s220 = sphi %s2, %s2
        %s221 = sphi %s203, %s203
      $region70: #{pr_network_forward.3} parent=66 // loop_header_branch
        %218 = sbr.rel (%p216) target = $region74
      $region71: #{pr_network_forward.3} parent=66 // loop_body
        %v222 = vld [vmem:[%s220] sm:%s213]
        %223 = vst [vmem:[%s221] sm:%s213] %v222
      $region72: #{pr_network_forward.3} parent=66 // loop_footer
        %s219 = sadd.s32 1, %s215
      $region73: #{pr_network_forward.3} parent=66 // loop_footer_branch
        %214 = sbr.rel target = $region69
      $region74: #{pr_network_forward.3} parent=66 // loop_exit
        _
    $region67: #{pr_network_forward.3} parent=24 // pred_fallthru
      _
    // Predicated region
    $region90: #{pr_network_forward.3} parent=24 // pred_check
      _
    $region91: #{pr_network_forward.3} parent=24 // pred_check_branch
      %371 = sbr.rel (0) target = $region93
    $region92: #{pr_network_forward.3} parent=24 // pred_region
      %372 = vsyncadd %s204, 8192
    $region93: #{pr_network_forward.3} parent=24 // pred_fallthru
      _
    %s373 = scalar_lea.vmem [#allocation6], 1024
    %s374 = scalar_lea.sflag [#allocation7], 2
    %p376 = scmp.lt.u32.totalorder 512, 8
    %p377 = pneg %p376
    // Predicated region
    $region94: #{pr_network_forward.3} parent=24 // pred_check
      _
    $region95: #{pr_network_forward.3} parent=24 // pred_check_branch
      %379 = sbr.rel (%p376) target = $region97
    $region96: #{pr_network_forward.3} parent=24 // pred_region
      %s394 = sand.u32 512, 7
      %p395 = scmp.eq.s32.totalorder %s394, 0
      // Predicated region
      $region109: #{pr_network_forward.3} parent=96 // pred_check
        %p396 = pneg %p395
      $region110: #{pr_network_forward.3} parent=96 // pred_check_branch
        %398 = sbr.rel (%p396) target = $region112
      $region111: #{pr_network_forward.3} parent=96 // pred_region
        loop: start=0, step=1, limit=1
        $region113: #{pr_network_forward.3} parent=111 // loop_pre_header
          _
        $region114: #{pr_network_forward.3} parent=111 // loop_header
          %s400 = sphi 0, %s404
          %p401 = scmp.ge.s32.totalorder %s400, 1
          %s405 = sphi %s3, %s3
          %s406 = sphi %s373, %s373
        $region115: #{pr_network_forward.3} parent=111 // loop_header_branch
          %403 = sbr.rel (%p401) target = $region119
        $region116: #{pr_network_forward.3} parent=111 // loop_body
          %v407 = vld [vmem:[%s405] sm:$0xff]
          %408 = vst [vmem:[%s406] sm:$0xff] %v407
          %v409 = vld [vmem:[%s405 + $0x8] sm:$0xff]
          %410 = vst [vmem:[%s406 + $0x8] sm:$0xff] %v409
          %v411 = vld [vmem:[%s405 + $0x10] sm:$0xff]
          %412 = vst [vmem:[%s406 + $0x10] sm:$0xff] %v411
          %v413 = vld [vmem:[%s405 + $0x18] sm:$0xff]
          %414 = vst [vmem:[%s406 + $0x18] sm:$0xff] %v413
          %v415 = vld [vmem:[%s405 + $0x20] sm:$0xff]
          %416 = vst [vmem:[%s406 + $0x20] sm:$0xff] %v415
          %v417 = vld [vmem:[%s405 + $0x28] sm:$0xff]
          %418 = vst [vmem:[%s406 + $0x28] sm:$0xff] %v417
          %v419 = vld [vmem:[%s405 + $0x30] sm:$0xff]
          %420 = vst [vmem:[%s406 + $0x30] sm:$0xff] %v419
          %v421 = vld [vmem:[%s405 + $0x38] sm:$0xff]
          %422 = vst [vmem:[%s406 + $0x38] sm:$0xff] %v421
          %v423 = vld [vmem:[%s405 + $0x40] sm:$0xff]
          %424 = vst [vmem:[%s406 + $0x40] sm:$0xff] %v423
          %v425 = vld [vmem:[%s405 + $0x48] sm:$0xff]
          %426 = vst [vmem:[%s406 + $0x48] sm:$0xff] %v425
          %v427 = vld [vmem:[%s405 + $0x50] sm:$0xff]
          %428 = vst [vmem:[%s406 + $0x50] sm:$0xff] %v427
          %v429 = vld [vmem:[%s405 + $0x58] sm:$0xff]
          %430 = vst [vmem:[%s406 + $0x58] sm:$0xff] %v429
          %v431 = vld [vmem:[%s405 + $0x60] sm:$0xff]
          %432 = vst [vmem:[%s406 + $0x60] sm:$0xff] %v431
          %v433 = vld [vmem:[%s405 + $0x68] sm:$0xff]
          %434 = vst [vmem:[%s406 + $0x68] sm:$0xff] %v433
          %v435 = vld [vmem:[%s405 + $0x70] sm:$0xff]
          %436 = vst [vmem:[%s406 + $0x70] sm:$0xff] %v435
          %v437 = vld [vmem:[%s405 + $0x78] sm:$0xff]
          %438 = vst [vmem:[%s406 + $0x78] sm:$0xff] %v437
          %v439 = vld [vmem:[%s405 + $0x80] sm:$0xff]
          %440 = vst [vmem:[%s406 + $0x80] sm:$0xff] %v439
          %v441 = vld [vmem:[%s405 + $0x88] sm:$0xff]
          %442 = vst [vmem:[%s406 + $0x88] sm:$0xff] %v441
          %v443 = vld [vmem:[%s405 + $0x90] sm:$0xff]
          %444 = vst [vmem:[%s406 + $0x90] sm:$0xff] %v443
          %v445 = vld [vmem:[%s405 + $0x98] sm:$0xff]
          %446 = vst [vmem:[%s406 + $0x98] sm:$0xff] %v445
          %v447 = vld [vmem:[%s405 + $0xa0] sm:$0xff]
          %448 = vst [vmem:[%s406 + $0xa0] sm:$0xff] %v447
          %v449 = vld [vmem:[%s405 + $0xa8] sm:$0xff]
          %450 = vst [vmem:[%s406 + $0xa8] sm:$0xff] %v449
          %v451 = vld [vmem:[%s405 + $0xb0] sm:$0xff]
          %452 = vst [vmem:[%s406 + $0xb0] sm:$0xff] %v451
          %v453 = vld [vmem:[%s405 + $0xb8] sm:$0xff]
          %454 = vst [vmem:[%s406 + $0xb8] sm:$0xff] %v453
          %v455 = vld [vmem:[%s405 + $0xc0] sm:$0xff]
          %456 = vst [vmem:[%s406 + $0xc0] sm:$0xff] %v455
          %v457 = vld [vmem:[%s405 + $0xc8] sm:$0xff]
          %458 = vst [vmem:[%s406 + $0xc8] sm:$0xff] %v457
          %v459 = vld [vmem:[%s405 + $0xd0] sm:$0xff]
          %460 = vst [vmem:[%s406 + $0xd0] sm:$0xff] %v459
          %v461 = vld [vmem:[%s405 + $0xd8] sm:$0xff]
          %462 = vst [vmem:[%s406 + $0xd8] sm:$0xff] %v461
          %v463 = vld [vmem:[%s405 + $0xe0] sm:$0xff]
          %464 = vst [vmem:[%s406 + $0xe0] sm:$0xff] %v463
          %v465 = vld [vmem:[%s405 + $0xe8] sm:$0xff]
          %466 = vst [vmem:[%s406 + $0xe8] sm:$0xff] %v465
          %v467 = vld [vmem:[%s405 + $0xf0] sm:$0xff]
          %468 = vst [vmem:[%s406 + $0xf0] sm:$0xff] %v467
          %v469 = vld [vmem:[%s405 + $0xf8] sm:$0xff]
          %470 = vst [vmem:[%s406 + $0xf8] sm:$0xff] %v469
          %v471 = vld [vmem:[%s405 + $0x100] sm:$0xff]
          %472 = vst [vmem:[%s406 + $0x100] sm:$0xff] %v471
          %v473 = vld [vmem:[%s405 + $0x108] sm:$0xff]
          %474 = vst [vmem:[%s406 + $0x108] sm:$0xff] %v473
          %v475 = vld [vmem:[%s405 + $0x110] sm:$0xff]
          %476 = vst [vmem:[%s406 + $0x110] sm:$0xff] %v475
          %v477 = vld [vmem:[%s405 + $0x118] sm:$0xff]
          %478 = vst [vmem:[%s406 + $0x118] sm:$0xff] %v477
          %v479 = vld [vmem:[%s405 + $0x120] sm:$0xff]
          %480 = vst [vmem:[%s406 + $0x120] sm:$0xff] %v479
          %v481 = vld [vmem:[%s405 + $0x128] sm:$0xff]
          %482 = vst [vmem:[%s406 + $0x128] sm:$0xff] %v481
          %v483 = vld [vmem:[%s405 + $0x130] sm:$0xff]
          %484 = vst [vmem:[%s406 + $0x130] sm:$0xff] %v483
          %v485 = vld [vmem:[%s405 + $0x138] sm:$0xff]
          %486 = vst [vmem:[%s406 + $0x138] sm:$0xff] %v485
          %v487 = vld [vmem:[%s405 + $0x140] sm:$0xff]
          %488 = vst [vmem:[%s406 + $0x140] sm:$0xff] %v487
          %v489 = vld [vmem:[%s405 + $0x148] sm:$0xff]
          %490 = vst [vmem:[%s406 + $0x148] sm:$0xff] %v489
          %v491 = vld [vmem:[%s405 + $0x150] sm:$0xff]
          %492 = vst [vmem:[%s406 + $0x150] sm:$0xff] %v491
          %v493 = vld [vmem:[%s405 + $0x158] sm:$0xff]
          %494 = vst [vmem:[%s406 + $0x158] sm:$0xff] %v493
          %v495 = vld [vmem:[%s405 + $0x160] sm:$0xff]
          %496 = vst [vmem:[%s406 + $0x160] sm:$0xff] %v495
          %v497 = vld [vmem:[%s405 + $0x168] sm:$0xff]
          %498 = vst [vmem:[%s406 + $0x168] sm:$0xff] %v497
          %v499 = vld [vmem:[%s405 + $0x170] sm:$0xff]
          %500 = vst [vmem:[%s406 + $0x170] sm:$0xff] %v499
          %v501 = vld [vmem:[%s405 + $0x178] sm:$0xff]
          %502 = vst [vmem:[%s406 + $0x178] sm:$0xff] %v501
          %v503 = vld [vmem:[%s405 + $0x180] sm:$0xff]
          %504 = vst [vmem:[%s406 + $0x180] sm:$0xff] %v503
          %v505 = vld [vmem:[%s405 + $0x188] sm:$0xff]
          %506 = vst [vmem:[%s406 + $0x188] sm:$0xff] %v505
          %v507 = vld [vmem:[%s405 + $0x190] sm:$0xff]
          %508 = vst [vmem:[%s406 + $0x190] sm:$0xff] %v507
          %v509 = vld [vmem:[%s405 + $0x198] sm:$0xff]
          %510 = vst [vmem:[%s406 + $0x198] sm:$0xff] %v509
          %v511 = vld [vmem:[%s405 + $0x1a0] sm:$0xff]
          %512 = vst [vmem:[%s406 + $0x1a0] sm:$0xff] %v511
          %v513 = vld [vmem:[%s405 + $0x1a8] sm:$0xff]
          %514 = vst [vmem:[%s406 + $0x1a8] sm:$0xff] %v513
          %v515 = vld [vmem:[%s405 + $0x1b0] sm:$0xff]
          %516 = vst [vmem:[%s406 + $0x1b0] sm:$0xff] %v515
          %v517 = vld [vmem:[%s405 + $0x1b8] sm:$0xff]
          %518 = vst [vmem:[%s406 + $0x1b8] sm:$0xff] %v517
          %v519 = vld [vmem:[%s405 + $0x1c0] sm:$0xff]
          %520 = vst [vmem:[%s406 + $0x1c0] sm:$0xff] %v519
          %v521 = vld [vmem:[%s405 + $0x1c8] sm:$0xff]
          %522 = vst [vmem:[%s406 + $0x1c8] sm:$0xff] %v521
          %v523 = vld [vmem:[%s405 + $0x1d0] sm:$0xff]
          %524 = vst [vmem:[%s406 + $0x1d0] sm:$0xff] %v523
          %v525 = vld [vmem:[%s405 + $0x1d8] sm:$0xff]
          %526 = vst [vmem:[%s406 + $0x1d8] sm:$0xff] %v525
          %v527 = vld [vmem:[%s405 + $0x1e0] sm:$0xff]
          %528 = vst [vmem:[%s406 + $0x1e0] sm:$0xff] %v527
          %v529 = vld [vmem:[%s405 + $0x1e8] sm:$0xff]
          %530 = vst [vmem:[%s406 + $0x1e8] sm:$0xff] %v529
          %v531 = vld [vmem:[%s405 + $0x1f0] sm:$0xff]
          %532 = vst [vmem:[%s406 + $0x1f0] sm:$0xff] %v531
          %v533 = vld [vmem:[%s405 + $0x1f8] sm:$0xff]
          %534 = vst [vmem:[%s406 + $0x1f8] sm:$0xff] %v533
        $region117: #{pr_network_forward.3} parent=111 // loop_footer
          %s404 = sadd.s32 1, %s400
        $region118: #{pr_network_forward.3} parent=111 // loop_footer_branch
          %399 = sbr.rel target = $region114
        $region119: #{pr_network_forward.3} parent=111 // loop_exit
          _
      $region112: #{pr_network_forward.3} parent=96 // pred_fallthru
        _
      %p535 = pneg %p395
      // Predicated region
      $region120: #{pr_network_forward.3} parent=96 // pred_check
        _
      $region121: #{pr_network_forward.3} parent=96 // pred_check_branch
        %537 = sbr.rel (%p395) target = $region123
      $region122: #{pr_network_forward.3} parent=96 // pred_region
        %s538 = sand.u32 512, 7
      $region123: #{pr_network_forward.3} parent=96 // pred_fallthru
        _
    $region97: #{pr_network_forward.3} parent=24 // pred_fallthru
      _
    // Predicated region
    $region98: #{pr_network_forward.3} parent=24 // pred_check
      %p380 = pneg %p376
    $region99: #{pr_network_forward.3} parent=24 // pred_check_branch
      %382 = sbr.rel (%p380) target = $region101
    $region100: #{pr_network_forward.3} parent=24 // pred_region
      %s383 = sshllo.u32 0, 512
      loop: start=0, step=1, limit=1
      $region102: #{pr_network_forward.3} parent=100 // loop_pre_header
        _
      $region103: #{pr_network_forward.3} parent=100 // loop_header
        %s385 = sphi 0, %s389
        %p386 = scmp.ge.s32.totalorder %s385, 1
        %s390 = sphi %s3, %s3
        %s391 = sphi %s373, %s373
      $region104: #{pr_network_forward.3} parent=100 // loop_header_branch
        %388 = sbr.rel (%p386) target = $region108
      $region105: #{pr_network_forward.3} parent=100 // loop_body
        %v392 = vld [vmem:[%s390] sm:%s383]
        %393 = vst [vmem:[%s391] sm:%s383] %v392
      $region106: #{pr_network_forward.3} parent=100 // loop_footer
        %s389 = sadd.s32 1, %s385
      $region107: #{pr_network_forward.3} parent=100 // loop_footer_branch
        %384 = sbr.rel target = $region103
      $region108: #{pr_network_forward.3} parent=100 // loop_exit
        _
    $region101: #{pr_network_forward.3} parent=24 // pred_fallthru
      _
    // Predicated region
    $region124: #{pr_network_forward.3} parent=24 // pred_check
      _
    $region125: #{pr_network_forward.3} parent=24 // pred_check_branch
      %541 = sbr.rel (0) target = $region127
    $region126: #{pr_network_forward.3} parent=24 // pred_region
      %542 = vsyncadd %s374, 8192
    $region127: #{pr_network_forward.3} parent=24 // pred_fallthru
      _
    %s543 = scalar_lea.vmem [#allocation6], 1536
    %s544 = scalar_lea.sflag [#allocation7], 3
    %p546 = scmp.lt.u32.totalorder 512, 8
    %p547 = pneg %p546
    // Predicated region
    $region128: #{pr_network_forward.3} parent=24 // pred_check
      _
    $region129: #{pr_network_forward.3} parent=24 // pred_check_branch
      %549 = sbr.rel (%p546) target = $region131
    $region130: #{pr_network_forward.3} parent=24 // pred_region
      %s564 = sand.u32 512, 7
      %p565 = scmp.eq.s32.totalorder %s564, 0
      // Predicated region
      $region143: #{pr_network_forward.3} parent=130 // pred_check
        %p566 = pneg %p565
      $region144: #{pr_network_forward.3} parent=130 // pred_check_branch
        %568 = sbr.rel (%p566) target = $region146
      $region145: #{pr_network_forward.3} parent=130 // pred_region
        loop: start=0, step=1, limit=1
        $region147: #{pr_network_forward.3} parent=145 // loop_pre_header
          _
        $region148: #{pr_network_forward.3} parent=145 // loop_header
          %s570 = sphi 0, %s574
          %p571 = scmp.ge.s32.totalorder %s570, 1
          %s575 = sphi %s4, %s4
          %s576 = sphi %s543, %s543
        $region149: #{pr_network_forward.3} parent=145 // loop_header_branch
          %573 = sbr.rel (%p571) target = $region153
        $region150: #{pr_network_forward.3} parent=145 // loop_body
          %v577 = vld [vmem:[%s575] sm:$0xff]
          %578 = vst [vmem:[%s576] sm:$0xff] %v577
          %v579 = vld [vmem:[%s575 + $0x8] sm:$0xff]
          %580 = vst [vmem:[%s576 + $0x8] sm:$0xff] %v579
          %v581 = vld [vmem:[%s575 + $0x10] sm:$0xff]
          %582 = vst [vmem:[%s576 + $0x10] sm:$0xff] %v581
          %v583 = vld [vmem:[%s575 + $0x18] sm:$0xff]
          %584 = vst [vmem:[%s576 + $0x18] sm:$0xff] %v583
          %v585 = vld [vmem:[%s575 + $0x20] sm:$0xff]
          %586 = vst [vmem:[%s576 + $0x20] sm:$0xff] %v585
          %v587 = vld [vmem:[%s575 + $0x28] sm:$0xff]
          %588 = vst [vmem:[%s576 + $0x28] sm:$0xff] %v587
          %v589 = vld [vmem:[%s575 + $0x30] sm:$0xff]
          %590 = vst [vmem:[%s576 + $0x30] sm:$0xff] %v589
          %v591 = vld [vmem:[%s575 + $0x38] sm:$0xff]
          %592 = vst [vmem:[%s576 + $0x38] sm:$0xff] %v591
          %v593 = vld [vmem:[%s575 + $0x40] sm:$0xff]
          %594 = vst [vmem:[%s576 + $0x40] sm:$0xff] %v593
          %v595 = vld [vmem:[%s575 + $0x48] sm:$0xff]
          %596 = vst [vmem:[%s576 + $0x48] sm:$0xff] %v595
          %v597 = vld [vmem:[%s575 + $0x50] sm:$0xff]
          %598 = vst [vmem:[%s576 + $0x50] sm:$0xff] %v597
          %v599 = vld [vmem:[%s575 + $0x58] sm:$0xff]
          %600 = vst [vmem:[%s576 + $0x58] sm:$0xff] %v599
          %v601 = vld [vmem:[%s575 + $0x60] sm:$0xff]
          %602 = vst [vmem:[%s576 + $0x60] sm:$0xff] %v601
          %v603 = vld [vmem:[%s575 + $0x68] sm:$0xff]
          %604 = vst [vmem:[%s576 + $0x68] sm:$0xff] %v603
          %v605 = vld [vmem:[%s575 + $0x70] sm:$0xff]
          %606 = vst [vmem:[%s576 + $0x70] sm:$0xff] %v605
          %v607 = vld [vmem:[%s575 + $0x78] sm:$0xff]
          %608 = vst [vmem:[%s576 + $0x78] sm:$0xff] %v607
          %v609 = vld [vmem:[%s575 + $0x80] sm:$0xff]
          %610 = vst [vmem:[%s576 + $0x80] sm:$0xff] %v609
          %v611 = vld [vmem:[%s575 + $0x88] sm:$0xff]
          %612 = vst [vmem:[%s576 + $0x88] sm:$0xff] %v611
          %v613 = vld [vmem:[%s575 + $0x90] sm:$0xff]
          %614 = vst [vmem:[%s576 + $0x90] sm:$0xff] %v613
          %v615 = vld [vmem:[%s575 + $0x98] sm:$0xff]
          %616 = vst [vmem:[%s576 + $0x98] sm:$0xff] %v615
          %v617 = vld [vmem:[%s575 + $0xa0] sm:$0xff]
          %618 = vst [vmem:[%s576 + $0xa0] sm:$0xff] %v617
          %v619 = vld [vmem:[%s575 + $0xa8] sm:$0xff]
          %620 = vst [vmem:[%s576 + $0xa8] sm:$0xff] %v619
          %v621 = vld [vmem:[%s575 + $0xb0] sm:$0xff]
          %622 = vst [vmem:[%s576 + $0xb0] sm:$0xff] %v621
          %v623 = vld [vmem:[%s575 + $0xb8] sm:$0xff]
          %624 = vst [vmem:[%s576 + $0xb8] sm:$0xff] %v623
          %v625 = vld [vmem:[%s575 + $0xc0] sm:$0xff]
          %626 = vst [vmem:[%s576 + $0xc0] sm:$0xff] %v625
          %v627 = vld [vmem:[%s575 + $0xc8] sm:$0xff]
          %628 = vst [vmem:[%s576 + $0xc8] sm:$0xff] %v627
          %v629 = vld [vmem:[%s575 + $0xd0] sm:$0xff]
          %630 = vst [vmem:[%s576 + $0xd0] sm:$0xff] %v629
          %v631 = vld [vmem:[%s575 + $0xd8] sm:$0xff]
          %632 = vst [vmem:[%s576 + $0xd8] sm:$0xff] %v631
          %v633 = vld [vmem:[%s575 + $0xe0] sm:$0xff]
          %634 = vst [vmem:[%s576 + $0xe0] sm:$0xff] %v633
          %v635 = vld [vmem:[%s575 + $0xe8] sm:$0xff]
          %636 = vst [vmem:[%s576 + $0xe8] sm:$0xff] %v635
          %v637 = vld [vmem:[%s575 + $0xf0] sm:$0xff]
          %638 = vst [vmem:[%s576 + $0xf0] sm:$0xff] %v637
          %v639 = vld [vmem:[%s575 + $0xf8] sm:$0xff]
          %640 = vst [vmem:[%s576 + $0xf8] sm:$0xff] %v639
          %v641 = vld [vmem:[%s575 + $0x100] sm:$0xff]
          %642 = vst [vmem:[%s576 + $0x100] sm:$0xff] %v641
          %v643 = vld [vmem:[%s575 + $0x108] sm:$0xff]
          %644 = vst [vmem:[%s576 + $0x108] sm:$0xff] %v643
          %v645 = vld [vmem:[%s575 + $0x110] sm:$0xff]
          %646 = vst [vmem:[%s576 + $0x110] sm:$0xff] %v645
          %v647 = vld [vmem:[%s575 + $0x118] sm:$0xff]
          %648 = vst [vmem:[%s576 + $0x118] sm:$0xff] %v647
          %v649 = vld [vmem:[%s575 + $0x120] sm:$0xff]
          %650 = vst [vmem:[%s576 + $0x120] sm:$0xff] %v649
          %v651 = vld [vmem:[%s575 + $0x128] sm:$0xff]
          %652 = vst [vmem:[%s576 + $0x128] sm:$0xff] %v651
          %v653 = vld [vmem:[%s575 + $0x130] sm:$0xff]
          %654 = vst [vmem:[%s576 + $0x130] sm:$0xff] %v653
          %v655 = vld [vmem:[%s575 + $0x138] sm:$0xff]
          %656 = vst [vmem:[%s576 + $0x138] sm:$0xff] %v655
          %v657 = vld [vmem:[%s575 + $0x140] sm:$0xff]
          %658 = vst [vmem:[%s576 + $0x140] sm:$0xff] %v657
          %v659 = vld [vmem:[%s575 + $0x148] sm:$0xff]
          %660 = vst [vmem:[%s576 + $0x148] sm:$0xff] %v659
          %v661 = vld [vmem:[%s575 + $0x150] sm:$0xff]
          %662 = vst [vmem:[%s576 + $0x150] sm:$0xff] %v661
          %v663 = vld [vmem:[%s575 + $0x158] sm:$0xff]
          %664 = vst [vmem:[%s576 + $0x158] sm:$0xff] %v663
          %v665 = vld [vmem:[%s575 + $0x160] sm:$0xff]
          %666 = vst [vmem:[%s576 + $0x160] sm:$0xff] %v665
          %v667 = vld [vmem:[%s575 + $0x168] sm:$0xff]
          %668 = vst [vmem:[%s576 + $0x168] sm:$0xff] %v667
          %v669 = vld [vmem:[%s575 + $0x170] sm:$0xff]
          %670 = vst [vmem:[%s576 + $0x170] sm:$0xff] %v669
          %v671 = vld [vmem:[%s575 + $0x178] sm:$0xff]
          %672 = vst [vmem:[%s576 + $0x178] sm:$0xff] %v671
          %v673 = vld [vmem:[%s575 + $0x180] sm:$0xff]
          %674 = vst [vmem:[%s576 + $0x180] sm:$0xff] %v673
          %v675 = vld [vmem:[%s575 + $0x188] sm:$0xff]
          %676 = vst [vmem:[%s576 + $0x188] sm:$0xff] %v675
          %v677 = vld [vmem:[%s575 + $0x190] sm:$0xff]
          %678 = vst [vmem:[%s576 + $0x190] sm:$0xff] %v677
          %v679 = vld [vmem:[%s575 + $0x198] sm:$0xff]
          %680 = vst [vmem:[%s576 + $0x198] sm:$0xff] %v679
          %v681 = vld [vmem:[%s575 + $0x1a0] sm:$0xff]
          %682 = vst [vmem:[%s576 + $0x1a0] sm:$0xff] %v681
          %v683 = vld [vmem:[%s575 + $0x1a8] sm:$0xff]
          %684 = vst [vmem:[%s576 + $0x1a8] sm:$0xff] %v683
          %v685 = vld [vmem:[%s575 + $0x1b0] sm:$0xff]
          %686 = vst [vmem:[%s576 + $0x1b0] sm:$0xff] %v685
          %v687 = vld [vmem:[%s575 + $0x1b8] sm:$0xff]
          %688 = vst [vmem:[%s576 + $0x1b8] sm:$0xff] %v687
          %v689 = vld [vmem:[%s575 + $0x1c0] sm:$0xff]
          %690 = vst [vmem:[%s576 + $0x1c0] sm:$0xff] %v689
          %v691 = vld [vmem:[%s575 + $0x1c8] sm:$0xff]
          %692 = vst [vmem:[%s576 + $0x1c8] sm:$0xff] %v691
          %v693 = vld [vmem:[%s575 + $0x1d0] sm:$0xff]
          %694 = vst [vmem:[%s576 + $0x1d0] sm:$0xff] %v693
          %v695 = vld [vmem:[%s575 + $0x1d8] sm:$0xff]
          %696 = vst [vmem:[%s576 + $0x1d8] sm:$0xff] %v695
          %v697 = vld [vmem:[%s575 + $0x1e0] sm:$0xff]
          %698 = vst [vmem:[%s576 + $0x1e0] sm:$0xff] %v697
          %v699 = vld [vmem:[%s575 + $0x1e8] sm:$0xff]
          %700 = vst [vmem:[%s576 + $0x1e8] sm:$0xff] %v699
          %v701 = vld [vmem:[%s575 + $0x1f0] sm:$0xff]
          %702 = vst [vmem:[%s576 + $0x1f0] sm:$0xff] %v701
          %v703 = vld [vmem:[%s575 + $0x1f8] sm:$0xff]
          %704 = vst [vmem:[%s576 + $0x1f8] sm:$0xff] %v703
        $region151: #{pr_network_forward.3} parent=145 // loop_footer
          %s574 = sadd.s32 1, %s570
        $region152: #{pr_network_forward.3} parent=145 // loop_footer_branch
          %569 = sbr.rel target = $region148
        $region153: #{pr_network_forward.3} parent=145 // loop_exit
          _
      $region146: #{pr_network_forward.3} parent=130 // pred_fallthru
        _
      %p705 = pneg %p565
      // Predicated region
      $region154: #{pr_network_forward.3} parent=130 // pred_check
        _
      $region155: #{pr_network_forward.3} parent=130 // pred_check_branch
        %707 = sbr.rel (%p565) target = $region157
      $region156: #{pr_network_forward.3} parent=130 // pred_region
        %s708 = sand.u32 512, 7
      $region157: #{pr_network_forward.3} parent=130 // pred_fallthru
        _
    $region131: #{pr_network_forward.3} parent=24 // pred_fallthru
      _
    // Predicated region
    $region132: #{pr_network_forward.3} parent=24 // pred_check
      %p550 = pneg %p546
    $region133: #{pr_network_forward.3} parent=24 // pred_check_branch
      %552 = sbr.rel (%p550) target = $region135
    $region134: #{pr_network_forward.3} parent=24 // pred_region
      %s553 = sshllo.u32 0, 512
      loop: start=0, step=1, limit=1
      $region136: #{pr_network_forward.3} parent=134 // loop_pre_header
        _
      $region137: #{pr_network_forward.3} parent=134 // loop_header
        %s555 = sphi 0, %s559
        %p556 = scmp.ge.s32.totalorder %s555, 1
        %s560 = sphi %s4, %s4
        %s561 = sphi %s543, %s543
      $region138: #{pr_network_forward.3} parent=134 // loop_header_branch
        %558 = sbr.rel (%p556) target = $region142
      $region139: #{pr_network_forward.3} parent=134 // loop_body
        %v562 = vld [vmem:[%s560] sm:%s553]
        %563 = vst [vmem:[%s561] sm:%s553] %v562
      $region140: #{pr_network_forward.3} parent=134 // loop_footer
        %s559 = sadd.s32 1, %s555
      $region141: #{pr_network_forward.3} parent=134 // loop_footer_branch
        %554 = sbr.rel target = $region137
      $region142: #{pr_network_forward.3} parent=134 // loop_exit
        _
    $region135: #{pr_network_forward.3} parent=24 // pred_fallthru
      _
    // Predicated region
    $region158: #{pr_network_forward.3} parent=24 // pred_check
      _
    $region159: #{pr_network_forward.3} parent=24 // pred_check_branch
      %711 = sbr.rel (0) target = $region161
    $region160: #{pr_network_forward.3} parent=24 // pred_region
      %712 = vsyncadd %s544, 8192
    $region161: #{pr_network_forward.3} parent=24 // pred_fallthru
      _
    %s713 = scalar_lea.vmem [#allocation6], 2048
    %s714 = scalar_lea.sflag [#allocation7], 4
    %p716 = scmp.lt.u32.totalorder 512, 8
    %p717 = pneg %p716
    // Predicated region
    $region162: #{pr_network_forward.3} parent=24 // pred_check
      _
    $region163: #{pr_network_forward.3} parent=24 // pred_check_branch
      %719 = sbr.rel (%p716) target = $region165
    $region164: #{pr_network_forward.3} parent=24 // pred_region
      %s734 = sand.u32 512, 7
      %p735 = scmp.eq.s32.totalorder %s734, 0
      // Predicated region
      $region177: #{pr_network_forward.3} parent=164 // pred_check
        %p736 = pneg %p735
      $region178: #{pr_network_forward.3} parent=164 // pred_check_branch
        %738 = sbr.rel (%p736) target = $region180
      $region179: #{pr_network_forward.3} parent=164 // pred_region
        loop: start=0, step=1, limit=1
        $region181: #{pr_network_forward.3} parent=179 // loop_pre_header
          _
        $region182: #{pr_network_forward.3} parent=179 // loop_header
          %s740 = sphi 0, %s744
          %p741 = scmp.ge.s32.totalorder %s740, 1
          %s745 = sphi %s5, %s5
          %s746 = sphi %s713, %s713
        $region183: #{pr_network_forward.3} parent=179 // loop_header_branch
          %743 = sbr.rel (%p741) target = $region187
        $region184: #{pr_network_forward.3} parent=179 // loop_body
          %v747 = vld [vmem:[%s745] sm:$0xff]
          %748 = vst [vmem:[%s746] sm:$0xff] %v747
          %v749 = vld [vmem:[%s745 + $0x8] sm:$0xff]
          %750 = vst [vmem:[%s746 + $0x8] sm:$0xff] %v749
          %v751 = vld [vmem:[%s745 + $0x10] sm:$0xff]
          %752 = vst [vmem:[%s746 + $0x10] sm:$0xff] %v751
          %v753 = vld [vmem:[%s745 + $0x18] sm:$0xff]
          %754 = vst [vmem:[%s746 + $0x18] sm:$0xff] %v753
          %v755 = vld [vmem:[%s745 + $0x20] sm:$0xff]
          %756 = vst [vmem:[%s746 + $0x20] sm:$0xff] %v755
          %v757 = vld [vmem:[%s745 + $0x28] sm:$0xff]
          %758 = vst [vmem:[%s746 + $0x28] sm:$0xff] %v757
          %v759 = vld [vmem:[%s745 + $0x30] sm:$0xff]
          %760 = vst [vmem:[%s746 + $0x30] sm:$0xff] %v759
          %v761 = vld [vmem:[%s745 + $0x38] sm:$0xff]
          %762 = vst [vmem:[%s746 + $0x38] sm:$0xff] %v761
          %v763 = vld [vmem:[%s745 + $0x40] sm:$0xff]
          %764 = vst [vmem:[%s746 + $0x40] sm:$0xff] %v763
          %v765 = vld [vmem:[%s745 + $0x48] sm:$0xff]
          %766 = vst [vmem:[%s746 + $0x48] sm:$0xff] %v765
          %v767 = vld [vmem:[%s745 + $0x50] sm:$0xff]
          %768 = vst [vmem:[%s746 + $0x50] sm:$0xff] %v767
          %v769 = vld [vmem:[%s745 + $0x58] sm:$0xff]
          %770 = vst [vmem:[%s746 + $0x58] sm:$0xff] %v769
          %v771 = vld [vmem:[%s745 + $0x60] sm:$0xff]
          %772 = vst [vmem:[%s746 + $0x60] sm:$0xff] %v771
          %v773 = vld [vmem:[%s745 + $0x68] sm:$0xff]
          %774 = vst [vmem:[%s746 + $0x68] sm:$0xff] %v773
          %v775 = vld [vmem:[%s745 + $0x70] sm:$0xff]
          %776 = vst [vmem:[%s746 + $0x70] sm:$0xff] %v775
          %v777 = vld [vmem:[%s745 + $0x78] sm:$0xff]
          %778 = vst [vmem:[%s746 + $0x78] sm:$0xff] %v777
          %v779 = vld [vmem:[%s745 + $0x80] sm:$0xff]
          %780 = vst [vmem:[%s746 + $0x80] sm:$0xff] %v779
          %v781 = vld [vmem:[%s745 + $0x88] sm:$0xff]
          %782 = vst [vmem:[%s746 + $0x88] sm:$0xff] %v781
          %v783 = vld [vmem:[%s745 + $0x90] sm:$0xff]
          %784 = vst [vmem:[%s746 + $0x90] sm:$0xff] %v783
          %v785 = vld [vmem:[%s745 + $0x98] sm:$0xff]
          %786 = vst [vmem:[%s746 + $0x98] sm:$0xff] %v785
          %v787 = vld [vmem:[%s745 + $0xa0] sm:$0xff]
          %788 = vst [vmem:[%s746 + $0xa0] sm:$0xff] %v787
          %v789 = vld [vmem:[%s745 + $0xa8] sm:$0xff]
          %790 = vst [vmem:[%s746 + $0xa8] sm:$0xff] %v789
          %v791 = vld [vmem:[%s745 + $0xb0] sm:$0xff]
          %792 = vst [vmem:[%s746 + $0xb0] sm:$0xff] %v791
          %v793 = vld [vmem:[%s745 + $0xb8] sm:$0xff]
          %794 = vst [vmem:[%s746 + $0xb8] sm:$0xff] %v793
          %v795 = vld [vmem:[%s745 + $0xc0] sm:$0xff]
          %796 = vst [vmem:[%s746 + $0xc0] sm:$0xff] %v795
          %v797 = vld [vmem:[%s745 + $0xc8] sm:$0xff]
          %798 = vst [vmem:[%s746 + $0xc8] sm:$0xff] %v797
          %v799 = vld [vmem:[%s745 + $0xd0] sm:$0xff]
          %800 = vst [vmem:[%s746 + $0xd0] sm:$0xff] %v799
          %v801 = vld [vmem:[%s745 + $0xd8] sm:$0xff]
          %802 = vst [vmem:[%s746 + $0xd8] sm:$0xff] %v801
          %v803 = vld [vmem:[%s745 + $0xe0] sm:$0xff]
          %804 = vst [vmem:[%s746 + $0xe0] sm:$0xff] %v803
          %v805 = vld [vmem:[%s745 + $0xe8] sm:$0xff]
          %806 = vst [vmem:[%s746 + $0xe8] sm:$0xff] %v805
          %v807 = vld [vmem:[%s745 + $0xf0] sm:$0xff]
          %808 = vst [vmem:[%s746 + $0xf0] sm:$0xff] %v807
          %v809 = vld [vmem:[%s745 + $0xf8] sm:$0xff]
          %810 = vst [vmem:[%s746 + $0xf8] sm:$0xff] %v809
          %v811 = vld [vmem:[%s745 + $0x100] sm:$0xff]
          %812 = vst [vmem:[%s746 + $0x100] sm:$0xff] %v811
          %v813 = vld [vmem:[%s745 + $0x108] sm:$0xff]
          %814 = vst [vmem:[%s746 + $0x108] sm:$0xff] %v813
          %v815 = vld [vmem:[%s745 + $0x110] sm:$0xff]
          %816 = vst [vmem:[%s746 + $0x110] sm:$0xff] %v815
          %v817 = vld [vmem:[%s745 + $0x118] sm:$0xff]
          %818 = vst [vmem:[%s746 + $0x118] sm:$0xff] %v817
          %v819 = vld [vmem:[%s745 + $0x120] sm:$0xff]
          %820 = vst [vmem:[%s746 + $0x120] sm:$0xff] %v819
          %v821 = vld [vmem:[%s745 + $0x128] sm:$0xff]
          %822 = vst [vmem:[%s746 + $0x128] sm:$0xff] %v821
          %v823 = vld [vmem:[%s745 + $0x130] sm:$0xff]
          %824 = vst [vmem:[%s746 + $0x130] sm:$0xff] %v823
          %v825 = vld [vmem:[%s745 + $0x138] sm:$0xff]
          %826 = vst [vmem:[%s746 + $0x138] sm:$0xff] %v825
          %v827 = vld [vmem:[%s745 + $0x140] sm:$0xff]
          %828 = vst [vmem:[%s746 + $0x140] sm:$0xff] %v827
          %v829 = vld [vmem:[%s745 + $0x148] sm:$0xff]
          %830 = vst [vmem:[%s746 + $0x148] sm:$0xff] %v829
          %v831 = vld [vmem:[%s745 + $0x150] sm:$0xff]
          %832 = vst [vmem:[%s746 + $0x150] sm:$0xff] %v831
          %v833 = vld [vmem:[%s745 + $0x158] sm:$0xff]
          %834 = vst [vmem:[%s746 + $0x158] sm:$0xff] %v833
          %v835 = vld [vmem:[%s745 + $0x160] sm:$0xff]
          %836 = vst [vmem:[%s746 + $0x160] sm:$0xff] %v835
          %v837 = vld [vmem:[%s745 + $0x168] sm:$0xff]
          %838 = vst [vmem:[%s746 + $0x168] sm:$0xff] %v837
          %v839 = vld [vmem:[%s745 + $0x170] sm:$0xff]
          %840 = vst [vmem:[%s746 + $0x170] sm:$0xff] %v839
          %v841 = vld [vmem:[%s745 + $0x178] sm:$0xff]
          %842 = vst [vmem:[%s746 + $0x178] sm:$0xff] %v841
          %v843 = vld [vmem:[%s745 + $0x180] sm:$0xff]
          %844 = vst [vmem:[%s746 + $0x180] sm:$0xff] %v843
          %v845 = vld [vmem:[%s745 + $0x188] sm:$0xff]
          %846 = vst [vmem:[%s746 + $0x188] sm:$0xff] %v845
          %v847 = vld [vmem:[%s745 + $0x190] sm:$0xff]
          %848 = vst [vmem:[%s746 + $0x190] sm:$0xff] %v847
          %v849 = vld [vmem:[%s745 + $0x198] sm:$0xff]
          %850 = vst [vmem:[%s746 + $0x198] sm:$0xff] %v849
          %v851 = vld [vmem:[%s745 + $0x1a0] sm:$0xff]
          %852 = vst [vmem:[%s746 + $0x1a0] sm:$0xff] %v851
          %v853 = vld [vmem:[%s745 + $0x1a8] sm:$0xff]
          %854 = vst [vmem:[%s746 + $0x1a8] sm:$0xff] %v853
          %v855 = vld [vmem:[%s745 + $0x1b0] sm:$0xff]
          %856 = vst [vmem:[%s746 + $0x1b0] sm:$0xff] %v855
          %v857 = vld [vmem:[%s745 + $0x1b8] sm:$0xff]
          %858 = vst [vmem:[%s746 + $0x1b8] sm:$0xff] %v857
          %v859 = vld [vmem:[%s745 + $0x1c0] sm:$0xff]
          %860 = vst [vmem:[%s746 + $0x1c0] sm:$0xff] %v859
          %v861 = vld [vmem:[%s745 + $0x1c8] sm:$0xff]
          %862 = vst [vmem:[%s746 + $0x1c8] sm:$0xff] %v861
          %v863 = vld [vmem:[%s745 + $0x1d0] sm:$0xff]
          %864 = vst [vmem:[%s746 + $0x1d0] sm:$0xff] %v863
          %v865 = vld [vmem:[%s745 + $0x1d8] sm:$0xff]
          %866 = vst [vmem:[%s746 + $0x1d8] sm:$0xff] %v865
          %v867 = vld [vmem:[%s745 + $0x1e0] sm:$0xff]
          %868 = vst [vmem:[%s746 + $0x1e0] sm:$0xff] %v867
          %v869 = vld [vmem:[%s745 + $0x1e8] sm:$0xff]
          %870 = vst [vmem:[%s746 + $0x1e8] sm:$0xff] %v869
          %v871 = vld [vmem:[%s745 + $0x1f0] sm:$0xff]
          %872 = vst [vmem:[%s746 + $0x1f0] sm:$0xff] %v871
          %v873 = vld [vmem:[%s745 + $0x1f8] sm:$0xff]
          %874 = vst [vmem:[%s746 + $0x1f8] sm:$0xff] %v873
        $region185: #{pr_network_forward.3} parent=179 // loop_footer
          %s744 = sadd.s32 1, %s740
        $region186: #{pr_network_forward.3} parent=179 // loop_footer_branch
          %739 = sbr.rel target = $region182
        $region187: #{pr_network_forward.3} parent=179 // loop_exit
          _
      $region180: #{pr_network_forward.3} parent=164 // pred_fallthru
        _
      %p875 = pneg %p735
      // Predicated region
      $region188: #{pr_network_forward.3} parent=164 // pred_check
        _
      $region189: #{pr_network_forward.3} parent=164 // pred_check_branch
        %877 = sbr.rel (%p735) target = $region191
      $region190: #{pr_network_forward.3} parent=164 // pred_region
        %s878 = sand.u32 512, 7
      $region191: #{pr_network_forward.3} parent=164 // pred_fallthru
        _
    $region165: #{pr_network_forward.3} parent=24 // pred_fallthru
      _
    // Predicated region
    $region166: #{pr_network_forward.3} parent=24 // pred_check
      %p720 = pneg %p716
    $region167: #{pr_network_forward.3} parent=24 // pred_check_branch
      %722 = sbr.rel (%p720) target = $region169
    $region168: #{pr_network_forward.3} parent=24 // pred_region
      %s723 = sshllo.u32 0, 512
      loop: start=0, step=1, limit=1
      $region170: #{pr_network_forward.3} parent=168 // loop_pre_header
        _
      $region171: #{pr_network_forward.3} parent=168 // loop_header
        %s725 = sphi 0, %s729
        %p726 = scmp.ge.s32.totalorder %s725, 1
        %s730 = sphi %s5, %s5
        %s731 = sphi %s713, %s713
      $region172: #{pr_network_forward.3} parent=168 // loop_header_branch
        %728 = sbr.rel (%p726) target = $region176
      $region173: #{pr_network_forward.3} parent=168 // loop_body
        %v732 = vld [vmem:[%s730] sm:%s723]
        %733 = vst [vmem:[%s731] sm:%s723] %v732
      $region174: #{pr_network_forward.3} parent=168 // loop_footer
        %s729 = sadd.s32 1, %s725
      $region175: #{pr_network_forward.3} parent=168 // loop_footer_branch
        %724 = sbr.rel target = $region171
      $region176: #{pr_network_forward.3} parent=168 // loop_exit
        _
    $region169: #{pr_network_forward.3} parent=24 // pred_fallthru
      _
    // Predicated region
    $region192: #{pr_network_forward.3} parent=24 // pred_check
      _
    $region193: #{pr_network_forward.3} parent=24 // pred_check_branch
      %881 = sbr.rel (0) target = $region195
    $region194: #{pr_network_forward.3} parent=24 // pred_region
      %882 = vsyncadd %s714, 8192
    $region195: #{pr_network_forward.3} parent=24 // pred_fallthru
      _
    %s883 = smul.u32 8, 16
    %s884 = smul.u32 %s883, 4
    %s885 = sshll.u32 %s884, 4
    %886 = dma.done [#allocation7], %s885
    %s887 = sshll.u32 %s884, 4
    %888 = dma.done %s204, %s887
    %s889 = sshll.u32 %s884, 4
    %890 = dma.done %s374, %s889
    %s891 = sshll.u32 %s884, 4
    %892 = dma.done %s544, %s891
    %s893 = sshll.u32 %s884, 4
    %894 = dma.done %s714, %s893
  $region25: #{pr_network_forward.3} parent=0 // pred_fallthru
    _
  %s895 = scalar_lea.vmem [#allocation6], 1024
  %v896 = vld [vmem:[%s895] sm:$0xff]
  %v897 = vld [vmem:[%s895 + $0x8] sm:$0xff]
  %v898 = vld [vmem:[%s895 + $0x10] sm:$0xff]
  %v899 = vld [vmem:[%s895 + $0x18] sm:$0xff]
  %v900 = vld [vmem:[%s895 + $0x20] sm:$0xff]
  %v901 = vld [vmem:[%s895 + $0x28] sm:$0xff]
  %v902 = vld [vmem:[%s895 + $0x30] sm:$0xff]
  %v903 = vld [vmem:[%s895 + $0x38] sm:$0xff]
  %v904 = vld [vmem:[%s895 + $0x40] sm:$0xff]
  %v905 = vld [vmem:[%s895 + $0x48] sm:$0xff]
  %v906 = vld [vmem:[%s895 + $0x50] sm:$0xff]
  %v907 = vld [vmem:[%s895 + $0x58] sm:$0xff]
  %v908 = vld [vmem:[%s895 + $0x60] sm:$0xff]
  %v909 = vld [vmem:[%s895 + $0x68] sm:$0xff]
  %v910 = vld [vmem:[%s895 + $0x70] sm:$0xff]
  %v911 = vld [vmem:[%s895 + $0x78] sm:$0xff]
  %v912 = vld [vmem:[%s895 + $0x80] sm:$0xff]
  %v913 = vld [vmem:[%s895 + $0x88] sm:$0xff]
  %v914 = vld [vmem:[%s895 + $0x90] sm:$0xff]
  %v915 = vld [vmem:[%s895 + $0x98] sm:$0xff]
  %v916 = vld [vmem:[%s895 + $0xa0] sm:$0xff]
  %v917 = vld [vmem:[%s895 + $0xa8] sm:$0xff]
  %v918 = vld [vmem:[%s895 + $0xb0] sm:$0xff]
  %v919 = vld [vmem:[%s895 + $0xb8] sm:$0xff]
  %v920 = vld [vmem:[%s895 + $0xc0] sm:$0xff]
  %v921 = vld [vmem:[%s895 + $0xc8] sm:$0xff]
  %v922 = vld [vmem:[%s895 + $0xd0] sm:$0xff]
  %v923 = vld [vmem:[%s895 + $0xd8] sm:$0xff]
  %v924 = vld [vmem:[%s895 + $0xe0] sm:$0xff]
  %v925 = vld [vmem:[%s895 + $0xe8] sm:$0xff]
  %v926 = vld [vmem:[%s895 + $0xf0] sm:$0xff]
  %v927 = vld [vmem:[%s895 + $0xf8] sm:$0xff]
  %v928 = vld [vmem:[%s895 + $0x100] sm:$0xff]
  %v929 = vld [vmem:[%s895 + $0x108] sm:$0xff]
  %v930 = vld [vmem:[%s895 + $0x110] sm:$0xff]
  %v931 = vld [vmem:[%s895 + $0x118] sm:$0xff]
  %v932 = vld [vmem:[%s895 + $0x120] sm:$0xff]
  %v933 = vld [vmem:[%s895 + $0x128] sm:$0xff]
  %v934 = vld [vmem:[%s895 + $0x130] sm:$0xff]
  %v935 = vld [vmem:[%s895 + $0x138] sm:$0xff]
  %v936 = vld [vmem:[%s895 + $0x140] sm:$0xff]
  %v937 = vld [vmem:[%s895 + $0x148] sm:$0xff]
  %v938 = vld [vmem:[%s895 + $0x150] sm:$0xff]
  %v939 = vld [vmem:[%s895 + $0x158] sm:$0xff]
  %v940 = vld [vmem:[%s895 + $0x160] sm:$0xff]
  %v941 = vld [vmem:[%s895 + $0x168] sm:$0xff]
  %v942 = vld [vmem:[%s895 + $0x170] sm:$0xff]
  %v943 = vld [vmem:[%s895 + $0x178] sm:$0xff]
  %v944 = vld [vmem:[%s895 + $0x180] sm:$0xff]
  %v945 = vld [vmem:[%s895 + $0x188] sm:$0xff]
  %v946 = vld [vmem:[%s895 + $0x190] sm:$0xff]
  %v947 = vld [vmem:[%s895 + $0x198] sm:$0xff]
  %v948 = vld [vmem:[%s895 + $0x1a0] sm:$0xff]
  %v949 = vld [vmem:[%s895 + $0x1a8] sm:$0xff]
  %v950 = vld [vmem:[%s895 + $0x1b0] sm:$0xff]
  %v951 = vld [vmem:[%s895 + $0x1b8] sm:$0xff]
  %v952 = vld [vmem:[%s895 + $0x1c0] sm:$0xff]
  %v953 = vld [vmem:[%s895 + $0x1c8] sm:$0xff]
  %v954 = vld [vmem:[%s895 + $0x1d0] sm:$0xff]
  %v955 = vld [vmem:[%s895 + $0x1d8] sm:$0xff]
  %v956 = vld [vmem:[%s895 + $0x1e0] sm:$0xff]
  %v957 = vld [vmem:[%s895 + $0x1e8] sm:$0xff]
  %v958 = vld [vmem:[%s895 + $0x1f0] sm:$0xff]
  %v959 = vld [vmem:[%s895 + $0x1f8] sm:$0xff]
  %v960 = vld [vmem:[#allocation2] sm:$0xff]
  %v961 = vld [vmem:[#allocation3] sm:$0xff]
  %s962 = smul.u32 0, 4
  %s963 = smul.addr %s962, 8
  %s964 = scalar_lea.vmem %s0, %s963
  %v965 = vld [vmem:[%s964] sm:$0xff]
  %v966 = vld [vmem:[%s964 + $0x8] sm:$0xff]
  %v967 = vld [vmem:[%s964 + $0x10] sm:$0xff]
  %v968 = vld [vmem:[%s964 + $0x18] sm:$0xff]
  %969 = vmatprep.subr.mxu0 %v897
  %970 = vmatpush1.msra.mxu0 %v896
  %971 = vmatprep.subr.mxu0 %v901
  %972 = vmatpush1.msra.mxu0 %v900
  %973 = vmatprep.subr.mxu0 %v905
  %974 = vmatpush1.msra.mxu0 %v904
  %975 = vmatprep.subr.mxu0 %v909
  %976 = vmatpush1.msra.mxu0 %v908
  %977 = vmatprep.subr.mxu0 %v913
  %978 = vmatpush1.msra.mxu0 %v912
  %979 = vmatprep.subr.mxu0 %v917
  %980 = vmatpush1.msra.mxu0 %v916
  %981 = vmatprep.subr.mxu0 %v921
  %982 = vmatpush1.msra.mxu0 %v920
  %983 = vmatprep.subr.mxu0 %v925
  %984 = vmatpush1.msra.mxu0 %v924
  %985 = vmatprep.subr.mxu0 %v929
  %986 = vmatpush1.msra.mxu0 %v928
  %987 = vmatprep.subr.mxu0 %v933
  %988 = vmatpush1.msra.mxu0 %v932
  %989 = vmatprep.subr.mxu0 %v937
  %990 = vmatpush1.msra.mxu0 %v936
  %991 = vmatprep.subr.mxu0 %v941
  %992 = vmatpush1.msra.mxu0 %v940
  %993 = vmatprep.subr.mxu0 %v945
  %994 = vmatpush1.msra.mxu0 %v944
  %995 = vmatprep.subr.mxu0 %v949
  %996 = vmatpush1.msra.mxu0 %v948
  %997 = vmatprep.subr.mxu0 %v953
  %998 = vmatpush1.msra.mxu0 %v952
  %999 = vmatprep.subr.mxu0 %v957
  %1000 = vmatpush1.msra.mxu0 %v956
  %1001 = vmatprep.subr.mxu0 0.0
  %1002 = vmatpush1.msra.mxu0 0.0
  %1003 = vmatprep.subr.mxu0 0.0
  %1004 = vmatpush1.msra.mxu0 0.0
  %1005 = vmatprep.subr.mxu0 0.0
  %1006 = vmatpush1.msra.mxu0 0.0
  %1007 = vmatprep.subr.mxu0 0.0
  %1008 = vmatpush1.msra.mxu0 0.0
  %1009 = vmatprep.subr.mxu0 0.0
  %1010 = vmatpush1.msra.mxu0 0.0
  %1011 = vmatprep.subr.mxu0 0.0
  %1012 = vmatpush1.msra.mxu0 0.0
  %1013 = vmatprep.subr.mxu0 0.0
  %1014 = vmatpush1.msra.mxu0 0.0
  %1015 = vmatprep.subr.mxu0 0.0
  %1016 = vmatpush1.msra.mxu0 0.0
  %1017 = vmatprep.subr.mxu0 0.0
  %1018 = vmatpush1.msra.mxu0 0.0
  %1019 = vmatprep.subr.mxu0 0.0
  %1020 = vmatpush1.msra.mxu0 0.0
  %1021 = vmatprep.subr.mxu0 0.0
  %1022 = vmatpush1.msra.mxu0 0.0
  %1023 = vmatprep.subr.mxu0 0.0
  %1024 = vmatpush1.msra.mxu0 0.0
  %1025 = vmatprep.subr.mxu0 0.0
  %1026 = vmatpush1.msra.mxu0 0.0
  %1027 = vmatprep.subr.mxu0 0.0
  %1028 = vmatpush1.msra.mxu0 0.0
  %1029 = vmatprep.subr.mxu0 0.0
  %1030 = vmatpush1.msra.mxu0 0.0
  %1031 = vmatprep.subr.mxu0 0.0
  %1032 = vmatpush1.msra.mxu0 0.0
  %1033 = vmatprep.mubr.f32.mxu0 0.0
  %1034 = vmatmul.mubr.f32.gmra.mrb[0].mxu0 %v960
  %v1035 = vpop.f32.mrb[0].mxu0
  %v1036 = vadd.f32 0.0, %v1035
  %v1037 = vpop.f32.mrb[0].mxu0
  %v1038 = vadd.f32 0.0, %v1037
  %1039 = vdwg.mxu0
  %1040 = vmatprep.subr.mxu0 %v899
  %1041 = vmatpush1.msra.mxu0 %v898
  %1042 = vmatprep.subr.mxu0 %v903
  %1043 = vmatpush1.msra.mxu0 %v902
  %1044 = vmatprep.subr.mxu0 %v907
  %1045 = vmatpush1.msra.mxu0 %v906
  %1046 = vmatprep.subr.mxu0 %v911
  %1047 = vmatpush1.msra.mxu0 %v910
  %1048 = vmatprep.subr.mxu0 %v915
  %1049 = vmatpush1.msra.mxu0 %v914
  %1050 = vmatprep.subr.mxu0 %v919
  %1051 = vmatpush1.msra.mxu0 %v918
  %1052 = vmatprep.subr.mxu0 %v923
  %1053 = vmatpush1.msra.mxu0 %v922
  %1054 = vmatprep.subr.mxu0 %v927
  %1055 = vmatpush1.msra.mxu0 %v926
  %1056 = vmatprep.subr.mxu0 %v931
  %1057 = vmatpush1.msra.mxu0 %v930
  %1058 = vmatprep.subr.mxu0 %v935
  %1059 = vmatpush1.msra.mxu0 %v934
  %1060 = vmatprep.subr.mxu0 %v939
  %1061 = vmatpush1.msra.mxu0 %v938
  %1062 = vmatprep.subr.mxu0 %v943
  %1063 = vmatpush1.msra.mxu0 %v942
  %1064 = vmatprep.subr.mxu0 %v947
  %1065 = vmatpush1.msra.mxu0 %v946
  %1066 = vmatprep.subr.mxu0 %v951
  %1067 = vmatpush1.msra.mxu0 %v950
  %1068 = vmatprep.subr.mxu0 %v955
  %1069 = vmatpush1.msra.mxu0 %v954
  %1070 = vmatprep.subr.mxu0 %v959
  %1071 = vmatpush1.msra.mxu0 %v958
  %1072 = vmatprep.subr.mxu0 0.0
  %1073 = vmatpush1.msra.mxu0 0.0
  %1074 = vmatprep.subr.mxu0 0.0
  %1075 = vmatpush1.msra.mxu0 0.0
  %1076 = vmatprep.subr.mxu0 0.0
  %1077 = vmatpush1.msra.mxu0 0.0
  %1078 = vmatprep.subr.mxu0 0.0
  %1079 = vmatpush1.msra.mxu0 0.0
  %1080 = vmatprep.subr.mxu0 0.0
  %1081 = vmatpush1.msra.mxu0 0.0
  %1082 = vmatprep.subr.mxu0 0.0
  %1083 = vmatpush1.msra.mxu0 0.0
  %1084 = vmatprep.subr.mxu0 0.0
  %1085 = vmatpush1.msra.mxu0 0.0
  %1086 = vmatprep.subr.mxu0 0.0
  %1087 = vmatpush1.msra.mxu0 0.0
  %1088 = vmatprep.subr.mxu0 0.0
  %1089 = vmatpush1.msra.mxu0 0.0
  %1090 = vmatprep.subr.mxu0 0.0
  %1091 = vmatpush1.msra.mxu0 0.0
  %1092 = vmatprep.subr.mxu0 0.0
  %1093 = vmatpush1.msra.mxu0 0.0
  %1094 = vmatprep.subr.mxu0 0.0
  %1095 = vmatpush1.msra.mxu0 0.0
  %1096 = vmatprep.subr.mxu0 0.0
  %1097 = vmatpush1.msra.mxu0 0.0
  %1098 = vmatprep.subr.mxu0 0.0
  %1099 = vmatpush1.msra.mxu0 0.0
  %1100 = vmatprep.subr.mxu0 0.0
  %1101 = vmatpush1.msra.mxu0 0.0
  %1102 = vmatprep.subr.mxu0 0.0
  %1103 = vmatpush1.msra.mxu0 0.0
  %1104 = vmatprep.mubr.f32.mxu0 0.0
  %1105 = vmatmul.mubr.f32.gmra.mrb[0].mxu0 %v960
  %v1106 = vpop.f32.mrb[0].mxu0
  %v1107 = vadd.f32 0.0, %v1106
  %v1108 = vpop.f32.mrb[0].mxu0
  %v1109 = vadd.f32 0.0, %v1108
  %1110 = vdwg.mxu0
  %v1111 = vadd.f32 %v965, %v1036
  %v1112 = vadd.f32 %v966, %v1038
  %v1113 = vadd.f32 %v967, %v1107
  %v1114 = vadd.f32 %v968, %v1109
  %v1115 = vxor.u32 %v1111, 2147483648
  %v1116 = vxor.u32 %v1112, 2147483648
  %v1117 = vxor.u32 %v1113, 2147483648
  %v1118 = vmul.f32 %v1115, 1.442695
  %v1119 = vpow.pop %v1118
  %v1120 = vmul.f32 %v1116, 1.442695
  %v1121 = vpow.pop %v1120
  %v1122 = vmul.f32 %v1117, 1.442695
  %v1123 = vpow.pop %v1122
  %v1124 = vadd.f32 %v1119, 1.0
  %v1125 = vadd.f32 %v1121, 1.0
  %v1126 = vadd.f32 %v1123, 1.0
  %v1127 = vrcp.pop %v1124
  %v1128 = vmul.f32 1.0, %v1127
  %v1129 = vrcp.pop %v1125
  %v1130 = vmul.f32 1.0, %v1129
  %v1131 = vrcp.pop %v1126
  %v1132 = vmul.f32 1.0, %v1131
  %v1133 = vtanh.pop %v1114
  %v1134 = vmul.f32 %v1130, %v961
  %v1135 = vmul.f32 %v1128, %v1133
  %v1136 = vadd.f32 %v1134, %v1135
  %v1137 = vtanh.pop %v1136
  %v1138 = vmul.f32 %v1132, %v1137
  %1139 = vst [vmem:[#allocation4] sm:$0xff] %v1138
  %s1140 = smul.u32 1, 4
  %s1141 = smul.addr %s1140, 8
  %s1142 = scalar_lea.vmem %s0, %s1141
  %v1143 = vld [vmem:[%s1142] sm:$0xff]
  %v1144 = vld [vmem:[%s1142 + $0x8] sm:$0xff]
  %v1145 = vld [vmem:[%s1142 + $0x10] sm:$0xff]
  %v1146 = vld [vmem:[%s1142 + $0x18] sm:$0xff]
  %1147 = vmatprep.subr.mxu0 %v897
  %1148 = vmatpush1.msra.mxu0 %v896
  %1149 = vmatprep.subr.mxu0 %v901
  %1150 = vmatpush1.msra.mxu0 %v900
  %1151 = vmatprep.subr.mxu0 %v905
  %1152 = vmatpush1.msra.mxu0 %v904
  %1153 = vmatprep.subr.mxu0 %v909
  %1154 = vmatpush1.msra.mxu0 %v908
  %1155 = vmatprep.subr.mxu0 %v913
  %1156 = vmatpush1.msra.mxu0 %v912
  %1157 = vmatprep.subr.mxu0 %v917
  %1158 = vmatpush1.msra.mxu0 %v916
  %1159 = vmatprep.subr.mxu0 %v921
  %1160 = vmatpush1.msra.mxu0 %v920
  %1161 = vmatprep.subr.mxu0 %v925
  %1162 = vmatpush1.msra.mxu0 %v924
  %1163 = vmatprep.subr.mxu0 %v929
  %1164 = vmatpush1.msra.mxu0 %v928
  %1165 = vmatprep.subr.mxu0 %v933
  %1166 = vmatpush1.msra.mxu0 %v932
  %1167 = vmatprep.subr.mxu0 %v937
  %1168 = vmatpush1.msra.mxu0 %v936
  %1169 = vmatprep.subr.mxu0 %v941
  %1170 = vmatpush1.msra.mxu0 %v940
  %1171 = vmatprep.subr.mxu0 %v945
  %1172 = vmatpush1.msra.mxu0 %v944
  %1173 = vmatprep.subr.mxu0 %v949
  %1174 = vmatpush1.msra.mxu0 %v948
  %1175 = vmatprep.subr.mxu0 %v953
  %1176 = vmatpush1.msra.mxu0 %v952
  %1177 = vmatprep.subr.mxu0 %v957
  %1178 = vmatpush1.msra.mxu0 %v956
  %1179 = vmatprep.subr.mxu0 0.0
  %1180 = vmatpush1.msra.mxu0 0.0
  %1181 = vmatprep.subr.mxu0 0.0
  %1182 = vmatpush1.msra.mxu0 0.0
  %1183 = vmatprep.subr.mxu0 0.0
  %1184 = vmatpush1.msra.mxu0 0.0
  %1185 = vmatprep.subr.mxu0 0.0
  %1186 = vmatpush1.msra.mxu0 0.0
  %1187 = vmatprep.subr.mxu0 0.0
  %1188 = vmatpush1.msra.mxu0 0.0
  %1189 = vmatprep.subr.mxu0 0.0
  %1190 = vmatpush1.msra.mxu0 0.0
  %1191 = vmatprep.subr.mxu0 0.0
  %1192 = vmatpush1.msra.mxu0 0.0
  %1193 = vmatprep.subr.mxu0 0.0
  %1194 = vmatpush1.msra.mxu0 0.0
  %1195 = vmatprep.subr.mxu0 0.0
  %1196 = vmatpush1.msra.mxu0 0.0
  %1197 = vmatprep.subr.mxu0 0.0
  %1198 = vmatpush1.msra.mxu0 0.0
  %1199 = vmatprep.subr.mxu0 0.0
  %1200 = vmatpush1.msra.mxu0 0.0
  %1201 = vmatprep.subr.mxu0 0.0
  %1202 = vmatpush1.msra.mxu0 0.0
  %1203 = vmatprep.subr.mxu0 0.0
  %1204 = vmatpush1.msra.mxu0 0.0
  %1205 = vmatprep.subr.mxu0 0.0
  %1206 = vmatpush1.msra.mxu0 0.0
  %1207 = vmatprep.subr.mxu0 0.0
  %1208 = vmatpush1.msra.mxu0 0.0
  %1209 = vmatprep.subr.mxu0 0.0
  %1210 = vmatpush1.msra.mxu0 0.0
  %1211 = vmatprep.mubr.f32.mxu0 0.0
  %1212 = vmatmul.mubr.f32.gmra.mrb[0].mxu0 %v1138
  %v1213 = vpop.f32.mrb[0].mxu0
  %v1214 = vadd.f32 0.0, %v1213
  %v1215 = vpop.f32.mrb[0].mxu0
  %v1216 = vadd.f32 0.0, %v1215
  %1217 = vdwg.mxu0
  %1218 = vmatprep.subr.mxu0 %v899
  %1219 = vmatpush1.msra.mxu0 %v898
  %1220 = vmatprep.subr.mxu0 %v903
  %1221 = vmatpush1.msra.mxu0 %v902
  %1222 = vmatprep.subr.mxu0 %v907
  %1223 = vmatpush1.msra.mxu0 %v906
  %1224 = vmatprep.subr.mxu0 %v911
  %1225 = vmatpush1.msra.mxu0 %v910
  %1226 = vmatprep.subr.mxu0 %v915
  %1227 = vmatpush1.msra.mxu0 %v914
  %1228 = vmatprep.subr.mxu0 %v919
  %1229 = vmatpush1.msra.mxu0 %v918
  %1230 = vmatprep.subr.mxu0 %v923
  %1231 = vmatpush1.msra.mxu0 %v922
  %1232 = vmatprep.subr.mxu0 %v927
  %1233 = vmatpush1.msra.mxu0 %v926
  %1234 = vmatprep.subr.mxu0 %v931
  %1235 = vmatpush1.msra.mxu0 %v930
  %1236 = vmatprep.subr.mxu0 %v935
  %1237 = vmatpush1.msra.mxu0 %v934
  %1238 = vmatprep.subr.mxu0 %v939
  %1239 = vmatpush1.msra.mxu0 %v938
  %1240 = vmatprep.subr.mxu0 %v943
  %1241 = vmatpush1.msra.mxu0 %v942
  %1242 = vmatprep.subr.mxu0 %v947
  %1243 = vmatpush1.msra.mxu0 %v946
  %1244 = vmatprep.subr.mxu0 %v951
  %1245 = vmatpush1.msra.mxu0 %v950
  %1246 = vmatprep.subr.mxu0 %v955
  %1247 = vmatpush1.msra.mxu0 %v954
  %1248 = vmatprep.subr.mxu0 %v959
  %1249 = vmatpush1.msra.mxu0 %v958
  %1250 = vmatprep.subr.mxu0 0.0
  %1251 = vmatpush1.msra.mxu0 0.0
  %1252 = vmatprep.subr.mxu0 0.0
  %1253 = vmatpush1.msra.mxu0 0.0
  %1254 = vmatprep.subr.mxu0 0.0
  %1255 = vmatpush1.msra.mxu0 0.0
  %1256 = vmatprep.subr.mxu0 0.0
  %1257 = vmatpush1.msra.mxu0 0.0
  %1258 = vmatprep.subr.mxu0 0.0
  %1259 = vmatpush1.msra.mxu0 0.0
  %1260 = vmatprep.subr.mxu0 0.0
  %1261 = vmatpush1.msra.mxu0 0.0
  %1262 = vmatprep.subr.mxu0 0.0
  %1263 = vmatpush1.msra.mxu0 0.0
  %1264 = vmatprep.subr.mxu0 0.0
  %1265 = vmatpush1.msra.mxu0 0.0
  %1266 = vmatprep.subr.mxu0 0.0
  %1267 = vmatpush1.msra.mxu0 0.0
  %1268 = vmatprep.subr.mxu0 0.0
  %1269 = vmatpush1.msra.mxu0 0.0
  %1270 = vmatprep.subr.mxu0 0.0
  %1271 = vmatpush1.msra.mxu0 0.0
  %1272 = vmatprep.subr.mxu0 0.0
  %1273 = vmatpush1.msra.mxu0 0.0
  %1274 = vmatprep.subr.mxu0 0.0
  %1275 = vmatpush1.msra.mxu0 0.0
  %1276 = vmatprep.subr.mxu0 0.0
  %1277 = vmatpush1.msra.mxu0 0.0
  %1278 = vmatprep.subr.mxu0 0.0
  %1279 = vmatpush1.msra.mxu0 0.0
  %1280 = vmatprep.subr.mxu0 0.0
  %1281 = vmatpush1.msra.mxu0 0.0
  %1282 = vmatprep.mubr.f32.mxu0 0.0
  %1283 = vmatmul.mubr.f32.gmra.mrb[0].mxu0 %v1138
  %v1284 = vpop.f32.mrb[0].mxu0
  %v1285 = vadd.f32 0.0, %v1284
  %v1286 = vpop.f32.mrb[0].mxu0
  %v1287 = vadd.f32 0.0, %v1286
  %1288 = vdwg.mxu0
  %v1289 = vadd.f32 %v1143, %v1214
  %v1290 = vadd.f32 %v1144, %v1216
  %v1291 = vadd.f32 %v1145, %v1285
  %v1292 = vadd.f32 %v1146, %v1287
  %v1293 = vxor.u32 %v1289, 2147483648
  %v1294 = vxor.u32 %v1290, 2147483648
  %v1295 = vxor.u32 %v1291, 2147483648
  %v1296 = vmul.f32 %v1293, 1.442695
  %v1297 = vpow.pop %v1296
  %v1298 = vmul.f32 %v1294, 1.442695
  %v1299 = vpow.pop %v1298
  %v1300 = vmul.f32 %v1295, 1.442695
  %v1301 = vpow.pop %v1300
  %v1302 = vadd.f32 %v1297, 1.0
  %v1303 = vadd.f32 %v1299, 1.0
  %v1304 = vadd.f32 %v1301, 1.0
  %v1305 = vrcp.pop %v1302
  %v1306 = vmul.f32 1.0, %v1305
  %v1307 = vrcp.pop %v1303
  %v1308 = vmul.f32 1.0, %v1307
  %v1309 = vrcp.pop %v1304
  %v1310 = vmul.f32 1.0, %v1309
  %v1311 = vtanh.pop %v1292
  %v1312 = vmul.f32 %v1308, %v1136
  %v1313 = vmul.f32 %v1306, %v1311
  %v1314 = vadd.f32 %v1312, %v1313
  %v1315 = vtanh.pop %v1314
  %v1316 = vmul.f32 %v1310, %v1315
  %s1317 = scalar_lea.vmem [#allocation4], 8
  %1318 = vst [vmem:[%s1317] sm:$0xff] %v1316
  %s1319 = smul.u32 2, 4
  %s1320 = smul.addr %s1319, 8
  %s1321 = scalar_lea.vmem %s0, %s1320
  %v1322 = vld [vmem:[%s1321] sm:$0xff]
  %v1323 = vld [vmem:[%s1321 + $0x8] sm:$0xff]
  %v1324 = vld [vmem:[%s1321 + $0x10] sm:$0xff]
  %v1325 = vld [vmem:[%s1321 + $0x18] sm:$0xff]
  %1326 = vmatprep.subr.mxu0 %v897
  %1327 = vmatpush1.msra.mxu0 %v896
  %1328 = vmatprep.subr.mxu0 %v901
  %1329 = vmatpush1.msra.mxu0 %v900
  %1330 = vmatprep.subr.mxu0 %v905
  %1331 = vmatpush1.msra.mxu0 %v904
  %1332 = vmatprep.subr.mxu0 %v909
  %1333 = vmatpush1.msra.mxu0 %v908
  %1334 = vmatprep.subr.mxu0 %v913
  %1335 = vmatpush1.msra.mxu0 %v912
  %1336 = vmatprep.subr.mxu0 %v917
  %1337 = vmatpush1.msra.mxu0 %v916
  %1338 = vmatprep.subr.mxu0 %v921
  %1339 = vmatpush1.msra.mxu0 %v920
  %1340 = vmatprep.subr.mxu0 %v925
  %1341 = vmatpush1.msra.mxu0 %v924
  %1342 = vmatprep.subr.mxu0 %v929
  %1343 = vmatpush1.msra.mxu0 %v928
  %1344 = vmatprep.subr.mxu0 %v933
  %1345 = vmatpush1.msra.mxu0 %v932
  %1346 = vmatprep.subr.mxu0 %v937
  %1347 = vmatpush1.msra.mxu0 %v936
  %1348 = vmatprep.subr.mxu0 %v941
  %1349 = vmatpush1.msra.mxu0 %v940
  %1350 = vmatprep.subr.mxu0 %v945
  %1351 = vmatpush1.msra.mxu0 %v944
  %1352 = vmatprep.subr.mxu0 %v949
  %1353 = vmatpush1.msra.mxu0 %v948
  %1354 = vmatprep.subr.mxu0 %v953
  %1355 = vmatpush1.msra.mxu0 %v952
  %1356 = vmatprep.subr.mxu0 %v957
  %1357 = vmatpush1.msra.mxu0 %v956
  %1358 = vmatprep.subr.mxu0 0.0
  %1359 = vmatpush1.msra.mxu0 0.0
  %1360 = vmatprep.subr.mxu0 0.0
  %1361 = vmatpush1.msra.mxu0 0.0
  %1362 = vmatprep.subr.mxu0 0.0
  %1363 = vmatpush1.msra.mxu0 0.0
  %1364 = vmatprep.subr.mxu0 0.0
  %1365 = vmatpush1.msra.mxu0 0.0
  %1366 = vmatprep.subr.mxu0 0.0
  %1367 = vmatpush1.msra.mxu0 0.0
  %1368 = vmatprep.subr.mxu0 0.0
  %1369 = vmatpush1.msra.mxu0 0.0
  %1370 = vmatprep.subr.mxu0 0.0
  %1371 = vmatpush1.msra.mxu0 0.0
  %1372 = vmatprep.subr.mxu0 0.0
  %1373 = vmatpush1.msra.mxu0 0.0
  %1374 = vmatprep.subr.mxu0 0.0
  %1375 = vmatpush1.msra.mxu0 0.0
  %1376 = vmatprep.subr.mxu0 0.0
  %1377 = vmatpush1.msra.mxu0 0.0
  %1378 = vmatprep.subr.mxu0 0.0
  %1379 = vmatpush1.msra.mxu0 0.0
  %1380 = vmatprep.subr.mxu0 0.0
  %1381 = vmatpush1.msra.mxu0 0.0
  %1382 = vmatprep.subr.mxu0 0.0
  %1383 = vmatpush1.msra.mxu0 0.0
  %1384 = vmatprep.subr.mxu0 0.0
  %1385 = vmatpush1.msra.mxu0 0.0
  %1386 = vmatprep.subr.mxu0 0.0
  %1387 = vmatpush1.msra.mxu0 0.0
  %1388 = vmatprep.subr.mxu0 0.0
  %1389 = vmatpush1.msra.mxu0 0.0
  %1390 = vmatprep.mubr.f32.mxu0 0.0
  %1391 = vmatmul.mubr.f32.gmra.mrb[0].mxu0 %v1316
  %v1392 = vpop.f32.mrb[0].mxu0
  %v1393 = vadd.f32 0.0, %v1392
  %v1394 = vpop.f32.mrb[0].mxu0
  %v1395 = vadd.f32 0.0, %v1394
  %1396 = vdwg.mxu0
  %1397 = vmatprep.subr.mxu0 %v899
  %1398 = vmatpush1.msra.mxu0 %v898
  %1399 = vmatprep.subr.mxu0 %v903
  %1400 = vmatpush1.msra.mxu0 %v902
  %1401 = vmatprep.subr.mxu0 %v907
  %1402 = vmatpush1.msra.mxu0 %v906
  %1403 = vmatprep.subr.mxu0 %v911
  %1404 = vmatpush1.msra.mxu0 %v910
  %1405 = vmatprep.subr.mxu0 %v915
  %1406 = vmatpush1.msra.mxu0 %v914
  %1407 = vmatprep.subr.mxu0 %v919
  %1408 = vmatpush1.msra.mxu0 %v918
  %1409 = vmatprep.subr.mxu0 %v923
  %1410 = vmatpush1.msra.mxu0 %v922
  %1411 = vmatprep.subr.mxu0 %v927
  %1412 = vmatpush1.msra.mxu0 %v926
  %1413 = vmatprep.subr.mxu0 %v931
  %1414 = vmatpush1.msra.mxu0 %v930
  %1415 = vmatprep.subr.mxu0 %v935
  %1416 = vmatpush1.msra.mxu0 %v934
  %1417 = vmatprep.subr.mxu0 %v939
  %1418 = vmatpush1.msra.mxu0 %v938
  %1419 = vmatprep.subr.mxu0 %v943
  %1420 = vmatpush1.msra.mxu0 %v942
  %1421 = vmatprep.subr.mxu0 %v947
  %1422 = vmatpush1.msra.mxu0 %v946
  %1423 = vmatprep.subr.mxu0 %v951
  %1424 = vmatpush1.msra.mxu0 %v950
  %1425 = vmatprep.subr.mxu0 %v955
  %1426 = vmatpush1.msra.mxu0 %v954
  %1427 = vmatprep.subr.mxu0 %v959
  %1428 = vmatpush1.msra.mxu0 %v958
  %1429 = vmatprep.subr.mxu0 0.0
  %1430 = vmatpush1.msra.mxu0 0.0
  %1431 = vmatprep.subr.mxu0 0.0
  %1432 = vmatpush1.msra.mxu0 0.0
  %1433 = vmatprep.subr.mxu0 0.0
  %1434 = vmatpush1.msra.mxu0 0.0
  %1435 = vmatprep.subr.mxu0 0.0
  %1436 = vmatpush1.msra.mxu0 0.0
  %1437 = vmatprep.subr.mxu0 0.0
  %1438 = vmatpush1.msra.mxu0 0.0
  %1439 = vmatprep.subr.mxu0 0.0
  %1440 = vmatpush1.msra.mxu0 0.0
  %1441 = vmatprep.subr.mxu0 0.0
  %1442 = vmatpush1.msra.mxu0 0.0
  %1443 = vmatprep.subr.mxu0 0.0
  %1444 = vmatpush1.msra.mxu0 0.0
  %1445 = vmatprep.subr.mxu0 0.0
  %1446 = vmatpush1.msra.mxu0 0.0
  %1447 = vmatprep.subr.mxu0 0.0
  %1448 = vmatpush1.msra.mxu0 0.0
  %1449 = vmatprep.subr.mxu0 0.0
  %1450 = vmatpush1.msra.mxu0 0.0
  %1451 = vmatprep.subr.mxu0 0.0
  %1452 = vmatpush1.msra.mxu0 0.0
  %1453 = vmatprep.subr.mxu0 0.0
  %1454 = vmatpush1.msra.mxu0 0.0
  %1455 = vmatprep.subr.mxu0 0.0
  %1456 = vmatpush1.msra.mxu0 0.0
  %1457 = vmatprep.subr.mxu0 0.0
  %1458 = vmatpush1.msra.mxu0 0.0
  %1459 = vmatprep.subr.mxu0 0.0
  %1460 = vmatpush1.msra.mxu0 0.0
  %1461 = vmatprep.mubr.f32.mxu0 0.0
  %1462 = vmatmul.mubr.f32.gmra.mrb[0].mxu0 %v1316
  %v1463 = vpop.f32.mrb[0].mxu0
  %v1464 = vadd.f32 0.0, %v1463
  %v1465 = vpop.f32.mrb[0].mxu0
  %v1466 = vadd.f32 0.0, %v1465
  %1467 = vdwg.mxu0
  %v1468 = vadd.f32 %v1322, %v1393
  %v1469 = vadd.f32 %v1323, %v1395
  %v1470 = vadd.f32 %v1324, %v1464
  %v1471 = vadd.f32 %v1325, %v1466
  %v1472 = vxor.u32 %v1468, 2147483648
  %v1473 = vxor.u32 %v1469, 2147483648
  %v1474 = vxor.u32 %v1470, 2147483648
  %v1475 = vmul.f32 %v1472, 1.442695
  %v1476 = vpow.pop %v1475
  %v1477 = vmul.f32 %v1473, 1.442695
  %v1478 = vpow.pop %v1477
  %v1479 = vmul.f32 %v1474, 1.442695
  %v1480 = vpow.pop %v1479
  %v1481 = vadd.f32 %v1476, 1.0
  %v1482 = vadd.f32 %v1478, 1.0
  %v1483 = vadd.f32 %v1480, 1.0
  %v1484 = vrcp.pop %v1481
  %v1485 = vmul.f32 1.0, %v1484
  %v1486 = vrcp.pop %v1482
  %v1487 = vmul.f32 1.0, %v1486
  %v1488 = vrcp.pop %v1483
  %v1489 = vmul.f32 1.0, %v1488
  %v1490 = vtanh.pop %v1471
  %v1491 = vmul.f32 %v1487, %v1314
  %v1492 = vmul.f32 %v1485, %v1490
  %v1493 = vadd.f32 %v1491, %v1492
  %v1494 = vtanh.pop %v1493
  %v1495 = vmul.f32 %v1489, %v1494
  %s1496 = scalar_lea.vmem [#allocation4], 16
  %1497 = vst [vmem:[%s1496] sm:$0xff] %v1495
  %s1498 = smul.u32 3, 4
  %s1499 = smul.addr %s1498, 8
  %s1500 = scalar_lea.vmem %s0, %s1499
  %v1501 = vld [vmem:[%s1500] sm:$0xff]
  %v1502 = vld [vmem:[%s1500 + $0x8] sm:$0xff]
  %v1503 = vld [vmem:[%s1500 + $0x10] sm:$0xff]
  %v1504 = vld [vmem:[%s1500 + $0x18] sm:$0xff]
  %1505 = vmatprep.subr.mxu0 %v897
  %1506 = vmatpush1.msra.mxu0 %v896
  %1507 = vmatprep.subr.mxu0 %v901
  %1508 = vmatpush1.msra.mxu0 %v900
  %1509 = vmatprep.subr.mxu0 %v905
  %1510 = vmatpush1.msra.mxu0 %v904
  %1511 = vmatprep.subr.mxu0 %v909
  %1512 = vmatpush1.msra.mxu0 %v908
  %1513 = vmatprep.subr.mxu0 %v913
  %1514 = vmatpush1.msra.mxu0 %v912
  %1515 = vmatprep.subr.mxu0 %v917
  %1516 = vmatpush1.msra.mxu0 %v916
  %1517 = vmatprep.subr.mxu0 %v921
  %1518 = vmatpush1.msra.mxu0 %v920
  %1519 = vmatprep.subr.mxu0 %v925
  %1520 = vmatpush1.msra.mxu0 %v924
  %1521 = vmatprep.subr.mxu0 %v929
  %1522 = vmatpush1.msra.mxu0 %v928
  %1523 = vmatprep.subr.mxu0 %v933
  %1524 = vmatpush1.msra.mxu0 %v932
  %1525 = vmatprep.subr.mxu0 %v937
  %1526 = vmatpush1.msra.mxu0 %v936
  %1527 = vmatprep.subr.mxu0 %v941
  %1528 = vmatpush1.msra.mxu0 %v940
  %1529 = vmatprep.subr.mxu0 %v945
  %1530 = vmatpush1.msra.mxu0 %v944
  %1531 = vmatprep.subr.mxu0 %v949
  %1532 = vmatpush1.msra.mxu0 %v948
  %1533 = vmatprep.subr.mxu0 %v953
  %1534 = vmatpush1.msra.mxu0 %v952
  %1535 = vmatprep.subr.mxu0 %v957
  %1536 = vmatpush1.msra.mxu0 %v956
  %1537 = vmatprep.subr.mxu0 0.0
  %1538 = vmatpush1.msra.mxu0 0.0
  %1539 = vmatprep.subr.mxu0 0.0
  %1540 = vmatpush1.msra.mxu0 0.0
  %1541 = vmatprep.subr.mxu0 0.0
  %1542 = vmatpush1.msra.mxu0 0.0
  %1543 = vmatprep.subr.mxu0 0.0
  %1544 = vmatpush1.msra.mxu0 0.0
  %1545 = vmatprep.subr.mxu0 0.0
  %1546 = vmatpush1.msra.mxu0 0.0
  %1547 = vmatprep.subr.mxu0 0.0
  %1548 = vmatpush1.msra.mxu0 0.0
  %1549 = vmatprep.subr.mxu0 0.0
  %1550 = vmatpush1.msra.mxu0 0.0
  %1551 = vmatprep.subr.mxu0 0.0
  %1552 = vmatpush1.msra.mxu0 0.0
  %1553 = vmatprep.subr.mxu0 0.0
  %1554 = vmatpush1.msra.mxu0 0.0
  %1555 = vmatprep.subr.mxu0 0.0
  %1556 = vmatpush1.msra.mxu0 0.0
  %1557 = vmatprep.subr.mxu0 0.0
  %1558 = vmatpush1.msra.mxu0 0.0
  %1559 = vmatprep.subr.mxu0 0.0
  %1560 = vmatpush1.msra.mxu0 0.0
  %1561 = vmatprep.subr.mxu0 0.0
  %1562 = vmatpush1.msra.mxu0 0.0
  %1563 = vmatprep.subr.mxu0 0.0
  %1564 = vmatpush1.msra.mxu0 0.0
  %1565 = vmatprep.subr.mxu0 0.0
  %1566 = vmatpush1.msra.mxu0 0.0
  %1567 = vmatprep.subr.mxu0 0.0
  %1568 = vmatpush1.msra.mxu0 0.0
  %1569 = vmatprep.mubr.f32.mxu0 0.0
  %1570 = vmatmul.mubr.f32.gmra.mrb[0].mxu0 %v1495
  %v1571 = vpop.f32.mrb[0].mxu0
  %v1572 = vadd.f32 0.0, %v1571
  %v1573 = vpop.f32.mrb[0].mxu0
  %v1574 = vadd.f32 0.0, %v1573
  %1575 = vdwg.mxu0
  %1576 = vmatprep.subr.mxu0 %v899
  %1577 = vmatpush1.msra.mxu0 %v898
  %1578 = vmatprep.subr.mxu0 %v903
  %1579 = vmatpush1.msra.mxu0 %v902
  %1580 = vmatprep.subr.mxu0 %v907
  %1581 = vmatpush1.msra.mxu0 %v906
  %1582 = vmatprep.subr.mxu0 %v911
  %1583 = vmatpush1.msra.mxu0 %v910
  %1584 = vmatprep.subr.mxu0 %v915
  %1585 = vmatpush1.msra.mxu0 %v914
  %1586 = vmatprep.subr.mxu0 %v919
  %1587 = vmatpush1.msra.mxu0 %v918
  %1588 = vmatprep.subr.mxu0 %v923
  %1589 = vmatpush1.msra.mxu0 %v922
  %1590 = vmatprep.subr.mxu0 %v927
  %1591 = vmatpush1.msra.mxu0 %v926
  %1592 = vmatprep.subr.mxu0 %v931
  %1593 = vmatpush1.msra.mxu0 %v930
  %1594 = vmatprep.subr.mxu0 %v935
  %1595 = vmatpush1.msra.mxu0 %v934
  %1596 = vmatprep.subr.mxu0 %v939
  %1597 = vmatpush1.msra.mxu0 %v938
  %1598 = vmatprep.subr.mxu0 %v943
  %1599 = vmatpush1.msra.mxu0 %v942
  %1600 = vmatprep.subr.mxu0 %v947
  %1601 = vmatpush1.msra.mxu0 %v946
  %1602 = vmatprep.subr.mxu0 %v951
  %1603 = vmatpush1.msra.mxu0 %v950
  %1604 = vmatprep.subr.mxu0 %v955
  %1605 = vmatpush1.msra.mxu0 %v954
  %1606 = vmatprep.subr.mxu0 %v959
  %1607 = vmatpush1.msra.mxu0 %v958
  %1608 = vmatprep.subr.mxu0 0.0
  %1609 = vmatpush1.msra.mxu0 0.0
  %1610 = vmatprep.subr.mxu0 0.0
  %1611 = vmatpush1.msra.mxu0 0.0
  %1612 = vmatprep.subr.mxu0 0.0
  %1613 = vmatpush1.msra.mxu0 0.0
  %1614 = vmatprep.subr.mxu0 0.0
  %1615 = vmatpush1.msra.mxu0 0.0
  %1616 = vmatprep.subr.mxu0 0.0
  %1617 = vmatpush1.msra.mxu0 0.0
  %1618 = vmatprep.subr.mxu0 0.0
  %1619 = vmatpush1.msra.mxu0 0.0
  %1620 = vmatprep.subr.mxu0 0.0
  %1621 = vmatpush1.msra.mxu0 0.0
  %1622 = vmatprep.subr.mxu0 0.0
  %1623 = vmatpush1.msra.mxu0 0.0
  %1624 = vmatprep.subr.mxu0 0.0
  %1625 = vmatpush1.msra.mxu0 0.0
  %1626 = vmatprep.subr.mxu0 0.0
  %1627 = vmatpush1.msra.mxu0 0.0
  %1628 = vmatprep.subr.mxu0 0.0
  %1629 = vmatpush1.msra.mxu0 0.0
  %1630 = vmatprep.subr.mxu0 0.0
  %1631 = vmatpush1.msra.mxu0 0.0
  %1632 = vmatprep.subr.mxu0 0.0
  %1633 = vmatpush1.msra.mxu0 0.0
  %1634 = vmatprep.subr.mxu0 0.0
  %1635 = vmatpush1.msra.mxu0 0.0
  %1636 = vmatprep.subr.mxu0 0.0
  %1637 = vmatpush1.msra.mxu0 0.0
  %1638 = vmatprep.subr.mxu0 0.0
  %1639 = vmatpush1.msra.mxu0 0.0
  %1640 = vmatprep.mubr.f32.mxu0 0.0
  %1641 = vmatmul.mubr.f32.gmra.mrb[0].mxu0 %v1495
  %v1642 = vpop.f32.mrb[0].mxu0
  %v1643 = vadd.f32 0.0, %v1642
  %v1644 = vpop.f32.mrb[0].mxu0
  %v1645 = vadd.f32 0.0, %v1644
  %1646 = vdwg.mxu0
  %v1647 = vadd.f32 %v1501, %v1572
  %v1648 = vadd.f32 %v1502, %v1574
  %v1649 = vadd.f32 %v1503, %v1643
  %v1650 = vadd.f32 %v1504, %v1645
  %v1651 = vxor.u32 %v1647, 2147483648
  %v1652 = vxor.u32 %v1648, 2147483648
  %v1653 = vxor.u32 %v1649, 2147483648
  %v1654 = vmul.f32 %v1651, 1.442695
  %v1655 = vpow.pop %v1654
  %v1656 = vmul.f32 %v1652, 1.442695
  %v1657 = vpow.pop %v1656
  %v1658 = vmul.f32 %v1653, 1.442695
  %v1659 = vpow.pop %v1658
  %v1660 = vadd.f32 %v1655, 1.0
  %v1661 = vadd.f32 %v1657, 1.0
  %v1662 = vadd.f32 %v1659, 1.0
  %v1663 = vrcp.pop %v1660
  %v1664 = vmul.f32 1.0, %v1663
  %v1665 = vrcp.pop %v1661
  %v1666 = vmul.f32 1.0, %v1665
  %v1667 = vrcp.pop %v1662
  %v1668 = vmul.f32 1.0, %v1667
  %v1669 = vtanh.pop %v1650
  %v1670 = vmul.f32 %v1666, %v1493
  %v1671 = vmul.f32 %v1664, %v1669
  %v1672 = vadd.f32 %v1670, %v1671
  %v1673 = vtanh.pop %v1672
  %v1674 = vmul.f32 %v1668, %v1673
  %s1675 = scalar_lea.vmem [#allocation4], 24
  %1676 = vst [vmem:[%s1675] sm:$0xff] %v1674
  %s1677 = smul.u32 4, 4
  %s1678 = smul.addr %s1677, 8
  %s1679 = scalar_lea.vmem %s0, %s1678
  %v1680 = vld [vmem:[%s1679] sm:$0xff]
  %v1681 = vld [vmem:[%s1679 + $0x8] sm:$0xff]
  %v1682 = vld [vmem:[%s1679 + $0x10] sm:$0xff]
  %v1683 = vld [vmem:[%s1679 + $0x18] sm:$0xff]
  %1684 = vmatprep.subr.mxu0 %v897
  %1685 = vmatpush1.msra.mxu0 %v896
  %1686 = vmatprep.subr.mxu0 %v901
  %1687 = vmatpush1.msra.mxu0 %v900
  %1688 = vmatprep.subr.mxu0 %v905
  %1689 = vmatpush1.msra.mxu0 %v904
  %1690 = vmatprep.subr.mxu0 %v909
  %1691 = vmatpush1.msra.mxu0 %v908
  %1692 = vmatprep.subr.mxu0 %v913
  %1693 = vmatpush1.msra.mxu0 %v912
  %1694 = vmatprep.subr.mxu0 %v917
  %1695 = vmatpush1.msra.mxu0 %v916
  %1696 = vmatprep.subr.mxu0 %v921
  %1697 = vmatpush1.msra.mxu0 %v920
  %1698 = vmatprep.subr.mxu0 %v925
  %1699 = vmatpush1.msra.mxu0 %v924
  %1700 = vmatprep.subr.mxu0 %v929
  %1701 = vmatpush1.msra.mxu0 %v928
  %1702 = vmatprep.subr.mxu0 %v933
  %1703 = vmatpush1.msra.mxu0 %v932
  %1704 = vmatprep.subr.mxu0 %v937
  %1705 = vmatpush1.msra.mxu0 %v936
  %1706 = vmatprep.subr.mxu0 %v941
  %1707 = vmatpush1.msra.mxu0 %v940
  %1708 = vmatprep.subr.mxu0 %v945
  %1709 = vmatpush1.msra.mxu0 %v944
  %1710 = vmatprep.subr.mxu0 %v949
  %1711 = vmatpush1.msra.mxu0 %v948
  %1712 = vmatprep.subr.mxu0 %v953
  %1713 = vmatpush1.msra.mxu0 %v952
  %1714 = vmatprep.subr.mxu0 %v957
  %1715 = vmatpush1.msra.mxu0 %v956
  %1716 = vmatprep.subr.mxu0 0.0
  %1717 = vmatpush1.msra.mxu0 0.0
  %1718 = vmatprep.subr.mxu0 0.0
  %1719 = vmatpush1.msra.mxu0 0.0
  %1720 = vmatprep.subr.mxu0 0.0
  %1721 = vmatpush1.msra.mxu0 0.0
  %1722 = vmatprep.subr.mxu0 0.0
  %1723 = vmatpush1.msra.mxu0 0.0
  %1724 = vmatprep.subr.mxu0 0.0
  %1725 = vmatpush1.msra.mxu0 0.0
  %1726 = vmatprep.subr.mxu0 0.0
  %1727 = vmatpush1.msra.mxu0 0.0
  %1728 = vmatprep.subr.mxu0 0.0
  %1729 = vmatpush1.msra.mxu0 0.0
  %1730 = vmatprep.subr.mxu0 0.0
  %1731 = vmatpush1.msra.mxu0 0.0
  %1732 = vmatprep.subr.mxu0 0.0
  %1733 = vmatpush1.msra.mxu0 0.0
  %1734 = vmatprep.subr.mxu0 0.0
  %1735 = vmatpush1.msra.mxu0 0.0
  %1736 = vmatprep.subr.mxu0 0.0
  %1737 = vmatpush1.msra.mxu0 0.0
  %1738 = vmatprep.subr.mxu0 0.0
  %1739 = vmatpush1.msra.mxu0 0.0
  %1740 = vmatprep.subr.mxu0 0.0
  %1741 = vmatpush1.msra.mxu0 0.0
  %1742 = vmatprep.subr.mxu0 0.0
  %1743 = vmatpush1.msra.mxu0 0.0
  %1744 = vmatprep.subr.mxu0 0.0
  %1745 = vmatpush1.msra.mxu0 0.0
  %1746 = vmatprep.subr.mxu0 0.0
  %1747 = vmatpush1.msra.mxu0 0.0
  %1748 = vmatprep.mubr.f32.mxu0 0.0
  %1749 = vmatmul.mubr.f32.gmra.mrb[0].mxu0 %v1674
  %v1750 = vpop.f32.mrb[0].mxu0
  %v1751 = vadd.f32 0.0, %v1750
  %v1752 = vpop.f32.mrb[0].mxu0
  %v1753 = vadd.f32 0.0, %v1752
  %1754 = vdwg.mxu0
  %1755 = vmatprep.subr.mxu0 %v899
  %1756 = vmatpush1.msra.mxu0 %v898
  %1757 = vmatprep.subr.mxu0 %v903
  %1758 = vmatpush1.msra.mxu0 %v902
  %1759 = vmatprep.subr.mxu0 %v907
  %1760 = vmatpush1.msra.mxu0 %v906
  %1761 = vmatprep.subr.mxu0 %v911
  %1762 = vmatpush1.msra.mxu0 %v910
  %1763 = vmatprep.subr.mxu0 %v915
  %1764 = vmatpush1.msra.mxu0 %v914
  %1765 = vmatprep.subr.mxu0 %v919
  %1766 = vmatpush1.msra.mxu0 %v918
  %1767 = vmatprep.subr.mxu0 %v923
  %1768 = vmatpush1.msra.mxu0 %v922
  %1769 = vmatprep.subr.mxu0 %v927
  %1770 = vmatpush1.msra.mxu0 %v926
  %1771 = vmatprep.subr.mxu0 %v931
  %1772 = vmatpush1.msra.mxu0 %v930
  %1773 = vmatprep.subr.mxu0 %v935
  %1774 = vmatpush1.msra.mxu0 %v934
  %1775 = vmatprep.subr.mxu0 %v939
  %1776 = vmatpush1.msra.mxu0 %v938
  %1777 = vmatprep.subr.mxu0 %v943
  %1778 = vmatpush1.msra.mxu0 %v942
  %1779 = vmatprep.subr.mxu0 %v947
  %1780 = vmatpush1.msra.mxu0 %v946
  %1781 = vmatprep.subr.mxu0 %v951
  %1782 = vmatpush1.msra.mxu0 %v950
  %1783 = vmatprep.subr.mxu0 %v955
  %1784 = vmatpush1.msra.mxu0 %v954
  %1785 = vmatprep.subr.mxu0 %v959
  %1786 = vmatpush1.msra.mxu0 %v958
  %1787 = vmatprep.subr.mxu0 0.0
  %1788 = vmatpush1.msra.mxu0 0.0
  %1789 = vmatprep.subr.mxu0 0.0
  %1790 = vmatpush1.msra.mxu0 0.0
  %1791 = vmatprep.subr.mxu0 0.0
  %1792 = vmatpush1.msra.mxu0 0.0
  %1793 = vmatprep.subr.mxu0 0.0
  %1794 = vmatpush1.msra.mxu0 0.0
  %1795 = vmatprep.subr.mxu0 0.0
  %1796 = vmatpush1.msra.mxu0 0.0
  %1797 = vmatprep.subr.mxu0 0.0
  %1798 = vmatpush1.msra.mxu0 0.0
  %1799 = vmatprep.subr.mxu0 0.0
  %1800 = vmatpush1.msra.mxu0 0.0
  %1801 = vmatprep.subr.mxu0 0.0
  %1802 = vmatpush1.msra.mxu0 0.0
  %1803 = vmatprep.subr.mxu0 0.0
  %1804 = vmatpush1.msra.mxu0 0.0
  %1805 = vmatprep.subr.mxu0 0.0
  %1806 = vmatpush1.msra.mxu0 0.0
  %1807 = vmatprep.subr.mxu0 0.0
  %1808 = vmatpush1.msra.mxu0 0.0
  %1809 = vmatprep.subr.mxu0 0.0
  %1810 = vmatpush1.msra.mxu0 0.0
  %1811 = vmatprep.subr.mxu0 0.0
  %1812 = vmatpush1.msra.mxu0 0.0
  %1813 = vmatprep.subr.mxu0 0.0
  %1814 = vmatpush1.msra.mxu0 0.0
  %1815 = vmatprep.subr.mxu0 0.0
  %1816 = vmatpush1.msra.mxu0 0.0
  %1817 = vmatprep.subr.mxu0 0.0
  %1818 = vmatpush1.msra.mxu0 0.0
  %1819 = vmatprep.mubr.f32.mxu0 0.0
  %1820 = vmatmul.mubr.f32.gmra.mrb[0].mxu0 %v1674
  %v1821 = vpop.f32.mrb[0].mxu0
  %v1822 = vadd.f32 0.0, %v1821
  %v1823 = vpop.f32.mrb[0].mxu0
  %v1824 = vadd.f32 0.0, %v1823
  %1825 = vdwg.mxu0
  %v1826 = vadd.f32 %v1680, %v1751
  %v1827 = vadd.f32 %v1681, %v1753
  %v1828 = vadd.f32 %v1682, %v1822
  %v1829 = vadd.f32 %v1683, %v1824
  %v1830 = vxor.u32 %v1826, 2147483648
  %v1831 = vxor.u32 %v1827, 2147483648
  %v1832 = vxor.u32 %v1828, 2147483648
  %v1833 = vmul.f32 %v1830, 1.442695
  %v1834 = vpow.pop %v1833
  %v1835 = vmul.f32 %v1831, 1.442695
  %v1836 = vpow.pop %v1835
  %v1837 = vmul.f32 %v1832, 1.442695
  %v1838 = vpow.pop %v1837
  %v1839 = vadd.f32 %v1834, 1.0
  %v1840 = vadd.f32 %v1836, 1.0
  %v1841 = vadd.f32 %v1838, 1.0
  %v1842 = vrcp.pop %v1839
  %v1843 = vmul.f32 1.0, %v1842
  %v1844 = vrcp.pop %v1840
  %v1845 = vmul.f32 1.0, %v1844
  %v1846 = vrcp.pop %v1841
  %v1847 = vmul.f32 1.0, %v1846
  %v1848 = vtanh.pop %v1829
  %v1849 = vmul.f32 %v1845, %v1672
  %v1850 = vmul.f32 %v1843, %v1848
  %v1851 = vadd.f32 %v1849, %v1850
  %v1852 = vtanh.pop %v1851
  %v1853 = vmul.f32 %v1847, %v1852
  %s1854 = scalar_lea.vmem [#allocation4], 32
  %1855 = vst [vmem:[%s1854] sm:$0xff] %v1853
  %s1856 = smul.u32 5, 4
  %s1857 = smul.addr %s1856, 8
  %s1858 = scalar_lea.vmem %s0, %s1857
  %v1859 = vld [vmem:[%s1858] sm:$0xff]
  %v1860 = vld [vmem:[%s1858 + $0x8] sm:$0xff]
  %v1861 = vld [vmem:[%s1858 + $0x10] sm:$0xff]
  %v1862 = vld [vmem:[%s1858 + $0x18] sm:$0xff]
  %1863 = vmatprep.subr.mxu0 %v897
  %1864 = vmatpush1.msra.mxu0 %v896
  %1865 = vmatprep.subr.mxu0 %v901
  %1866 = vmatpush1.msra.mxu0 %v900
  %1867 = vmatprep.subr.mxu0 %v905
  %1868 = vmatpush1.msra.mxu0 %v904
  %1869 = vmatprep.subr.mxu0 %v909
  %1870 = vmatpush1.msra.mxu0 %v908
  %1871 = vmatprep.subr.mxu0 %v913
  %1872 = vmatpush1.msra.mxu0 %v912
  %1873 = vmatprep.subr.mxu0 %v917
  %1874 = vmatpush1.msra.mxu0 %v916
  %1875 = vmatprep.subr.mxu0 %v921
  %1876 = vmatpush1.msra.mxu0 %v920
  %1877 = vmatprep.subr.mxu0 %v925
  %1878 = vmatpush1.msra.mxu0 %v924
  %1879 = vmatprep.subr.mxu0 %v929
  %1880 = vmatpush1.msra.mxu0 %v928
  %1881 = vmatprep.subr.mxu0 %v933
  %1882 = vmatpush1.msra.mxu0 %v932
  %1883 = vmatprep.subr.mxu0 %v937
  %1884 = vmatpush1.msra.mxu0 %v936
  %1885 = vmatprep.subr.mxu0 %v941
  %1886 = vmatpush1.msra.mxu0 %v940
  %1887 = vmatprep.subr.mxu0 %v945
  %1888 = vmatpush1.msra.mxu0 %v944
  %1889 = vmatprep.subr.mxu0 %v949
  %1890 = vmatpush1.msra.mxu0 %v948
  %1891 = vmatprep.subr.mxu0 %v953
  %1892 = vmatpush1.msra.mxu0 %v952
  %1893 = vmatprep.subr.mxu0 %v957
  %1894 = vmatpush1.msra.mxu0 %v956
  %1895 = vmatprep.subr.mxu0 0.0
  %1896 = vmatpush1.msra.mxu0 0.0
  %1897 = vmatprep.subr.mxu0 0.0
  %1898 = vmatpush1.msra.mxu0 0.0
  %1899 = vmatprep.subr.mxu0 0.0
  %1900 = vmatpush1.msra.mxu0 0.0
  %1901 = vmatprep.subr.mxu0 0.0
  %1902 = vmatpush1.msra.mxu0 0.0
  %1903 = vmatprep.subr.mxu0 0.0
  %1904 = vmatpush1.msra.mxu0 0.0
  %1905 = vmatprep.subr.mxu0 0.0
  %1906 = vmatpush1.msra.mxu0 0.0
  %1907 = vmatprep.subr.mxu0 0.0
  %1908 = vmatpush1.msra.mxu0 0.0
  %1909 = vmatprep.subr.mxu0 0.0
  %1910 = vmatpush1.msra.mxu0 0.0
  %1911 = vmatprep.subr.mxu0 0.0
  %1912 = vmatpush1.msra.mxu0 0.0
  %1913 = vmatprep.subr.mxu0 0.0
  %1914 = vmatpush1.msra.mxu0 0.0
  %1915 = vmatprep.subr.mxu0 0.0
  %1916 = vmatpush1.msra.mxu0 0.0
  %1917 = vmatprep.subr.mxu0 0.0
  %1918 = vmatpush1.msra.mxu0 0.0
  %1919 = vmatprep.subr.mxu0 0.0
  %1920 = vmatpush1.msra.mxu0 0.0
  %1921 = vmatprep.subr.mxu0 0.0
  %1922 = vmatpush1.msra.mxu0 0.0
  %1923 = vmatprep.subr.mxu0 0.0
  %1924 = vmatpush1.msra.mxu0 0.0
  %1925 = vmatprep.subr.mxu0 0.0
  %1926 = vmatpush1.msra.mxu0 0.0
  %1927 = vmatprep.mubr.f32.mxu0 0.0
  %1928 = vmatmul.mubr.f32.gmra.mrb[0].mxu0 %v1853
  %v1929 = vpop.f32.mrb[0].mxu0
  %v1930 = vadd.f32 0.0, %v1929
  %v1931 = vpop.f32.mrb[0].mxu0
  %v1932 = vadd.f32 0.0, %v1931
  %1933 = vdwg.mxu0
  %1934 = vmatprep.subr.mxu0 %v899
  %1935 = vmatpush1.msra.mxu0 %v898
  %1936 = vmatprep.subr.mxu0 %v903
  %1937 = vmatpush1.msra.mxu0 %v902
  %1938 = vmatprep.subr.mxu0 %v907
  %1939 = vmatpush1.msra.mxu0 %v906
  %1940 = vmatprep.subr.mxu0 %v911
  %1941 = vmatpush1.msra.mxu0 %v910
  %1942 = vmatprep.subr.mxu0 %v915
  %1943 = vmatpush1.msra.mxu0 %v914
  %1944 = vmatprep.subr.mxu0 %v919
  %1945 = vmatpush1.msra.mxu0 %v918
  %1946 = vmatprep.subr.mxu0 %v923
  %1947 = vmatpush1.msra.mxu0 %v922
  %1948 = vmatprep.subr.mxu0 %v927
  %1949 = vmatpush1.msra.mxu0 %v926
  %1950 = vmatprep.subr.mxu0 %v931
  %1951 = vmatpush1.msra.mxu0 %v930
  %1952 = vmatprep.subr.mxu0 %v935
  %1953 = vmatpush1.msra.mxu0 %v934
  %1954 = vmatprep.subr.mxu0 %v939
  %1955 = vmatpush1.msra.mxu0 %v938
  %1956 = vmatprep.subr.mxu0 %v943
  %1957 = vmatpush1.msra.mxu0 %v942
  %1958 = vmatprep.subr.mxu0 %v947
  %1959 = vmatpush1.msra.mxu0 %v946
  %1960 = vmatprep.subr.mxu0 %v951
  %1961 = vmatpush1.msra.mxu0 %v950
  %1962 = vmatprep.subr.mxu0 %v955
  %1963 = vmatpush1.msra.mxu0 %v954
  %1964 = vmatprep.subr.mxu0 %v959
  %1965 = vmatpush1.msra.mxu0 %v958
  %1966 = vmatprep.subr.mxu0 0.0
  %1967 = vmatpush1.msra.mxu0 0.0
  %1968 = vmatprep.subr.mxu0 0.0
  %1969 = vmatpush1.msra.mxu0 0.0
  %1970 = vmatprep.subr.mxu0 0.0
  %1971 = vmatpush1.msra.mxu0 0.0
  %1972 = vmatprep.subr.mxu0 0.0
  %1973 = vmatpush1.msra.mxu0 0.0
  %1974 = vmatprep.subr.mxu0 0.0
  %1975 = vmatpush1.msra.mxu0 0.0
  %1976 = vmatprep.subr.mxu0 0.0
  %1977 = vmatpush1.msra.mxu0 0.0
  %1978 = vmatprep.subr.mxu0 0.0
  %1979 = vmatpush1.msra.mxu0 0.0
  %1980 = vmatprep.subr.mxu0 0.0
  %1981 = vmatpush1.msra.mxu0 0.0
  %1982 = vmatprep.subr.mxu0 0.0
  %1983 = vmatpush1.msra.mxu0 0.0
  %1984 = vmatprep.subr.mxu0 0.0
  %1985 = vmatpush1.msra.mxu0 0.0
  %1986 = vmatprep.subr.mxu0 0.0
  %1987 = vmatpush1.msra.mxu0 0.0
  %1988 = vmatprep.subr.mxu0 0.0
  %1989 = vmatpush1.msra.mxu0 0.0
  %1990 = vmatprep.subr.mxu0 0.0
  %1991 = vmatpush1.msra.mxu0 0.0
  %1992 = vmatprep.subr.mxu0 0.0
  %1993 = vmatpush1.msra.mxu0 0.0
  %1994 = vmatprep.subr.mxu0 0.0
  %1995 = vmatpush1.msra.mxu0 0.0
  %1996 = vmatprep.subr.mxu0 0.0
  %1997 = vmatpush1.msra.mxu0 0.0
  %1998 = vmatprep.mubr.f32.mxu0 0.0
  %1999 = vmatmul.mubr.f32.gmra.mrb[0].mxu0 %v1853
  %v2000 = vpop.f32.mrb[0].mxu0
  %v2001 = vadd.f32 0.0, %v2000
  %v2002 = vpop.f32.mrb[0].mxu0
  %v2003 = vadd.f32 0.0, %v2002
  %2004 = vdwg.mxu0
  %v2005 = vadd.f32 %v1859, %v1930
  %v2006 = vadd.f32 %v1860, %v1932
  %v2007 = vadd.f32 %v1861, %v2001
  %v2008 = vadd.f32 %v1862, %v2003
  %v2009 = vxor.u32 %v2005, 2147483648
  %v2010 = vxor.u32 %v2006, 2147483648
  %v2011 = vxor.u32 %v2007, 2147483648
  %v2012 = vmul.f32 %v2009, 1.442695
  %v2013 = vpow.pop %v2012
  %v2014 = vmul.f32 %v2010, 1.442695
  %v2015 = vpow.pop %v2014
  %v2016 = vmul.f32 %v2011, 1.442695
  %v2017 = vpow.pop %v2016
  %v2018 = vadd.f32 %v2013, 1.0
  %v2019 = vadd.f32 %v2015, 1.0
  %v2020 = vadd.f32 %v2017, 1.0
  %v2021 = vrcp.pop %v2018
  %v2022 = vmul.f32 1.0, %v2021
  %v2023 = vrcp.pop %v2019
  %v2024 = vmul.f32 1.0, %v2023
  %v2025 = vrcp.pop %v2020
  %v2026 = vmul.f32 1.0, %v2025
  %v2027 = vtanh.pop %v2008
  %v2028 = vmul.f32 %v2024, %v1851
  %v2029 = vmul.f32 %v2022, %v2027
  %v2030 = vadd.f32 %v2028, %v2029
  %v2031 = vtanh.pop %v2030
  %v2032 = vmul.f32 %v2026, %v2031
  %s2033 = scalar_lea.vmem [#allocation4], 40
  %2034 = vst [vmem:[%s2033] sm:$0xff] %v2032
  %s2035 = smul.u32 6, 4
  %s2036 = smul.addr %s2035, 8
  %s2037 = scalar_lea.vmem %s0, %s2036
  %v2038 = vld [vmem:[%s2037] sm:$0xff]
  %v2039 = vld [vmem:[%s2037 + $0x8] sm:$0xff]
  %v2040 = vld [vmem:[%s2037 + $0x10] sm:$0xff]
  %v2041 = vld [vmem:[%s2037 + $0x18] sm:$0xff]
  %2042 = vmatprep.subr.mxu0 %v897
  %2043 = vmatpush1.msra.mxu0 %v896
  %2044 = vmatprep.subr.mxu0 %v901
  %2045 = vmatpush1.msra.mxu0 %v900
  %2046 = vmatprep.subr.mxu0 %v905
  %2047 = vmatpush1.msra.mxu0 %v904
  %2048 = vmatprep.subr.mxu0 %v909
  %2049 = vmatpush1.msra.mxu0 %v908
  %2050 = vmatprep.subr.mxu0 %v913
  %2051 = vmatpush1.msra.mxu0 %v912
  %2052 = vmatprep.subr.mxu0 %v917
  %2053 = vmatpush1.msra.mxu0 %v916
  %2054 = vmatprep.subr.mxu0 %v921
  %2055 = vmatpush1.msra.mxu0 %v920
  %2056 = vmatprep.subr.mxu0 %v925
  %2057 = vmatpush1.msra.mxu0 %v924
  %2058 = vmatprep.subr.mxu0 %v929
  %2059 = vmatpush1.msra.mxu0 %v928
  %2060 = vmatprep.subr.mxu0 %v933
  %2061 = vmatpush1.msra.mxu0 %v932
  %2062 = vmatprep.subr.mxu0 %v937
  %2063 = vmatpush1.msra.mxu0 %v936
  %2064 = vmatprep.subr.mxu0 %v941
  %2065 = vmatpush1.msra.mxu0 %v940
  %2066 = vmatprep.subr.mxu0 %v945
  %2067 = vmatpush1.msra.mxu0 %v944
  %2068 = vmatprep.subr.mxu0 %v949
  %2069 = vmatpush1.msra.mxu0 %v948
  %2070 = vmatprep.subr.mxu0 %v953
  %2071 = vmatpush1.msra.mxu0 %v952
  %2072 = vmatprep.subr.mxu0 %v957
  %2073 = vmatpush1.msra.mxu0 %v956
  %2074 = vmatprep.subr.mxu0 0.0
  %2075 = vmatpush1.msra.mxu0 0.0
  %2076 = vmatprep.subr.mxu0 0.0
  %2077 = vmatpush1.msra.mxu0 0.0
  %2078 = vmatprep.subr.mxu0 0.0
  %2079 = vmatpush1.msra.mxu0 0.0
  %2080 = vmatprep.subr.mxu0 0.0
  %2081 = vmatpush1.msra.mxu0 0.0
  %2082 = vmatprep.subr.mxu0 0.0
  %2083 = vmatpush1.msra.mxu0 0.0
  %2084 = vmatprep.subr.mxu0 0.0
  %2085 = vmatpush1.msra.mxu0 0.0
  %2086 = vmatprep.subr.mxu0 0.0
  %2087 = vmatpush1.msra.mxu0 0.0
  %2088 = vmatprep.subr.mxu0 0.0
  %2089 = vmatpush1.msra.mxu0 0.0
  %2090 = vmatprep.subr.mxu0 0.0
  %2091 = vmatpush1.msra.mxu0 0.0
  %2092 = vmatprep.subr.mxu0 0.0
  %2093 = vmatpush1.msra.mxu0 0.0
  %2094 = vmatprep.subr.mxu0 0.0
  %2095 = vmatpush1.msra.mxu0 0.0
  %2096 = vmatprep.subr.mxu0 0.0
  %2097 = vmatpush1.msra.mxu0 0.0
  %2098 = vmatprep.subr.mxu0 0.0
  %2099 = vmatpush1.msra.mxu0 0.0
  %2100 = vmatprep.subr.mxu0 0.0
  %2101 = vmatpush1.msra.mxu0 0.0
  %2102 = vmatprep.subr.mxu0 0.0
  %2103 = vmatpush1.msra.mxu0 0.0
  %2104 = vmatprep.subr.mxu0 0.0
  %2105 = vmatpush1.msra.mxu0 0.0
  %2106 = vmatprep.mubr.f32.mxu0 0.0
  %2107 = vmatmul.mubr.f32.gmra.mrb[0].mxu0 %v2032
  %v2108 = vpop.f32.mrb[0].mxu0
  %v2109 = vadd.f32 0.0, %v2108
  %v2110 = vpop.f32.mrb[0].mxu0
  %v2111 = vadd.f32 0.0, %v2110
  %2112 = vdwg.mxu0
  %2113 = vmatprep.subr.mxu0 %v899
  %2114 = vmatpush1.msra.mxu0 %v898
  %2115 = vmatprep.subr.mxu0 %v903
  %2116 = vmatpush1.msra.mxu0 %v902
  %2117 = vmatprep.subr.mxu0 %v907
  %2118 = vmatpush1.msra.mxu0 %v906
  %2119 = vmatprep.subr.mxu0 %v911
  %2120 = vmatpush1.msra.mxu0 %v910
  %2121 = vmatprep.subr.mxu0 %v915
  %2122 = vmatpush1.msra.mxu0 %v914
  %2123 = vmatprep.subr.mxu0 %v919
  %2124 = vmatpush1.msra.mxu0 %v918
  %2125 = vmatprep.subr.mxu0 %v923
  %2126 = vmatpush1.msra.mxu0 %v922
  %2127 = vmatprep.subr.mxu0 %v927
  %2128 = vmatpush1.msra.mxu0 %v926
  %2129 = vmatprep.subr.mxu0 %v931
  %2130 = vmatpush1.msra.mxu0 %v930
  %2131 = vmatprep.subr.mxu0 %v935
  %2132 = vmatpush1.msra.mxu0 %v934
  %2133 = vmatprep.subr.mxu0 %v939
  %2134 = vmatpush1.msra.mxu0 %v938
  %2135 = vmatprep.subr.mxu0 %v943
  %2136 = vmatpush1.msra.mxu0 %v942
  %2137 = vmatprep.subr.mxu0 %v947
  %2138 = vmatpush1.msra.mxu0 %v946
  %2139 = vmatprep.subr.mxu0 %v951
  %2140 = vmatpush1.msra.mxu0 %v950
  %2141 = vmatprep.subr.mxu0 %v955
  %2142 = vmatpush1.msra.mxu0 %v954
  %2143 = vmatprep.subr.mxu0 %v959
  %2144 = vmatpush1.msra.mxu0 %v958
  %2145 = vmatprep.subr.mxu0 0.0
  %2146 = vmatpush1.msra.mxu0 0.0
  %2147 = vmatprep.subr.mxu0 0.0
  %2148 = vmatpush1.msra.mxu0 0.0
  %2149 = vmatprep.subr.mxu0 0.0
  %2150 = vmatpush1.msra.mxu0 0.0
  %2151 = vmatprep.subr.mxu0 0.0
  %2152 = vmatpush1.msra.mxu0 0.0
  %2153 = vmatprep.subr.mxu0 0.0
  %2154 = vmatpush1.msra.mxu0 0.0
  %2155 = vmatprep.subr.mxu0 0.0
  %2156 = vmatpush1.msra.mxu0 0.0
  %2157 = vmatprep.subr.mxu0 0.0
  %2158 = vmatpush1.msra.mxu0 0.0
  %2159 = vmatprep.subr.mxu0 0.0
  %2160 = vmatpush1.msra.mxu0 0.0
  %2161 = vmatprep.subr.mxu0 0.0
  %2162 = vmatpush1.msra.mxu0 0.0
  %2163 = vmatprep.subr.mxu0 0.0
  %2164 = vmatpush1.msra.mxu0 0.0
  %2165 = vmatprep.subr.mxu0 0.0
  %2166 = vmatpush1.msra.mxu0 0.0
  %2167 = vmatprep.subr.mxu0 0.0
  %2168 = vmatpush1.msra.mxu0 0.0
  %2169 = vmatprep.subr.mxu0 0.0
  %2170 = vmatpush1.msra.mxu0 0.0
  %2171 = vmatprep.subr.mxu0 0.0
  %2172 = vmatpush1.msra.mxu0 0.0
  %2173 = vmatprep.subr.mxu0 0.0
  %2174 = vmatpush1.msra.mxu0 0.0
  %2175 = vmatprep.subr.mxu0 0.0
  %2176 = vmatpush1.msra.mxu0 0.0
  %2177 = vmatprep.mubr.f32.mxu0 0.0
  %2178 = vmatmul.mubr.f32.gmra.mrb[0].mxu0 %v2032
  %v2179 = vpop.f32.mrb[0].mxu0
  %v2180 = vadd.f32 0.0, %v2179
  %v2181 = vpop.f32.mrb[0].mxu0
  %v2182 = vadd.f32 0.0, %v2181
  %2183 = vdwg.mxu0
  %v2184 = vadd.f32 %v2038, %v2109
  %v2185 = vadd.f32 %v2039, %v2111
  %v2186 = vadd.f32 %v2040, %v2180
  %v2187 = vadd.f32 %v2041, %v2182
  %v2188 = vxor.u32 %v2184, 2147483648
  %v2189 = vxor.u32 %v2185, 2147483648
  %v2190 = vxor.u32 %v2186, 2147483648
  %v2191 = vmul.f32 %v2188, 1.442695
  %v2192 = vpow.pop %v2191
  %v2193 = vmul.f32 %v2189, 1.442695
  %v2194 = vpow.pop %v2193
  %v2195 = vmul.f32 %v2190, 1.442695
  %v2196 = vpow.pop %v2195
  %v2197 = vadd.f32 %v2192, 1.0
  %v2198 = vadd.f32 %v2194, 1.0
  %v2199 = vadd.f32 %v2196, 1.0
  %v2200 = vrcp.pop %v2197
  %v2201 = vmul.f32 1.0, %v2200
  %v2202 = vrcp.pop %v2198
  %v2203 = vmul.f32 1.0, %v2202
  %v2204 = vrcp.pop %v2199
  %v2205 = vmul.f32 1.0, %v2204
  %v2206 = vtanh.pop %v2187
  %v2207 = vmul.f32 %v2203, %v2030
  %v2208 = vmul.f32 %v2201, %v2206
  %v2209 = vadd.f32 %v2207, %v2208
  %v2210 = vtanh.pop %v2209
  %v2211 = vmul.f32 %v2205, %v2210
  %s2212 = scalar_lea.vmem [#allocation4], 48
  %2213 = vst [vmem:[%s2212] sm:$0xff] %v2211
  %s2214 = smul.u32 7, 4
  %s2215 = smul.addr %s2214, 8
  %s2216 = scalar_lea.vmem %s0, %s2215
  %v2217 = vld [vmem:[%s2216] sm:$0xff]
  %v2218 = vld [vmem:[%s2216 + $0x8] sm:$0xff]
  %v2219 = vld [vmem:[%s2216 + $0x10] sm:$0xff]
  %v2220 = vld [vmem:[%s2216 + $0x18] sm:$0xff]
  %2221 = vmatprep.subr.mxu0 %v897
  %2222 = vmatpush1.msra.mxu0 %v896
  %2223 = vmatprep.subr.mxu0 %v901
  %2224 = vmatpush1.msra.mxu0 %v900
  %2225 = vmatprep.subr.mxu0 %v905
  %2226 = vmatpush1.msra.mxu0 %v904
  %2227 = vmatprep.subr.mxu0 %v909
  %2228 = vmatpush1.msra.mxu0 %v908
  %2229 = vmatprep.subr.mxu0 %v913
  %2230 = vmatpush1.msra.mxu0 %v912
  %2231 = vmatprep.subr.mxu0 %v917
  %2232 = vmatpush1.msra.mxu0 %v916
  %2233 = vmatprep.subr.mxu0 %v921
  %2234 = vmatpush1.msra.mxu0 %v920
  %2235 = vmatprep.subr.mxu0 %v925
  %2236 = vmatpush1.msra.mxu0 %v924
  %2237 = vmatprep.subr.mxu0 %v929
  %2238 = vmatpush1.msra.mxu0 %v928
  %2239 = vmatprep.subr.mxu0 %v933
  %2240 = vmatpush1.msra.mxu0 %v932
  %2241 = vmatprep.subr.mxu0 %v937
  %2242 = vmatpush1.msra.mxu0 %v936
  %2243 = vmatprep.subr.mxu0 %v941
  %2244 = vmatpush1.msra.mxu0 %v940
  %2245 = vmatprep.subr.mxu0 %v945
  %2246 = vmatpush1.msra.mxu0 %v944
  %2247 = vmatprep.subr.mxu0 %v949
  %2248 = vmatpush1.msra.mxu0 %v948
  %2249 = vmatprep.subr.mxu0 %v953
  %2250 = vmatpush1.msra.mxu0 %v952
  %2251 = vmatprep.subr.mxu0 %v957
  %2252 = vmatpush1.msra.mxu0 %v956
  %2253 = vmatprep.subr.mxu0 0.0
  %2254 = vmatpush1.msra.mxu0 0.0
  %2255 = vmatprep.subr.mxu0 0.0
  %2256 = vmatpush1.msra.mxu0 0.0
  %2257 = vmatprep.subr.mxu0 0.0
  %2258 = vmatpush1.msra.mxu0 0.0
  %2259 = vmatprep.subr.mxu0 0.0
  %2260 = vmatpush1.msra.mxu0 0.0
  %2261 = vmatprep.subr.mxu0 0.0
  %2262 = vmatpush1.msra.mxu0 0.0
  %2263 = vmatprep.subr.mxu0 0.0
  %2264 = vmatpush1.msra.mxu0 0.0
  %2265 = vmatprep.subr.mxu0 0.0
  %2266 = vmatpush1.msra.mxu0 0.0
  %2267 = vmatprep.subr.mxu0 0.0
  %2268 = vmatpush1.msra.mxu0 0.0
  %2269 = vmatprep.subr.mxu0 0.0
  %2270 = vmatpush1.msra.mxu0 0.0
  %2271 = vmatprep.subr.mxu0 0.0
  %2272 = vmatpush1.msra.mxu0 0.0
  %2273 = vmatprep.subr.mxu0 0.0
  %2274 = vmatpush1.msra.mxu0 0.0
  %2275 = vmatprep.subr.mxu0 0.0
  %2276 = vmatpush1.msra.mxu0 0.0
  %2277 = vmatprep.subr.mxu0 0.0
  %2278 = vmatpush1.msra.mxu0 0.0
  %2279 = vmatprep.subr.mxu0 0.0
  %2280 = vmatpush1.msra.mxu0 0.0
  %2281 = vmatprep.subr.mxu0 0.0
  %2282 = vmatpush1.msra.mxu0 0.0
  %2283 = vmatprep.subr.mxu0 0.0
  %2284 = vmatpush1.msra.mxu0 0.0
  %2285 = vmatprep.mubr.f32.mxu0 0.0
  %2286 = vmatmul.mubr.f32.gmra.mrb[0].mxu0 %v2211
  %v2287 = vpop.f32.mrb[0].mxu0
  %v2288 = vadd.f32 0.0, %v2287
  %v2289 = vpop.f32.mrb[0].mxu0
  %v2290 = vadd.f32 0.0, %v2289
  %2291 = vdwg.mxu0
  %2292 = vmatprep.subr.mxu0 %v899
  %2293 = vmatpush1.msra.mxu0 %v898
  %2294 = vmatprep.subr.mxu0 %v903
  %2295 = vmatpush1.msra.mxu0 %v902
  %2296 = vmatprep.subr.mxu0 %v907
  %2297 = vmatpush1.msra.mxu0 %v906
  %2298 = vmatprep.subr.mxu0 %v911
  %2299 = vmatpush1.msra.mxu0 %v910
  %2300 = vmatprep.subr.mxu0 %v915
  %2301 = vmatpush1.msra.mxu0 %v914
  %2302 = vmatprep.subr.mxu0 %v919
  %2303 = vmatpush1.msra.mxu0 %v918
  %2304 = vmatprep.subr.mxu0 %v923
  %2305 = vmatpush1.msra.mxu0 %v922
  %2306 = vmatprep.subr.mxu0 %v927
  %2307 = vmatpush1.msra.mxu0 %v926
  %2308 = vmatprep.subr.mxu0 %v931
  %2309 = vmatpush1.msra.mxu0 %v930
  %2310 = vmatprep.subr.mxu0 %v935
  %2311 = vmatpush1.msra.mxu0 %v934
  %2312 = vmatprep.subr.mxu0 %v939
  %2313 = vmatpush1.msra.mxu0 %v938
  %2314 = vmatprep.subr.mxu0 %v943
  %2315 = vmatpush1.msra.mxu0 %v942
  %2316 = vmatprep.subr.mxu0 %v947
  %2317 = vmatpush1.msra.mxu0 %v946
  %2318 = vmatprep.subr.mxu0 %v951
  %2319 = vmatpush1.msra.mxu0 %v950
  %2320 = vmatprep.subr.mxu0 %v955
  %2321 = vmatpush1.msra.mxu0 %v954
  %2322 = vmatprep.subr.mxu0 %v959
  %2323 = vmatpush1.msra.mxu0 %v958
  %2324 = vmatprep.subr.mxu0 0.0
  %2325 = vmatpush1.msra.mxu0 0.0
  %2326 = vmatprep.subr.mxu0 0.0
  %2327 = vmatpush1.msra.mxu0 0.0
  %2328 = vmatprep.subr.mxu0 0.0
  %2329 = vmatpush1.msra.mxu0 0.0
  %2330 = vmatprep.subr.mxu0 0.0
  %2331 = vmatpush1.msra.mxu0 0.0
  %2332 = vmatprep.subr.mxu0 0.0
  %2333 = vmatpush1.msra.mxu0 0.0
  %2334 = vmatprep.subr.mxu0 0.0
  %2335 = vmatpush1.msra.mxu0 0.0
  %2336 = vmatprep.subr.mxu0 0.0
  %2337 = vmatpush1.msra.mxu0 0.0
  %2338 = vmatprep.subr.mxu0 0.0
  %2339 = vmatpush1.msra.mxu0 0.0
  %2340 = vmatprep.subr.mxu0 0.0
  %2341 = vmatpush1.msra.mxu0 0.0
  %2342 = vmatprep.subr.mxu0 0.0
  %2343 = vmatpush1.msra.mxu0 0.0
  %2344 = vmatprep.subr.mxu0 0.0
  %2345 = vmatpush1.msra.mxu0 0.0
  %2346 = vmatprep.subr.mxu0 0.0
  %2347 = vmatpush1.msra.mxu0 0.0
  %2348 = vmatprep.subr.mxu0 0.0
  %2349 = vmatpush1.msra.mxu0 0.0
  %2350 = vmatprep.subr.mxu0 0.0
  %2351 = vmatpush1.msra.mxu0 0.0
  %2352 = vmatprep.subr.mxu0 0.0
  %2353 = vmatpush1.msra.mxu0 0.0
  %2354 = vmatprep.subr.mxu0 0.0
  %2355 = vmatpush1.msra.mxu0 0.0
  %2356 = vmatprep.mubr.f32.mxu0 0.0
  %2357 = vmatmul.mubr.f32.gmra.mrb[0].mxu0 %v2211
  %v2358 = vpop.f32.mrb[0].mxu0
  %v2359 = vadd.f32 0.0, %v2358
  %v2360 = vpop.f32.mrb[0].mxu0
  %v2361 = vadd.f32 0.0, %v2360
  %2362 = vdwg.mxu0
  %v2363 = vadd.f32 %v2217, %v2288
  %v2364 = vadd.f32 %v2218, %v2290
  %v2365 = vadd.f32 %v2219, %v2359
  %v2366 = vadd.f32 %v2220, %v2361
  %v2367 = vxor.u32 %v2363, 2147483648
  %v2368 = vxor.u32 %v2364, 2147483648
  %v2369 = vxor.u32 %v2365, 2147483648
  %v2370 = vmul.f32 %v2367, 1.442695
  %v2371 = vpow.pop %v2370
  %v2372 = vmul.f32 %v2368, 1.442695
  %v2373 = vpow.pop %v2372
  %v2374 = vmul.f32 %v2369, 1.442695
  %v2375 = vpow.pop %v2374
  %v2376 = vadd.f32 %v2371, 1.0
  %v2377 = vadd.f32 %v2373, 1.0
  %v2378 = vadd.f32 %v2375, 1.0
  %v2379 = vrcp.pop %v2376
  %v2380 = vmul.f32 1.0, %v2379
  %v2381 = vrcp.pop %v2377
  %v2382 = vmul.f32 1.0, %v2381
  %v2383 = vrcp.pop %v2378
  %v2384 = vmul.f32 1.0, %v2383
  %v2385 = vtanh.pop %v2366
  %v2386 = vmul.f32 %v2382, %v2209
  %v2387 = vmul.f32 %v2380, %v2385
  %v2388 = vadd.f32 %v2386, %v2387
  %v2389 = vtanh.pop %v2388
  %v2390 = vmul.f32 %v2384, %v2389
  %s2391 = scalar_lea.vmem [#allocation4], 56
  %2392 = vst [vmem:[%s2391] sm:$0xff] %v2390
  %2393 = vst [vmem:[#allocation2] sm:$0xff] %v2390
  %2394 = vst [vmem:[#allocation3] sm:$0xff] %v2388
  %v2395 = vld [vmem:[#allocation4] sm:$0xff]
  %v2396 = vld [vmem:[#allocation4 + $0x8] sm:$0xff]
  %v2397 = vld [vmem:[#allocation4 + $0x10] sm:$0xff]
  %v2398 = vld [vmem:[#allocation4 + $0x18] sm:$0xff]
  %v2399 = vld [vmem:[#allocation4 + $0x20] sm:$0xff]
  %v2400 = vld [vmem:[#allocation4 + $0x28] sm:$0xff]
  %v2401 = vld [vmem:[#allocation4 + $0x30] sm:$0xff]
  %v2402 = vld [vmem:[#allocation4 + $0x38] sm:$0xff]
  %v2403 = vld [vmem:[#allocation6] sm:$0xff]
  %v2404 = vld [vmem:[#allocation6 + $0x8] sm:$0xff]
  %v2405 = vld [vmem:[#allocation6 + $0x10] sm:$0xff]
  %v2406 = vld [vmem:[#allocation6 + $0x18] sm:$0xff]
  %v2407 = vld [vmem:[#allocation6 + $0x20] sm:$0xff]
  %v2408 = vld [vmem:[#allocation6 + $0x28] sm:$0xff]
  %v2409 = vld [vmem:[#allocation6 + $0x30] sm:$0xff]
  %v2410 = vld [vmem:[#allocation6 + $0x38] sm:$0xff]
  %v2411 = vld [vmem:[#allocation6 + $0x40] sm:$0xff]
  %v2412 = vld [vmem:[#allocation6 + $0x48] sm:$0xff]
  %v2413 = vld [vmem:[#allocation6 + $0x50] sm:$0xff]
  %v2414 = vld [vmem:[#allocation6 + $0x58] sm:$0xff]
  %v2415 = vld [vmem:[#allocation6 + $0x60] sm:$0xff]
  %v2416 = vld [vmem:[#allocation6 + $0x68] sm:$0xff]
  %v2417 = vld [vmem:[#allocation6 + $0x70] sm:$0xff]
  %v2418 = vld [vmem:[#allocation6 + $0x78] sm:$0xff]
  %v2419 = vld [vmem:[#allocation6 + $0x80] sm:$0xff]
  %v2420 = vld [vmem:[#allocation6 + $0x88] sm:$0xff]
  %v2421 = vld [vmem:[#allocation6 + $0x90] sm:$0xff]
  %v2422 = vld [vmem:[#allocation6 + $0x98] sm:$0xff]
  %v2423 = vld [vmem:[#allocation6 + $0xa0] sm:$0xff]
  %v2424 = vld [vmem:[#allocation6 + $0xa8] sm:$0xff]
  %v2425 = vld [vmem:[#allocation6 + $0xb0] sm:$0xff]
  %v2426 = vld [vmem:[#allocation6 + $0xb8] sm:$0xff]
  %v2427 = vld [vmem:[#allocation6 + $0xc0] sm:$0xff]
  %v2428 = vld [vmem:[#allocation6 + $0xc8] sm:$0xff]
  %v2429 = vld [vmem:[#allocation6 + $0xd0] sm:$0xff]
  %v2430 = vld [vmem:[#allocation6 + $0xd8] sm:$0xff]
  %v2431 = vld [vmem:[#allocation6 + $0xe0] sm:$0xff]
  %v2432 = vld [vmem:[#allocation6 + $0xe8] sm:$0xff]
  %v2433 = vld [vmem:[#allocation6 + $0xf0] sm:$0xff]
  %v2434 = vld [vmem:[#allocation6 + $0xf8] sm:$0xff]
  %v2435 = vld [vmem:[#allocation6 + $0x100] sm:$0xff]
  %v2436 = vld [vmem:[#allocation6 + $0x108] sm:$0xff]
  %v2437 = vld [vmem:[#allocation6 + $0x110] sm:$0xff]
  %v2438 = vld [vmem:[#allocation6 + $0x118] sm:$0xff]
  %v2439 = vld [vmem:[#allocation6 + $0x120] sm:$0xff]
  %v2440 = vld [vmem:[#allocation6 + $0x128] sm:$0xff]
  %v2441 = vld [vmem:[#allocation6 + $0x130] sm:$0xff]
  %v2442 = vld [vmem:[#allocation6 + $0x138] sm:$0xff]
  %v2443 = vld [vmem:[#allocation6 + $0x140] sm:$0xff]
  %v2444 = vld [vmem:[#allocation6 + $0x148] sm:$0xff]
  %v2445 = vld [vmem:[#allocation6 + $0x150] sm:$0xff]
  %v2446 = vld [vmem:[#allocation6 + $0x158] sm:$0xff]
  %v2447 = vld [vmem:[#allocation6 + $0x160] sm:$0xff]
  %v2448 = vld [vmem:[#allocation6 + $0x168] sm:$0xff]
  %v2449 = vld [vmem:[#allocation6 + $0x170] sm:$0xff]
  %v2450 = vld [vmem:[#allocation6 + $0x178] sm:$0xff]
  %v2451 = vld [vmem:[#allocation6 + $0x180] sm:$0xff]
  %v2452 = vld [vmem:[#allocation6 + $0x188] sm:$0xff]
  %v2453 = vld [vmem:[#allocation6 + $0x190] sm:$0xff]
  %v2454 = vld [vmem:[#allocation6 + $0x198] sm:$0xff]
  %v2455 = vld [vmem:[#allocation6 + $0x1a0] sm:$0xff]
  %v2456 = vld [vmem:[#allocation6 + $0x1a8] sm:$0xff]
  %v2457 = vld [vmem:[#allocation6 + $0x1b0] sm:$0xff]
  %v2458 = vld [vmem:[#allocation6 + $0x1b8] sm:$0xff]
  %v2459 = vld [vmem:[#allocation6 + $0x1c0] sm:$0xff]
  %v2460 = vld [vmem:[#allocation6 + $0x1c8] sm:$0xff]
  %v2461 = vld [vmem:[#allocation6 + $0x1d0] sm:$0xff]
  %v2462 = vld [vmem:[#allocation6 + $0x1d8] sm:$0xff]
  %v2463 = vld [vmem:[#allocation6 + $0x1e0] sm:$0xff]
  %v2464 = vld [vmem:[#allocation6 + $0x1e8] sm:$0xff]
  %v2465 = vld [vmem:[#allocation6 + $0x1f0] sm:$0xff]
  %v2466 = vld [vmem:[#allocation6 + $0x1f8] sm:$0xff]
  %v2467 = vld [vmem:[%s6] sm:$0xf]
  %v2469 = vlaneseq
  %v2470 = vshrl.u32 %v2469, 7
  %v2471 = vsub.s32 0, %v2470
  %v2472 = vrot.slane %v2467, %v2471
  %v2473 = vlaneseq
  %v2474 = vshrl.u32 %v2473, 7
  %v2475 = vsub.s32 1, %v2474
  %v2476 = vrot.slane %v2467, %v2475
  %v2477 = vlaneseq
  %v2478 = vshrl.u32 %v2477, 7
  %v2479 = vsub.s32 2, %v2478
  %v2480 = vrot.slane %v2467, %v2479
  %v2481 = vlaneseq
  %v2482 = vshrl.u32 %v2481, 7
  %v2483 = vsub.s32 3, %v2482
  %v2484 = vrot.slane %v2467, %v2483
  %2489 = vmatprep.subr.mxu0 %v2404
  %2490 = vmatpush1.msra.mxu0 %v2403
  %2491 = vmatprep.subr.mxu0 %v2408
  %2492 = vmatpush1.msra.mxu0 %v2407
  %2493 = vmatprep.subr.mxu0 %v2412
  %2494 = vmatpush1.msra.mxu0 %v2411
  %2495 = vmatprep.subr.mxu0 %v2416
  %2496 = vmatpush1.msra.mxu0 %v2415
  %2497 = vmatprep.subr.mxu0 %v2420
  %2498 = vmatpush1.msra.mxu0 %v2419
  %2499 = vmatprep.subr.mxu0 %v2424
  %2500 = vmatpush1.msra.mxu0 %v2423
  %2501 = vmatprep.subr.mxu0 %v2428
  %2502 = vmatpush1.msra.mxu0 %v2427
  %2503 = vmatprep.subr.mxu0 %v2432
  %2504 = vmatpush1.msra.mxu0 %v2431
  %2505 = vmatprep.subr.mxu0 %v2436
  %2506 = vmatpush1.msra.mxu0 %v2435
  %2507 = vmatprep.subr.mxu0 %v2440
  %2508 = vmatpush1.msra.mxu0 %v2439
  %2509 = vmatprep.subr.mxu0 %v2444
  %2510 = vmatpush1.msra.mxu0 %v2443
  %2511 = vmatprep.subr.mxu0 %v2448
  %2512 = vmatpush1.msra.mxu0 %v2447
  %2513 = vmatprep.subr.mxu0 %v2452
  %2514 = vmatpush1.msra.mxu0 %v2451
  %2515 = vmatprep.subr.mxu0 %v2456
  %2516 = vmatpush1.msra.mxu0 %v2455
  %2517 = vmatprep.subr.mxu0 %v2460
  %2518 = vmatpush1.msra.mxu0 %v2459
  %2519 = vmatprep.subr.mxu0 %v2464
  %2520 = vmatpush1.msra.mxu0 %v2463
  %2521 = vmatprep.subr.mxu0 0.0
  %2522 = vmatpush1.msra.mxu0 0.0
  %2523 = vmatprep.subr.mxu0 0.0
  %2524 = vmatpush1.msra.mxu0 0.0
  %2525 = vmatprep.subr.mxu0 0.0
  %2526 = vmatpush1.msra.mxu0 0.0
  %2527 = vmatprep.subr.mxu0 0.0
  %2528 = vmatpush1.msra.mxu0 0.0
  %2529 = vmatprep.subr.mxu0 0.0
  %2530 = vmatpush1.msra.mxu0 0.0
  %2531 = vmatprep.subr.mxu0 0.0
  %2532 = vmatpush1.msra.mxu0 0.0
  %2533 = vmatprep.subr.mxu0 0.0
  %2534 = vmatpush1.msra.mxu0 0.0
  %2535 = vmatprep.subr.mxu0 0.0
  %2536 = vmatpush1.msra.mxu0 0.0
  %2537 = vmatprep.subr.mxu0 0.0
  %2538 = vmatpush1.msra.mxu0 0.0
  %2539 = vmatprep.subr.mxu0 0.0
  %2540 = vmatpush1.msra.mxu0 0.0
  %2541 = vmatprep.subr.mxu0 0.0
  %2542 = vmatpush1.msra.mxu0 0.0
  %2543 = vmatprep.subr.mxu0 0.0
  %2544 = vmatpush1.msra.mxu0 0.0
  %2545 = vmatprep.subr.mxu0 0.0
  %2546 = vmatpush1.msra.mxu0 0.0
  %2547 = vmatprep.subr.mxu0 0.0
  %2548 = vmatpush1.msra.mxu0 0.0
  %2549 = vmatprep.subr.mxu0 0.0
  %2550 = vmatpush1.msra.mxu0 0.0
  %2551 = vmatprep.subr.mxu0 0.0
  %2552 = vmatpush1.msra.mxu0 0.0
  %2553 = vmatprep.mubr.f32.mxu0 0.0
  %2554 = vmatmul.mubr.f32.gmra.mrb[0].mxu0 %v2395
  %v2555 = vpop.f32.mrb[0].mxu0
  %v2556 = vadd.f32 %v2472, %v2555
  %v2557 = vpop.f32.mrb[0].mxu0
  %v2558 = vadd.f32 %v2476, %v2557
  %2559 = vmatprep.mubr.f32.mxu0 0.0
  %2560 = vmatmul.mubr.f32.gmra.mrb[0].mxu0 %v2396
  %v2561 = vpop.f32.mrb[0].mxu0
  %v2562 = vadd.f32 %v2472, %v2561
  %v2563 = vpop.f32.mrb[0].mxu0
  %v2564 = vadd.f32 %v2476, %v2563
  %2565 = vmatprep.mubr.f32.mxu0 0.0
  %2566 = vmatmul.mubr.f32.gmra.mrb[0].mxu0 %v2397
  %v2567 = vpop.f32.mrb[0].mxu0
  %v2568 = vadd.f32 %v2472, %v2567
  %v2569 = vpop.f32.mrb[0].mxu0
  %v2570 = vadd.f32 %v2476, %v2569
  %2571 = vmatprep.mubr.f32.mxu0 0.0
  %2572 = vmatmul.mubr.f32.gmra.mrb[0].mxu0 %v2398
  %v2573 = vpop.f32.mrb[0].mxu0
  %v2574 = vadd.f32 %v2472, %v2573
  %v2575 = vpop.f32.mrb[0].mxu0
  %v2576 = vadd.f32 %v2476, %v2575
  %2577 = vmatprep.mubr.f32.mxu0 0.0
  %2578 = vmatmul.mubr.f32.gmra.mrb[0].mxu0 %v2399
  %v2579 = vpop.f32.mrb[0].mxu0
  %v2580 = vadd.f32 %v2472, %v2579
  %v2581 = vpop.f32.mrb[0].mxu0
  %v2582 = vadd.f32 %v2476, %v2581
  %2583 = vmatprep.mubr.f32.mxu0 0.0
  %2584 = vmatmul.mubr.f32.gmra.mrb[0].mxu0 %v2400
  %v2585 = vpop.f32.mrb[0].mxu0
  %v2586 = vadd.f32 %v2472, %v2585
  %v2587 = vpop.f32.mrb[0].mxu0
  %v2588 = vadd.f32 %v2476, %v2587
  %2589 = vmatprep.mubr.f32.mxu0 0.0
  %2590 = vmatmul.mubr.f32.gmra.mrb[0].mxu0 %v2401
  %v2591 = vpop.f32.mrb[0].mxu0
  %v2592 = vadd.f32 %v2472, %v2591
  %v2593 = vpop.f32.mrb[0].mxu0
  %v2594 = vadd.f32 %v2476, %v2593
  %2595 = vmatprep.mubr.f32.mxu0 0.0
  %2596 = vmatmul.mubr.f32.gmra.mrb[0].mxu0 %v2402
  %v2597 = vpop.f32.mrb[0].mxu0
  %v2598 = vadd.f32 %v2472, %v2597
  %v2599 = vpop.f32.mrb[0].mxu0
  %v2600 = vadd.f32 %v2476, %v2599
  %2601 = vdwg.mxu0
  %2602 = vmatprep.subr.mxu0 %v2406
  %2603 = vmatpush1.msra.mxu0 %v2405
  %2604 = vmatprep.subr.mxu0 %v2410
  %2605 = vmatpush1.msra.mxu0 %v2409
  %2606 = vmatprep.subr.mxu0 %v2414
  %2607 = vmatpush1.msra.mxu0 %v2413
  %2608 = vmatprep.subr.mxu0 %v2418
  %2609 = vmatpush1.msra.mxu0 %v2417
  %2610 = vmatprep.subr.mxu0 %v2422
  %2611 = vmatpush1.msra.mxu0 %v2421
  %2612 = vmatprep.subr.mxu0 %v2426
  %2613 = vmatpush1.msra.mxu0 %v2425
  %2614 = vmatprep.subr.mxu0 %v2430
  %2615 = vmatpush1.msra.mxu0 %v2429
  %2616 = vmatprep.subr.mxu0 %v2434
  %2617 = vmatpush1.msra.mxu0 %v2433
  %2618 = vmatprep.subr.mxu0 %v2438
  %2619 = vmatpush1.msra.mxu0 %v2437
  %2620 = vmatprep.subr.mxu0 %v2442
  %2621 = vmatpush1.msra.mxu0 %v2441
  %2622 = vmatprep.subr.mxu0 %v2446
  %2623 = vmatpush1.msra.mxu0 %v2445
  %2624 = vmatprep.subr.mxu0 %v2450
  %2625 = vmatpush1.msra.mxu0 %v2449
  %2626 = vmatprep.subr.mxu0 %v2454
  %2627 = vmatpush1.msra.mxu0 %v2453
  %2628 = vmatprep.subr.mxu0 %v2458
  %2629 = vmatpush1.msra.mxu0 %v2457
  %2630 = vmatprep.subr.mxu0 %v2462
  %2631 = vmatpush1.msra.mxu0 %v2461
  %2632 = vmatprep.subr.mxu0 %v2466
  %2633 = vmatpush1.msra.mxu0 %v2465
  %2634 = vmatprep.subr.mxu0 0.0
  %2635 = vmatpush1.msra.mxu0 0.0
  %2636 = vmatprep.subr.mxu0 0.0
  %2637 = vmatpush1.msra.mxu0 0.0
  %2638 = vmatprep.subr.mxu0 0.0
  %2639 = vmatpush1.msra.mxu0 0.0
  %2640 = vmatprep.subr.mxu0 0.0
  %2641 = vmatpush1.msra.mxu0 0.0
  %2642 = vmatprep.subr.mxu0 0.0
  %2643 = vmatpush1.msra.mxu0 0.0
  %2644 = vmatprep.subr.mxu0 0.0
  %2645 = vmatpush1.msra.mxu0 0.0
  %2646 = vmatprep.subr.mxu0 0.0
  %2647 = vmatpush1.msra.mxu0 0.0
  %2648 = vmatprep.subr.mxu0 0.0
  %2649 = vmatpush1.msra.mxu0 0.0
  %2650 = vmatprep.subr.mxu0 0.0
  %2651 = vmatpush1.msra.mxu0 0.0
  %2652 = vmatprep.subr.mxu0 0.0
  %2653 = vmatpush1.msra.mxu0 0.0
  %2654 = vmatprep.subr.mxu0 0.0
  %2655 = vmatpush1.msra.mxu0 0.0
  %2656 = vmatprep.subr.mxu0 0.0
  %2657 = vmatpush1.msra.mxu0 0.0
  %2658 = vmatprep.subr.mxu0 0.0
  %2659 = vmatpush1.msra.mxu0 0.0
  %2660 = vmatprep.subr.mxu0 0.0
  %2661 = vmatpush1.msra.mxu0 0.0
  %2662 = vmatprep.subr.mxu0 0.0
  %2663 = vmatpush1.msra.mxu0 0.0
  %2664 = vmatprep.subr.mxu0 0.0
  %2665 = vmatpush1.msra.mxu0 0.0
  %2666 = vmatprep.mubr.f32.mxu0 0.0
  %2667 = vmatmul.mubr.f32.gmra.mrb[0].mxu0 %v2395
  %v2668 = vpop.f32.mrb[0].mxu0
  %v2669 = vadd.f32 %v2480, %v2668
  %v2670 = vpop.f32.mrb[0].mxu0
  %v2671 = vadd.f32 %v2484, %v2670
  %2672 = vmatprep.mubr.f32.mxu0 0.0
  %2673 = vmatmul.mubr.f32.gmra.mrb[0].mxu0 %v2396
  %v2674 = vpop.f32.mrb[0].mxu0
  %v2675 = vadd.f32 %v2480, %v2674
  %v2676 = vpop.f32.mrb[0].mxu0
  %v2677 = vadd.f32 %v2484, %v2676
  %2678 = vmatprep.mubr.f32.mxu0 0.0
  %2679 = vmatmul.mubr.f32.gmra.mrb[0].mxu0 %v2397
  %v2680 = vpop.f32.mrb[0].mxu0
  %v2681 = vadd.f32 %v2480, %v2680
  %v2682 = vpop.f32.mrb[0].mxu0
  %v2683 = vadd.f32 %v2484, %v2682
  %2684 = vmatprep.mubr.f32.mxu0 0.0
  %2685 = vmatmul.mubr.f32.gmra.mrb[0].mxu0 %v2398
  %v2686 = vpop.f32.mrb[0].mxu0
  %v2687 = vadd.f32 %v2480, %v2686
  %v2688 = vpop.f32.mrb[0].mxu0
  %v2689 = vadd.f32 %v2484, %v2688
  %2690 = vmatprep.mubr.f32.mxu0 0.0
  %2691 = vmatmul.mubr.f32.gmra.mrb[0].mxu0 %v2399
  %v2692 = vpop.f32.mrb[0].mxu0
  %v2693 = vadd.f32 %v2480, %v2692
  %v2694 = vpop.f32.mrb[0].mxu0
  %v2695 = vadd.f32 %v2484, %v2694
  %2696 = vmatprep.mubr.f32.mxu0 0.0
  %2697 = vmatmul.mubr.f32.gmra.mrb[0].mxu0 %v2400
  %v2698 = vpop.f32.mrb[0].mxu0
  %v2699 = vadd.f32 %v2480, %v2698
  %v2700 = vpop.f32.mrb[0].mxu0
  %v2701 = vadd.f32 %v2484, %v2700
  %2702 = vmatprep.mubr.f32.mxu0 0.0
  %2703 = vmatmul.mubr.f32.gmra.mrb[0].mxu0 %v2401
  %v2704 = vpop.f32.mrb[0].mxu0
  %v2705 = vadd.f32 %v2480, %v2704
  %v2706 = vpop.f32.mrb[0].mxu0
  %v2707 = vadd.f32 %v2484, %v2706
  %2708 = vmatprep.mubr.f32.mxu0 0.0
  %2709 = vmatmul.mubr.f32.gmra.mrb[0].mxu0 %v2402
  %v2710 = vpop.f32.mrb[0].mxu0
  %v2711 = vadd.f32 %v2480, %v2710
  %v2712 = vpop.f32.mrb[0].mxu0
  %v2713 = vadd.f32 %v2484, %v2712
  %2714 = vdwg.mxu0
  %2715 = vst [vmem:[#allocation5] sm:$0xff] %v2556
  %2716 = vst [vmem:[#allocation5 + $0x8] sm:$0xff] %v2558
  %2717 = vst [vmem:[#allocation5 + $0x10] sm:$0xff] %v2669
  %2718 = vst [vmem:[#allocation5 + $0x18] sm:$0xff] %v2671
  %2719 = vst [vmem:[#allocation5 + $0x20] sm:$0xff] %v2562
  %2720 = vst [vmem:[#allocation5 + $0x28] sm:$0xff] %v2564
  %2721 = vst [vmem:[#allocation5 + $0x30] sm:$0xff] %v2675
  %2722 = vst [vmem:[#allocation5 + $0x38] sm:$0xff] %v2677
  %2723 = vst [vmem:[#allocation5 + $0x40] sm:$0xff] %v2568
  %2724 = vst [vmem:[#allocation5 + $0x48] sm:$0xff] %v2570
  %2725 = vst [vmem:[#allocation5 + $0x50] sm:$0xff] %v2681
  %2726 = vst [vmem:[#allocation5 + $0x58] sm:$0xff] %v2683
  %2727 = vst [vmem:[#allocation5 + $0x60] sm:$0xff] %v2574
  %2728 = vst [vmem:[#allocation5 + $0x68] sm:$0xff] %v2576
  %2729 = vst [vmem:[#allocation5 + $0x70] sm:$0xff] %v2687
  %2730 = vst [vmem:[#allocation5 + $0x78] sm:$0xff] %v2689
  %2731 = vst [vmem:[#allocation5 + $0x80] sm:$0xff] %v2580
  %2732 = vst [vmem:[#allocation5 + $0x88] sm:$0xff] %v2582
  %2733 = vst [vmem:[#allocation5 + $0x90] sm:$0xff] %v2693
  %2734 = vst [vmem:[#allocation5 + $0x98] sm:$0xff] %v2695
  %2735 = vst [vmem:[#allocation5 + $0xa0] sm:$0xff] %v2586
  %2736 = vst [vmem:[#allocation5 + $0xa8] sm:$0xff] %v2588
  %2737 = vst [vmem:[#allocation5 + $0xb0] sm:$0xff] %v2699
  %2738 = vst [vmem:[#allocation5 + $0xb8] sm:$0xff] %v2701
  %2739 = vst [vmem:[#allocation5 + $0xc0] sm:$0xff] %v2592
  %2740 = vst [vmem:[#allocation5 + $0xc8] sm:$0xff] %v2594
  %2741 = vst [vmem:[#allocation5 + $0xd0] sm:$0xff] %v2705
  %2742 = vst [vmem:[#allocation5 + $0xd8] sm:$0xff] %v2707
  %2743 = vst [vmem:[#allocation5 + $0xe0] sm:$0xff] %v2598
  %2744 = vst [vmem:[#allocation5 + $0xe8] sm:$0xff] %v2600
  %2745 = vst [vmem:[#allocation5 + $0xf0] sm:$0xff] %v2711
  %2746 = vst [vmem:[#allocation5 + $0xf8] sm:$0xff] %v2713
  %s2747 = scalar_lea.vmem [#allocation6], 1536
  %v2748 = vld [vmem:[%s2747] sm:$0xff]
  %v2749 = vld [vmem:[%s2747 + $0x8] sm:$0xff]
  %v2750 = vld [vmem:[%s2747 + $0x10] sm:$0xff]
  %v2751 = vld [vmem:[%s2747 + $0x18] sm:$0xff]
  %v2752 = vld [vmem:[%s2747 + $0x20] sm:$0xff]
  %v2753 = vld [vmem:[%s2747 + $0x28] sm:$0xff]
  %v2754 = vld [vmem:[%s2747 + $0x30] sm:$0xff]
  %v2755 = vld [vmem:[%s2747 + $0x38] sm:$0xff]
  %v2756 = vld [vmem:[%s2747 + $0x40] sm:$0xff]
  %v2757 = vld [vmem:[%s2747 + $0x48] sm:$0xff]
  %v2758 = vld [vmem:[%s2747 + $0x50] sm:$0xff]
  %v2759 = vld [vmem:[%s2747 + $0x58] sm:$0xff]
  %v2760 = vld [vmem:[%s2747 + $0x60] sm:$0xff]
  %v2761 = vld [vmem:[%s2747 + $0x68] sm:$0xff]
  %v2762 = vld [vmem:[%s2747 + $0x70] sm:$0xff]
  %v2763 = vld [vmem:[%s2747 + $0x78] sm:$0xff]
  %v2764 = vld [vmem:[%s2747 + $0x80] sm:$0xff]
  %v2765 = vld [vmem:[%s2747 + $0x88] sm:$0xff]
  %v2766 = vld [vmem:[%s2747 + $0x90] sm:$0xff]
  %v2767 = vld [vmem:[%s2747 + $0x98] sm:$0xff]
  %v2768 = vld [vmem:[%s2747 + $0xa0] sm:$0xff]
  %v2769 = vld [vmem:[%s2747 + $0xa8] sm:$0xff]
  %v2770 = vld [vmem:[%s2747 + $0xb0] sm:$0xff]
  %v2771 = vld [vmem:[%s2747 + $0xb8] sm:$0xff]
  %v2772 = vld [vmem:[%s2747 + $0xc0] sm:$0xff]
  %v2773 = vld [vmem:[%s2747 + $0xc8] sm:$0xff]
  %v2774 = vld [vmem:[%s2747 + $0xd0] sm:$0xff]
  %v2775 = vld [vmem:[%s2747 + $0xd8] sm:$0xff]
  %v2776 = vld [vmem:[%s2747 + $0xe0] sm:$0xff]
  %v2777 = vld [vmem:[%s2747 + $0xe8] sm:$0xff]
  %v2778 = vld [vmem:[%s2747 + $0xf0] sm:$0xff]
  %v2779 = vld [vmem:[%s2747 + $0xf8] sm:$0xff]
  %v2780 = vld [vmem:[%s2747 + $0x100] sm:$0xff]
  %v2781 = vld [vmem:[%s2747 + $0x108] sm:$0xff]
  %v2782 = vld [vmem:[%s2747 + $0x110] sm:$0xff]
  %v2783 = vld [vmem:[%s2747 + $0x118] sm:$0xff]
  %v2784 = vld [vmem:[%s2747 + $0x120] sm:$0xff]
  %v2785 = vld [vmem:[%s2747 + $0x128] sm:$0xff]
  %v2786 = vld [vmem:[%s2747 + $0x130] sm:$0xff]
  %v2787 = vld [vmem:[%s2747 + $0x138] sm:$0xff]
  %v2788 = vld [vmem:[%s2747 + $0x140] sm:$0xff]
  %v2789 = vld [vmem:[%s2747 + $0x148] sm:$0xff]
  %v2790 = vld [vmem:[%s2747 + $0x150] sm:$0xff]
  %v2791 = vld [vmem:[%s2747 + $0x158] sm:$0xff]
  %v2792 = vld [vmem:[%s2747 + $0x160] sm:$0xff]
  %v2793 = vld [vmem:[%s2747 + $0x168] sm:$0xff]
  %v2794 = vld [vmem:[%s2747 + $0x170] sm:$0xff]
  %v2795 = vld [vmem:[%s2747 + $0x178] sm:$0xff]
  %v2796 = vld [vmem:[%s2747 + $0x180] sm:$0xff]
  %v2797 = vld [vmem:[%s2747 + $0x188] sm:$0xff]
  %v2798 = vld [vmem:[%s2747 + $0x190] sm:$0xff]
  %v2799 = vld [vmem:[%s2747 + $0x198] sm:$0xff]
  %v2800 = vld [vmem:[%s2747 + $0x1a0] sm:$0xff]
  %v2801 = vld [vmem:[%s2747 + $0x1a8] sm:$0xff]
  %v2802 = vld [vmem:[%s2747 + $0x1b0] sm:$0xff]
  %v2803 = vld [vmem:[%s2747 + $0x1b8] sm:$0xff]
  %v2804 = vld [vmem:[%s2747 + $0x1c0] sm:$0xff]
  %v2805 = vld [vmem:[%s2747 + $0x1c8] sm:$0xff]
  %v2806 = vld [vmem:[%s2747 + $0x1d0] sm:$0xff]
  %v2807 = vld [vmem:[%s2747 + $0x1d8] sm:$0xff]
  %v2808 = vld [vmem:[%s2747 + $0x1e0] sm:$0xff]
  %v2809 = vld [vmem:[%s2747 + $0x1e8] sm:$0xff]
  %v2810 = vld [vmem:[%s2747 + $0x1f0] sm:$0xff]
  %v2811 = vld [vmem:[%s2747 + $0x1f8] sm:$0xff]
  %s2812 = scalar_lea.vmem [#allocation2], 8
  %v2813 = vld [vmem:[%s2812] sm:$0xff]
  %s2814 = scalar_lea.vmem [#allocation3], 8
  %v2815 = vld [vmem:[%s2814] sm:$0xff]
  %s2816 = smul.addr %s962, 8
  %s2817 = scalar_lea.vmem [#allocation5], %s2816
  %v2818 = vld [vmem:[%s2817] sm:$0xff]
  %v2819 = vld [vmem:[%s2817 + $0x8] sm:$0xff]
  %v2820 = vld [vmem:[%s2817 + $0x10] sm:$0xff]
  %v2821 = vld [vmem:[%s2817 + $0x18] sm:$0xff]
  %2822 = vmatprep.subr.mxu0 %v2749
  %2823 = vmatpush1.msra.mxu0 %v2748
  %2824 = vmatprep.subr.mxu0 %v2753
  %2825 = vmatpush1.msra.mxu0 %v2752
  %2826 = vmatprep.subr.mxu0 %v2757
  %2827 = vmatpush1.msra.mxu0 %v2756
  %2828 = vmatprep.subr.mxu0 %v2761
  %2829 = vmatpush1.msra.mxu0 %v2760
  %2830 = vmatprep.subr.mxu0 %v2765
  %2831 = vmatpush1.msra.mxu0 %v2764
  %2832 = vmatprep.subr.mxu0 %v2769
  %2833 = vmatpush1.msra.mxu0 %v2768
  %2834 = vmatprep.subr.mxu0 %v2773
  %2835 = vmatpush1.msra.mxu0 %v2772
  %2836 = vmatprep.subr.mxu0 %v2777
  %2837 = vmatpush1.msra.mxu0 %v2776
  %2838 = vmatprep.subr.mxu0 %v2781
  %2839 = vmatpush1.msra.mxu0 %v2780
  %2840 = vmatprep.subr.mxu0 %v2785
  %2841 = vmatpush1.msra.mxu0 %v2784
  %2842 = vmatprep.subr.mxu0 %v2789
  %2843 = vmatpush1.msra.mxu0 %v2788
  %2844 = vmatprep.subr.mxu0 %v2793
  %2845 = vmatpush1.msra.mxu0 %v2792
  %2846 = vmatprep.subr.mxu0 %v2797
  %2847 = vmatpush1.msra.mxu0 %v2796
  %2848 = vmatprep.subr.mxu0 %v2801
  %2849 = vmatpush1.msra.mxu0 %v2800
  %2850 = vmatprep.subr.mxu0 %v2805
  %2851 = vmatpush1.msra.mxu0 %v2804
  %2852 = vmatprep.subr.mxu0 %v2809
  %2853 = vmatpush1.msra.mxu0 %v2808
  %2854 = vmatprep.subr.mxu0 0.0
  %2855 = vmatpush1.msra.mxu0 0.0
  %2856 = vmatprep.subr.mxu0 0.0
  %2857 = vmatpush1.msra.mxu0 0.0
  %2858 = vmatprep.subr.mxu0 0.0
  %2859 = vmatpush1.msra.mxu0 0.0
  %2860 = vmatprep.subr.mxu0 0.0
  %2861 = vmatpush1.msra.mxu0 0.0
  %2862 = vmatprep.subr.mxu0 0.0
  %2863 = vmatpush1.msra.mxu0 0.0
  %2864 = vmatprep.subr.mxu0 0.0
  %2865 = vmatpush1.msra.mxu0 0.0
  %2866 = vmatprep.subr.mxu0 0.0
  %2867 = vmatpush1.msra.mxu0 0.0
  %2868 = vmatprep.subr.mxu0 0.0
  %2869 = vmatpush1.msra.mxu0 0.0
  %2870 = vmatprep.subr.mxu0 0.0
  %2871 = vmatpush1.msra.mxu0 0.0
  %2872 = vmatprep.subr.mxu0 0.0
  %2873 = vmatpush1.msra.mxu0 0.0
  %2874 = vmatprep.subr.mxu0 0.0
  %2875 = vmatpush1.msra.mxu0 0.0
  %2876 = vmatprep.subr.mxu0 0.0
  %2877 = vmatpush1.msra.mxu0 0.0
  %2878 = vmatprep.subr.mxu0 0.0
  %2879 = vmatpush1.msra.mxu0 0.0
  %2880 = vmatprep.subr.mxu0 0.0
  %2881 = vmatpush1.msra.mxu0 0.0
  %2882 = vmatprep.subr.mxu0 0.0
  %2883 = vmatpush1.msra.mxu0 0.0
  %2884 = vmatprep.subr.mxu0 0.0
  %2885 = vmatpush1.msra.mxu0 0.0
  %2886 = vmatprep.mubr.f32.mxu0 0.0
  %2887 = vmatmul.mubr.f32.gmra.mrb[0].mxu0 %v2813
  %v2888 = vpop.f32.mrb[0].mxu0
  %v2889 = vadd.f32 0.0, %v2888
  %v2890 = vpop.f32.mrb[0].mxu0
  %v2891 = vadd.f32 0.0, %v2890
  %2892 = vdwg.mxu0
  %2893 = vmatprep.subr.mxu0 %v2751
  %2894 = vmatpush1.msra.mxu0 %v2750
  %2895 = vmatprep.subr.mxu0 %v2755
  %2896 = vmatpush1.msra.mxu0 %v2754
  %2897 = vmatprep.subr.mxu0 %v2759
  %2898 = vmatpush1.msra.mxu0 %v2758
  %2899 = vmatprep.subr.mxu0 %v2763
  %2900 = vmatpush1.msra.mxu0 %v2762
  %2901 = vmatprep.subr.mxu0 %v2767
  %2902 = vmatpush1.msra.mxu0 %v2766
  %2903 = vmatprep.subr.mxu0 %v2771
  %2904 = vmatpush1.msra.mxu0 %v2770
  %2905 = vmatprep.subr.mxu0 %v2775
  %2906 = vmatpush1.msra.mxu0 %v2774
  %2907 = vmatprep.subr.mxu0 %v2779
  %2908 = vmatpush1.msra.mxu0 %v2778
  %2909 = vmatprep.subr.mxu0 %v2783
  %2910 = vmatpush1.msra.mxu0 %v2782
  %2911 = vmatprep.subr.mxu0 %v2787
  %2912 = vmatpush1.msra.mxu0 %v2786
  %2913 = vmatprep.subr.mxu0 %v2791
  %2914 = vmatpush1.msra.mxu0 %v2790
  %2915 = vmatprep.subr.mxu0 %v2795
  %2916 = vmatpush1.msra.mxu0 %v2794
  %2917 = vmatprep.subr.mxu0 %v2799
  %2918 = vmatpush1.msra.mxu0 %v2798
  %2919 = vmatprep.subr.mxu0 %v2803
  %2920 = vmatpush1.msra.mxu0 %v2802
  %2921 = vmatprep.subr.mxu0 %v2807
  %2922 = vmatpush1.msra.mxu0 %v2806
  %2923 = vmatprep.subr.mxu0 %v2811
  %2924 = vmatpush1.msra.mxu0 %v2810
  %2925 = vmatprep.subr.mxu0 0.0
  %2926 = vmatpush1.msra.mxu0 0.0
  %2927 = vmatprep.subr.mxu0 0.0
  %2928 = vmatpush1.msra.mxu0 0.0
  %2929 = vmatprep.subr.mxu0 0.0
  %2930 = vmatpush1.msra.mxu0 0.0
  %2931 = vmatprep.subr.mxu0 0.0
  %2932 = vmatpush1.msra.mxu0 0.0
  %2933 = vmatprep.subr.mxu0 0.0
  %2934 = vmatpush1.msra.mxu0 0.0
  %2935 = vmatprep.subr.mxu0 0.0
  %2936 = vmatpush1.msra.mxu0 0.0
  %2937 = vmatprep.subr.mxu0 0.0
  %2938 = vmatpush1.msra.mxu0 0.0
  %2939 = vmatprep.subr.mxu0 0.0
  %2940 = vmatpush1.msra.mxu0 0.0
  %2941 = vmatprep.subr.mxu0 0.0
  %2942 = vmatpush1.msra.mxu0 0.0
  %2943 = vmatprep.subr.mxu0 0.0
  %2944 = vmatpush1.msra.mxu0 0.0
  %2945 = vmatprep.subr.mxu0 0.0
  %2946 = vmatpush1.msra.mxu0 0.0
  %2947 = vmatprep.subr.mxu0 0.0
  %2948 = vmatpush1.msra.mxu0 0.0
  %2949 = vmatprep.subr.mxu0 0.0
  %2950 = vmatpush1.msra.mxu0 0.0
  %2951 = vmatprep.subr.mxu0 0.0
  %2952 = vmatpush1.msra.mxu0 0.0
  %2953 = vmatprep.subr.mxu0 0.0
  %2954 = vmatpush1.msra.mxu0 0.0
  %2955 = vmatprep.subr.mxu0 0.0
  %2956 = vmatpush1.msra.mxu0 0.0
  %2957 = vmatprep.mubr.f32.mxu0 0.0
  %2958 = vmatmul.mubr.f32.gmra.mrb[0].mxu0 %v2813
  %v2959 = vpop.f32.mrb[0].mxu0
  %v2960 = vadd.f32 0.0, %v2959
  %v2961 = vpop.f32.mrb[0].mxu0
  %v2962 = vadd.f32 0.0, %v2961
  %2963 = vdwg.mxu0
  %v2964 = vadd.f32 %v2818, %v2889
  %v2965 = vadd.f32 %v2819, %v2891
  %v2966 = vadd.f32 %v2820, %v2960
  %v2967 = vadd.f32 %v2821, %v2962
  %v2968 = vxor.u32 %v2964, 2147483648
  %v2969 = vxor.u32 %v2965, 2147483648
  %v2970 = vxor.u32 %v2966, 2147483648
  %v2971 = vmul.f32 %v2968, 1.442695
  %v2972 = vpow.pop %v2971
  %v2973 = vmul.f32 %v2969, 1.442695
  %v2974 = vpow.pop %v2973
  %v2975 = vmul.f32 %v2970, 1.442695
  %v2976 = vpow.pop %v2975
  %v2977 = vadd.f32 %v2972, 1.0
  %v2978 = vadd.f32 %v2974, 1.0
  %v2979 = vadd.f32 %v2976, 1.0
  %v2980 = vrcp.pop %v2977
  %v2981 = vmul.f32 1.0, %v2980
  %v2982 = vrcp.pop %v2978
  %v2983 = vmul.f32 1.0, %v2982
  %v2984 = vrcp.pop %v2979
  %v2985 = vmul.f32 1.0, %v2984
  %v2986 = vtanh.pop %v2967
  %v2987 = vmul.f32 %v2983, %v2815
  %v2988 = vmul.f32 %v2981, %v2986
  %v2989 = vadd.f32 %v2987, %v2988
  %v2990 = vtanh.pop %v2989
  %v2991 = vmul.f32 %v2985, %v2990
  %2992 = vst [vmem:[#allocation4] sm:$0xff] %v2991
  %s2993 = smul.addr %s1140, 8
  %s2994 = scalar_lea.vmem [#allocation5], %s2993
  %v2995 = vld [vmem:[%s2994] sm:$0xff]
  %v2996 = vld [vmem:[%s2994 + $0x8] sm:$0xff]
  %v2997 = vld [vmem:[%s2994 + $0x10] sm:$0xff]
  %v2998 = vld [vmem:[%s2994 + $0x18] sm:$0xff]
  %2999 = vmatprep.subr.mxu0 %v2749
  %3000 = vmatpush1.msra.mxu0 %v2748
  %3001 = vmatprep.subr.mxu0 %v2753
  %3002 = vmatpush1.msra.mxu0 %v2752
  %3003 = vmatprep.subr.mxu0 %v2757
  %3004 = vmatpush1.msra.mxu0 %v2756
  %3005 = vmatprep.subr.mxu0 %v2761
  %3006 = vmatpush1.msra.mxu0 %v2760
  %3007 = vmatprep.subr.mxu0 %v2765
  %3008 = vmatpush1.msra.mxu0 %v2764
  %3009 = vmatprep.subr.mxu0 %v2769
  %3010 = vmatpush1.msra.mxu0 %v2768
  %3011 = vmatprep.subr.mxu0 %v2773
  %3012 = vmatpush1.msra.mxu0 %v2772
  %3013 = vmatprep.subr.mxu0 %v2777
  %3014 = vmatpush1.msra.mxu0 %v2776
  %3015 = vmatprep.subr.mxu0 %v2781
  %3016 = vmatpush1.msra.mxu0 %v2780
  %3017 = vmatprep.subr.mxu0 %v2785
  %3018 = vmatpush1.msra.mxu0 %v2784
  %3019 = vmatprep.subr.mxu0 %v2789
  %3020 = vmatpush1.msra.mxu0 %v2788
  %3021 = vmatprep.subr.mxu0 %v2793
  %3022 = vmatpush1.msra.mxu0 %v2792
  %3023 = vmatprep.subr.mxu0 %v2797
  %3024 = vmatpush1.msra.mxu0 %v2796
  %3025 = vmatprep.subr.mxu0 %v2801
  %3026 = vmatpush1.msra.mxu0 %v2800
  %3027 = vmatprep.subr.mxu0 %v2805
  %3028 = vmatpush1.msra.mxu0 %v2804
  %3029 = vmatprep.subr.mxu0 %v2809
  %3030 = vmatpush1.msra.mxu0 %v2808
  %3031 = vmatprep.subr.mxu0 0.0
  %3032 = vmatpush1.msra.mxu0 0.0
  %3033 = vmatprep.subr.mxu0 0.0
  %3034 = vmatpush1.msra.mxu0 0.0
  %3035 = vmatprep.subr.mxu0 0.0
  %3036 = vmatpush1.msra.mxu0 0.0
  %3037 = vmatprep.subr.mxu0 0.0
  %3038 = vmatpush1.msra.mxu0 0.0
  %3039 = vmatprep.subr.mxu0 0.0
  %3040 = vmatpush1.msra.mxu0 0.0
  %3041 = vmatprep.subr.mxu0 0.0
  %3042 = vmatpush1.msra.mxu0 0.0
  %3043 = vmatprep.subr.mxu0 0.0
  %3044 = vmatpush1.msra.mxu0 0.0
  %3045 = vmatprep.subr.mxu0 0.0
  %3046 = vmatpush1.msra.mxu0 0.0
  %3047 = vmatprep.subr.mxu0 0.0
  %3048 = vmatpush1.msra.mxu0 0.0
  %3049 = vmatprep.subr.mxu0 0.0
  %3050 = vmatpush1.msra.mxu0 0.0
  %3051 = vmatprep.subr.mxu0 0.0
  %3052 = vmatpush1.msra.mxu0 0.0
  %3053 = vmatprep.subr.mxu0 0.0
  %3054 = vmatpush1.msra.mxu0 0.0
  %3055 = vmatprep.subr.mxu0 0.0
  %3056 = vmatpush1.msra.mxu0 0.0
  %3057 = vmatprep.subr.mxu0 0.0
  %3058 = vmatpush1.msra.mxu0 0.0
  %3059 = vmatprep.subr.mxu0 0.0
  %3060 = vmatpush1.msra.mxu0 0.0
  %3061 = vmatprep.subr.mxu0 0.0
  %3062 = vmatpush1.msra.mxu0 0.0
  %3063 = vmatprep.mubr.f32.mxu0 0.0
  %3064 = vmatmul.mubr.f32.gmra.mrb[0].mxu0 %v2991
  %v3065 = vpop.f32.mrb[0].mxu0
  %v3066 = vadd.f32 0.0, %v3065
  %v3067 = vpop.f32.mrb[0].mxu0
  %v3068 = vadd.f32 0.0, %v3067
  %3069 = vdwg.mxu0
  %3070 = vmatprep.subr.mxu0 %v2751
  %3071 = vmatpush1.msra.mxu0 %v2750
  %3072 = vmatprep.subr.mxu0 %v2755
  %3073 = vmatpush1.msra.mxu0 %v2754
  %3074 = vmatprep.subr.mxu0 %v2759
  %3075 = vmatpush1.msra.mxu0 %v2758
  %3076 = vmatprep.subr.mxu0 %v2763
  %3077 = vmatpush1.msra.mxu0 %v2762
  %3078 = vmatprep.subr.mxu0 %v2767
  %3079 = vmatpush1.msra.mxu0 %v2766
  %3080 = vmatprep.subr.mxu0 %v2771
  %3081 = vmatpush1.msra.mxu0 %v2770
  %3082 = vmatprep.subr.mxu0 %v2775
  %3083 = vmatpush1.msra.mxu0 %v2774
  %3084 = vmatprep.subr.mxu0 %v2779
  %3085 = vmatpush1.msra.mxu0 %v2778
  %3086 = vmatprep.subr.mxu0 %v2783
  %3087 = vmatpush1.msra.mxu0 %v2782
  %3088 = vmatprep.subr.mxu0 %v2787
  %3089 = vmatpush1.msra.mxu0 %v2786
  %3090 = vmatprep.subr.mxu0 %v2791
  %3091 = vmatpush1.msra.mxu0 %v2790
  %3092 = vmatprep.subr.mxu0 %v2795
  %3093 = vmatpush1.msra.mxu0 %v2794
  %3094 = vmatprep.subr.mxu0 %v2799
  %3095 = vmatpush1.msra.mxu0 %v2798
  %3096 = vmatprep.subr.mxu0 %v2803
  %3097 = vmatpush1.msra.mxu0 %v2802
  %3098 = vmatprep.subr.mxu0 %v2807
  %3099 = vmatpush1.msra.mxu0 %v2806
  %3100 = vmatprep.subr.mxu0 %v2811
  %3101 = vmatpush1.msra.mxu0 %v2810
  %3102 = vmatprep.subr.mxu0 0.0
  %3103 = vmatpush1.msra.mxu0 0.0
  %3104 = vmatprep.subr.mxu0 0.0
  %3105 = vmatpush1.msra.mxu0 0.0
  %3106 = vmatprep.subr.mxu0 0.0
  %3107 = vmatpush1.msra.mxu0 0.0
  %3108 = vmatprep.subr.mxu0 0.0
  %3109 = vmatpush1.msra.mxu0 0.0
  %3110 = vmatprep.subr.mxu0 0.0
  %3111 = vmatpush1.msra.mxu0 0.0
  %3112 = vmatprep.subr.mxu0 0.0
  %3113 = vmatpush1.msra.mxu0 0.0
  %3114 = vmatprep.subr.mxu0 0.0
  %3115 = vmatpush1.msra.mxu0 0.0
  %3116 = vmatprep.subr.mxu0 0.0
  %3117 = vmatpush1.msra.mxu0 0.0
  %3118 = vmatprep.subr.mxu0 0.0
  %3119 = vmatpush1.msra.mxu0 0.0
  %3120 = vmatprep.subr.mxu0 0.0
  %3121 = vmatpush1.msra.mxu0 0.0
  %3122 = vmatprep.subr.mxu0 0.0
  %3123 = vmatpush1.msra.mxu0 0.0
  %3124 = vmatprep.subr.mxu0 0.0
  %3125 = vmatpush1.msra.mxu0 0.0
  %3126 = vmatprep.subr.mxu0 0.0
  %3127 = vmatpush1.msra.mxu0 0.0
  %3128 = vmatprep.subr.mxu0 0.0
  %3129 = vmatpush1.msra.mxu0 0.0
  %3130 = vmatprep.subr.mxu0 0.0
  %3131 = vmatpush1.msra.mxu0 0.0
  %3132 = vmatprep.subr.mxu0 0.0
  %3133 = vmatpush1.msra.mxu0 0.0
  %3134 = vmatprep.mubr.f32.mxu0 0.0
  %3135 = vmatmul.mubr.f32.gmra.mrb[0].mxu0 %v2991
  %v3136 = vpop.f32.mrb[0].mxu0
  %v3137 = vadd.f32 0.0, %v3136
  %v3138 = vpop.f32.mrb[0].mxu0
  %v3139 = vadd.f32 0.0, %v3138
  %3140 = vdwg.mxu0
  %v3141 = vadd.f32 %v2995, %v3066
  %v3142 = vadd.f32 %v2996, %v3068
  %v3143 = vadd.f32 %v2997, %v3137
  %v3144 = vadd.f32 %v2998, %v3139
  %v3145 = vxor.u32 %v3141, 2147483648
  %v3146 = vxor.u32 %v3142, 2147483648
  %v3147 = vxor.u32 %v3143, 2147483648
  %v3148 = vmul.f32 %v3145, 1.442695
  %v3149 = vpow.pop %v3148
  %v3150 = vmul.f32 %v3146, 1.442695
  %v3151 = vpow.pop %v3150
  %v3152 = vmul.f32 %v3147, 1.442695
  %v3153 = vpow.pop %v3152
  %v3154 = vadd.f32 %v3149, 1.0
  %v3155 = vadd.f32 %v3151, 1.0
  %v3156 = vadd.f32 %v3153, 1.0
  %v3157 = vrcp.pop %v3154
  %v3158 = vmul.f32 1.0, %v3157
  %v3159 = vrcp.pop %v3155
  %v3160 = vmul.f32 1.0, %v3159
  %v3161 = vrcp.pop %v3156
  %v3162 = vmul.f32 1.0, %v3161
  %v3163 = vtanh.pop %v3144
  %v3164 = vmul.f32 %v3160, %v2989
  %v3165 = vmul.f32 %v3158, %v3163
  %v3166 = vadd.f32 %v3164, %v3165
  %v3167 = vtanh.pop %v3166
  %v3168 = vmul.f32 %v3162, %v3167
  %3169 = vst [vmem:[%s1317] sm:$0xff] %v3168
  %s3170 = smul.addr %s1319, 8
  %s3171 = scalar_lea.vmem [#allocation5], %s3170
  %v3172 = vld [vmem:[%s3171] sm:$0xff]
  %v3173 = vld [vmem:[%s3171 + $0x8] sm:$0xff]
  %v3174 = vld [vmem:[%s3171 + $0x10] sm:$0xff]
  %v3175 = vld [vmem:[%s3171 + $0x18] sm:$0xff]
  %3176 = vmatprep.subr.mxu0 %v2749
  %3177 = vmatpush1.msra.mxu0 %v2748
  %3178 = vmatprep.subr.mxu0 %v2753
  %3179 = vmatpush1.msra.mxu0 %v2752
  %3180 = vmatprep.subr.mxu0 %v2757
  %3181 = vmatpush1.msra.mxu0 %v2756
  %3182 = vmatprep.subr.mxu0 %v2761
  %3183 = vmatpush1.msra.mxu0 %v2760
  %3184 = vmatprep.subr.mxu0 %v2765
  %3185 = vmatpush1.msra.mxu0 %v2764
  %3186 = vmatprep.subr.mxu0 %v2769
  %3187 = vmatpush1.msra.mxu0 %v2768
  %3188 = vmatprep.subr.mxu0 %v2773
  %3189 = vmatpush1.msra.mxu0 %v2772
  %3190 = vmatprep.subr.mxu0 %v2777
  %3191 = vmatpush1.msra.mxu0 %v2776
  %3192 = vmatprep.subr.mxu0 %v2781
  %3193 = vmatpush1.msra.mxu0 %v2780
  %3194 = vmatprep.subr.mxu0 %v2785
  %3195 = vmatpush1.msra.mxu0 %v2784
  %3196 = vmatprep.subr.mxu0 %v2789
  %3197 = vmatpush1.msra.mxu0 %v2788
  %3198 = vmatprep.subr.mxu0 %v2793
  %3199 = vmatpush1.msra.mxu0 %v2792
  %3200 = vmatprep.subr.mxu0 %v2797
  %3201 = vmatpush1.msra.mxu0 %v2796
  %3202 = vmatprep.subr.mxu0 %v2801
  %3203 = vmatpush1.msra.mxu0 %v2800
  %3204 = vmatprep.subr.mxu0 %v2805
  %3205 = vmatpush1.msra.mxu0 %v2804
  %3206 = vmatprep.subr.mxu0 %v2809
  %3207 = vmatpush1.msra.mxu0 %v2808
  %3208 = vmatprep.subr.mxu0 0.0
  %3209 = vmatpush1.msra.mxu0 0.0
  %3210 = vmatprep.subr.mxu0 0.0
  %3211 = vmatpush1.msra.mxu0 0.0
  %3212 = vmatprep.subr.mxu0 0.0
  %3213 = vmatpush1.msra.mxu0 0.0
  %3214 = vmatprep.subr.mxu0 0.0
  %3215 = vmatpush1.msra.mxu0 0.0
  %3216 = vmatprep.subr.mxu0 0.0
  %3217 = vmatpush1.msra.mxu0 0.0
  %3218 = vmatprep.subr.mxu0 0.0
  %3219 = vmatpush1.msra.mxu0 0.0
  %3220 = vmatprep.subr.mxu0 0.0
  %3221 = vmatpush1.msra.mxu0 0.0
  %3222 = vmatprep.subr.mxu0 0.0
  %3223 = vmatpush1.msra.mxu0 0.0
  %3224 = vmatprep.subr.mxu0 0.0
  %3225 = vmatpush1.msra.mxu0 0.0
  %3226 = vmatprep.subr.mxu0 0.0
  %3227 = vmatpush1.msra.mxu0 0.0
  %3228 = vmatprep.subr.mxu0 0.0
  %3229 = vmatpush1.msra.mxu0 0.0
  %3230 = vmatprep.subr.mxu0 0.0
  %3231 = vmatpush1.msra.mxu0 0.0
  %3232 = vmatprep.subr.mxu0 0.0
  %3233 = vmatpush1.msra.mxu0 0.0
  %3234 = vmatprep.subr.mxu0 0.0
  %3235 = vmatpush1.msra.mxu0 0.0
  %3236 = vmatprep.subr.mxu0 0.0
  %3237 = vmatpush1.msra.mxu0 0.0
  %3238 = vmatprep.subr.mxu0 0.0
  %3239 = vmatpush1.msra.mxu0 0.0
  %3240 = vmatprep.mubr.f32.mxu0 0.0
  %3241 = vmatmul.mubr.f32.gmra.mrb[0].mxu0 %v3168
  %v3242 = vpop.f32.mrb[0].mxu0
  %v3243 = vadd.f32 0.0, %v3242
  %v3244 = vpop.f32.mrb[0].mxu0
  %v3245 = vadd.f32 0.0, %v3244
  %3246 = vdwg.mxu0
  %3247 = vmatprep.subr.mxu0 %v2751
  %3248 = vmatpush1.msra.mxu0 %v2750
  %3249 = vmatprep.subr.mxu0 %v2755
  %3250 = vmatpush1.msra.mxu0 %v2754
  %3251 = vmatprep.subr.mxu0 %v2759
  %3252 = vmatpush1.msra.mxu0 %v2758
  %3253 = vmatprep.subr.mxu0 %v2763
  %3254 = vmatpush1.msra.mxu0 %v2762
  %3255 = vmatprep.subr.mxu0 %v2767
  %3256 = vmatpush1.msra.mxu0 %v2766
  %3257 = vmatprep.subr.mxu0 %v2771
  %3258 = vmatpush1.msra.mxu0 %v2770
  %3259 = vmatprep.subr.mxu0 %v2775
  %3260 = vmatpush1.msra.mxu0 %v2774
  %3261 = vmatprep.subr.mxu0 %v2779
  %3262 = vmatpush1.msra.mxu0 %v2778
  %3263 = vmatprep.subr.mxu0 %v2783
  %3264 = vmatpush1.msra.mxu0 %v2782
  %3265 = vmatprep.subr.mxu0 %v2787
  %3266 = vmatpush1.msra.mxu0 %v2786
  %3267 = vmatprep.subr.mxu0 %v2791
  %3268 = vmatpush1.msra.mxu0 %v2790
  %3269 = vmatprep.subr.mxu0 %v2795
  %3270 = vmatpush1.msra.mxu0 %v2794
  %3271 = vmatprep.subr.mxu0 %v2799
  %3272 = vmatpush1.msra.mxu0 %v2798
  %3273 = vmatprep.subr.mxu0 %v2803
  %3274 = vmatpush1.msra.mxu0 %v2802
  %3275 = vmatprep.subr.mxu0 %v2807
  %3276 = vmatpush1.msra.mxu0 %v2806
  %3277 = vmatprep.subr.mxu0 %v2811
  %3278 = vmatpush1.msra.mxu0 %v2810
  %3279 = vmatprep.subr.mxu0 0.0
  %3280 = vmatpush1.msra.mxu0 0.0
  %3281 = vmatprep.subr.mxu0 0.0
  %3282 = vmatpush1.msra.mxu0 0.0
  %3283 = vmatprep.subr.mxu0 0.0
  %3284 = vmatpush1.msra.mxu0 0.0
  %3285 = vmatprep.subr.mxu0 0.0
  %3286 = vmatpush1.msra.mxu0 0.0
  %3287 = vmatprep.subr.mxu0 0.0
  %3288 = vmatpush1.msra.mxu0 0.0
  %3289 = vmatprep.subr.mxu0 0.0
  %3290 = vmatpush1.msra.mxu0 0.0
  %3291 = vmatprep.subr.mxu0 0.0
  %3292 = vmatpush1.msra.mxu0 0.0
  %3293 = vmatprep.subr.mxu0 0.0
  %3294 = vmatpush1.msra.mxu0 0.0
  %3295 = vmatprep.subr.mxu0 0.0
  %3296 = vmatpush1.msra.mxu0 0.0
  %3297 = vmatprep.subr.mxu0 0.0
  %3298 = vmatpush1.msra.mxu0 0.0
  %3299 = vmatprep.subr.mxu0 0.0
  %3300 = vmatpush1.msra.mxu0 0.0
  %3301 = vmatprep.subr.mxu0 0.0
  %3302 = vmatpush1.msra.mxu0 0.0
  %3303 = vmatprep.subr.mxu0 0.0
  %3304 = vmatpush1.msra.mxu0 0.0
  %3305 = vmatprep.subr.mxu0 0.0
  %3306 = vmatpush1.msra.mxu0 0.0
  %3307 = vmatprep.subr.mxu0 0.0
  %3308 = vmatpush1.msra.mxu0 0.0
  %3309 = vmatprep.subr.mxu0 0.0
  %3310 = vmatpush1.msra.mxu0 0.0
  %3311 = vmatprep.mubr.f32.mxu0 0.0
  %3312 = vmatmul.mubr.f32.gmra.mrb[0].mxu0 %v3168
  %v3313 = vpop.f32.mrb[0].mxu0
  %v3314 = vadd.f32 0.0, %v3313
  %v3315 = vpop.f32.mrb[0].mxu0
  %v3316 = vadd.f32 0.0, %v3315
  %3317 = vdwg.mxu0
  %v3318 = vadd.f32 %v3172, %v3243
  %v3319 = vadd.f32 %v3173, %v3245
  %v3320 = vadd.f32 %v3174, %v3314
  %v3321 = vadd.f32 %v3175, %v3316
  %v3322 = vxor.u32 %v3318, 2147483648
  %v3323 = vxor.u32 %v3319, 2147483648
  %v3324 = vxor.u32 %v3320, 2147483648
  %v3325 = vmul.f32 %v3322, 1.442695
  %v3326 = vpow.pop %v3325
  %v3327 = vmul.f32 %v3323, 1.442695
  %v3328 = vpow.pop %v3327
  %v3329 = vmul.f32 %v3324, 1.442695
  %v3330 = vpow.pop %v3329
  %v3331 = vadd.f32 %v3326, 1.0
  %v3332 = vadd.f32 %v3328, 1.0
  %v3333 = vadd.f32 %v3330, 1.0
  %v3334 = vrcp.pop %v3331
  %v3335 = vmul.f32 1.0, %v3334
  %v3336 = vrcp.pop %v3332
  %v3337 = vmul.f32 1.0, %v3336
  %v3338 = vrcp.pop %v3333
  %v3339 = vmul.f32 1.0, %v3338
  %v3340 = vtanh.pop %v3321
  %v3341 = vmul.f32 %v3337, %v3166
  %v3342 = vmul.f32 %v3335, %v3340
  %v3343 = vadd.f32 %v3341, %v3342
  %v3344 = vtanh.pop %v3343
  %v3345 = vmul.f32 %v3339, %v3344
  %3346 = vst [vmem:[%s1496] sm:$0xff] %v3345
  %s3347 = smul.addr %s1498, 8
  %s3348 = scalar_lea.vmem [#allocation5], %s3347
  %v3349 = vld [vmem:[%s3348] sm:$0xff]
  %v3350 = vld [vmem:[%s3348 + $0x8] sm:$0xff]
  %v3351 = vld [vmem:[%s3348 + $0x10] sm:$0xff]
  %v3352 = vld [vmem:[%s3348 + $0x18] sm:$0xff]
  %3353 = vmatprep.subr.mxu0 %v2749
  %3354 = vmatpush1.msra.mxu0 %v2748
  %3355 = vmatprep.subr.mxu0 %v2753
  %3356 = vmatpush1.msra.mxu0 %v2752
  %3357 = vmatprep.subr.mxu0 %v2757
  %3358 = vmatpush1.msra.mxu0 %v2756
  %3359 = vmatprep.subr.mxu0 %v2761
  %3360 = vmatpush1.msra.mxu0 %v2760
  %3361 = vmatprep.subr.mxu0 %v2765
  %3362 = vmatpush1.msra.mxu0 %v2764
  %3363 = vmatprep.subr.mxu0 %v2769
  %3364 = vmatpush1.msra.mxu0 %v2768
  %3365 = vmatprep.subr.mxu0 %v2773
  %3366 = vmatpush1.msra.mxu0 %v2772
  %3367 = vmatprep.subr.mxu0 %v2777
  %3368 = vmatpush1.msra.mxu0 %v2776
  %3369 = vmatprep.subr.mxu0 %v2781
  %3370 = vmatpush1.msra.mxu0 %v2780
  %3371 = vmatprep.subr.mxu0 %v2785
  %3372 = vmatpush1.msra.mxu0 %v2784
  %3373 = vmatprep.subr.mxu0 %v2789
  %3374 = vmatpush1.msra.mxu0 %v2788
  %3375 = vmatprep.subr.mxu0 %v2793
  %3376 = vmatpush1.msra.mxu0 %v2792
  %3377 = vmatprep.subr.mxu0 %v2797
  %3378 = vmatpush1.msra.mxu0 %v2796
  %3379 = vmatprep.subr.mxu0 %v2801
  %3380 = vmatpush1.msra.mxu0 %v2800
  %3381 = vmatprep.subr.mxu0 %v2805
  %3382 = vmatpush1.msra.mxu0 %v2804
  %3383 = vmatprep.subr.mxu0 %v2809
  %3384 = vmatpush1.msra.mxu0 %v2808
  %3385 = vmatprep.subr.mxu0 0.0
  %3386 = vmatpush1.msra.mxu0 0.0
  %3387 = vmatprep.subr.mxu0 0.0
  %3388 = vmatpush1.msra.mxu0 0.0
  %3389 = vmatprep.subr.mxu0 0.0
  %3390 = vmatpush1.msra.mxu0 0.0
  %3391 = vmatprep.subr.mxu0 0.0
  %3392 = vmatpush1.msra.mxu0 0.0
  %3393 = vmatprep.subr.mxu0 0.0
  %3394 = vmatpush1.msra.mxu0 0.0
  %3395 = vmatprep.subr.mxu0 0.0
  %3396 = vmatpush1.msra.mxu0 0.0
  %3397 = vmatprep.subr.mxu0 0.0
  %3398 = vmatpush1.msra.mxu0 0.0
  %3399 = vmatprep.subr.mxu0 0.0
  %3400 = vmatpush1.msra.mxu0 0.0
  %3401 = vmatprep.subr.mxu0 0.0
  %3402 = vmatpush1.msra.mxu0 0.0
  %3403 = vmatprep.subr.mxu0 0.0
  %3404 = vmatpush1.msra.mxu0 0.0
  %3405 = vmatprep.subr.mxu0 0.0
  %3406 = vmatpush1.msra.mxu0 0.0
  %3407 = vmatprep.subr.mxu0 0.0
  %3408 = vmatpush1.msra.mxu0 0.0
  %3409 = vmatprep.subr.mxu0 0.0
  %3410 = vmatpush1.msra.mxu0 0.0
  %3411 = vmatprep.subr.mxu0 0.0
  %3412 = vmatpush1.msra.mxu0 0.0
  %3413 = vmatprep.subr.mxu0 0.0
  %3414 = vmatpush1.msra.mxu0 0.0
  %3415 = vmatprep.subr.mxu0 0.0
  %3416 = vmatpush1.msra.mxu0 0.0
  %3417 = vmatprep.mubr.f32.mxu0 0.0
  %3418 = vmatmul.mubr.f32.gmra.mrb[0].mxu0 %v3345
  %v3419 = vpop.f32.mrb[0].mxu0
  %v3420 = vadd.f32 0.0, %v3419
  %v3421 = vpop.f32.mrb[0].mxu0
  %v3422 = vadd.f32 0.0, %v3421
  %3423 = vdwg.mxu0
  %3424 = vmatprep.subr.mxu0 %v2751
  %3425 = vmatpush1.msra.mxu0 %v2750
  %3426 = vmatprep.subr.mxu0 %v2755
  %3427 = vmatpush1.msra.mxu0 %v2754
  %3428 = vmatprep.subr.mxu0 %v2759
  %3429 = vmatpush1.msra.mxu0 %v2758
  %3430 = vmatprep.subr.mxu0 %v2763
  %3431 = vmatpush1.msra.mxu0 %v2762
  %3432 = vmatprep.subr.mxu0 %v2767
  %3433 = vmatpush1.msra.mxu0 %v2766
  %3434 = vmatprep.subr.mxu0 %v2771
  %3435 = vmatpush1.msra.mxu0 %v2770
  %3436 = vmatprep.subr.mxu0 %v2775
  %3437 = vmatpush1.msra.mxu0 %v2774
  %3438 = vmatprep.subr.mxu0 %v2779
  %3439 = vmatpush1.msra.mxu0 %v2778
  %3440 = vmatprep.subr.mxu0 %v2783
  %3441 = vmatpush1.msra.mxu0 %v2782
  %3442 = vmatprep.subr.mxu0 %v2787
  %3443 = vmatpush1.msra.mxu0 %v2786
  %3444 = vmatprep.subr.mxu0 %v2791
  %3445 = vmatpush1.msra.mxu0 %v2790
  %3446 = vmatprep.subr.mxu0 %v2795
  %3447 = vmatpush1.msra.mxu0 %v2794
  %3448 = vmatprep.subr.mxu0 %v2799
  %3449 = vmatpush1.msra.mxu0 %v2798
  %3450 = vmatprep.subr.mxu0 %v2803
  %3451 = vmatpush1.msra.mxu0 %v2802
  %3452 = vmatprep.subr.mxu0 %v2807
  %3453 = vmatpush1.msra.mxu0 %v2806
  %3454 = vmatprep.subr.mxu0 %v2811
  %3455 = vmatpush1.msra.mxu0 %v2810
  %3456 = vmatprep.subr.mxu0 0.0
  %3457 = vmatpush1.msra.mxu0 0.0
  %3458 = vmatprep.subr.mxu0 0.0
  %3459 = vmatpush1.msra.mxu0 0.0
  %3460 = vmatprep.subr.mxu0 0.0
  %3461 = vmatpush1.msra.mxu0 0.0
  %3462 = vmatprep.subr.mxu0 0.0
  %3463 = vmatpush1.msra.mxu0 0.0
  %3464 = vmatprep.subr.mxu0 0.0
  %3465 = vmatpush1.msra.mxu0 0.0
  %3466 = vmatprep.subr.mxu0 0.0
  %3467 = vmatpush1.msra.mxu0 0.0
  %3468 = vmatprep.subr.mxu0 0.0
  %3469 = vmatpush1.msra.mxu0 0.0
  %3470 = vmatprep.subr.mxu0 0.0
  %3471 = vmatpush1.msra.mxu0 0.0
  %3472 = vmatprep.subr.mxu0 0.0
  %3473 = vmatpush1.msra.mxu0 0.0
  %3474 = vmatprep.subr.mxu0 0.0
  %3475 = vmatpush1.msra.mxu0 0.0
  %3476 = vmatprep.subr.mxu0 0.0
  %3477 = vmatpush1.msra.mxu0 0.0
  %3478 = vmatprep.subr.mxu0 0.0
  %3479 = vmatpush1.msra.mxu0 0.0
  %3480 = vmatprep.subr.mxu0 0.0
  %3481 = vmatpush1.msra.mxu0 0.0
  %3482 = vmatprep.subr.mxu0 0.0
  %3483 = vmatpush1.msra.mxu0 0.0
  %3484 = vmatprep.subr.mxu0 0.0
  %3485 = vmatpush1.msra.mxu0 0.0
  %3486 = vmatprep.subr.mxu0 0.0
  %3487 = vmatpush1.msra.mxu0 0.0
  %3488 = vmatprep.mubr.f32.mxu0 0.0
  %3489 = vmatmul.mubr.f32.gmra.mrb[0].mxu0 %v3345
  %v3490 = vpop.f32.mrb[0].mxu0
  %v3491 = vadd.f32 0.0, %v3490
  %v3492 = vpop.f32.mrb[0].mxu0
  %v3493 = vadd.f32 0.0, %v3492
  %3494 = vdwg.mxu0
  %v3495 = vadd.f32 %v3349, %v3420
  %v3496 = vadd.f32 %v3350, %v3422
  %v3497 = vadd.f32 %v3351, %v3491
  %v3498 = vadd.f32 %v3352, %v3493
  %v3499 = vxor.u32 %v3495, 2147483648
  %v3500 = vxor.u32 %v3496, 2147483648
  %v3501 = vxor.u32 %v3497, 2147483648
  %v3502 = vmul.f32 %v3499, 1.442695
  %v3503 = vpow.pop %v3502
  %v3504 = vmul.f32 %v3500, 1.442695
  %v3505 = vpow.pop %v3504
  %v3506 = vmul.f32 %v3501, 1.442695
  %v3507 = vpow.pop %v3506
  %v3508 = vadd.f32 %v3503, 1.0
  %v3509 = vadd.f32 %v3505, 1.0
  %v3510 = vadd.f32 %v3507, 1.0
  %v3511 = vrcp.pop %v3508
  %v3512 = vmul.f32 1.0, %v3511
  %v3513 = vrcp.pop %v3509
  %v3514 = vmul.f32 1.0, %v3513
  %v3515 = vrcp.pop %v3510
  %v3516 = vmul.f32 1.0, %v3515
  %v3517 = vtanh.pop %v3498
  %v3518 = vmul.f32 %v3514, %v3343
  %v3519 = vmul.f32 %v3512, %v3517
  %v3520 = vadd.f32 %v3518, %v3519
  %v3521 = vtanh.pop %v3520
  %v3522 = vmul.f32 %v3516, %v3521
  %3523 = vst [vmem:[%s1675] sm:$0xff] %v3522
  %s3524 = smul.addr %s1677, 8
  %s3525 = scalar_lea.vmem [#allocation5], %s3524
  %v3526 = vld [vmem:[%s3525] sm:$0xff]
  %v3527 = vld [vmem:[%s3525 + $0x8] sm:$0xff]
  %v3528 = vld [vmem:[%s3525 + $0x10] sm:$0xff]
  %v3529 = vld [vmem:[%s3525 + $0x18] sm:$0xff]
  %3530 = vmatprep.subr.mxu0 %v2749
  %3531 = vmatpush1.msra.mxu0 %v2748
  %3532 = vmatprep.subr.mxu0 %v2753
  %3533 = vmatpush1.msra.mxu0 %v2752
  %3534 = vmatprep.subr.mxu0 %v2757
  %3535 = vmatpush1.msra.mxu0 %v2756
  %3536 = vmatprep.subr.mxu0 %v2761
  %3537 = vmatpush1.msra.mxu0 %v2760
  %3538 = vmatprep.subr.mxu0 %v2765
  %3539 = vmatpush1.msra.mxu0 %v2764
  %3540 = vmatprep.subr.mxu0 %v2769
  %3541 = vmatpush1.msra.mxu0 %v2768
  %3542 = vmatprep.subr.mxu0 %v2773
  %3543 = vmatpush1.msra.mxu0 %v2772
  %3544 = vmatprep.subr.mxu0 %v2777
  %3545 = vmatpush1.msra.mxu0 %v2776
  %3546 = vmatprep.subr.mxu0 %v2781
  %3547 = vmatpush1.msra.mxu0 %v2780
  %3548 = vmatprep.subr.mxu0 %v2785
  %3549 = vmatpush1.msra.mxu0 %v2784
  %3550 = vmatprep.subr.mxu0 %v2789
  %3551 = vmatpush1.msra.mxu0 %v2788
  %3552 = vmatprep.subr.mxu0 %v2793
  %3553 = vmatpush1.msra.mxu0 %v2792
  %3554 = vmatprep.subr.mxu0 %v2797
  %3555 = vmatpush1.msra.mxu0 %v2796
  %3556 = vmatprep.subr.mxu0 %v2801
  %3557 = vmatpush1.msra.mxu0 %v2800
  %3558 = vmatprep.subr.mxu0 %v2805
  %3559 = vmatpush1.msra.mxu0 %v2804
  %3560 = vmatprep.subr.mxu0 %v2809
  %3561 = vmatpush1.msra.mxu0 %v2808
  %3562 = vmatprep.subr.mxu0 0.0
  %3563 = vmatpush1.msra.mxu0 0.0
  %3564 = vmatprep.subr.mxu0 0.0
  %3565 = vmatpush1.msra.mxu0 0.0
  %3566 = vmatprep.subr.mxu0 0.0
  %3567 = vmatpush1.msra.mxu0 0.0
  %3568 = vmatprep.subr.mxu0 0.0
  %3569 = vmatpush1.msra.mxu0 0.0
  %3570 = vmatprep.subr.mxu0 0.0
  %3571 = vmatpush1.msra.mxu0 0.0
  %3572 = vmatprep.subr.mxu0 0.0
  %3573 = vmatpush1.msra.mxu0 0.0
  %3574 = vmatprep.subr.mxu0 0.0
  %3575 = vmatpush1.msra.mxu0 0.0
  %3576 = vmatprep.subr.mxu0 0.0
  %3577 = vmatpush1.msra.mxu0 0.0
  %3578 = vmatprep.subr.mxu0 0.0
  %3579 = vmatpush1.msra.mxu0 0.0
  %3580 = vmatprep.subr.mxu0 0.0
  %3581 = vmatpush1.msra.mxu0 0.0
  %3582 = vmatprep.subr.mxu0 0.0
  %3583 = vmatpush1.msra.mxu0 0.0
  %3584 = vmatprep.subr.mxu0 0.0
  %3585 = vmatpush1.msra.mxu0 0.0
  %3586 = vmatprep.subr.mxu0 0.0
  %3587 = vmatpush1.msra.mxu0 0.0
  %3588 = vmatprep.subr.mxu0 0.0
  %3589 = vmatpush1.msra.mxu0 0.0
  %3590 = vmatprep.subr.mxu0 0.0
  %3591 = vmatpush1.msra.mxu0 0.0
  %3592 = vmatprep.subr.mxu0 0.0
  %3593 = vmatpush1.msra.mxu0 0.0
  %3594 = vmatprep.mubr.f32.mxu0 0.0
  %3595 = vmatmul.mubr.f32.gmra.mrb[0].mxu0 %v3522
  %v3596 = vpop.f32.mrb[0].mxu0
  %v3597 = vadd.f32 0.0, %v3596
  %v3598 = vpop.f32.mrb[0].mxu0
  %v3599 = vadd.f32 0.0, %v3598
  %3600 = vdwg.mxu0
  %3601 = vmatprep.subr.mxu0 %v2751
  %3602 = vmatpush1.msra.mxu0 %v2750
  %3603 = vmatprep.subr.mxu0 %v2755
  %3604 = vmatpush1.msra.mxu0 %v2754
  %3605 = vmatprep.subr.mxu0 %v2759
  %3606 = vmatpush1.msra.mxu0 %v2758
  %3607 = vmatprep.subr.mxu0 %v2763
  %3608 = vmatpush1.msra.mxu0 %v2762
  %3609 = vmatprep.subr.mxu0 %v2767
  %3610 = vmatpush1.msra.mxu0 %v2766
  %3611 = vmatprep.subr.mxu0 %v2771
  %3612 = vmatpush1.msra.mxu0 %v2770
  %3613 = vmatprep.subr.mxu0 %v2775
  %3614 = vmatpush1.msra.mxu0 %v2774
  %3615 = vmatprep.subr.mxu0 %v2779
  %3616 = vmatpush1.msra.mxu0 %v2778
  %3617 = vmatprep.subr.mxu0 %v2783
  %3618 = vmatpush1.msra.mxu0 %v2782
  %3619 = vmatprep.subr.mxu0 %v2787
  %3620 = vmatpush1.msra.mxu0 %v2786
  %3621 = vmatprep.subr.mxu0 %v2791
  %3622 = vmatpush1.msra.mxu0 %v2790
  %3623 = vmatprep.subr.mxu0 %v2795
  %3624 = vmatpush1.msra.mxu0 %v2794
  %3625 = vmatprep.subr.mxu0 %v2799
  %3626 = vmatpush1.msra.mxu0 %v2798
  %3627 = vmatprep.subr.mxu0 %v2803
  %3628 = vmatpush1.msra.mxu0 %v2802
  %3629 = vmatprep.subr.mxu0 %v2807
  %3630 = vmatpush1.msra.mxu0 %v2806
  %3631 = vmatprep.subr.mxu0 %v2811
  %3632 = vmatpush1.msra.mxu0 %v2810
  %3633 = vmatprep.subr.mxu0 0.0
  %3634 = vmatpush1.msra.mxu0 0.0
  %3635 = vmatprep.subr.mxu0 0.0
  %3636 = vmatpush1.msra.mxu0 0.0
  %3637 = vmatprep.subr.mxu0 0.0
  %3638 = vmatpush1.msra.mxu0 0.0
  %3639 = vmatprep.subr.mxu0 0.0
  %3640 = vmatpush1.msra.mxu0 0.0
  %3641 = vmatprep.subr.mxu0 0.0
  %3642 = vmatpush1.msra.mxu0 0.0
  %3643 = vmatprep.subr.mxu0 0.0
  %3644 = vmatpush1.msra.mxu0 0.0
  %3645 = vmatprep.subr.mxu0 0.0
  %3646 = vmatpush1.msra.mxu0 0.0
  %3647 = vmatprep.subr.mxu0 0.0
  %3648 = vmatpush1.msra.mxu0 0.0
  %3649 = vmatprep.subr.mxu0 0.0
  %3650 = vmatpush1.msra.mxu0 0.0
  %3651 = vmatprep.subr.mxu0 0.0
  %3652 = vmatpush1.msra.mxu0 0.0
  %3653 = vmatprep.subr.mxu0 0.0
  %3654 = vmatpush1.msra.mxu0 0.0
  %3655 = vmatprep.subr.mxu0 0.0
  %3656 = vmatpush1.msra.mxu0 0.0
  %3657 = vmatprep.subr.mxu0 0.0
  %3658 = vmatpush1.msra.mxu0 0.0
  %3659 = vmatprep.subr.mxu0 0.0
  %3660 = vmatpush1.msra.mxu0 0.0
  %3661 = vmatprep.subr.mxu0 0.0
  %3662 = vmatpush1.msra.mxu0 0.0
  %3663 = vmatprep.subr.mxu0 0.0
  %3664 = vmatpush1.msra.mxu0 0.0
  %3665 = vmatprep.mubr.f32.mxu0 0.0
  %3666 = vmatmul.mubr.f32.gmra.mrb[0].mxu0 %v3522
  %v3667 = vpop.f32.mrb[0].mxu0
  %v3668 = vadd.f32 0.0, %v3667
  %v3669 = vpop.f32.mrb[0].mxu0
  %v3670 = vadd.f32 0.0, %v3669
  %3671 = vdwg.mxu0
  %v3672 = vadd.f32 %v3526, %v3597
  %v3673 = vadd.f32 %v3527, %v3599
  %v3674 = vadd.f32 %v3528, %v3668
  %v3675 = vadd.f32 %v3529, %v3670
  %v3676 = vxor.u32 %v3672, 2147483648
  %v3677 = vxor.u32 %v3673, 2147483648
  %v3678 = vxor.u32 %v3674, 2147483648
  %v3679 = vmul.f32 %v3676, 1.442695
  %v3680 = vpow.pop %v3679
  %v3681 = vmul.f32 %v3677, 1.442695
  %v3682 = vpow.pop %v3681
  %v3683 = vmul.f32 %v3678, 1.442695
  %v3684 = vpow.pop %v3683
  %v3685 = vadd.f32 %v3680, 1.0
  %v3686 = vadd.f32 %v3682, 1.0
  %v3687 = vadd.f32 %v3684, 1.0
  %v3688 = vrcp.pop %v3685
  %v3689 = vmul.f32 1.0, %v3688
  %v3690 = vrcp.pop %v3686
  %v3691 = vmul.f32 1.0, %v3690
  %v3692 = vrcp.pop %v3687
  %v3693 = vmul.f32 1.0, %v3692
  %v3694 = vtanh.pop %v3675
  %v3695 = vmul.f32 %v3691, %v3520
  %v3696 = vmul.f32 %v3689, %v3694
  %v3697 = vadd.f32 %v3695, %v3696
  %v3698 = vtanh.pop %v3697
  %v3699 = vmul.f32 %v3693, %v3698
  %3700 = vst [vmem:[%s1854] sm:$0xff] %v3699
  %s3701 = smul.addr %s1856, 8
  %s3702 = scalar_lea.vmem [#allocation5], %s3701
  %v3703 = vld [vmem:[%s3702] sm:$0xff]
  %v3704 = vld [vmem:[%s3702 + $0x8] sm:$0xff]
  %v3705 = vld [vmem:[%s3702 + $0x10] sm:$0xff]
  %v3706 = vld [vmem:[%s3702 + $0x18] sm:$0xff]
  %3707 = vmatprep.subr.mxu0 %v2749
  %3708 = vmatpush1.msra.mxu0 %v2748
  %3709 = vmatprep.subr.mxu0 %v2753
  %3710 = vmatpush1.msra.mxu0 %v2752
  %3711 = vmatprep.subr.mxu0 %v2757
  %3712 = vmatpush1.msra.mxu0 %v2756
  %3713 = vmatprep.subr.mxu0 %v2761
  %3714 = vmatpush1.msra.mxu0 %v2760
  %3715 = vmatprep.subr.mxu0 %v2765
  %3716 = vmatpush1.msra.mxu0 %v2764
  %3717 = vmatprep.subr.mxu0 %v2769
  %3718 = vmatpush1.msra.mxu0 %v2768
  %3719 = vmatprep.subr.mxu0 %v2773
  %3720 = vmatpush1.msra.mxu0 %v2772
  %3721 = vmatprep.subr.mxu0 %v2777
  %3722 = vmatpush1.msra.mxu0 %v2776
  %3723 = vmatprep.subr.mxu0 %v2781
  %3724 = vmatpush1.msra.mxu0 %v2780
  %3725 = vmatprep.subr.mxu0 %v2785
  %3726 = vmatpush1.msra.mxu0 %v2784
  %3727 = vmatprep.subr.mxu0 %v2789
  %3728 = vmatpush1.msra.mxu0 %v2788
  %3729 = vmatprep.subr.mxu0 %v2793
  %3730 = vmatpush1.msra.mxu0 %v2792
  %3731 = vmatprep.subr.mxu0 %v2797
  %3732 = vmatpush1.msra.mxu0 %v2796
  %3733 = vmatprep.subr.mxu0 %v2801
  %3734 = vmatpush1.msra.mxu0 %v2800
  %3735 = vmatprep.subr.mxu0 %v2805
  %3736 = vmatpush1.msra.mxu0 %v2804
  %3737 = vmatprep.subr.mxu0 %v2809
  %3738 = vmatpush1.msra.mxu0 %v2808
  %3739 = vmatprep.subr.mxu0 0.0
  %3740 = vmatpush1.msra.mxu0 0.0
  %3741 = vmatprep.subr.mxu0 0.0
  %3742 = vmatpush1.msra.mxu0 0.0
  %3743 = vmatprep.subr.mxu0 0.0
  %3744 = vmatpush1.msra.mxu0 0.0
  %3745 = vmatprep.subr.mxu0 0.0
  %3746 = vmatpush1.msra.mxu0 0.0
  %3747 = vmatprep.subr.mxu0 0.0
  %3748 = vmatpush1.msra.mxu0 0.0
  %3749 = vmatprep.subr.mxu0 0.0
  %3750 = vmatpush1.msra.mxu0 0.0
  %3751 = vmatprep.subr.mxu0 0.0
  %3752 = vmatpush1.msra.mxu0 0.0
  %3753 = vmatprep.subr.mxu0 0.0
  %3754 = vmatpush1.msra.mxu0 0.0
  %3755 = vmatprep.subr.mxu0 0.0
  %3756 = vmatpush1.msra.mxu0 0.0
  %3757 = vmatprep.subr.mxu0 0.0
  %3758 = vmatpush1.msra.mxu0 0.0
  %3759 = vmatprep.subr.mxu0 0.0
  %3760 = vmatpush1.msra.mxu0 0.0
  %3761 = vmatprep.subr.mxu0 0.0
  %3762 = vmatpush1.msra.mxu0 0.0
  %3763 = vmatprep.subr.mxu0 0.0
  %3764 = vmatpush1.msra.mxu0 0.0
  %3765 = vmatprep.subr.mxu0 0.0
  %3766 = vmatpush1.msra.mxu0 0.0
  %3767 = vmatprep.subr.mxu0 0.0
  %3768 = vmatpush1.msra.mxu0 0.0
  %3769 = vmatprep.subr.mxu0 0.0
  %3770 = vmatpush1.msra.mxu0 0.0
  %3771 = vmatprep.mubr.f32.mxu0 0.0
  %3772 = vmatmul.mubr.f32.gmra.mrb[0].mxu0 %v3699
  %v3773 = vpop.f32.mrb[0].mxu0
  %v3774 = vadd.f32 0.0, %v3773
  %v3775 = vpop.f32.mrb[0].mxu0
  %v3776 = vadd.f32 0.0, %v3775
  %3777 = vdwg.mxu0
  %3778 = vmatprep.subr.mxu0 %v2751
  %3779 = vmatpush1.msra.mxu0 %v2750
  %3780 = vmatprep.subr.mxu0 %v2755
  %3781 = vmatpush1.msra.mxu0 %v2754
  %3782 = vmatprep.subr.mxu0 %v2759
  %3783 = vmatpush1.msra.mxu0 %v2758
  %3784 = vmatprep.subr.mxu0 %v2763
  %3785 = vmatpush1.msra.mxu0 %v2762
  %3786 = vmatprep.subr.mxu0 %v2767
  %3787 = vmatpush1.msra.mxu0 %v2766
  %3788 = vmatprep.subr.mxu0 %v2771
  %3789 = vmatpush1.msra.mxu0 %v2770
  %3790 = vmatprep.subr.mxu0 %v2775
  %3791 = vmatpush1.msra.mxu0 %v2774
  %3792 = vmatprep.subr.mxu0 %v2779
  %3793 = vmatpush1.msra.mxu0 %v2778
  %3794 = vmatprep.subr.mxu0 %v2783
  %3795 = vmatpush1.msra.mxu0 %v2782
  %3796 = vmatprep.subr.mxu0 %v2787
  %3797 = vmatpush1.msra.mxu0 %v2786
  %3798 = vmatprep.subr.mxu0 %v2791
  %3799 = vmatpush1.msra.mxu0 %v2790
  %3800 = vmatprep.subr.mxu0 %v2795
  %3801 = vmatpush1.msra.mxu0 %v2794
  %3802 = vmatprep.subr.mxu0 %v2799
  %3803 = vmatpush1.msra.mxu0 %v2798
  %3804 = vmatprep.subr.mxu0 %v2803
  %3805 = vmatpush1.msra.mxu0 %v2802
  %3806 = vmatprep.subr.mxu0 %v2807
  %3807 = vmatpush1.msra.mxu0 %v2806
  %3808 = vmatprep.subr.mxu0 %v2811
  %3809 = vmatpush1.msra.mxu0 %v2810
  %3810 = vmatprep.subr.mxu0 0.0
  %3811 = vmatpush1.msra.mxu0 0.0
  %3812 = vmatprep.subr.mxu0 0.0
  %3813 = vmatpush1.msra.mxu0 0.0
  %3814 = vmatprep.subr.mxu0 0.0
  %3815 = vmatpush1.msra.mxu0 0.0
  %3816 = vmatprep.subr.mxu0 0.0
  %3817 = vmatpush1.msra.mxu0 0.0
  %3818 = vmatprep.subr.mxu0 0.0
  %3819 = vmatpush1.msra.mxu0 0.0
  %3820 = vmatprep.subr.mxu0 0.0
  %3821 = vmatpush1.msra.mxu0 0.0
  %3822 = vmatprep.subr.mxu0 0.0
  %3823 = vmatpush1.msra.mxu0 0.0
  %3824 = vmatprep.subr.mxu0 0.0
  %3825 = vmatpush1.msra.mxu0 0.0
  %3826 = vmatprep.subr.mxu0 0.0
  %3827 = vmatpush1.msra.mxu0 0.0
  %3828 = vmatprep.subr.mxu0 0.0
  %3829 = vmatpush1.msra.mxu0 0.0
  %3830 = vmatprep.subr.mxu0 0.0
  %3831 = vmatpush1.msra.mxu0 0.0
  %3832 = vmatprep.subr.mxu0 0.0
  %3833 = vmatpush1.msra.mxu0 0.0
  %3834 = vmatprep.subr.mxu0 0.0
  %3835 = vmatpush1.msra.mxu0 0.0
  %3836 = vmatprep.subr.mxu0 0.0
  %3837 = vmatpush1.msra.mxu0 0.0
  %3838 = vmatprep.subr.mxu0 0.0
  %3839 = vmatpush1.msra.mxu0 0.0
  %3840 = vmatprep.subr.mxu0 0.0
  %3841 = vmatpush1.msra.mxu0 0.0
  %3842 = vmatprep.mubr.f32.mxu0 0.0
  %3843 = vmatmul.mubr.f32.gmra.mrb[0].mxu0 %v3699
  %v3844 = vpop.f32.mrb[0].mxu0
  %v3845 = vadd.f32 0.0, %v3844
  %v3846 = vpop.f32.mrb[0].mxu0
  %v3847 = vadd.f32 0.0, %v3846
  %3848 = vdwg.mxu0
  %v3849 = vadd.f32 %v3703, %v3774
  %v3850 = vadd.f32 %v3704, %v3776
  %v3851 = vadd.f32 %v3705, %v3845
  %v3852 = vadd.f32 %v3706, %v3847
  %v3853 = vxor.u32 %v3849, 2147483648
  %v3854 = vxor.u32 %v3850, 2147483648
  %v3855 = vxor.u32 %v3851, 2147483648
  %v3856 = vmul.f32 %v3853, 1.442695
  %v3857 = vpow.pop %v3856
  %v3858 = vmul.f32 %v3854, 1.442695
  %v3859 = vpow.pop %v3858
  %v3860 = vmul.f32 %v3855, 1.442695
  %v3861 = vpow.pop %v3860
  %v3862 = vadd.f32 %v3857, 1.0
  %v3863 = vadd.f32 %v3859, 1.0
  %v3864 = vadd.f32 %v3861, 1.0
  %v3865 = vrcp.pop %v3862
  %v3866 = vmul.f32 1.0, %v3865
  %v3867 = vrcp.pop %v3863
  %v3868 = vmul.f32 1.0, %v3867
  %v3869 = vrcp.pop %v3864
  %v3870 = vmul.f32 1.0, %v3869
  %v3871 = vtanh.pop %v3852
  %v3872 = vmul.f32 %v3868, %v3697
  %v3873 = vmul.f32 %v3866, %v3871
  %v3874 = vadd.f32 %v3872, %v3873
  %v3875 = vtanh.pop %v3874
  %v3876 = vmul.f32 %v3870, %v3875
  %3877 = vst [vmem:[%s2033] sm:$0xff] %v3876
  %s3878 = smul.addr %s2035, 8
  %s3879 = scalar_lea.vmem [#allocation5], %s3878
  %v3880 = vld [vmem:[%s3879] sm:$0xff]
  %v3881 = vld [vmem:[%s3879 + $0x8] sm:$0xff]
  %v3882 = vld [vmem:[%s3879 + $0x10] sm:$0xff]
  %v3883 = vld [vmem:[%s3879 + $0x18] sm:$0xff]
  %3884 = vmatprep.subr.mxu0 %v2749
  %3885 = vmatpush1.msra.mxu0 %v2748
  %3886 = vmatprep.subr.mxu0 %v2753
  %3887 = vmatpush1.msra.mxu0 %v2752
  %3888 = vmatprep.subr.mxu0 %v2757
  %3889 = vmatpush1.msra.mxu0 %v2756
  %3890 = vmatprep.subr.mxu0 %v2761
  %3891 = vmatpush1.msra.mxu0 %v2760
  %3892 = vmatprep.subr.mxu0 %v2765
  %3893 = vmatpush1.msra.mxu0 %v2764
  %3894 = vmatprep.subr.mxu0 %v2769
  %3895 = vmatpush1.msra.mxu0 %v2768
  %3896 = vmatprep.subr.mxu0 %v2773
  %3897 = vmatpush1.msra.mxu0 %v2772
  %3898 = vmatprep.subr.mxu0 %v2777
  %3899 = vmatpush1.msra.mxu0 %v2776
  %3900 = vmatprep.subr.mxu0 %v2781
  %3901 = vmatpush1.msra.mxu0 %v2780
  %3902 = vmatprep.subr.mxu0 %v2785
  %3903 = vmatpush1.msra.mxu0 %v2784
  %3904 = vmatprep.subr.mxu0 %v2789
  %3905 = vmatpush1.msra.mxu0 %v2788
  %3906 = vmatprep.subr.mxu0 %v2793
  %3907 = vmatpush1.msra.mxu0 %v2792
  %3908 = vmatprep.subr.mxu0 %v2797
  %3909 = vmatpush1.msra.mxu0 %v2796
  %3910 = vmatprep.subr.mxu0 %v2801
  %3911 = vmatpush1.msra.mxu0 %v2800
  %3912 = vmatprep.subr.mxu0 %v2805
  %3913 = vmatpush1.msra.mxu0 %v2804
  %3914 = vmatprep.subr.mxu0 %v2809
  %3915 = vmatpush1.msra.mxu0 %v2808
  %3916 = vmatprep.subr.mxu0 0.0
  %3917 = vmatpush1.msra.mxu0 0.0
  %3918 = vmatprep.subr.mxu0 0.0
  %3919 = vmatpush1.msra.mxu0 0.0
  %3920 = vmatprep.subr.mxu0 0.0
  %3921 = vmatpush1.msra.mxu0 0.0
  %3922 = vmatprep.subr.mxu0 0.0
  %3923 = vmatpush1.msra.mxu0 0.0
  %3924 = vmatprep.subr.mxu0 0.0
  %3925 = vmatpush1.msra.mxu0 0.0
  %3926 = vmatprep.subr.mxu0 0.0
  %3927 = vmatpush1.msra.mxu0 0.0
  %3928 = vmatprep.subr.mxu0 0.0
  %3929 = vmatpush1.msra.mxu0 0.0
  %3930 = vmatprep.subr.mxu0 0.0
  %3931 = vmatpush1.msra.mxu0 0.0
  %3932 = vmatprep.subr.mxu0 0.0
  %3933 = vmatpush1.msra.mxu0 0.0
  %3934 = vmatprep.subr.mxu0 0.0
  %3935 = vmatpush1.msra.mxu0 0.0
  %3936 = vmatprep.subr.mxu0 0.0
  %3937 = vmatpush1.msra.mxu0 0.0
  %3938 = vmatprep.subr.mxu0 0.0
  %3939 = vmatpush1.msra.mxu0 0.0
  %3940 = vmatprep.subr.mxu0 0.0
  %3941 = vmatpush1.msra.mxu0 0.0
  %3942 = vmatprep.subr.mxu0 0.0
  %3943 = vmatpush1.msra.mxu0 0.0
  %3944 = vmatprep.subr.mxu0 0.0
  %3945 = vmatpush1.msra.mxu0 0.0
  %3946 = vmatprep.subr.mxu0 0.0
  %3947 = vmatpush1.msra.mxu0 0.0
  %3948 = vmatprep.mubr.f32.mxu0 0.0
  %3949 = vmatmul.mubr.f32.gmra.mrb[0].mxu0 %v3876
  %v3950 = vpop.f32.mrb[0].mxu0
  %v3951 = vadd.f32 0.0, %v3950
  %v3952 = vpop.f32.mrb[0].mxu0
  %v3953 = vadd.f32 0.0, %v3952
  %3954 = vdwg.mxu0
  %3955 = vmatprep.subr.mxu0 %v2751
  %3956 = vmatpush1.msra.mxu0 %v2750
  %3957 = vmatprep.subr.mxu0 %v2755
  %3958 = vmatpush1.msra.mxu0 %v2754
  %3959 = vmatprep.subr.mxu0 %v2759
  %3960 = vmatpush1.msra.mxu0 %v2758
  %3961 = vmatprep.subr.mxu0 %v2763
  %3962 = vmatpush1.msra.mxu0 %v2762
  %3963 = vmatprep.subr.mxu0 %v2767
  %3964 = vmatpush1.msra.mxu0 %v2766
  %3965 = vmatprep.subr.mxu0 %v2771
  %3966 = vmatpush1.msra.mxu0 %v2770
  %3967 = vmatprep.subr.mxu0 %v2775
  %3968 = vmatpush1.msra.mxu0 %v2774
  %3969 = vmatprep.subr.mxu0 %v2779
  %3970 = vmatpush1.msra.mxu0 %v2778
  %3971 = vmatprep.subr.mxu0 %v2783
  %3972 = vmatpush1.msra.mxu0 %v2782
  %3973 = vmatprep.subr.mxu0 %v2787
  %3974 = vmatpush1.msra.mxu0 %v2786
  %3975 = vmatprep.subr.mxu0 %v2791
  %3976 = vmatpush1.msra.mxu0 %v2790
  %3977 = vmatprep.subr.mxu0 %v2795
  %3978 = vmatpush1.msra.mxu0 %v2794
  %3979 = vmatprep.subr.mxu0 %v2799
  %3980 = vmatpush1.msra.mxu0 %v2798
  %3981 = vmatprep.subr.mxu0 %v2803
  %3982 = vmatpush1.msra.mxu0 %v2802
  %3983 = vmatprep.subr.mxu0 %v2807
  %3984 = vmatpush1.msra.mxu0 %v2806
  %3985 = vmatprep.subr.mxu0 %v2811
  %3986 = vmatpush1.msra.mxu0 %v2810
  %3987 = vmatprep.subr.mxu0 0.0
  %3988 = vmatpush1.msra.mxu0 0.0
  %3989 = vmatprep.subr.mxu0 0.0
  %3990 = vmatpush1.msra.mxu0 0.0
  %3991 = vmatprep.subr.mxu0 0.0
  %3992 = vmatpush1.msra.mxu0 0.0
  %3993 = vmatprep.subr.mxu0 0.0
  %3994 = vmatpush1.msra.mxu0 0.0
  %3995 = vmatprep.subr.mxu0 0.0
  %3996 = vmatpush1.msra.mxu0 0.0
  %3997 = vmatprep.subr.mxu0 0.0
  %3998 = vmatpush1.msra.mxu0 0.0
  %3999 = vmatprep.subr.mxu0 0.0
  %4000 = vmatpush1.msra.mxu0 0.0
  %4001 = vmatprep.subr.mxu0 0.0
  %4002 = vmatpush1.msra.mxu0 0.0
  %4003 = vmatprep.subr.mxu0 0.0
  %4004 = vmatpush1.msra.mxu0 0.0
  %4005 = vmatprep.subr.mxu0 0.0
  %4006 = vmatpush1.msra.mxu0 0.0
  %4007 = vmatprep.subr.mxu0 0.0
  %4008 = vmatpush1.msra.mxu0 0.0
  %4009 = vmatprep.subr.mxu0 0.0
  %4010 = vmatpush1.msra.mxu0 0.0
  %4011 = vmatprep.subr.mxu0 0.0
  %4012 = vmatpush1.msra.mxu0 0.0
  %4013 = vmatprep.subr.mxu0 0.0
  %4014 = vmatpush1.msra.mxu0 0.0
  %4015 = vmatprep.subr.mxu0 0.0
  %4016 = vmatpush1.msra.mxu0 0.0
  %4017 = vmatprep.subr.mxu0 0.0
  %4018 = vmatpush1.msra.mxu0 0.0
  %4019 = vmatprep.mubr.f32.mxu0 0.0
  %4020 = vmatmul.mubr.f32.gmra.mrb[0].mxu0 %v3876
  %v4021 = vpop.f32.mrb[0].mxu0
  %v4022 = vadd.f32 0.0, %v4021
  %v4023 = vpop.f32.mrb[0].mxu0
  %v4024 = vadd.f32 0.0, %v4023
  %4025 = vdwg.mxu0
  %v4026 = vadd.f32 %v3880, %v3951
  %v4027 = vadd.f32 %v3881, %v3953
  %v4028 = vadd.f32 %v3882, %v4022
  %v4029 = vadd.f32 %v3883, %v4024
  %v4030 = vxor.u32 %v4026, 2147483648
  %v4031 = vxor.u32 %v4027, 2147483648
  %v4032 = vxor.u32 %v4028, 2147483648
  %v4033 = vmul.f32 %v4030, 1.442695
  %v4034 = vpow.pop %v4033
  %v4035 = vmul.f32 %v4031, 1.442695
  %v4036 = vpow.pop %v4035
  %v4037 = vmul.f32 %v4032, 1.442695
  %v4038 = vpow.pop %v4037
  %v4039 = vadd.f32 %v4034, 1.0
  %v4040 = vadd.f32 %v4036, 1.0
  %v4041 = vadd.f32 %v4038, 1.0
  %v4042 = vrcp.pop %v4039
  %v4043 = vmul.f32 1.0, %v4042
  %v4044 = vrcp.pop %v4040
  %v4045 = vmul.f32 1.0, %v4044
  %v4046 = vrcp.pop %v4041
  %v4047 = vmul.f32 1.0, %v4046
  %v4048 = vtanh.pop %v4029
  %v4049 = vmul.f32 %v4045, %v3874
  %v4050 = vmul.f32 %v4043, %v4048
  %v4051 = vadd.f32 %v4049, %v4050
  %v4052 = vtanh.pop %v4051
  %v4053 = vmul.f32 %v4047, %v4052
  %4054 = vst [vmem:[%s2212] sm:$0xff] %v4053
  %s4055 = smul.addr %s2214, 8
  %s4056 = scalar_lea.vmem [#allocation5], %s4055
  %v4057 = vld [vmem:[%s4056] sm:$0xff]
  %v4058 = vld [vmem:[%s4056 + $0x8] sm:$0xff]
  %v4059 = vld [vmem:[%s4056 + $0x10] sm:$0xff]
  %v4060 = vld [vmem:[%s4056 + $0x18] sm:$0xff]
  %4061 = vmatprep.subr.mxu0 %v2749
  %4062 = vmatpush1.msra.mxu0 %v2748
  %4063 = vmatprep.subr.mxu0 %v2753
  %4064 = vmatpush1.msra.mxu0 %v2752
  %4065 = vmatprep.subr.mxu0 %v2757
  %4066 = vmatpush1.msra.mxu0 %v2756
  %4067 = vmatprep.subr.mxu0 %v2761
  %4068 = vmatpush1.msra.mxu0 %v2760
  %4069 = vmatprep.subr.mxu0 %v2765
  %4070 = vmatpush1.msra.mxu0 %v2764
  %4071 = vmatprep.subr.mxu0 %v2769
  %4072 = vmatpush1.msra.mxu0 %v2768
  %4073 = vmatprep.subr.mxu0 %v2773
  %4074 = vmatpush1.msra.mxu0 %v2772
  %4075 = vmatprep.subr.mxu0 %v2777
  %4076 = vmatpush1.msra.mxu0 %v2776
  %4077 = vmatprep.subr.mxu0 %v2781
  %4078 = vmatpush1.msra.mxu0 %v2780
  %4079 = vmatprep.subr.mxu0 %v2785
  %4080 = vmatpush1.msra.mxu0 %v2784
  %4081 = vmatprep.subr.mxu0 %v2789
  %4082 = vmatpush1.msra.mxu0 %v2788
  %4083 = vmatprep.subr.mxu0 %v2793
  %4084 = vmatpush1.msra.mxu0 %v2792
  %4085 = vmatprep.subr.mxu0 %v2797
  %4086 = vmatpush1.msra.mxu0 %v2796
  %4087 = vmatprep.subr.mxu0 %v2801
  %4088 = vmatpush1.msra.mxu0 %v2800
  %4089 = vmatprep.subr.mxu0 %v2805
  %4090 = vmatpush1.msra.mxu0 %v2804
  %4091 = vmatprep.subr.mxu0 %v2809
  %4092 = vmatpush1.msra.mxu0 %v2808
  %4093 = vmatprep.subr.mxu0 0.0
  %4094 = vmatpush1.msra.mxu0 0.0
  %4095 = vmatprep.subr.mxu0 0.0
  %4096 = vmatpush1.msra.mxu0 0.0
  %4097 = vmatprep.subr.mxu0 0.0
  %4098 = vmatpush1.msra.mxu0 0.0
  %4099 = vmatprep.subr.mxu0 0.0
  %4100 = vmatpush1.msra.mxu0 0.0
  %4101 = vmatprep.subr.mxu0 0.0
  %4102 = vmatpush1.msra.mxu0 0.0
  %4103 = vmatprep.subr.mxu0 0.0
  %4104 = vmatpush1.msra.mxu0 0.0
  %4105 = vmatprep.subr.mxu0 0.0
  %4106 = vmatpush1.msra.mxu0 0.0
  %4107 = vmatprep.subr.mxu0 0.0
  %4108 = vmatpush1.msra.mxu0 0.0
  %4109 = vmatprep.subr.mxu0 0.0
  %4110 = vmatpush1.msra.mxu0 0.0
  %4111 = vmatprep.subr.mxu0 0.0
  %4112 = vmatpush1.msra.mxu0 0.0
  %4113 = vmatprep.subr.mxu0 0.0
  %4114 = vmatpush1.msra.mxu0 0.0
  %4115 = vmatprep.subr.mxu0 0.0
  %4116 = vmatpush1.msra.mxu0 0.0
  %4117 = vmatprep.subr.mxu0 0.0
  %4118 = vmatpush1.msra.mxu0 0.0
  %4119 = vmatprep.subr.mxu0 0.0
  %4120 = vmatpush1.msra.mxu0 0.0
  %4121 = vmatprep.subr.mxu0 0.0
  %4122 = vmatpush1.msra.mxu0 0.0
  %4123 = vmatprep.subr.mxu0 0.0
  %4124 = vmatpush1.msra.mxu0 0.0
  %4125 = vmatprep.mubr.f32.mxu0 0.0
  %4126 = vmatmul.mubr.f32.gmra.mrb[0].mxu0 %v4053
  %v4127 = vpop.f32.mrb[0].mxu0
  %v4128 = vadd.f32 0.0, %v4127
  %v4129 = vpop.f32.mrb[0].mxu0
  %v4130 = vadd.f32 0.0, %v4129
  %4131 = vdwg.mxu0
  %4132 = vmatprep.subr.mxu0 %v2751
  %4133 = vmatpush1.msra.mxu0 %v2750
  %4134 = vmatprep.subr.mxu0 %v2755
  %4135 = vmatpush1.msra.mxu0 %v2754
  %4136 = vmatprep.subr.mxu0 %v2759
  %4137 = vmatpush1.msra.mxu0 %v2758
  %4138 = vmatprep.subr.mxu0 %v2763
  %4139 = vmatpush1.msra.mxu0 %v2762
  %4140 = vmatprep.subr.mxu0 %v2767
  %4141 = vmatpush1.msra.mxu0 %v2766
  %4142 = vmatprep.subr.mxu0 %v2771
  %4143 = vmatpush1.msra.mxu0 %v2770
  %4144 = vmatprep.subr.mxu0 %v2775
  %4145 = vmatpush1.msra.mxu0 %v2774
  %4146 = vmatprep.subr.mxu0 %v2779
  %4147 = vmatpush1.msra.mxu0 %v2778
  %4148 = vmatprep.subr.mxu0 %v2783
  %4149 = vmatpush1.msra.mxu0 %v2782
  %4150 = vmatprep.subr.mxu0 %v2787
  %4151 = vmatpush1.msra.mxu0 %v2786
  %4152 = vmatprep.subr.mxu0 %v2791
  %4153 = vmatpush1.msra.mxu0 %v2790
  %4154 = vmatprep.subr.mxu0 %v2795
  %4155 = vmatpush1.msra.mxu0 %v2794
  %4156 = vmatprep.subr.mxu0 %v2799
  %4157 = vmatpush1.msra.mxu0 %v2798
  %4158 = vmatprep.subr.mxu0 %v2803
  %4159 = vmatpush1.msra.mxu0 %v2802
  %4160 = vmatprep.subr.mxu0 %v2807
  %4161 = vmatpush1.msra.mxu0 %v2806
  %4162 = vmatprep.subr.mxu0 %v2811
  %4163 = vmatpush1.msra.mxu0 %v2810
  %4164 = vmatprep.subr.mxu0 0.0
  %4165 = vmatpush1.msra.mxu0 0.0
  %4166 = vmatprep.subr.mxu0 0.0
  %4167 = vmatpush1.msra.mxu0 0.0
  %4168 = vmatprep.subr.mxu0 0.0
  %4169 = vmatpush1.msra.mxu0 0.0
  %4170 = vmatprep.subr.mxu0 0.0
  %4171 = vmatpush1.msra.mxu0 0.0
  %4172 = vmatprep.subr.mxu0 0.0
  %4173 = vmatpush1.msra.mxu0 0.0
  %4174 = vmatprep.subr.mxu0 0.0
  %4175 = vmatpush1.msra.mxu0 0.0
  %4176 = vmatprep.subr.mxu0 0.0
  %4177 = vmatpush1.msra.mxu0 0.0
  %4178 = vmatprep.subr.mxu0 0.0
  %4179 = vmatpush1.msra.mxu0 0.0
  %4180 = vmatprep.subr.mxu0 0.0
  %4181 = vmatpush1.msra.mxu0 0.0
  %4182 = vmatprep.subr.mxu0 0.0
  %4183 = vmatpush1.msra.mxu0 0.0
  %4184 = vmatprep.subr.mxu0 0.0
  %4185 = vmatpush1.msra.mxu0 0.0
  %4186 = vmatprep.subr.mxu0 0.0
  %4187 = vmatpush1.msra.mxu0 0.0
  %4188 = vmatprep.subr.mxu0 0.0
  %4189 = vmatpush1.msra.mxu0 0.0
  %4190 = vmatprep.subr.mxu0 0.0
  %4191 = vmatpush1.msra.mxu0 0.0
  %4192 = vmatprep.subr.mxu0 0.0
  %4193 = vmatpush1.msra.mxu0 0.0
  %4194 = vmatprep.subr.mxu0 0.0
  %4195 = vmatpush1.msra.mxu0 0.0
  %4196 = vmatprep.mubr.f32.mxu0 0.0
  %4197 = vmatmul.mubr.f32.gmra.mrb[0].mxu0 %v4053
  %v4198 = vpop.f32.mrb[0].mxu0
  %v4199 = vadd.f32 0.0, %v4198
  %v4200 = vpop.f32.mrb[0].mxu0
  %v4201 = vadd.f32 0.0, %v4200
  %4202 = vdwg.mxu0
  %v4203 = vadd.f32 %v4057, %v4128
  %v4204 = vadd.f32 %v4058, %v4130
  %v4205 = vadd.f32 %v4059, %v4199
  %v4206 = vadd.f32 %v4060, %v4201
  %v4207 = vxor.u32 %v4203, 2147483648
  %v4208 = vxor.u32 %v4204, 2147483648
  %v4209 = vxor.u32 %v4205, 2147483648
  %v4210 = vmul.f32 %v4207, 1.442695
  %v4211 = vpow.pop %v4210
  %v4212 = vmul.f32 %v4208, 1.442695
  %v4213 = vpow.pop %v4212
  %v4214 = vmul.f32 %v4209, 1.442695
  %v4215 = vpow.pop %v4214
  %v4216 = vadd.f32 %v4211, 1.0
  %v4217 = vadd.f32 %v4213, 1.0
  %v4218 = vadd.f32 %v4215, 1.0
  %v4219 = vrcp.pop %v4216
  %v4220 = vmul.f32 1.0, %v4219
  %v4221 = vrcp.pop %v4217
  %v4222 = vmul.f32 1.0, %v4221
  %v4223 = vrcp.pop %v4218
  %v4224 = vmul.f32 1.0, %v4223
  %v4225 = vtanh.pop %v4206
  %v4226 = vmul.f32 %v4222, %v4051
  %v4227 = vmul.f32 %v4220, %v4225
  %v4228 = vadd.f32 %v4226, %v4227
  %v4229 = vtanh.pop %v4228
  %v4230 = vmul.f32 %v4224, %v4229
  %4231 = vst [vmem:[%s2391] sm:$0xff] %v4230
  %4232 = vst [vmem:[%s2812] sm:$0xff] %v4230
  %4233 = vst [vmem:[%s2814] sm:$0xff] %v4228
  %v4234 = vld [vmem:[#allocation4] sm:$0xff]
  %v4235 = vld [vmem:[#allocation4 + $0x8] sm:$0xff]
  %v4236 = vld [vmem:[#allocation4 + $0x10] sm:$0xff]
  %v4237 = vld [vmem:[#allocation4 + $0x18] sm:$0xff]
  %v4238 = vld [vmem:[#allocation4 + $0x20] sm:$0xff]
  %v4239 = vld [vmem:[#allocation4 + $0x28] sm:$0xff]
  %v4240 = vld [vmem:[#allocation4 + $0x30] sm:$0xff]
  %v4241 = vld [vmem:[#allocation4 + $0x38] sm:$0xff]
  %s4242 = scalar_lea.vmem [#allocation6], 512
  %v4243 = vld [vmem:[%s4242] sm:$0xff]
  %v4244 = vld [vmem:[%s4242 + $0x8] sm:$0xff]
  %v4245 = vld [vmem:[%s4242 + $0x10] sm:$0xff]
  %v4246 = vld [vmem:[%s4242 + $0x18] sm:$0xff]
  %v4247 = vld [vmem:[%s4242 + $0x20] sm:$0xff]
  %v4248 = vld [vmem:[%s4242 + $0x28] sm:$0xff]
  %v4249 = vld [vmem:[%s4242 + $0x30] sm:$0xff]
  %v4250 = vld [vmem:[%s4242 + $0x38] sm:$0xff]
  %v4251 = vld [vmem:[%s4242 + $0x40] sm:$0xff]
  %v4252 = vld [vmem:[%s4242 + $0x48] sm:$0xff]
  %v4253 = vld [vmem:[%s4242 + $0x50] sm:$0xff]
  %v4254 = vld [vmem:[%s4242 + $0x58] sm:$0xff]
  %v4255 = vld [vmem:[%s4242 + $0x60] sm:$0xff]
  %v4256 = vld [vmem:[%s4242 + $0x68] sm:$0xff]
  %v4257 = vld [vmem:[%s4242 + $0x70] sm:$0xff]
  %v4258 = vld [vmem:[%s4242 + $0x78] sm:$0xff]
  %v4259 = vld [vmem:[%s4242 + $0x80] sm:$0xff]
  %v4260 = vld [vmem:[%s4242 + $0x88] sm:$0xff]
  %v4261 = vld [vmem:[%s4242 + $0x90] sm:$0xff]
  %v4262 = vld [vmem:[%s4242 + $0x98] sm:$0xff]
  %v4263 = vld [vmem:[%s4242 + $0xa0] sm:$0xff]
  %v4264 = vld [vmem:[%s4242 + $0xa8] sm:$0xff]
  %v4265 = vld [vmem:[%s4242 + $0xb0] sm:$0xff]
  %v4266 = vld [vmem:[%s4242 + $0xb8] sm:$0xff]
  %v4267 = vld [vmem:[%s4242 + $0xc0] sm:$0xff]
  %v4268 = vld [vmem:[%s4242 + $0xc8] sm:$0xff]
  %v4269 = vld [vmem:[%s4242 + $0xd0] sm:$0xff]
  %v4270 = vld [vmem:[%s4242 + $0xd8] sm:$0xff]
  %v4271 = vld [vmem:[%s4242 + $0xe0] sm:$0xff]
  %v4272 = vld [vmem:[%s4242 + $0xe8] sm:$0xff]
  %v4273 = vld [vmem:[%s4242 + $0xf0] sm:$0xff]
  %v4274 = vld [vmem:[%s4242 + $0xf8] sm:$0xff]
  %v4275 = vld [vmem:[%s4242 + $0x100] sm:$0xff]
  %v4276 = vld [vmem:[%s4242 + $0x108] sm:$0xff]
  %v4277 = vld [vmem:[%s4242 + $0x110] sm:$0xff]
  %v4278 = vld [vmem:[%s4242 + $0x118] sm:$0xff]
  %v4279 = vld [vmem:[%s4242 + $0x120] sm:$0xff]
  %v4280 = vld [vmem:[%s4242 + $0x128] sm:$0xff]
  %v4281 = vld [vmem:[%s4242 + $0x130] sm:$0xff]
  %v4282 = vld [vmem:[%s4242 + $0x138] sm:$0xff]
  %v4283 = vld [vmem:[%s4242 + $0x140] sm:$0xff]
  %v4284 = vld [vmem:[%s4242 + $0x148] sm:$0xff]
  %v4285 = vld [vmem:[%s4242 + $0x150] sm:$0xff]
  %v4286 = vld [vmem:[%s4242 + $0x158] sm:$0xff]
  %v4287 = vld [vmem:[%s4242 + $0x160] sm:$0xff]
  %v4288 = vld [vmem:[%s4242 + $0x168] sm:$0xff]
  %v4289 = vld [vmem:[%s4242 + $0x170] sm:$0xff]
  %v4290 = vld [vmem:[%s4242 + $0x178] sm:$0xff]
  %v4291 = vld [vmem:[%s4242 + $0x180] sm:$0xff]
  %v4292 = vld [vmem:[%s4242 + $0x188] sm:$0xff]
  %v4293 = vld [vmem:[%s4242 + $0x190] sm:$0xff]
  %v4294 = vld [vmem:[%s4242 + $0x198] sm:$0xff]
  %v4295 = vld [vmem:[%s4242 + $0x1a0] sm:$0xff]
  %v4296 = vld [vmem:[%s4242 + $0x1a8] sm:$0xff]
  %v4297 = vld [vmem:[%s4242 + $0x1b0] sm:$0xff]
  %v4298 = vld [vmem:[%s4242 + $0x1b8] sm:$0xff]
  %v4299 = vld [vmem:[%s4242 + $0x1c0] sm:$0xff]
  %v4300 = vld [vmem:[%s4242 + $0x1c8] sm:$0xff]
  %v4301 = vld [vmem:[%s4242 + $0x1d0] sm:$0xff]
  %v4302 = vld [vmem:[%s4242 + $0x1d8] sm:$0xff]
  %v4303 = vld [vmem:[%s4242 + $0x1e0] sm:$0xff]
  %v4304 = vld [vmem:[%s4242 + $0x1e8] sm:$0xff]
  %v4305 = vld [vmem:[%s4242 + $0x1f0] sm:$0xff]
  %v4306 = vld [vmem:[%s4242 + $0x1f8] sm:$0xff]
  %v4307 = vld [vmem:[%s7] sm:$0xf]
  %v4309 = vlaneseq
  %v4310 = vshrl.u32 %v4309, 7
  %v4311 = vsub.s32 0, %v4310
  %v4312 = vrot.slane %v4307, %v4311
  %v4313 = vlaneseq
  %v4314 = vshrl.u32 %v4313, 7
  %v4315 = vsub.s32 1, %v4314
  %v4316 = vrot.slane %v4307, %v4315
  %v4317 = vlaneseq
  %v4318 = vshrl.u32 %v4317, 7
  %v4319 = vsub.s32 2, %v4318
  %v4320 = vrot.slane %v4307, %v4319
  %v4321 = vlaneseq
  %v4322 = vshrl.u32 %v4321, 7
  %v4323 = vsub.s32 3, %v4322
  %v4324 = vrot.slane %v4307, %v4323
  %4329 = vmatprep.subr.mxu0 %v4244
  %4330 = vmatpush1.msra.mxu0 %v4243
  %4331 = vmatprep.subr.mxu0 %v4248
  %4332 = vmatpush1.msra.mxu0 %v4247
  %4333 = vmatprep.subr.mxu0 %v4252
  %4334 = vmatpush1.msra.mxu0 %v4251
  %4335 = vmatprep.subr.mxu0 %v4256
  %4336 = vmatpush1.msra.mxu0 %v4255
  %4337 = vmatprep.subr.mxu0 %v4260
  %4338 = vmatpush1.msra.mxu0 %v4259
  %4339 = vmatprep.subr.mxu0 %v4264
  %4340 = vmatpush1.msra.mxu0 %v4263
  %4341 = vmatprep.subr.mxu0 %v4268
  %4342 = vmatpush1.msra.mxu0 %v4267
  %4343 = vmatprep.subr.mxu0 %v4272
  %4344 = vmatpush1.msra.mxu0 %v4271
  %4345 = vmatprep.subr.mxu0 %v4276
  %4346 = vmatpush1.msra.mxu0 %v4275
  %4347 = vmatprep.subr.mxu0 %v4280
  %4348 = vmatpush1.msra.mxu0 %v4279
  %4349 = vmatprep.subr.mxu0 %v4284
  %4350 = vmatpush1.msra.mxu0 %v4283
  %4351 = vmatprep.subr.mxu0 %v4288
  %4352 = vmatpush1.msra.mxu0 %v4287
  %4353 = vmatprep.subr.mxu0 %v4292
  %4354 = vmatpush1.msra.mxu0 %v4291
  %4355 = vmatprep.subr.mxu0 %v4296
  %4356 = vmatpush1.msra.mxu0 %v4295
  %4357 = vmatprep.subr.mxu0 %v4300
  %4358 = vmatpush1.msra.mxu0 %v4299
  %4359 = vmatprep.subr.mxu0 %v4304
  %4360 = vmatpush1.msra.mxu0 %v4303
  %4361 = vmatprep.subr.mxu0 0.0
  %4362 = vmatpush1.msra.mxu0 0.0
  %4363 = vmatprep.subr.mxu0 0.0
  %4364 = vmatpush1.msra.mxu0 0.0
  %4365 = vmatprep.subr.mxu0 0.0
  %4366 = vmatpush1.msra.mxu0 0.0
  %4367 = vmatprep.subr.mxu0 0.0
  %4368 = vmatpush1.msra.mxu0 0.0
  %4369 = vmatprep.subr.mxu0 0.0
  %4370 = vmatpush1.msra.mxu0 0.0
  %4371 = vmatprep.subr.mxu0 0.0
  %4372 = vmatpush1.msra.mxu0 0.0
  %4373 = vmatprep.subr.mxu0 0.0
  %4374 = vmatpush1.msra.mxu0 0.0
  %4375 = vmatprep.subr.mxu0 0.0
  %4376 = vmatpush1.msra.mxu0 0.0
  %4377 = vmatprep.subr.mxu0 0.0
  %4378 = vmatpush1.msra.mxu0 0.0
  %4379 = vmatprep.subr.mxu0 0.0
  %4380 = vmatpush1.msra.mxu0 0.0
  %4381 = vmatprep.subr.mxu0 0.0
  %4382 = vmatpush1.msra.mxu0 0.0
  %4383 = vmatprep.subr.mxu0 0.0
  %4384 = vmatpush1.msra.mxu0 0.0
  %4385 = vmatprep.subr.mxu0 0.0
  %4386 = vmatpush1.msra.mxu0 0.0
  %4387 = vmatprep.subr.mxu0 0.0
  %4388 = vmatpush1.msra.mxu0 0.0
  %4389 = vmatprep.subr.mxu0 0.0
  %4390 = vmatpush1.msra.mxu0 0.0
  %4391 = vmatprep.subr.mxu0 0.0
  %4392 = vmatpush1.msra.mxu0 0.0
  %4393 = vmatprep.mubr.f32.mxu0 0.0
  %4394 = vmatmul.mubr.f32.gmra.mrb[0].mxu0 %v4234
  %v4395 = vpop.f32.mrb[0].mxu0
  %v4396 = vadd.f32 %v4312, %v4395
  %v4397 = vpop.f32.mrb[0].mxu0
  %v4398 = vadd.f32 %v4316, %v4397
  %4399 = vmatprep.mubr.f32.mxu0 0.0
  %4400 = vmatmul.mubr.f32.gmra.mrb[0].mxu0 %v4235
  %v4401 = vpop.f32.mrb[0].mxu0
  %v4402 = vadd.f32 %v4312, %v4401
  %v4403 = vpop.f32.mrb[0].mxu0
  %v4404 = vadd.f32 %v4316, %v4403
  %4405 = vmatprep.mubr.f32.mxu0 0.0
  %4406 = vmatmul.mubr.f32.gmra.mrb[0].mxu0 %v4236
  %v4407 = vpop.f32.mrb[0].mxu0
  %v4408 = vadd.f32 %v4312, %v4407
  %v4409 = vpop.f32.mrb[0].mxu0
  %v4410 = vadd.f32 %v4316, %v4409
  %4411 = vmatprep.mubr.f32.mxu0 0.0
  %4412 = vmatmul.mubr.f32.gmra.mrb[0].mxu0 %v4237
  %v4413 = vpop.f32.mrb[0].mxu0
  %v4414 = vadd.f32 %v4312, %v4413
  %v4415 = vpop.f32.mrb[0].mxu0
  %v4416 = vadd.f32 %v4316, %v4415
  %4417 = vmatprep.mubr.f32.mxu0 0.0
  %4418 = vmatmul.mubr.f32.gmra.mrb[0].mxu0 %v4238
  %v4419 = vpop.f32.mrb[0].mxu0
  %v4420 = vadd.f32 %v4312, %v4419
  %v4421 = vpop.f32.mrb[0].mxu0
  %v4422 = vadd.f32 %v4316, %v4421
  %4423 = vmatprep.mubr.f32.mxu0 0.0
  %4424 = vmatmul.mubr.f32.gmra.mrb[0].mxu0 %v4239
  %v4425 = vpop.f32.mrb[0].mxu0
  %v4426 = vadd.f32 %v4312, %v4425
  %v4427 = vpop.f32.mrb[0].mxu0
  %v4428 = vadd.f32 %v4316, %v4427
  %4429 = vmatprep.mubr.f32.mxu0 0.0
  %4430 = vmatmul.mubr.f32.gmra.mrb[0].mxu0 %v4240
  %v4431 = vpop.f32.mrb[0].mxu0
  %v4432 = vadd.f32 %v4312, %v4431
  %v4433 = vpop.f32.mrb[0].mxu0
  %v4434 = vadd.f32 %v4316, %v4433
  %4435 = vmatprep.mubr.f32.mxu0 0.0
  %4436 = vmatmul.mubr.f32.gmra.mrb[0].mxu0 %v4241
  %v4437 = vpop.f32.mrb[0].mxu0
  %v4438 = vadd.f32 %v4312, %v4437
  %v4439 = vpop.f32.mrb[0].mxu0
  %v4440 = vadd.f32 %v4316, %v4439
  %4441 = vdwg.mxu0
  %4442 = vmatprep.subr.mxu0 %v4246
  %4443 = vmatpush1.msra.mxu0 %v4245
  %4444 = vmatprep.subr.mxu0 %v4250
  %4445 = vmatpush1.msra.mxu0 %v4249
  %4446 = vmatprep.subr.mxu0 %v4254
  %4447 = vmatpush1.msra.mxu0 %v4253
  %4448 = vmatprep.subr.mxu0 %v4258
  %4449 = vmatpush1.msra.mxu0 %v4257
  %4450 = vmatprep.subr.mxu0 %v4262
  %4451 = vmatpush1.msra.mxu0 %v4261
  %4452 = vmatprep.subr.mxu0 %v4266
  %4453 = vmatpush1.msra.mxu0 %v4265
  %4454 = vmatprep.subr.mxu0 %v4270
  %4455 = vmatpush1.msra.mxu0 %v4269
  %4456 = vmatprep.subr.mxu0 %v4274
  %4457 = vmatpush1.msra.mxu0 %v4273
  %4458 = vmatprep.subr.mxu0 %v4278
  %4459 = vmatpush1.msra.mxu0 %v4277
  %4460 = vmatprep.subr.mxu0 %v4282
  %4461 = vmatpush1.msra.mxu0 %v4281
  %4462 = vmatprep.subr.mxu0 %v4286
  %4463 = vmatpush1.msra.mxu0 %v4285
  %4464 = vmatprep.subr.mxu0 %v4290
  %4465 = vmatpush1.msra.mxu0 %v4289
  %4466 = vmatprep.subr.mxu0 %v4294
  %4467 = vmatpush1.msra.mxu0 %v4293
  %4468 = vmatprep.subr.mxu0 %v4298
  %4469 = vmatpush1.msra.mxu0 %v4297
  %4470 = vmatprep.subr.mxu0 %v4302
  %4471 = vmatpush1.msra.mxu0 %v4301
  %4472 = vmatprep.subr.mxu0 %v4306
  %4473 = vmatpush1.msra.mxu0 %v4305
  %4474 = vmatprep.subr.mxu0 0.0
  %4475 = vmatpush1.msra.mxu0 0.0
  %4476 = vmatprep.subr.mxu0 0.0
  %4477 = vmatpush1.msra.mxu0 0.0
  %4478 = vmatprep.subr.mxu0 0.0
  %4479 = vmatpush1.msra.mxu0 0.0
  %4480 = vmatprep.subr.mxu0 0.0
  %4481 = vmatpush1.msra.mxu0 0.0
  %4482 = vmatprep.subr.mxu0 0.0
  %4483 = vmatpush1.msra.mxu0 0.0
  %4484 = vmatprep.subr.mxu0 0.0
  %4485 = vmatpush1.msra.mxu0 0.0
  %4486 = vmatprep.subr.mxu0 0.0
  %4487 = vmatpush1.msra.mxu0 0.0
  %4488 = vmatprep.subr.mxu0 0.0
  %4489 = vmatpush1.msra.mxu0 0.0
  %4490 = vmatprep.subr.mxu0 0.0
  %4491 = vmatpush1.msra.mxu0 0.0
  %4492 = vmatprep.subr.mxu0 0.0
  %4493 = vmatpush1.msra.mxu0 0.0
  %4494 = vmatprep.subr.mxu0 0.0
  %4495 = vmatpush1.msra.mxu0 0.0
  %4496 = vmatprep.subr.mxu0 0.0
  %4497 = vmatpush1.msra.mxu0 0.0
  %4498 = vmatprep.subr.mxu0 0.0
  %4499 = vmatpush1.msra.mxu0 0.0
  %4500 = vmatprep.subr.mxu0 0.0
  %4501 = vmatpush1.msra.mxu0 0.0
  %4502 = vmatprep.subr.mxu0 0.0
  %4503 = vmatpush1.msra.mxu0 0.0
  %4504 = vmatprep.subr.mxu0 0.0
  %4505 = vmatpush1.msra.mxu0 0.0
  %4506 = vmatprep.mubr.f32.mxu0 0.0
  %4507 = vmatmul.mubr.f32.gmra.mrb[0].mxu0 %v4234
  %v4508 = vpop.f32.mrb[0].mxu0
  %v4509 = vadd.f32 %v4320, %v4508
  %v4510 = vpop.f32.mrb[0].mxu0
  %v4511 = vadd.f32 %v4324, %v4510
  %4512 = vmatprep.mubr.f32.mxu0 0.0
  %4513 = vmatmul.mubr.f32.gmra.mrb[0].mxu0 %v4235
  %v4514 = vpop.f32.mrb[0].mxu0
  %v4515 = vadd.f32 %v4320, %v4514
  %v4516 = vpop.f32.mrb[0].mxu0
  %v4517 = vadd.f32 %v4324, %v4516
  %4518 = vmatprep.mubr.f32.mxu0 0.0
  %4519 = vmatmul.mubr.f32.gmra.mrb[0].mxu0 %v4236
  %v4520 = vpop.f32.mrb[0].mxu0
  %v4521 = vadd.f32 %v4320, %v4520
  %v4522 = vpop.f32.mrb[0].mxu0
  %v4523 = vadd.f32 %v4324, %v4522
  %4524 = vmatprep.mubr.f32.mxu0 0.0
  %4525 = vmatmul.mubr.f32.gmra.mrb[0].mxu0 %v4237
  %v4526 = vpop.f32.mrb[0].mxu0
  %v4527 = vadd.f32 %v4320, %v4526
  %v4528 = vpop.f32.mrb[0].mxu0
  %v4529 = vadd.f32 %v4324, %v4528
  %4530 = vmatprep.mubr.f32.mxu0 0.0
  %4531 = vmatmul.mubr.f32.gmra.mrb[0].mxu0 %v4238
  %v4532 = vpop.f32.mrb[0].mxu0
  %v4533 = vadd.f32 %v4320, %v4532
  %v4534 = vpop.f32.mrb[0].mxu0
  %v4535 = vadd.f32 %v4324, %v4534
  %4536 = vmatprep.mubr.f32.mxu0 0.0
  %4537 = vmatmul.mubr.f32.gmra.mrb[0].mxu0 %v4239
  %v4538 = vpop.f32.mrb[0].mxu0
  %v4539 = vadd.f32 %v4320, %v4538
  %v4540 = vpop.f32.mrb[0].mxu0
  %v4541 = vadd.f32 %v4324, %v4540
  %4542 = vmatprep.mubr.f32.mxu0 0.0
  %4543 = vmatmul.mubr.f32.gmra.mrb[0].mxu0 %v4240
  %v4544 = vpop.f32.mrb[0].mxu0
  %v4545 = vadd.f32 %v4320, %v4544
  %v4546 = vpop.f32.mrb[0].mxu0
  %v4547 = vadd.f32 %v4324, %v4546
  %4548 = vmatprep.mubr.f32.mxu0 0.0
  %4549 = vmatmul.mubr.f32.gmra.mrb[0].mxu0 %v4241
  %v4550 = vpop.f32.mrb[0].mxu0
  %v4551 = vadd.f32 %v4320, %v4550
  %v4552 = vpop.f32.mrb[0].mxu0
  %v4553 = vadd.f32 %v4324, %v4552
  %4554 = vdwg.mxu0
  %4555 = vst [vmem:[#allocation5] sm:$0xff] %v4396
  %4556 = vst [vmem:[#allocation5 + $0x8] sm:$0xff] %v4398
  %4557 = vst [vmem:[#allocation5 + $0x10] sm:$0xff] %v4509
  %4558 = vst [vmem:[#allocation5 + $0x18] sm:$0xff] %v4511
  %4559 = vst [vmem:[#allocation5 + $0x20] sm:$0xff] %v4402
  %4560 = vst [vmem:[#allocation5 + $0x28] sm:$0xff] %v4404
  %4561 = vst [vmem:[#allocation5 + $0x30] sm:$0xff] %v4515
  %4562 = vst [vmem:[#allocation5 + $0x38] sm:$0xff] %v4517
  %4563 = vst [vmem:[#allocation5 + $0x40] sm:$0xff] %v4408
  %4564 = vst [vmem:[#allocation5 + $0x48] sm:$0xff] %v4410
  %4565 = vst [vmem:[#allocation5 + $0x50] sm:$0xff] %v4521
  %4566 = vst [vmem:[#allocation5 + $0x58] sm:$0xff] %v4523
  %4567 = vst [vmem:[#allocation5 + $0x60] sm:$0xff] %v4414
  %4568 = vst [vmem:[#allocation5 + $0x68] sm:$0xff] %v4416
  %4569 = vst [vmem:[#allocation5 + $0x70] sm:$0xff] %v4527
  %4570 = vst [vmem:[#allocation5 + $0x78] sm:$0xff] %v4529
  %4571 = vst [vmem:[#allocation5 + $0x80] sm:$0xff] %v4420
  %4572 = vst [vmem:[#allocation5 + $0x88] sm:$0xff] %v4422
  %4573 = vst [vmem:[#allocation5 + $0x90] sm:$0xff] %v4533
  %4574 = vst [vmem:[#allocation5 + $0x98] sm:$0xff] %v4535
  %4575 = vst [vmem:[#allocation5 + $0xa0] sm:$0xff] %v4426
  %4576 = vst [vmem:[#allocation5 + $0xa8] sm:$0xff] %v4428
  %4577 = vst [vmem:[#allocation5 + $0xb0] sm:$0xff] %v4539
  %4578 = vst [vmem:[#allocation5 + $0xb8] sm:$0xff] %v4541
  %4579 = vst [vmem:[#allocation5 + $0xc0] sm:$0xff] %v4432
  %4580 = vst [vmem:[#allocation5 + $0xc8] sm:$0xff] %v4434
  %4581 = vst [vmem:[#allocation5 + $0xd0] sm:$0xff] %v4545
  %4582 = vst [vmem:[#allocation5 + $0xd8] sm:$0xff] %v4547
  %4583 = vst [vmem:[#allocation5 + $0xe0] sm:$0xff] %v4438
  %4584 = vst [vmem:[#allocation5 + $0xe8] sm:$0xff] %v4440
  %4585 = vst [vmem:[#allocation5 + $0xf0] sm:$0xff] %v4551
  %4586 = vst [vmem:[#allocation5 + $0xf8] sm:$0xff] %v4553
  %s4587 = scalar_lea.vmem [#allocation6], 2048
  %v4588 = vld [vmem:[%s4587] sm:$0xff]
  %v4589 = vld [vmem:[%s4587 + $0x8] sm:$0xff]
  %v4590 = vld [vmem:[%s4587 + $0x10] sm:$0xff]
  %v4591 = vld [vmem:[%s4587 + $0x18] sm:$0xff]
  %v4592 = vld [vmem:[%s4587 + $0x20] sm:$0xff]
  %v4593 = vld [vmem:[%s4587 + $0x28] sm:$0xff]
  %v4594 = vld [vmem:[%s4587 + $0x30] sm:$0xff]
  %v4595 = vld [vmem:[%s4587 + $0x38] sm:$0xff]
  %v4596 = vld [vmem:[%s4587 + $0x40] sm:$0xff]
  %v4597 = vld [vmem:[%s4587 + $0x48] sm:$0xff]
  %v4598 = vld [vmem:[%s4587 + $0x50] sm:$0xff]
  %v4599 = vld [vmem:[%s4587 + $0x58] sm:$0xff]
  %v4600 = vld [vmem:[%s4587 + $0x60] sm:$0xff]
  %v4601 = vld [vmem:[%s4587 + $0x68] sm:$0xff]
  %v4602 = vld [vmem:[%s4587 + $0x70] sm:$0xff]
  %v4603 = vld [vmem:[%s4587 + $0x78] sm:$0xff]
  %v4604 = vld [vmem:[%s4587 + $0x80] sm:$0xff]
  %v4605 = vld [vmem:[%s4587 + $0x88] sm:$0xff]
  %v4606 = vld [vmem:[%s4587 + $0x90] sm:$0xff]
  %v4607 = vld [vmem:[%s4587 + $0x98] sm:$0xff]
  %v4608 = vld [vmem:[%s4587 + $0xa0] sm:$0xff]
  %v4609 = vld [vmem:[%s4587 + $0xa8] sm:$0xff]
  %v4610 = vld [vmem:[%s4587 + $0xb0] sm:$0xff]
  %v4611 = vld [vmem:[%s4587 + $0xb8] sm:$0xff]
  %v4612 = vld [vmem:[%s4587 + $0xc0] sm:$0xff]
  %v4613 = vld [vmem:[%s4587 + $0xc8] sm:$0xff]
  %v4614 = vld [vmem:[%s4587 + $0xd0] sm:$0xff]
  %v4615 = vld [vmem:[%s4587 + $0xd8] sm:$0xff]
  %v4616 = vld [vmem:[%s4587 + $0xe0] sm:$0xff]
  %v4617 = vld [vmem:[%s4587 + $0xe8] sm:$0xff]
  %v4618 = vld [vmem:[%s4587 + $0xf0] sm:$0xff]
  %v4619 = vld [vmem:[%s4587 + $0xf8] sm:$0xff]
  %v4620 = vld [vmem:[%s4587 + $0x100] sm:$0xff]
  %v4621 = vld [vmem:[%s4587 + $0x108] sm:$0xff]
  %v4622 = vld [vmem:[%s4587 + $0x110] sm:$0xff]
  %v4623 = vld [vmem:[%s4587 + $0x118] sm:$0xff]
  %v4624 = vld [vmem:[%s4587 + $0x120] sm:$0xff]
  %v4625 = vld [vmem:[%s4587 + $0x128] sm:$0xff]
  %v4626 = vld [vmem:[%s4587 + $0x130] sm:$0xff]
  %v4627 = vld [vmem:[%s4587 + $0x138] sm:$0xff]
  %v4628 = vld [vmem:[%s4587 + $0x140] sm:$0xff]
  %v4629 = vld [vmem:[%s4587 + $0x148] sm:$0xff]
  %v4630 = vld [vmem:[%s4587 + $0x150] sm:$0xff]
  %v4631 = vld [vmem:[%s4587 + $0x158] sm:$0xff]
  %v4632 = vld [vmem:[%s4587 + $0x160] sm:$0xff]
  %v4633 = vld [vmem:[%s4587 + $0x168] sm:$0xff]
  %v4634 = vld [vmem:[%s4587 + $0x170] sm:$0xff]
  %v4635 = vld [vmem:[%s4587 + $0x178] sm:$0xff]
  %v4636 = vld [vmem:[%s4587 + $0x180] sm:$0xff]
  %v4637 = vld [vmem:[%s4587 + $0x188] sm:$0xff]
  %v4638 = vld [vmem:[%s4587 + $0x190] sm:$0xff]
  %v4639 = vld [vmem:[%s4587 + $0x198] sm:$0xff]
  %v4640 = vld [vmem:[%s4587 + $0x1a0] sm:$0xff]
  %v4641 = vld [vmem:[%s4587 + $0x1a8] sm:$0xff]
  %v4642 = vld [vmem:[%s4587 + $0x1b0] sm:$0xff]
  %v4643 = vld [vmem:[%s4587 + $0x1b8] sm:$0xff]
  %v4644 = vld [vmem:[%s4587 + $0x1c0] sm:$0xff]
  %v4645 = vld [vmem:[%s4587 + $0x1c8] sm:$0xff]
  %v4646 = vld [vmem:[%s4587 + $0x1d0] sm:$0xff]
  %v4647 = vld [vmem:[%s4587 + $0x1d8] sm:$0xff]
  %v4648 = vld [vmem:[%s4587 + $0x1e0] sm:$0xff]
  %v4649 = vld [vmem:[%s4587 + $0x1e8] sm:$0xff]
  %v4650 = vld [vmem:[%s4587 + $0x1f0] sm:$0xff]
  %v4651 = vld [vmem:[%s4587 + $0x1f8] sm:$0xff]
  %s4652 = scalar_lea.vmem [#allocation2], 16
  %v4653 = vld [vmem:[%s4652] sm:$0xff]
  %s4654 = scalar_lea.vmem [#allocation3], 16
  %v4655 = vld [vmem:[%s4654] sm:$0xff]
  %v4656 = vld [vmem:[%s2817] sm:$0xff]
  %v4657 = vld [vmem:[%s2817 + $0x8] sm:$0xff]
  %v4658 = vld [vmem:[%s2817 + $0x10] sm:$0xff]
  %v4659 = vld [vmem:[%s2817 + $0x18] sm:$0xff]
  %4660 = vmatprep.subr.mxu0 %v4589
  %4661 = vmatpush1.msra.mxu0 %v4588
  %4662 = vmatprep.subr.mxu0 %v4593
  %4663 = vmatpush1.msra.mxu0 %v4592
  %4664 = vmatprep.subr.mxu0 %v4597
  %4665 = vmatpush1.msra.mxu0 %v4596
  %4666 = vmatprep.subr.mxu0 %v4601
  %4667 = vmatpush1.msra.mxu0 %v4600
  %4668 = vmatprep.subr.mxu0 %v4605
  %4669 = vmatpush1.msra.mxu0 %v4604
  %4670 = vmatprep.subr.mxu0 %v4609
  %4671 = vmatpush1.msra.mxu0 %v4608
  %4672 = vmatprep.subr.mxu0 %v4613
  %4673 = vmatpush1.msra.mxu0 %v4612
  %4674 = vmatprep.subr.mxu0 %v4617
  %4675 = vmatpush1.msra.mxu0 %v4616
  %4676 = vmatprep.subr.mxu0 %v4621
  %4677 = vmatpush1.msra.mxu0 %v4620
  %4678 = vmatprep.subr.mxu0 %v4625
  %4679 = vmatpush1.msra.mxu0 %v4624
  %4680 = vmatprep.subr.mxu0 %v4629
  %4681 = vmatpush1.msra.mxu0 %v4628
  %4682 = vmatprep.subr.mxu0 %v4633
  %4683 = vmatpush1.msra.mxu0 %v4632
  %4684 = vmatprep.subr.mxu0 %v4637
  %4685 = vmatpush1.msra.mxu0 %v4636
  %4686 = vmatprep.subr.mxu0 %v4641
  %4687 = vmatpush1.msra.mxu0 %v4640
  %4688 = vmatprep.subr.mxu0 %v4645
  %4689 = vmatpush1.msra.mxu0 %v4644
  %4690 = vmatprep.subr.mxu0 %v4649
  %4691 = vmatpush1.msra.mxu0 %v4648
  %4692 = vmatprep.subr.mxu0 0.0
  %4693 = vmatpush1.msra.mxu0 0.0
  %4694 = vmatprep.subr.mxu0 0.0
  %4695 = vmatpush1.msra.mxu0 0.0
  %4696 = vmatprep.subr.mxu0 0.0
  %4697 = vmatpush1.msra.mxu0 0.0
  %4698 = vmatprep.subr.mxu0 0.0
  %4699 = vmatpush1.msra.mxu0 0.0
  %4700 = vmatprep.subr.mxu0 0.0
  %4701 = vmatpush1.msra.mxu0 0.0
  %4702 = vmatprep.subr.mxu0 0.0
  %4703 = vmatpush1.msra.mxu0 0.0
  %4704 = vmatprep.subr.mxu0 0.0
  %4705 = vmatpush1.msra.mxu0 0.0
  %4706 = vmatprep.subr.mxu0 0.0
  %4707 = vmatpush1.msra.mxu0 0.0
  %4708 = vmatprep.subr.mxu0 0.0
  %4709 = vmatpush1.msra.mxu0 0.0
  %4710 = vmatprep.subr.mxu0 0.0
  %4711 = vmatpush1.msra.mxu0 0.0
  %4712 = vmatprep.subr.mxu0 0.0
  %4713 = vmatpush1.msra.mxu0 0.0
  %4714 = vmatprep.subr.mxu0 0.0
  %4715 = vmatpush1.msra.mxu0 0.0
  %4716 = vmatprep.subr.mxu0 0.0
  %4717 = vmatpush1.msra.mxu0 0.0
  %4718 = vmatprep.subr.mxu0 0.0
  %4719 = vmatpush1.msra.mxu0 0.0
  %4720 = vmatprep.subr.mxu0 0.0
  %4721 = vmatpush1.msra.mxu0 0.0
  %4722 = vmatprep.subr.mxu0 0.0
  %4723 = vmatpush1.msra.mxu0 0.0
  %4724 = vmatprep.mubr.f32.mxu0 0.0
  %4725 = vmatmul.mubr.f32.gmra.mrb[0].mxu0 %v4653
  %v4726 = vpop.f32.mrb[0].mxu0
  %v4727 = vadd.f32 0.0, %v4726
  %v4728 = vpop.f32.mrb[0].mxu0
  %v4729 = vadd.f32 0.0, %v4728
  %4730 = vdwg.mxu0
  %4731 = vmatprep.subr.mxu0 %v4591
  %4732 = vmatpush1.msra.mxu0 %v4590
  %4733 = vmatprep.subr.mxu0 %v4595
  %4734 = vmatpush1.msra.mxu0 %v4594
  %4735 = vmatprep.subr.mxu0 %v4599
  %4736 = vmatpush1.msra.mxu0 %v4598
  %4737 = vmatprep.subr.mxu0 %v4603
  %4738 = vmatpush1.msra.mxu0 %v4602
  %4739 = vmatprep.subr.mxu0 %v4607
  %4740 = vmatpush1.msra.mxu0 %v4606
  %4741 = vmatprep.subr.mxu0 %v4611
  %4742 = vmatpush1.msra.mxu0 %v4610
  %4743 = vmatprep.subr.mxu0 %v4615
  %4744 = vmatpush1.msra.mxu0 %v4614
  %4745 = vmatprep.subr.mxu0 %v4619
  %4746 = vmatpush1.msra.mxu0 %v4618
  %4747 = vmatprep.subr.mxu0 %v4623
  %4748 = vmatpush1.msra.mxu0 %v4622
  %4749 = vmatprep.subr.mxu0 %v4627
  %4750 = vmatpush1.msra.mxu0 %v4626
  %4751 = vmatprep.subr.mxu0 %v4631
  %4752 = vmatpush1.msra.mxu0 %v4630
  %4753 = vmatprep.subr.mxu0 %v4635
  %4754 = vmatpush1.msra.mxu0 %v4634
  %4755 = vmatprep.subr.mxu0 %v4639
  %4756 = vmatpush1.msra.mxu0 %v4638
  %4757 = vmatprep.subr.mxu0 %v4643
  %4758 = vmatpush1.msra.mxu0 %v4642
  %4759 = vmatprep.subr.mxu0 %v4647
  %4760 = vmatpush1.msra.mxu0 %v4646
  %4761 = vmatprep.subr.mxu0 %v4651
  %4762 = vmatpush1.msra.mxu0 %v4650
  %4763 = vmatprep.subr.mxu0 0.0
  %4764 = vmatpush1.msra.mxu0 0.0
  %4765 = vmatprep.subr.mxu0 0.0
  %4766 = vmatpush1.msra.mxu0 0.0
  %4767 = vmatprep.subr.mxu0 0.0
  %4768 = vmatpush1.msra.mxu0 0.0
  %4769 = vmatprep.subr.mxu0 0.0
  %4770 = vmatpush1.msra.mxu0 0.0
  %4771 = vmatprep.subr.mxu0 0.0
  %4772 = vmatpush1.msra.mxu0 0.0
  %4773 = vmatprep.subr.mxu0 0.0
  %4774 = vmatpush1.msra.mxu0 0.0
  %4775 = vmatprep.subr.mxu0 0.0
  %4776 = vmatpush1.msra.mxu0 0.0
  %4777 = vmatprep.subr.mxu0 0.0
  %4778 = vmatpush1.msra.mxu0 0.0
  %4779 = vmatprep.subr.mxu0 0.0
  %4780 = vmatpush1.msra.mxu0 0.0
  %4781 = vmatprep.subr.mxu0 0.0
  %4782 = vmatpush1.msra.mxu0 0.0
  %4783 = vmatprep.subr.mxu0 0.0
  %4784 = vmatpush1.msra.mxu0 0.0
  %4785 = vmatprep.subr.mxu0 0.0
  %4786 = vmatpush1.msra.mxu0 0.0
  %4787 = vmatprep.subr.mxu0 0.0
  %4788 = vmatpush1.msra.mxu0 0.0
  %4789 = vmatprep.subr.mxu0 0.0
  %4790 = vmatpush1.msra.mxu0 0.0
  %4791 = vmatprep.subr.mxu0 0.0
  %4792 = vmatpush1.msra.mxu0 0.0
  %4793 = vmatprep.subr.mxu0 0.0
  %4794 = vmatpush1.msra.mxu0 0.0
  %4795 = vmatprep.mubr.f32.mxu0 0.0
  %4796 = vmatmul.mubr.f32.gmra.mrb[0].mxu0 %v4653
  %v4797 = vpop.f32.mrb[0].mxu0
  %v4798 = vadd.f32 0.0, %v4797
  %v4799 = vpop.f32.mrb[0].mxu0
  %v4800 = vadd.f32 0.0, %v4799
  %4801 = vdwg.mxu0
  %v4802 = vadd.f32 %v4656, %v4727
  %v4803 = vadd.f32 %v4657, %v4729
  %v4804 = vadd.f32 %v4658, %v4798
  %v4805 = vadd.f32 %v4659, %v4800
  %v4806 = vxor.u32 %v4802, 2147483648
  %v4807 = vxor.u32 %v4803, 2147483648
  %v4808 = vxor.u32 %v4804, 2147483648
  %v4809 = vmul.f32 %v4806, 1.442695
  %v4810 = vpow.pop %v4809
  %v4811 = vmul.f32 %v4807, 1.442695
  %v4812 = vpow.pop %v4811
  %v4813 = vmul.f32 %v4808, 1.442695
  %v4814 = vpow.pop %v4813
  %v4815 = vadd.f32 %v4810, 1.0
  %v4816 = vadd.f32 %v4812, 1.0
  %v4817 = vadd.f32 %v4814, 1.0
  %v4818 = vrcp.pop %v4815
  %v4819 = vmul.f32 1.0, %v4818
  %v4820 = vrcp.pop %v4816
  %v4821 = vmul.f32 1.0, %v4820
  %v4822 = vrcp.pop %v4817
  %v4823 = vmul.f32 1.0, %v4822
  %v4824 = vtanh.pop %v4805
  %v4825 = vmul.f32 %v4821, %v4655
  %v4826 = vmul.f32 %v4819, %v4824
  %v4827 = vadd.f32 %v4825, %v4826
  %v4828 = vtanh.pop %v4827
  %v4829 = vmul.f32 %v4823, %v4828
  %4830 = vst [vmem:[#allocation4] sm:$0xff] %v4829
  %v4831 = vld [vmem:[%s2994] sm:$0xff]
  %v4832 = vld [vmem:[%s2994 + $0x8] sm:$0xff]
  %v4833 = vld [vmem:[%s2994 + $0x10] sm:$0xff]
  %v4834 = vld [vmem:[%s2994 + $0x18] sm:$0xff]
  %4835 = vmatprep.subr.mxu0 %v4589
  %4836 = vmatpush1.msra.mxu0 %v4588
  %4837 = vmatprep.subr.mxu0 %v4593
  %4838 = vmatpush1.msra.mxu0 %v4592
  %4839 = vmatprep.subr.mxu0 %v4597
  %4840 = vmatpush1.msra.mxu0 %v4596
  %4841 = vmatprep.subr.mxu0 %v4601
  %4842 = vmatpush1.msra.mxu0 %v4600
  %4843 = vmatprep.subr.mxu0 %v4605
  %4844 = vmatpush1.msra.mxu0 %v4604
  %4845 = vmatprep.subr.mxu0 %v4609
  %4846 = vmatpush1.msra.mxu0 %v4608
  %4847 = vmatprep.subr.mxu0 %v4613
  %4848 = vmatpush1.msra.mxu0 %v4612
  %4849 = vmatprep.subr.mxu0 %v4617
  %4850 = vmatpush1.msra.mxu0 %v4616
  %4851 = vmatprep.subr.mxu0 %v4621
  %4852 = vmatpush1.msra.mxu0 %v4620
  %4853 = vmatprep.subr.mxu0 %v4625
  %4854 = vmatpush1.msra.mxu0 %v4624
  %4855 = vmatprep.subr.mxu0 %v4629
  %4856 = vmatpush1.msra.mxu0 %v4628
  %4857 = vmatprep.subr.mxu0 %v4633
  %4858 = vmatpush1.msra.mxu0 %v4632
  %4859 = vmatprep.subr.mxu0 %v4637
  %4860 = vmatpush1.msra.mxu0 %v4636
  %4861 = vmatprep.subr.mxu0 %v4641
  %4862 = vmatpush1.msra.mxu0 %v4640
  %4863 = vmatprep.subr.mxu0 %v4645
  %4864 = vmatpush1.msra.mxu0 %v4644
  %4865 = vmatprep.subr.mxu0 %v4649
  %4866 = vmatpush1.msra.mxu0 %v4648
  %4867 = vmatprep.subr.mxu0 0.0
  %4868 = vmatpush1.msra.mxu0 0.0
  %4869 = vmatprep.subr.mxu0 0.0
  %4870 = vmatpush1.msra.mxu0 0.0
  %4871 = vmatprep.subr.mxu0 0.0
  %4872 = vmatpush1.msra.mxu0 0.0
  %4873 = vmatprep.subr.mxu0 0.0
  %4874 = vmatpush1.msra.mxu0 0.0
  %4875 = vmatprep.subr.mxu0 0.0
  %4876 = vmatpush1.msra.mxu0 0.0
  %4877 = vmatprep.subr.mxu0 0.0
  %4878 = vmatpush1.msra.mxu0 0.0
  %4879 = vmatprep.subr.mxu0 0.0
  %4880 = vmatpush1.msra.mxu0 0.0
  %4881 = vmatprep.subr.mxu0 0.0
  %4882 = vmatpush1.msra.mxu0 0.0
  %4883 = vmatprep.subr.mxu0 0.0
  %4884 = vmatpush1.msra.mxu0 0.0
  %4885 = vmatprep.subr.mxu0 0.0
  %4886 = vmatpush1.msra.mxu0 0.0
  %4887 = vmatprep.subr.mxu0 0.0
  %4888 = vmatpush1.msra.mxu0 0.0
  %4889 = vmatprep.subr.mxu0 0.0
  %4890 = vmatpush1.msra.mxu0 0.0
  %4891 = vmatprep.subr.mxu0 0.0
  %4892 = vmatpush1.msra.mxu0 0.0
  %4893 = vmatprep.subr.mxu0 0.0
  %4894 = vmatpush1.msra.mxu0 0.0
  %4895 = vmatprep.subr.mxu0 0.0
  %4896 = vmatpush1.msra.mxu0 0.0
  %4897 = vmatprep.subr.mxu0 0.0
  %4898 = vmatpush1.msra.mxu0 0.0
  %4899 = vmatprep.mubr.f32.mxu0 0.0
  %4900 = vmatmul.mubr.f32.gmra.mrb[0].mxu0 %v4829
  %v4901 = vpop.f32.mrb[0].mxu0
  %v4902 = vadd.f32 0.0, %v4901
  %v4903 = vpop.f32.mrb[0].mxu0
  %v4904 = vadd.f32 0.0, %v4903
  %4905 = vdwg.mxu0
  %4906 = vmatprep.subr.mxu0 %v4591
  %4907 = vmatpush1.msra.mxu0 %v4590
  %4908 = vmatprep.subr.mxu0 %v4595
  %4909 = vmatpush1.msra.mxu0 %v4594
  %4910 = vmatprep.subr.mxu0 %v4599
  %4911 = vmatpush1.msra.mxu0 %v4598
  %4912 = vmatprep.subr.mxu0 %v4603
  %4913 = vmatpush1.msra.mxu0 %v4602
  %4914 = vmatprep.subr.mxu0 %v4607
  %4915 = vmatpush1.msra.mxu0 %v4606
  %4916 = vmatprep.subr.mxu0 %v4611
  %4917 = vmatpush1.msra.mxu0 %v4610
  %4918 = vmatprep.subr.mxu0 %v4615
  %4919 = vmatpush1.msra.mxu0 %v4614
  %4920 = vmatprep.subr.mxu0 %v4619
  %4921 = vmatpush1.msra.mxu0 %v4618
  %4922 = vmatprep.subr.mxu0 %v4623
  %4923 = vmatpush1.msra.mxu0 %v4622
  %4924 = vmatprep.subr.mxu0 %v4627
  %4925 = vmatpush1.msra.mxu0 %v4626
  %4926 = vmatprep.subr.mxu0 %v4631
  %4927 = vmatpush1.msra.mxu0 %v4630
  %4928 = vmatprep.subr.mxu0 %v4635
  %4929 = vmatpush1.msra.mxu0 %v4634
  %4930 = vmatprep.subr.mxu0 %v4639
  %4931 = vmatpush1.msra.mxu0 %v4638
  %4932 = vmatprep.subr.mxu0 %v4643
  %4933 = vmatpush1.msra.mxu0 %v4642
  %4934 = vmatprep.subr.mxu0 %v4647
  %4935 = vmatpush1.msra.mxu0 %v4646
  %4936 = vmatprep.subr.mxu0 %v4651
  %4937 = vmatpush1.msra.mxu0 %v4650
  %4938 = vmatprep.subr.mxu0 0.0
  %4939 = vmatpush1.msra.mxu0 0.0
  %4940 = vmatprep.subr.mxu0 0.0
  %4941 = vmatpush1.msra.mxu0 0.0
  %4942 = vmatprep.subr.mxu0 0.0
  %4943 = vmatpush1.msra.mxu0 0.0
  %4944 = vmatprep.subr.mxu0 0.0
  %4945 = vmatpush1.msra.mxu0 0.0
  %4946 = vmatprep.subr.mxu0 0.0
  %4947 = vmatpush1.msra.mxu0 0.0
  %4948 = vmatprep.subr.mxu0 0.0
  %4949 = vmatpush1.msra.mxu0 0.0
  %4950 = vmatprep.subr.mxu0 0.0
  %4951 = vmatpush1.msra.mxu0 0.0
  %4952 = vmatprep.subr.mxu0 0.0
  %4953 = vmatpush1.msra.mxu0 0.0
  %4954 = vmatprep.subr.mxu0 0.0
  %4955 = vmatpush1.msra.mxu0 0.0
  %4956 = vmatprep.subr.mxu0 0.0
  %4957 = vmatpush1.msra.mxu0 0.0
  %4958 = vmatprep.subr.mxu0 0.0
  %4959 = vmatpush1.msra.mxu0 0.0
  %4960 = vmatprep.subr.mxu0 0.0
  %4961 = vmatpush1.msra.mxu0 0.0
  %4962 = vmatprep.subr.mxu0 0.0
  %4963 = vmatpush1.msra.mxu0 0.0
  %4964 = vmatprep.subr.mxu0 0.0
  %4965 = vmatpush1.msra.mxu0 0.0
  %4966 = vmatprep.subr.mxu0 0.0
  %4967 = vmatpush1.msra.mxu0 0.0
  %4968 = vmatprep.subr.mxu0 0.0
  %4969 = vmatpush1.msra.mxu0 0.0
  %4970 = vmatprep.mubr.f32.mxu0 0.0
  %4971 = vmatmul.mubr.f32.gmra.mrb[0].mxu0 %v4829
  %v4972 = vpop.f32.mrb[0].mxu0
  %v4973 = vadd.f32 0.0, %v4972
  %v4974 = vpop.f32.mrb[0].mxu0
  %v4975 = vadd.f32 0.0, %v4974
  %4976 = vdwg.mxu0
  %v4977 = vadd.f32 %v4831, %v4902
  %v4978 = vadd.f32 %v4832, %v4904
  %v4979 = vadd.f32 %v4833, %v4973
  %v4980 = vadd.f32 %v4834, %v4975
  %v4981 = vxor.u32 %v4977, 2147483648
  %v4982 = vxor.u32 %v4978, 2147483648
  %v4983 = vxor.u32 %v4979, 2147483648
  %v4984 = vmul.f32 %v4981, 1.442695
  %v4985 = vpow.pop %v4984
  %v4986 = vmul.f32 %v4982, 1.442695
  %v4987 = vpow.pop %v4986
  %v4988 = vmul.f32 %v4983, 1.442695
  %v4989 = vpow.pop %v4988
  %v4990 = vadd.f32 %v4985, 1.0
  %v4991 = vadd.f32 %v4987, 1.0
  %v4992 = vadd.f32 %v4989, 1.0
  %v4993 = vrcp.pop %v4990
  %v4994 = vmul.f32 1.0, %v4993
  %v4995 = vrcp.pop %v4991
  %v4996 = vmul.f32 1.0, %v4995
  %v4997 = vrcp.pop %v4992
  %v4998 = vmul.f32 1.0, %v4997
  %v4999 = vtanh.pop %v4980
  %v5000 = vmul.f32 %v4996, %v4827
  %v5001 = vmul.f32 %v4994, %v4999
  %v5002 = vadd.f32 %v5000, %v5001
  %v5003 = vtanh.pop %v5002
  %v5004 = vmul.f32 %v4998, %v5003
  %5005 = vst [vmem:[%s1317] sm:$0xff] %v5004
  %v5006 = vld [vmem:[%s3171] sm:$0xff]
  %v5007 = vld [vmem:[%s3171 + $0x8] sm:$0xff]
  %v5008 = vld [vmem:[%s3171 + $0x10] sm:$0xff]
  %v5009 = vld [vmem:[%s3171 + $0x18] sm:$0xff]
  %5010 = vmatprep.subr.mxu0 %v4589
  %5011 = vmatpush1.msra.mxu0 %v4588
  %5012 = vmatprep.subr.mxu0 %v4593
  %5013 = vmatpush1.msra.mxu0 %v4592
  %5014 = vmatprep.subr.mxu0 %v4597
  %5015 = vmatpush1.msra.mxu0 %v4596
  %5016 = vmatprep.subr.mxu0 %v4601
  %5017 = vmatpush1.msra.mxu0 %v4600
  %5018 = vmatprep.subr.mxu0 %v4605
  %5019 = vmatpush1.msra.mxu0 %v4604
  %5020 = vmatprep.subr.mxu0 %v4609
  %5021 = vmatpush1.msra.mxu0 %v4608
  %5022 = vmatprep.subr.mxu0 %v4613
  %5023 = vmatpush1.msra.mxu0 %v4612
  %5024 = vmatprep.subr.mxu0 %v4617
  %5025 = vmatpush1.msra.mxu0 %v4616
  %5026 = vmatprep.subr.mxu0 %v4621
  %5027 = vmatpush1.msra.mxu0 %v4620
  %5028 = vmatprep.subr.mxu0 %v4625
  %5029 = vmatpush1.msra.mxu0 %v4624
  %5030 = vmatprep.subr.mxu0 %v4629
  %5031 = vmatpush1.msra.mxu0 %v4628
  %5032 = vmatprep.subr.mxu0 %v4633
  %5033 = vmatpush1.msra.mxu0 %v4632
  %5034 = vmatprep.subr.mxu0 %v4637
  %5035 = vmatpush1.msra.mxu0 %v4636
  %5036 = vmatprep.subr.mxu0 %v4641
  %5037 = vmatpush1.msra.mxu0 %v4640
  %5038 = vmatprep.subr.mxu0 %v4645
  %5039 = vmatpush1.msra.mxu0 %v4644
  %5040 = vmatprep.subr.mxu0 %v4649
  %5041 = vmatpush1.msra.mxu0 %v4648
  %5042 = vmatprep.subr.mxu0 0.0
  %5043 = vmatpush1.msra.mxu0 0.0
  %5044 = vmatprep.subr.mxu0 0.0
  %5045 = vmatpush1.msra.mxu0 0.0
  %5046 = vmatprep.subr.mxu0 0.0
  %5047 = vmatpush1.msra.mxu0 0.0
  %5048 = vmatprep.subr.mxu0 0.0
  %5049 = vmatpush1.msra.mxu0 0.0
  %5050 = vmatprep.subr.mxu0 0.0
  %5051 = vmatpush1.msra.mxu0 0.0
  %5052 = vmatprep.subr.mxu0 0.0
  %5053 = vmatpush1.msra.mxu0 0.0
  %5054 = vmatprep.subr.mxu0 0.0
  %5055 = vmatpush1.msra.mxu0 0.0
  %5056 = vmatprep.subr.mxu0 0.0
  %5057 = vmatpush1.msra.mxu0 0.0
  %5058 = vmatprep.subr.mxu0 0.0
  %5059 = vmatpush1.msra.mxu0 0.0
  %5060 = vmatprep.subr.mxu0 0.0
  %5061 = vmatpush1.msra.mxu0 0.0
  %5062 = vmatprep.subr.mxu0 0.0
  %5063 = vmatpush1.msra.mxu0 0.0
  %5064 = vmatprep.subr.mxu0 0.0
  %5065 = vmatpush1.msra.mxu0 0.0
  %5066 = vmatprep.subr.mxu0 0.0
  %5067 = vmatpush1.msra.mxu0 0.0
  %5068 = vmatprep.subr.mxu0 0.0
  %5069 = vmatpush1.msra.mxu0 0.0
  %5070 = vmatprep.subr.mxu0 0.0
  %5071 = vmatpush1.msra.mxu0 0.0
  %5072 = vmatprep.subr.mxu0 0.0
  %5073 = vmatpush1.msra.mxu0 0.0
  %5074 = vmatprep.mubr.f32.mxu0 0.0
  %5075 = vmatmul.mubr.f32.gmra.mrb[0].mxu0 %v5004
  %v5076 = vpop.f32.mrb[0].mxu0
  %v5077 = vadd.f32 0.0, %v5076
  %v5078 = vpop.f32.mrb[0].mxu0
  %v5079 = vadd.f32 0.0, %v5078
  %5080 = vdwg.mxu0
  %5081 = vmatprep.subr.mxu0 %v4591
  %5082 = vmatpush1.msra.mxu0 %v4590
  %5083 = vmatprep.subr.mxu0 %v4595
  %5084 = vmatpush1.msra.mxu0 %v4594
  %5085 = vmatprep.subr.mxu0 %v4599
  %5086 = vmatpush1.msra.mxu0 %v4598
  %5087 = vmatprep.subr.mxu0 %v4603
  %5088 = vmatpush1.msra.mxu0 %v4602
  %5089 = vmatprep.subr.mxu0 %v4607
  %5090 = vmatpush1.msra.mxu0 %v4606
  %5091 = vmatprep.subr.mxu0 %v4611
  %5092 = vmatpush1.msra.mxu0 %v4610
  %5093 = vmatprep.subr.mxu0 %v4615
  %5094 = vmatpush1.msra.mxu0 %v4614
  %5095 = vmatprep.subr.mxu0 %v4619
  %5096 = vmatpush1.msra.mxu0 %v4618
  %5097 = vmatprep.subr.mxu0 %v4623
  %5098 = vmatpush1.msra.mxu0 %v4622
  %5099 = vmatprep.subr.mxu0 %v4627
  %5100 = vmatpush1.msra.mxu0 %v4626
  %5101 = vmatprep.subr.mxu0 %v4631
  %5102 = vmatpush1.msra.mxu0 %v4630
  %5103 = vmatprep.subr.mxu0 %v4635
  %5104 = vmatpush1.msra.mxu0 %v4634
  %5105 = vmatprep.subr.mxu0 %v4639
  %5106 = vmatpush1.msra.mxu0 %v4638
  %5107 = vmatprep.subr.mxu0 %v4643
  %5108 = vmatpush1.msra.mxu0 %v4642
  %5109 = vmatprep.subr.mxu0 %v4647
  %5110 = vmatpush1.msra.mxu0 %v4646
  %5111 = vmatprep.subr.mxu0 %v4651
  %5112 = vmatpush1.msra.mxu0 %v4650
  %5113 = vmatprep.subr.mxu0 0.0
  %5114 = vmatpush1.msra.mxu0 0.0
  %5115 = vmatprep.subr.mxu0 0.0
  %5116 = vmatpush1.msra.mxu0 0.0
  %5117 = vmatprep.subr.mxu0 0.0
  %5118 = vmatpush1.msra.mxu0 0.0
  %5119 = vmatprep.subr.mxu0 0.0
  %5120 = vmatpush1.msra.mxu0 0.0
  %5121 = vmatprep.subr.mxu0 0.0
  %5122 = vmatpush1.msra.mxu0 0.0
  %5123 = vmatprep.subr.mxu0 0.0
  %5124 = vmatpush1.msra.mxu0 0.0
  %5125 = vmatprep.subr.mxu0 0.0
  %5126 = vmatpush1.msra.mxu0 0.0
  %5127 = vmatprep.subr.mxu0 0.0
  %5128 = vmatpush1.msra.mxu0 0.0
  %5129 = vmatprep.subr.mxu0 0.0
  %5130 = vmatpush1.msra.mxu0 0.0
  %5131 = vmatprep.subr.mxu0 0.0
  %5132 = vmatpush1.msra.mxu0 0.0
  %5133 = vmatprep.subr.mxu0 0.0
  %5134 = vmatpush1.msra.mxu0 0.0
  %5135 = vmatprep.subr.mxu0 0.0
  %5136 = vmatpush1.msra.mxu0 0.0
  %5137 = vmatprep.subr.mxu0 0.0
  %5138 = vmatpush1.msra.mxu0 0.0
  %5139 = vmatprep.subr.mxu0 0.0
  %5140 = vmatpush1.msra.mxu0 0.0
  %5141 = vmatprep.subr.mxu0 0.0
  %5142 = vmatpush1.msra.mxu0 0.0
  %5143 = vmatprep.subr.mxu0 0.0
  %5144 = vmatpush1.msra.mxu0 0.0
  %5145 = vmatprep.mubr.f32.mxu0 0.0
  %5146 = vmatmul.mubr.f32.gmra.mrb[0].mxu0 %v5004
  %v5147 = vpop.f32.mrb[0].mxu0
  %v5148 = vadd.f32 0.0, %v5147
  %v5149 = vpop.f32.mrb[0].mxu0
  %v5150 = vadd.f32 0.0, %v5149
  %5151 = vdwg.mxu0
  %v5152 = vadd.f32 %v5006, %v5077
  %v5153 = vadd.f32 %v5007, %v5079
  %v5154 = vadd.f32 %v5008, %v5148
  %v5155 = vadd.f32 %v5009, %v5150
  %v5156 = vxor.u32 %v5152, 2147483648
  %v5157 = vxor.u32 %v5153, 2147483648
  %v5158 = vxor.u32 %v5154, 2147483648
  %v5159 = vmul.f32 %v5156, 1.442695
  %v5160 = vpow.pop %v5159
  %v5161 = vmul.f32 %v5157, 1.442695
  %v5162 = vpow.pop %v5161
  %v5163 = vmul.f32 %v5158, 1.442695
  %v5164 = vpow.pop %v5163
  %v5165 = vadd.f32 %v5160, 1.0
  %v5166 = vadd.f32 %v5162, 1.0
  %v5167 = vadd.f32 %v5164, 1.0
  %v5168 = vrcp.pop %v5165
  %v5169 = vmul.f32 1.0, %v5168
  %v5170 = vrcp.pop %v5166
  %v5171 = vmul.f32 1.0, %v5170
  %v5172 = vrcp.pop %v5167
  %v5173 = vmul.f32 1.0, %v5172
  %v5174 = vtanh.pop %v5155
  %v5175 = vmul.f32 %v5171, %v5002
  %v5176 = vmul.f32 %v5169, %v5174
  %v5177 = vadd.f32 %v5175, %v5176
  %v5178 = vtanh.pop %v5177
  %v5179 = vmul.f32 %v5173, %v5178
  %5180 = vst [vmem:[%s1496] sm:$0xff] %v5179
  %v5181 = vld [vmem:[%s3348] sm:$0xff]
  %v5182 = vld [vmem:[%s3348 + $0x8] sm:$0xff]
  %v5183 = vld [vmem:[%s3348 + $0x10] sm:$0xff]
  %v5184 = vld [vmem:[%s3348 + $0x18] sm:$0xff]
  %5185 = vmatprep.subr.mxu0 %v4589
  %5186 = vmatpush1.msra.mxu0 %v4588
  %5187 = vmatprep.subr.mxu0 %v4593
  %5188 = vmatpush1.msra.mxu0 %v4592
  %5189 = vmatprep.subr.mxu0 %v4597
  %5190 = vmatpush1.msra.mxu0 %v4596
  %5191 = vmatprep.subr.mxu0 %v4601
  %5192 = vmatpush1.msra.mxu0 %v4600
  %5193 = vmatprep.subr.mxu0 %v4605
  %5194 = vmatpush1.msra.mxu0 %v4604
  %5195 = vmatprep.subr.mxu0 %v4609
  %5196 = vmatpush1.msra.mxu0 %v4608
  %5197 = vmatprep.subr.mxu0 %v4613
  %5198 = vmatpush1.msra.mxu0 %v4612
  %5199 = vmatprep.subr.mxu0 %v4617
  %5200 = vmatpush1.msra.mxu0 %v4616
  %5201 = vmatprep.subr.mxu0 %v4621
  %5202 = vmatpush1.msra.mxu0 %v4620
  %5203 = vmatprep.subr.mxu0 %v4625
  %5204 = vmatpush1.msra.mxu0 %v4624
  %5205 = vmatprep.subr.mxu0 %v4629
  %5206 = vmatpush1.msra.mxu0 %v4628
  %5207 = vmatprep.subr.mxu0 %v4633
  %5208 = vmatpush1.msra.mxu0 %v4632
  %5209 = vmatprep.subr.mxu0 %v4637
  %5210 = vmatpush1.msra.mxu0 %v4636
  %5211 = vmatprep.subr.mxu0 %v4641
  %5212 = vmatpush1.msra.mxu0 %v4640
  %5213 = vmatprep.subr.mxu0 %v4645
  %5214 = vmatpush1.msra.mxu0 %v4644
  %5215 = vmatprep.subr.mxu0 %v4649
  %5216 = vmatpush1.msra.mxu0 %v4648
  %5217 = vmatprep.subr.mxu0 0.0
  %5218 = vmatpush1.msra.mxu0 0.0
  %5219 = vmatprep.subr.mxu0 0.0
  %5220 = vmatpush1.msra.mxu0 0.0
  %5221 = vmatprep.subr.mxu0 0.0
  %5222 = vmatpush1.msra.mxu0 0.0
  %5223 = vmatprep.subr.mxu0 0.0
  %5224 = vmatpush1.msra.mxu0 0.0
  %5225 = vmatprep.subr.mxu0 0.0
  %5226 = vmatpush1.msra.mxu0 0.0
  %5227 = vmatprep.subr.mxu0 0.0
  %5228 = vmatpush1.msra.mxu0 0.0
  %5229 = vmatprep.subr.mxu0 0.0
  %5230 = vmatpush1.msra.mxu0 0.0
  %5231 = vmatprep.subr.mxu0 0.0
  %5232 = vmatpush1.msra.mxu0 0.0
  %5233 = vmatprep.subr.mxu0 0.0
  %5234 = vmatpush1.msra.mxu0 0.0
  %5235 = vmatprep.subr.mxu0 0.0
  %5236 = vmatpush1.msra.mxu0 0.0
  %5237 = vmatprep.subr.mxu0 0.0
  %5238 = vmatpush1.msra.mxu0 0.0
  %5239 = vmatprep.subr.mxu0 0.0
  %5240 = vmatpush1.msra.mxu0 0.0
  %5241 = vmatprep.subr.mxu0 0.0
  %5242 = vmatpush1.msra.mxu0 0.0
  %5243 = vmatprep.subr.mxu0 0.0
  %5244 = vmatpush1.msra.mxu0 0.0
  %5245 = vmatprep.subr.mxu0 0.0
  %5246 = vmatpush1.msra.mxu0 0.0
  %5247 = vmatprep.subr.mxu0 0.0
  %5248 = vmatpush1.msra.mxu0 0.0
  %5249 = vmatprep.mubr.f32.mxu0 0.0
  %5250 = vmatmul.mubr.f32.gmra.mrb[0].mxu0 %v5179
  %v5251 = vpop.f32.mrb[0].mxu0
  %v5252 = vadd.f32 0.0, %v5251
  %v5253 = vpop.f32.mrb[0].mxu0
  %v5254 = vadd.f32 0.0, %v5253
  %5255 = vdwg.mxu0
  %5256 = vmatprep.subr.mxu0 %v4591
  %5257 = vmatpush1.msra.mxu0 %v4590
  %5258 = vmatprep.subr.mxu0 %v4595
  %5259 = vmatpush1.msra.mxu0 %v4594
  %5260 = vmatprep.subr.mxu0 %v4599
  %5261 = vmatpush1.msra.mxu0 %v4598
  %5262 = vmatprep.subr.mxu0 %v4603
  %5263 = vmatpush1.msra.mxu0 %v4602
  %5264 = vmatprep.subr.mxu0 %v4607
  %5265 = vmatpush1.msra.mxu0 %v4606
  %5266 = vmatprep.subr.mxu0 %v4611
  %5267 = vmatpush1.msra.mxu0 %v4610
  %5268 = vmatprep.subr.mxu0 %v4615
  %5269 = vmatpush1.msra.mxu0 %v4614
  %5270 = vmatprep.subr.mxu0 %v4619
  %5271 = vmatpush1.msra.mxu0 %v4618
  %5272 = vmatprep.subr.mxu0 %v4623
  %5273 = vmatpush1.msra.mxu0 %v4622
  %5274 = vmatprep.subr.mxu0 %v4627
  %5275 = vmatpush1.msra.mxu0 %v4626
  %5276 = vmatprep.subr.mxu0 %v4631
  %5277 = vmatpush1.msra.mxu0 %v4630
  %5278 = vmatprep.subr.mxu0 %v4635
  %5279 = vmatpush1.msra.mxu0 %v4634
  %5280 = vmatprep.subr.mxu0 %v4639
  %5281 = vmatpush1.msra.mxu0 %v4638
  %5282 = vmatprep.subr.mxu0 %v4643
  %5283 = vmatpush1.msra.mxu0 %v4642
  %5284 = vmatprep.subr.mxu0 %v4647
  %5285 = vmatpush1.msra.mxu0 %v4646
  %5286 = vmatprep.subr.mxu0 %v4651
  %5287 = vmatpush1.msra.mxu0 %v4650
  %5288 = vmatprep.subr.mxu0 0.0
  %5289 = vmatpush1.msra.mxu0 0.0
  %5290 = vmatprep.subr.mxu0 0.0
  %5291 = vmatpush1.msra.mxu0 0.0
  %5292 = vmatprep.subr.mxu0 0.0
  %5293 = vmatpush1.msra.mxu0 0.0
  %5294 = vmatprep.subr.mxu0 0.0
  %5295 = vmatpush1.msra.mxu0 0.0
  %5296 = vmatprep.subr.mxu0 0.0
  %5297 = vmatpush1.msra.mxu0 0.0
  %5298 = vmatprep.subr.mxu0 0.0
  %5299 = vmatpush1.msra.mxu0 0.0
  %5300 = vmatprep.subr.mxu0 0.0
  %5301 = vmatpush1.msra.mxu0 0.0
  %5302 = vmatprep.subr.mxu0 0.0
  %5303 = vmatpush1.msra.mxu0 0.0
  %5304 = vmatprep.subr.mxu0 0.0
  %5305 = vmatpush1.msra.mxu0 0.0
  %5306 = vmatprep.subr.mxu0 0.0
  %5307 = vmatpush1.msra.mxu0 0.0
  %5308 = vmatprep.subr.mxu0 0.0
  %5309 = vmatpush1.msra.mxu0 0.0
  %5310 = vmatprep.subr.mxu0 0.0
  %5311 = vmatpush1.msra.mxu0 0.0
  %5312 = vmatprep.subr.mxu0 0.0
  %5313 = vmatpush1.msra.mxu0 0.0
  %5314 = vmatprep.subr.mxu0 0.0
  %5315 = vmatpush1.msra.mxu0 0.0
  %5316 = vmatprep.subr.mxu0 0.0
  %5317 = vmatpush1.msra.mxu0 0.0
  %5318 = vmatprep.subr.mxu0 0.0
  %5319 = vmatpush1.msra.mxu0 0.0
  %5320 = vmatprep.mubr.f32.mxu0 0.0
  %5321 = vmatmul.mubr.f32.gmra.mrb[0].mxu0 %v5179
  %v5322 = vpop.f32.mrb[0].mxu0
  %v5323 = vadd.f32 0.0, %v5322
  %v5324 = vpop.f32.mrb[0].mxu0
  %v5325 = vadd.f32 0.0, %v5324
  %5326 = vdwg.mxu0
  %v5327 = vadd.f32 %v5181, %v5252
  %v5328 = vadd.f32 %v5182, %v5254
  %v5329 = vadd.f32 %v5183, %v5323
  %v5330 = vadd.f32 %v5184, %v5325
  %v5331 = vxor.u32 %v5327, 2147483648
  %v5332 = vxor.u32 %v5328, 2147483648
  %v5333 = vxor.u32 %v5329, 2147483648
  %v5334 = vmul.f32 %v5331, 1.442695
  %v5335 = vpow.pop %v5334
  %v5336 = vmul.f32 %v5332, 1.442695
  %v5337 = vpow.pop %v5336
  %v5338 = vmul.f32 %v5333, 1.442695
  %v5339 = vpow.pop %v5338
  %v5340 = vadd.f32 %v5335, 1.0
  %v5341 = vadd.f32 %v5337, 1.0
  %v5342 = vadd.f32 %v5339, 1.0
  %v5343 = vrcp.pop %v5340
  %v5344 = vmul.f32 1.0, %v5343
  %v5345 = vrcp.pop %v5341
  %v5346 = vmul.f32 1.0, %v5345
  %v5347 = vrcp.pop %v5342
  %v5348 = vmul.f32 1.0, %v5347
  %v5349 = vtanh.pop %v5330
  %v5350 = vmul.f32 %v5346, %v5177
  %v5351 = vmul.f32 %v5344, %v5349
  %v5352 = vadd.f32 %v5350, %v5351
  %v5353 = vtanh.pop %v5352
  %v5354 = vmul.f32 %v5348, %v5353
  %5355 = vst [vmem:[%s1675] sm:$0xff] %v5354
  %v5356 = vld [vmem:[%s3525] sm:$0xff]
  %v5357 = vld [vmem:[%s3525 + $0x8] sm:$0xff]
  %v5358 = vld [vmem:[%s3525 + $0x10] sm:$0xff]
  %v5359 = vld [vmem:[%s3525 + $0x18] sm:$0xff]
  %5360 = vmatprep.subr.mxu0 %v4589
  %5361 = vmatpush1.msra.mxu0 %v4588
  %5362 = vmatprep.subr.mxu0 %v4593
  %5363 = vmatpush1.msra.mxu0 %v4592
  %5364 = vmatprep.subr.mxu0 %v4597
  %5365 = vmatpush1.msra.mxu0 %v4596
  %5366 = vmatprep.subr.mxu0 %v4601
  %5367 = vmatpush1.msra.mxu0 %v4600
  %5368 = vmatprep.subr.mxu0 %v4605
  %5369 = vmatpush1.msra.mxu0 %v4604
  %5370 = vmatprep.subr.mxu0 %v4609
  %5371 = vmatpush1.msra.mxu0 %v4608
  %5372 = vmatprep.subr.mxu0 %v4613
  %5373 = vmatpush1.msra.mxu0 %v4612
  %5374 = vmatprep.subr.mxu0 %v4617
  %5375 = vmatpush1.msra.mxu0 %v4616
  %5376 = vmatprep.subr.mxu0 %v4621
  %5377 = vmatpush1.msra.mxu0 %v4620
  %5378 = vmatprep.subr.mxu0 %v4625
  %5379 = vmatpush1.msra.mxu0 %v4624
  %5380 = vmatprep.subr.mxu0 %v4629
  %5381 = vmatpush1.msra.mxu0 %v4628
  %5382 = vmatprep.subr.mxu0 %v4633
  %5383 = vmatpush1.msra.mxu0 %v4632
  %5384 = vmatprep.subr.mxu0 %v4637
  %5385 = vmatpush1.msra.mxu0 %v4636
  %5386 = vmatprep.subr.mxu0 %v4641
  %5387 = vmatpush1.msra.mxu0 %v4640
  %5388 = vmatprep.subr.mxu0 %v4645
  %5389 = vmatpush1.msra.mxu0 %v4644
  %5390 = vmatprep.subr.mxu0 %v4649
  %5391 = vmatpush1.msra.mxu0 %v4648
  %5392 = vmatprep.subr.mxu0 0.0
  %5393 = vmatpush1.msra.mxu0 0.0
  %5394 = vmatprep.subr.mxu0 0.0
  %5395 = vmatpush1.msra.mxu0 0.0
  %5396 = vmatprep.subr.mxu0 0.0
  %5397 = vmatpush1.msra.mxu0 0.0
  %5398 = vmatprep.subr.mxu0 0.0
  %5399 = vmatpush1.msra.mxu0 0.0
  %5400 = vmatprep.subr.mxu0 0.0
  %5401 = vmatpush1.msra.mxu0 0.0
  %5402 = vmatprep.subr.mxu0 0.0
  %5403 = vmatpush1.msra.mxu0 0.0
  %5404 = vmatprep.subr.mxu0 0.0
  %5405 = vmatpush1.msra.mxu0 0.0
  %5406 = vmatprep.subr.mxu0 0.0
  %5407 = vmatpush1.msra.mxu0 0.0
  %5408 = vmatprep.subr.mxu0 0.0
  %5409 = vmatpush1.msra.mxu0 0.0
  %5410 = vmatprep.subr.mxu0 0.0
  %5411 = vmatpush1.msra.mxu0 0.0
  %5412 = vmatprep.subr.mxu0 0.0
  %5413 = vmatpush1.msra.mxu0 0.0
  %5414 = vmatprep.subr.mxu0 0.0
  %5415 = vmatpush1.msra.mxu0 0.0
  %5416 = vmatprep.subr.mxu0 0.0
  %5417 = vmatpush1.msra.mxu0 0.0
  %5418 = vmatprep.subr.mxu0 0.0
  %5419 = vmatpush1.msra.mxu0 0.0
  %5420 = vmatprep.subr.mxu0 0.0
  %5421 = vmatpush1.msra.mxu0 0.0
  %5422 = vmatprep.subr.mxu0 0.0
  %5423 = vmatpush1.msra.mxu0 0.0
  %5424 = vmatprep.mubr.f32.mxu0 0.0
  %5425 = vmatmul.mubr.f32.gmra.mrb[0].mxu0 %v5354
  %v5426 = vpop.f32.mrb[0].mxu0
  %v5427 = vadd.f32 0.0, %v5426
  %v5428 = vpop.f32.mrb[0].mxu0
  %v5429 = vadd.f32 0.0, %v5428
  %5430 = vdwg.mxu0
  %5431 = vmatprep.subr.mxu0 %v4591
  %5432 = vmatpush1.msra.mxu0 %v4590
  %5433 = vmatprep.subr.mxu0 %v4595
  %5434 = vmatpush1.msra.mxu0 %v4594
  %5435 = vmatprep.subr.mxu0 %v4599
  %5436 = vmatpush1.msra.mxu0 %v4598
  %5437 = vmatprep.subr.mxu0 %v4603
  %5438 = vmatpush1.msra.mxu0 %v4602
  %5439 = vmatprep.subr.mxu0 %v4607
  %5440 = vmatpush1.msra.mxu0 %v4606
  %5441 = vmatprep.subr.mxu0 %v4611
  %5442 = vmatpush1.msra.mxu0 %v4610
  %5443 = vmatprep.subr.mxu0 %v4615
  %5444 = vmatpush1.msra.mxu0 %v4614
  %5445 = vmatprep.subr.mxu0 %v4619
  %5446 = vmatpush1.msra.mxu0 %v4618
  %5447 = vmatprep.subr.mxu0 %v4623
  %5448 = vmatpush1.msra.mxu0 %v4622
  %5449 = vmatprep.subr.mxu0 %v4627
  %5450 = vmatpush1.msra.mxu0 %v4626
  %5451 = vmatprep.subr.mxu0 %v4631
  %5452 = vmatpush1.msra.mxu0 %v4630
  %5453 = vmatprep.subr.mxu0 %v4635
  %5454 = vmatpush1.msra.mxu0 %v4634
  %5455 = vmatprep.subr.mxu0 %v4639
  %5456 = vmatpush1.msra.mxu0 %v4638
  %5457 = vmatprep.subr.mxu0 %v4643
  %5458 = vmatpush1.msra.mxu0 %v4642
  %5459 = vmatprep.subr.mxu0 %v4647
  %5460 = vmatpush1.msra.mxu0 %v4646
  %5461 = vmatprep.subr.mxu0 %v4651
  %5462 = vmatpush1.msra.mxu0 %v4650
  %5463 = vmatprep.subr.mxu0 0.0
  %5464 = vmatpush1.msra.mxu0 0.0
  %5465 = vmatprep.subr.mxu0 0.0
  %5466 = vmatpush1.msra.mxu0 0.0
  %5467 = vmatprep.subr.mxu0 0.0
  %5468 = vmatpush1.msra.mxu0 0.0
  %5469 = vmatprep.subr.mxu0 0.0
  %5470 = vmatpush1.msra.mxu0 0.0
  %5471 = vmatprep.subr.mxu0 0.0
  %5472 = vmatpush1.msra.mxu0 0.0
  %5473 = vmatprep.subr.mxu0 0.0
  %5474 = vmatpush1.msra.mxu0 0.0
  %5475 = vmatprep.subr.mxu0 0.0
  %5476 = vmatpush1.msra.mxu0 0.0
  %5477 = vmatprep.subr.mxu0 0.0
  %5478 = vmatpush1.msra.mxu0 0.0
  %5479 = vmatprep.subr.mxu0 0.0
  %5480 = vmatpush1.msra.mxu0 0.0
  %5481 = vmatprep.subr.mxu0 0.0
  %5482 = vmatpush1.msra.mxu0 0.0
  %5483 = vmatprep.subr.mxu0 0.0
  %5484 = vmatpush1.msra.mxu0 0.0
  %5485 = vmatprep.subr.mxu0 0.0
  %5486 = vmatpush1.msra.mxu0 0.0
  %5487 = vmatprep.subr.mxu0 0.0
  %5488 = vmatpush1.msra.mxu0 0.0
  %5489 = vmatprep.subr.mxu0 0.0
  %5490 = vmatpush1.msra.mxu0 0.0
  %5491 = vmatprep.subr.mxu0 0.0
  %5492 = vmatpush1.msra.mxu0 0.0
  %5493 = vmatprep.subr.mxu0 0.0
  %5494 = vmatpush1.msra.mxu0 0.0
  %5495 = vmatprep.mubr.f32.mxu0 0.0
  %5496 = vmatmul.mubr.f32.gmra.mrb[0].mxu0 %v5354
  %v5497 = vpop.f32.mrb[0].mxu0
  %v5498 = vadd.f32 0.0, %v5497
  %v5499 = vpop.f32.mrb[0].mxu0
  %v5500 = vadd.f32 0.0, %v5499
  %5501 = vdwg.mxu0
  %v5502 = vadd.f32 %v5356, %v5427
  %v5503 = vadd.f32 %v5357, %v5429
  %v5504 = vadd.f32 %v5358, %v5498
  %v5505 = vadd.f32 %v5359, %v5500
  %v5506 = vxor.u32 %v5502, 2147483648
  %v5507 = vxor.u32 %v5503, 2147483648
  %v5508 = vxor.u32 %v5504, 2147483648
  %v5509 = vmul.f32 %v5506, 1.442695
  %v5510 = vpow.pop %v5509
  %v5511 = vmul.f32 %v5507, 1.442695
  %v5512 = vpow.pop %v5511
  %v5513 = vmul.f32 %v5508, 1.442695
  %v5514 = vpow.pop %v5513
  %v5515 = vadd.f32 %v5510, 1.0
  %v5516 = vadd.f32 %v5512, 1.0
  %v5517 = vadd.f32 %v5514, 1.0
  %v5518 = vrcp.pop %v5515
  %v5519 = vmul.f32 1.0, %v5518
  %v5520 = vrcp.pop %v5516
  %v5521 = vmul.f32 1.0, %v5520
  %v5522 = vrcp.pop %v5517
  %v5523 = vmul.f32 1.0, %v5522
  %v5524 = vtanh.pop %v5505
  %v5525 = vmul.f32 %v5521, %v5352
  %v5526 = vmul.f32 %v5519, %v5524
  %v5527 = vadd.f32 %v5525, %v5526
  %v5528 = vtanh.pop %v5527
  %v5529 = vmul.f32 %v5523, %v5528
  %5530 = vst [vmem:[%s1854] sm:$0xff] %v5529
  %v5531 = vld [vmem:[%s3702] sm:$0xff]
  %v5532 = vld [vmem:[%s3702 + $0x8] sm:$0xff]
  %v5533 = vld [vmem:[%s3702 + $0x10] sm:$0xff]
  %v5534 = vld [vmem:[%s3702 + $0x18] sm:$0xff]
  %5535 = vmatprep.subr.mxu0 %v4589
  %5536 = vmatpush1.msra.mxu0 %v4588
  %5537 = vmatprep.subr.mxu0 %v4593
  %5538 = vmatpush1.msra.mxu0 %v4592
  %5539 = vmatprep.subr.mxu0 %v4597
  %5540 = vmatpush1.msra.mxu0 %v4596
  %5541 = vmatprep.subr.mxu0 %v4601
  %5542 = vmatpush1.msra.mxu0 %v4600
  %5543 = vmatprep.subr.mxu0 %v4605
  %5544 = vmatpush1.msra.mxu0 %v4604
  %5545 = vmatprep.subr.mxu0 %v4609
  %5546 = vmatpush1.msra.mxu0 %v4608
  %5547 = vmatprep.subr.mxu0 %v4613
  %5548 = vmatpush1.msra.mxu0 %v4612
  %5549 = vmatprep.subr.mxu0 %v4617
  %5550 = vmatpush1.msra.mxu0 %v4616
  %5551 = vmatprep.subr.mxu0 %v4621
  %5552 = vmatpush1.msra.mxu0 %v4620
  %5553 = vmatprep.subr.mxu0 %v4625
  %5554 = vmatpush1.msra.mxu0 %v4624
  %5555 = vmatprep.subr.mxu0 %v4629
  %5556 = vmatpush1.msra.mxu0 %v4628
  %5557 = vmatprep.subr.mxu0 %v4633
  %5558 = vmatpush1.msra.mxu0 %v4632
  %5559 = vmatprep.subr.mxu0 %v4637
  %5560 = vmatpush1.msra.mxu0 %v4636
  %5561 = vmatprep.subr.mxu0 %v4641
  %5562 = vmatpush1.msra.mxu0 %v4640
  %5563 = vmatprep.subr.mxu0 %v4645
  %5564 = vmatpush1.msra.mxu0 %v4644
  %5565 = vmatprep.subr.mxu0 %v4649
  %5566 = vmatpush1.msra.mxu0 %v4648
  %5567 = vmatprep.subr.mxu0 0.0
  %5568 = vmatpush1.msra.mxu0 0.0
  %5569 = vmatprep.subr.mxu0 0.0
  %5570 = vmatpush1.msra.mxu0 0.0
  %5571 = vmatprep.subr.mxu0 0.0
  %5572 = vmatpush1.msra.mxu0 0.0
  %5573 = vmatprep.subr.mxu0 0.0
  %5574 = vmatpush1.msra.mxu0 0.0
  %5575 = vmatprep.subr.mxu0 0.0
  %5576 = vmatpush1.msra.mxu0 0.0
  %5577 = vmatprep.subr.mxu0 0.0
  %5578 = vmatpush1.msra.mxu0 0.0
  %5579 = vmatprep.subr.mxu0 0.0
  %5580 = vmatpush1.msra.mxu0 0.0
  %5581 = vmatprep.subr.mxu0 0.0
  %5582 = vmatpush1.msra.mxu0 0.0
  %5583 = vmatprep.subr.mxu0 0.0
  %5584 = vmatpush1.msra.mxu0 0.0
  %5585 = vmatprep.subr.mxu0 0.0
  %5586 = vmatpush1.msra.mxu0 0.0
  %5587 = vmatprep.subr.mxu0 0.0
  %5588 = vmatpush1.msra.mxu0 0.0
  %5589 = vmatprep.subr.mxu0 0.0
  %5590 = vmatpush1.msra.mxu0 0.0
  %5591 = vmatprep.subr.mxu0 0.0
  %5592 = vmatpush1.msra.mxu0 0.0
  %5593 = vmatprep.subr.mxu0 0.0
  %5594 = vmatpush1.msra.mxu0 0.0
  %5595 = vmatprep.subr.mxu0 0.0
  %5596 = vmatpush1.msra.mxu0 0.0
  %5597 = vmatprep.subr.mxu0 0.0
  %5598 = vmatpush1.msra.mxu0 0.0
  %5599 = vmatprep.mubr.f32.mxu0 0.0
  %5600 = vmatmul.mubr.f32.gmra.mrb[0].mxu0 %v5529
  %v5601 = vpop.f32.mrb[0].mxu0
  %v5602 = vadd.f32 0.0, %v5601
  %v5603 = vpop.f32.mrb[0].mxu0
  %v5604 = vadd.f32 0.0, %v5603
  %5605 = vdwg.mxu0
  %5606 = vmatprep.subr.mxu0 %v4591
  %5607 = vmatpush1.msra.mxu0 %v4590
  %5608 = vmatprep.subr.mxu0 %v4595
  %5609 = vmatpush1.msra.mxu0 %v4594
  %5610 = vmatprep.subr.mxu0 %v4599
  %5611 = vmatpush1.msra.mxu0 %v4598
  %5612 = vmatprep.subr.mxu0 %v4603
  %5613 = vmatpush1.msra.mxu0 %v4602
  %5614 = vmatprep.subr.mxu0 %v4607
  %5615 = vmatpush1.msra.mxu0 %v4606
  %5616 = vmatprep.subr.mxu0 %v4611
  %5617 = vmatpush1.msra.mxu0 %v4610
  %5618 = vmatprep.subr.mxu0 %v4615
  %5619 = vmatpush1.msra.mxu0 %v4614
  %5620 = vmatprep.subr.mxu0 %v4619
  %5621 = vmatpush1.msra.mxu0 %v4618
  %5622 = vmatprep.subr.mxu0 %v4623
  %5623 = vmatpush1.msra.mxu0 %v4622
  %5624 = vmatprep.subr.mxu0 %v4627
  %5625 = vmatpush1.msra.mxu0 %v4626
  %5626 = vmatprep.subr.mxu0 %v4631
  %5627 = vmatpush1.msra.mxu0 %v4630
  %5628 = vmatprep.subr.mxu0 %v4635
  %5629 = vmatpush1.msra.mxu0 %v4634
  %5630 = vmatprep.subr.mxu0 %v4639
  %5631 = vmatpush1.msra.mxu0 %v4638
  %5632 = vmatprep.subr.mxu0 %v4643
  %5633 = vmatpush1.msra.mxu0 %v4642
  %5634 = vmatprep.subr.mxu0 %v4647
  %5635 = vmatpush1.msra.mxu0 %v4646
  %5636 = vmatprep.subr.mxu0 %v4651
  %5637 = vmatpush1.msra.mxu0 %v4650
  %5638 = vmatprep.subr.mxu0 0.0
  %5639 = vmatpush1.msra.mxu0 0.0
  %5640 = vmatprep.subr.mxu0 0.0
  %5641 = vmatpush1.msra.mxu0 0.0
  %5642 = vmatprep.subr.mxu0 0.0
  %5643 = vmatpush1.msra.mxu0 0.0
  %5644 = vmatprep.subr.mxu0 0.0
  %5645 = vmatpush1.msra.mxu0 0.0
  %5646 = vmatprep.subr.mxu0 0.0
  %5647 = vmatpush1.msra.mxu0 0.0
  %5648 = vmatprep.subr.mxu0 0.0
  %5649 = vmatpush1.msra.mxu0 0.0
  %5650 = vmatprep.subr.mxu0 0.0
  %5651 = vmatpush1.msra.mxu0 0.0
  %5652 = vmatprep.subr.mxu0 0.0
  %5653 = vmatpush1.msra.mxu0 0.0
  %5654 = vmatprep.subr.mxu0 0.0
  %5655 = vmatpush1.msra.mxu0 0.0
  %5656 = vmatprep.subr.mxu0 0.0
  %5657 = vmatpush1.msra.mxu0 0.0
  %5658 = vmatprep.subr.mxu0 0.0
  %5659 = vmatpush1.msra.mxu0 0.0
  %5660 = vmatprep.subr.mxu0 0.0
  %5661 = vmatpush1.msra.mxu0 0.0
  %5662 = vmatprep.subr.mxu0 0.0
  %5663 = vmatpush1.msra.mxu0 0.0
  %5664 = vmatprep.subr.mxu0 0.0
  %5665 = vmatpush1.msra.mxu0 0.0
  %5666 = vmatprep.subr.mxu0 0.0
  %5667 = vmatpush1.msra.mxu0 0.0
  %5668 = vmatprep.subr.mxu0 0.0
  %5669 = vmatpush1.msra.mxu0 0.0
  %5670 = vmatprep.mubr.f32.mxu0 0.0
  %5671 = vmatmul.mubr.f32.gmra.mrb[0].mxu0 %v5529
  %v5672 = vpop.f32.mrb[0].mxu0
  %v5673 = vadd.f32 0.0, %v5672
  %v5674 = vpop.f32.mrb[0].mxu0
  %v5675 = vadd.f32 0.0, %v5674
  %5676 = vdwg.mxu0
  %v5677 = vadd.f32 %v5531, %v5602
  %v5678 = vadd.f32 %v5532, %v5604
  %v5679 = vadd.f32 %v5533, %v5673
  %v5680 = vadd.f32 %v5534, %v5675
  %v5681 = vxor.u32 %v5677, 2147483648
  %v5682 = vxor.u32 %v5678, 2147483648
  %v5683 = vxor.u32 %v5679, 2147483648
  %v5684 = vmul.f32 %v5681, 1.442695
  %v5685 = vpow.pop %v5684
  %v5686 = vmul.f32 %v5682, 1.442695
  %v5687 = vpow.pop %v5686
  %v5688 = vmul.f32 %v5683, 1.442695
  %v5689 = vpow.pop %v5688
  %v5690 = vadd.f32 %v5685, 1.0
  %v5691 = vadd.f32 %v5687, 1.0
  %v5692 = vadd.f32 %v5689, 1.0
  %v5693 = vrcp.pop %v5690
  %v5694 = vmul.f32 1.0, %v5693
  %v5695 = vrcp.pop %v5691
  %v5696 = vmul.f32 1.0, %v5695
  %v5697 = vrcp.pop %v5692
  %v5698 = vmul.f32 1.0, %v5697
  %v5699 = vtanh.pop %v5680
  %v5700 = vmul.f32 %v5696, %v5527
  %v5701 = vmul.f32 %v5694, %v5699
  %v5702 = vadd.f32 %v5700, %v5701
  %v5703 = vtanh.pop %v5702
  %v5704 = vmul.f32 %v5698, %v5703
  %5705 = vst [vmem:[%s2033] sm:$0xff] %v5704
  %v5706 = vld [vmem:[%s3879] sm:$0xff]
  %v5707 = vld [vmem:[%s3879 + $0x8] sm:$0xff]
  %v5708 = vld [vmem:[%s3879 + $0x10] sm:$0xff]
  %v5709 = vld [vmem:[%s3879 + $0x18] sm:$0xff]
  %5710 = vmatprep.subr.mxu0 %v4589
  %5711 = vmatpush1.msra.mxu0 %v4588
  %5712 = vmatprep.subr.mxu0 %v4593
  %5713 = vmatpush1.msra.mxu0 %v4592
  %5714 = vmatprep.subr.mxu0 %v4597
  %5715 = vmatpush1.msra.mxu0 %v4596
  %5716 = vmatprep.subr.mxu0 %v4601
  %5717 = vmatpush1.msra.mxu0 %v4600
  %5718 = vmatprep.subr.mxu0 %v4605
  %5719 = vmatpush1.msra.mxu0 %v4604
  %5720 = vmatprep.subr.mxu0 %v4609
  %5721 = vmatpush1.msra.mxu0 %v4608
  %5722 = vmatprep.subr.mxu0 %v4613
  %5723 = vmatpush1.msra.mxu0 %v4612
  %5724 = vmatprep.subr.mxu0 %v4617
  %5725 = vmatpush1.msra.mxu0 %v4616
  %5726 = vmatprep.subr.mxu0 %v4621
  %5727 = vmatpush1.msra.mxu0 %v4620
  %5728 = vmatprep.subr.mxu0 %v4625
  %5729 = vmatpush1.msra.mxu0 %v4624
  %5730 = vmatprep.subr.mxu0 %v4629
  %5731 = vmatpush1.msra.mxu0 %v4628
  %5732 = vmatprep.subr.mxu0 %v4633
  %5733 = vmatpush1.msra.mxu0 %v4632
  %5734 = vmatprep.subr.mxu0 %v4637
  %5735 = vmatpush1.msra.mxu0 %v4636
  %5736 = vmatprep.subr.mxu0 %v4641
  %5737 = vmatpush1.msra.mxu0 %v4640
  %5738 = vmatprep.subr.mxu0 %v4645
  %5739 = vmatpush1.msra.mxu0 %v4644
  %5740 = vmatprep.subr.mxu0 %v4649
  %5741 = vmatpush1.msra.mxu0 %v4648
  %5742 = vmatprep.subr.mxu0 0.0
  %5743 = vmatpush1.msra.mxu0 0.0
  %5744 = vmatprep.subr.mxu0 0.0
  %5745 = vmatpush1.msra.mxu0 0.0
  %5746 = vmatprep.subr.mxu0 0.0
  %5747 = vmatpush1.msra.mxu0 0.0
  %5748 = vmatprep.subr.mxu0 0.0
  %5749 = vmatpush1.msra.mxu0 0.0
  %5750 = vmatprep.subr.mxu0 0.0
  %5751 = vmatpush1.msra.mxu0 0.0
  %5752 = vmatprep.subr.mxu0 0.0
  %5753 = vmatpush1.msra.mxu0 0.0
  %5754 = vmatprep.subr.mxu0 0.0
  %5755 = vmatpush1.msra.mxu0 0.0
  %5756 = vmatprep.subr.mxu0 0.0
  %5757 = vmatpush1.msra.mxu0 0.0
  %5758 = vmatprep.subr.mxu0 0.0
  %5759 = vmatpush1.msra.mxu0 0.0
  %5760 = vmatprep.subr.mxu0 0.0
  %5761 = vmatpush1.msra.mxu0 0.0
  %5762 = vmatprep.subr.mxu0 0.0
  %5763 = vmatpush1.msra.mxu0 0.0
  %5764 = vmatprep.subr.mxu0 0.0
  %5765 = vmatpush1.msra.mxu0 0.0
  %5766 = vmatprep.subr.mxu0 0.0
  %5767 = vmatpush1.msra.mxu0 0.0
  %5768 = vmatprep.subr.mxu0 0.0
  %5769 = vmatpush1.msra.mxu0 0.0
  %5770 = vmatprep.subr.mxu0 0.0
  %5771 = vmatpush1.msra.mxu0 0.0
  %5772 = vmatprep.subr.mxu0 0.0
  %5773 = vmatpush1.msra.mxu0 0.0
  %5774 = vmatprep.mubr.f32.mxu0 0.0
  %5775 = vmatmul.mubr.f32.gmra.mrb[0].mxu0 %v5704
  %v5776 = vpop.f32.mrb[0].mxu0
  %v5777 = vadd.f32 0.0, %v5776
  %v5778 = vpop.f32.mrb[0].mxu0
  %v5779 = vadd.f32 0.0, %v5778
  %5780 = vdwg.mxu0
  %5781 = vmatprep.subr.mxu0 %v4591
  %5782 = vmatpush1.msra.mxu0 %v4590
  %5783 = vmatprep.subr.mxu0 %v4595
  %5784 = vmatpush1.msra.mxu0 %v4594
  %5785 = vmatprep.subr.mxu0 %v4599
  %5786 = vmatpush1.msra.mxu0 %v4598
  %5787 = vmatprep.subr.mxu0 %v4603
  %5788 = vmatpush1.msra.mxu0 %v4602
  %5789 = vmatprep.subr.mxu0 %v4607
  %5790 = vmatpush1.msra.mxu0 %v4606
  %5791 = vmatprep.subr.mxu0 %v4611
  %5792 = vmatpush1.msra.mxu0 %v4610
  %5793 = vmatprep.subr.mxu0 %v4615
  %5794 = vmatpush1.msra.mxu0 %v4614
  %5795 = vmatprep.subr.mxu0 %v4619
  %5796 = vmatpush1.msra.mxu0 %v4618
  %5797 = vmatprep.subr.mxu0 %v4623
  %5798 = vmatpush1.msra.mxu0 %v4622
  %5799 = vmatprep.subr.mxu0 %v4627
  %5800 = vmatpush1.msra.mxu0 %v4626
  %5801 = vmatprep.subr.mxu0 %v4631
  %5802 = vmatpush1.msra.mxu0 %v4630
  %5803 = vmatprep.subr.mxu0 %v4635
  %5804 = vmatpush1.msra.mxu0 %v4634
  %5805 = vmatprep.subr.mxu0 %v4639
  %5806 = vmatpush1.msra.mxu0 %v4638
  %5807 = vmatprep.subr.mxu0 %v4643
  %5808 = vmatpush1.msra.mxu0 %v4642
  %5809 = vmatprep.subr.mxu0 %v4647
  %5810 = vmatpush1.msra.mxu0 %v4646
  %5811 = vmatprep.subr.mxu0 %v4651
  %5812 = vmatpush1.msra.mxu0 %v4650
  %5813 = vmatprep.subr.mxu0 0.0
  %5814 = vmatpush1.msra.mxu0 0.0
  %5815 = vmatprep.subr.mxu0 0.0
  %5816 = vmatpush1.msra.mxu0 0.0
  %5817 = vmatprep.subr.mxu0 0.0
  %5818 = vmatpush1.msra.mxu0 0.0
  %5819 = vmatprep.subr.mxu0 0.0
  %5820 = vmatpush1.msra.mxu0 0.0
  %5821 = vmatprep.subr.mxu0 0.0
  %5822 = vmatpush1.msra.mxu0 0.0
  %5823 = vmatprep.subr.mxu0 0.0
  %5824 = vmatpush1.msra.mxu0 0.0
  %5825 = vmatprep.subr.mxu0 0.0
  %5826 = vmatpush1.msra.mxu0 0.0
  %5827 = vmatprep.subr.mxu0 0.0
  %5828 = vmatpush1.msra.mxu0 0.0
  %5829 = vmatprep.subr.mxu0 0.0
  %5830 = vmatpush1.msra.mxu0 0.0
  %5831 = vmatprep.subr.mxu0 0.0
  %5832 = vmatpush1.msra.mxu0 0.0
  %5833 = vmatprep.subr.mxu0 0.0
  %5834 = vmatpush1.msra.mxu0 0.0
  %5835 = vmatprep.subr.mxu0 0.0
  %5836 = vmatpush1.msra.mxu0 0.0
  %5837 = vmatprep.subr.mxu0 0.0
  %5838 = vmatpush1.msra.mxu0 0.0
  %5839 = vmatprep.subr.mxu0 0.0
  %5840 = vmatpush1.msra.mxu0 0.0
  %5841 = vmatprep.subr.mxu0 0.0
  %5842 = vmatpush1.msra.mxu0 0.0
  %5843 = vmatprep.subr.mxu0 0.0
  %5844 = vmatpush1.msra.mxu0 0.0
  %5845 = vmatprep.mubr.f32.mxu0 0.0
  %5846 = vmatmul.mubr.f32.gmra.mrb[0].mxu0 %v5704
  %v5847 = vpop.f32.mrb[0].mxu0
  %v5848 = vadd.f32 0.0, %v5847
  %v5849 = vpop.f32.mrb[0].mxu0
  %v5850 = vadd.f32 0.0, %v5849
  %5851 = vdwg.mxu0
  %v5852 = vadd.f32 %v5706, %v5777
  %v5853 = vadd.f32 %v5707, %v5779
  %v5854 = vadd.f32 %v5708, %v5848
  %v5855 = vadd.f32 %v5709, %v5850
  %v5856 = vxor.u32 %v5852, 2147483648
  %v5857 = vxor.u32 %v5853, 2147483648
  %v5858 = vxor.u32 %v5854, 2147483648
  %v5859 = vmul.f32 %v5856, 1.442695
  %v5860 = vpow.pop %v5859
  %v5861 = vmul.f32 %v5857, 1.442695
  %v5862 = vpow.pop %v5861
  %v5863 = vmul.f32 %v5858, 1.442695
  %v5864 = vpow.pop %v5863
  %v5865 = vadd.f32 %v5860, 1.0
  %v5866 = vadd.f32 %v5862, 1.0
  %v5867 = vadd.f32 %v5864, 1.0
  %v5868 = vrcp.pop %v5865
  %v5869 = vmul.f32 1.0, %v5868
  %v5870 = vrcp.pop %v5866
  %v5871 = vmul.f32 1.0, %v5870
  %v5872 = vrcp.pop %v5867
  %v5873 = vmul.f32 1.0, %v5872
  %v5874 = vtanh.pop %v5855
  %v5875 = vmul.f32 %v5871, %v5702
  %v5876 = vmul.f32 %v5869, %v5874
  %v5877 = vadd.f32 %v5875, %v5876
  %v5878 = vtanh.pop %v5877
  %v5879 = vmul.f32 %v5873, %v5878
  %5880 = vst [vmem:[%s2212] sm:$0xff] %v5879
  %v5881 = vld [vmem:[%s4056] sm:$0xff]
  %v5882 = vld [vmem:[%s4056 + $0x8] sm:$0xff]
  %v5883 = vld [vmem:[%s4056 + $0x10] sm:$0xff]
  %v5884 = vld [vmem:[%s4056 + $0x18] sm:$0xff]
  %5885 = vmatprep.subr.mxu0 %v4589
  %5886 = vmatpush1.msra.mxu0 %v4588
  %5887 = vmatprep.subr.mxu0 %v4593
  %5888 = vmatpush1.msra.mxu0 %v4592
  %5889 = vmatprep.subr.mxu0 %v4597
  %5890 = vmatpush1.msra.mxu0 %v4596
  %5891 = vmatprep.subr.mxu0 %v4601
  %5892 = vmatpush1.msra.mxu0 %v4600
  %5893 = vmatprep.subr.mxu0 %v4605
  %5894 = vmatpush1.msra.mxu0 %v4604
  %5895 = vmatprep.subr.mxu0 %v4609
  %5896 = vmatpush1.msra.mxu0 %v4608
  %5897 = vmatprep.subr.mxu0 %v4613
  %5898 = vmatpush1.msra.mxu0 %v4612
  %5899 = vmatprep.subr.mxu0 %v4617
  %5900 = vmatpush1.msra.mxu0 %v4616
  %5901 = vmatprep.subr.mxu0 %v4621
  %5902 = vmatpush1.msra.mxu0 %v4620
  %5903 = vmatprep.subr.mxu0 %v4625
  %5904 = vmatpush1.msra.mxu0 %v4624
  %5905 = vmatprep.subr.mxu0 %v4629
  %5906 = vmatpush1.msra.mxu0 %v4628
  %5907 = vmatprep.subr.mxu0 %v4633
  %5908 = vmatpush1.msra.mxu0 %v4632
  %5909 = vmatprep.subr.mxu0 %v4637
  %5910 = vmatpush1.msra.mxu0 %v4636
  %5911 = vmatprep.subr.mxu0 %v4641
  %5912 = vmatpush1.msra.mxu0 %v4640
  %5913 = vmatprep.subr.mxu0 %v4645
  %5914 = vmatpush1.msra.mxu0 %v4644
  %5915 = vmatprep.subr.mxu0 %v4649
  %5916 = vmatpush1.msra.mxu0 %v4648
  %5917 = vmatprep.subr.mxu0 0.0
  %5918 = vmatpush1.msra.mxu0 0.0
  %5919 = vmatprep.subr.mxu0 0.0
  %5920 = vmatpush1.msra.mxu0 0.0
  %5921 = vmatprep.subr.mxu0 0.0
  %5922 = vmatpush1.msra.mxu0 0.0
  %5923 = vmatprep.subr.mxu0 0.0
  %5924 = vmatpush1.msra.mxu0 0.0
  %5925 = vmatprep.subr.mxu0 0.0
  %5926 = vmatpush1.msra.mxu0 0.0
  %5927 = vmatprep.subr.mxu0 0.0
  %5928 = vmatpush1.msra.mxu0 0.0
  %5929 = vmatprep.subr.mxu0 0.0
  %5930 = vmatpush1.msra.mxu0 0.0
  %5931 = vmatprep.subr.mxu0 0.0
  %5932 = vmatpush1.msra.mxu0 0.0
  %5933 = vmatprep.subr.mxu0 0.0
  %5934 = vmatpush1.msra.mxu0 0.0
  %5935 = vmatprep.subr.mxu0 0.0
  %5936 = vmatpush1.msra.mxu0 0.0
  %5937 = vmatprep.subr.mxu0 0.0
  %5938 = vmatpush1.msra.mxu0 0.0
  %5939 = vmatprep.subr.mxu0 0.0
  %5940 = vmatpush1.msra.mxu0 0.0
  %5941 = vmatprep.subr.mxu0 0.0
  %5942 = vmatpush1.msra.mxu0 0.0
  %5943 = vmatprep.subr.mxu0 0.0
  %5944 = vmatpush1.msra.mxu0 0.0
  %5945 = vmatprep.subr.mxu0 0.0
  %5946 = vmatpush1.msra.mxu0 0.0
  %5947 = vmatprep.subr.mxu0 0.0
  %5948 = vmatpush1.msra.mxu0 0.0
  %5949 = vmatprep.mubr.f32.mxu0 0.0
  %5950 = vmatmul.mubr.f32.gmra.mrb[0].mxu0 %v5879
  %v5951 = vpop.f32.mrb[0].mxu0
  %v5952 = vadd.f32 0.0, %v5951
  %v5953 = vpop.f32.mrb[0].mxu0
  %v5954 = vadd.f32 0.0, %v5953
  %5955 = vdwg.mxu0
  %5956 = vmatprep.subr.mxu0 %v4591
  %5957 = vmatpush1.msra.mxu0 %v4590
  %5958 = vmatprep.subr.mxu0 %v4595
  %5959 = vmatpush1.msra.mxu0 %v4594
  %5960 = vmatprep.subr.mxu0 %v4599
  %5961 = vmatpush1.msra.mxu0 %v4598
  %5962 = vmatprep.subr.mxu0 %v4603
  %5963 = vmatpush1.msra.mxu0 %v4602
  %5964 = vmatprep.subr.mxu0 %v4607
  %5965 = vmatpush1.msra.mxu0 %v4606
  %5966 = vmatprep.subr.mxu0 %v4611
  %5967 = vmatpush1.msra.mxu0 %v4610
  %5968 = vmatprep.subr.mxu0 %v4615
  %5969 = vmatpush1.msra.mxu0 %v4614
  %5970 = vmatprep.subr.mxu0 %v4619
  %5971 = vmatpush1.msra.mxu0 %v4618
  %5972 = vmatprep.subr.mxu0 %v4623
  %5973 = vmatpush1.msra.mxu0 %v4622
  %5974 = vmatprep.subr.mxu0 %v4627
  %5975 = vmatpush1.msra.mxu0 %v4626
  %5976 = vmatprep.subr.mxu0 %v4631
  %5977 = vmatpush1.msra.mxu0 %v4630
  %5978 = vmatprep.subr.mxu0 %v4635
  %5979 = vmatpush1.msra.mxu0 %v4634
  %5980 = vmatprep.subr.mxu0 %v4639
  %5981 = vmatpush1.msra.mxu0 %v4638
  %5982 = vmatprep.subr.mxu0 %v4643
  %5983 = vmatpush1.msra.mxu0 %v4642
  %5984 = vmatprep.subr.mxu0 %v4647
  %5985 = vmatpush1.msra.mxu0 %v4646
  %5986 = vmatprep.subr.mxu0 %v4651
  %5987 = vmatpush1.msra.mxu0 %v4650
  %5988 = vmatprep.subr.mxu0 0.0
  %5989 = vmatpush1.msra.mxu0 0.0
  %5990 = vmatprep.subr.mxu0 0.0
  %5991 = vmatpush1.msra.mxu0 0.0
  %5992 = vmatprep.subr.mxu0 0.0
  %5993 = vmatpush1.msra.mxu0 0.0
  %5994 = vmatprep.subr.mxu0 0.0
  %5995 = vmatpush1.msra.mxu0 0.0
  %5996 = vmatprep.subr.mxu0 0.0
  %5997 = vmatpush1.msra.mxu0 0.0
  %5998 = vmatprep.subr.mxu0 0.0
  %5999 = vmatpush1.msra.mxu0 0.0
  %6000 = vmatprep.subr.mxu0 0.0
  %6001 = vmatpush1.msra.mxu0 0.0
  %6002 = vmatprep.subr.mxu0 0.0
  %6003 = vmatpush1.msra.mxu0 0.0
  %6004 = vmatprep.subr.mxu0 0.0
  %6005 = vmatpush1.msra.mxu0 0.0
  %6006 = vmatprep.subr.mxu0 0.0
  %6007 = vmatpush1.msra.mxu0 0.0
  %6008 = vmatprep.subr.mxu0 0.0
  %6009 = vmatpush1.msra.mxu0 0.0
  %6010 = vmatprep.subr.mxu0 0.0
  %6011 = vmatpush1.msra.mxu0 0.0
  %6012 = vmatprep.subr.mxu0 0.0
  %6013 = vmatpush1.msra.mxu0 0.0
  %6014 = vmatprep.subr.mxu0 0.0
  %6015 = vmatpush1.msra.mxu0 0.0
  %6016 = vmatprep.subr.mxu0 0.0
  %6017 = vmatpush1.msra.mxu0 0.0
  %6018 = vmatprep.subr.mxu0 0.0
  %6019 = vmatpush1.msra.mxu0 0.0
  %6020 = vmatprep.mubr.f32.mxu0 0.0
  %6021 = vmatmul.mubr.f32.gmra.mrb[0].mxu0 %v5879
  %v6022 = vpop.f32.mrb[0].mxu0
  %v6023 = vadd.f32 0.0, %v6022
  %v6024 = vpop.f32.mrb[0].mxu0
  %v6025 = vadd.f32 0.0, %v6024
  %6026 = vdwg.mxu0
  %v6027 = vadd.f32 %v5881, %v5952
  %v6028 = vadd.f32 %v5882, %v5954
  %v6029 = vadd.f32 %v5883, %v6023
  %v6030 = vadd.f32 %v5884, %v6025
  %v6031 = vxor.u32 %v6027, 2147483648
  %v6032 = vxor.u32 %v6028, 2147483648
  %v6033 = vxor.u32 %v6029, 2147483648
  %v6034 = vmul.f32 %v6031, 1.442695
  %v6035 = vpow.pop %v6034
  %v6036 = vmul.f32 %v6032, 1.442695
  %v6037 = vpow.pop %v6036
  %v6038 = vmul.f32 %v6033, 1.442695
  %v6039 = vpow.pop %v6038
  %v6040 = vadd.f32 %v6035, 1.0
  %v6041 = vadd.f32 %v6037, 1.0
  %v6042 = vadd.f32 %v6039, 1.0
  %v6043 = vrcp.pop %v6040
  %v6044 = vmul.f32 1.0, %v6043
  %v6045 = vrcp.pop %v6041
  %v6046 = vmul.f32 1.0, %v6045
  %v6047 = vrcp.pop %v6042
  %v6048 = vmul.f32 1.0, %v6047
  %v6049 = vtanh.pop %v6030
  %v6050 = vmul.f32 %v6046, %v5877
  %v6051 = vmul.f32 %v6044, %v6049
  %v6052 = vadd.f32 %v6050, %v6051
  %v6053 = vtanh.pop %v6052
  %v6054 = vmul.f32 %v6048, %v6053
  %6055 = vst [vmem:[%s2391] sm:$0xff] %v6054
  %6056 = vst [vmem:[%s4652] sm:$0xff] %v6054
  %6057 = vst [vmem:[%s4654] sm:$0xff] %v6052
  %v6058 = vld [vmem:[#allocation4] sm:$0xff]
  %v6059 = vld [vmem:[#allocation4 + $0x8] sm:$0xff]
  %v6060 = vld [vmem:[#allocation4 + $0x10] sm:$0xff]
  %v6061 = vld [vmem:[#allocation4 + $0x18] sm:$0xff]
  %v6062 = vld [vmem:[#allocation4 + $0x20] sm:$0xff]
  %v6063 = vld [vmem:[#allocation4 + $0x28] sm:$0xff]
  %v6064 = vld [vmem:[#allocation4 + $0x30] sm:$0xff]
  %v6065 = vld [vmem:[#allocation4 + $0x38] sm:$0xff]
  %v6066 = vld [vmem:[%s8] sm:$0xff]
  %v6067 = vld [vmem:[%s8 + $0x8] sm:$0xff]
  %v6068 = vld [vmem:[%s8 + $0x10] sm:$0xff]
  %v6069 = vld [vmem:[%s8 + $0x18] sm:$0xff]
  %v6070 = vld [vmem:[%s8 + $0x20] sm:$0xff]
  %v6071 = vld [vmem:[%s8 + $0x28] sm:$0xff]
  %v6072 = vld [vmem:[%s8 + $0x30] sm:$0xff]
  %v6073 = vld [vmem:[%s8 + $0x38] sm:$0xff]
  %v6074 = vld [vmem:[%s8 + $0x40] sm:$0xff]
  %v6075 = vld [vmem:[%s8 + $0x48] sm:$0xff]
  %v6076 = vld [vmem:[%s8 + $0x50] sm:$0xff]
  %v6077 = vld [vmem:[%s8 + $0x58] sm:$0xff]
  %v6078 = vld [vmem:[%s8 + $0x60] sm:$0xff]
  %v6079 = vld [vmem:[%s8 + $0x68] sm:$0xff]
  %v6080 = vld [vmem:[%s8 + $0x70] sm:$0xff]
  %v6081 = vld [vmem:[%s8 + $0x78] sm:$0xff]
  %v6082 = vld [vmem:[%s9] sm:$0x1]
  %v6084 = vlaneseq
  %v6085 = vshrl.u32 %v6084, 7
  %v6086 = vsub.s32 0, %v6085
  %v6087 = vrot.slane %v6082, %v6086
  %6089 = vmatprep.subr.mxu0 0.0
  %6090 = vmatpush1.msra.mxu0 %v6066
  %6091 = vmatprep.subr.mxu0 0.0
  %6092 = vmatpush1.msra.mxu0 %v6067
  %6093 = vmatprep.subr.mxu0 0.0
  %6094 = vmatpush1.msra.mxu0 %v6068
  %6095 = vmatprep.subr.mxu0 0.0
  %6096 = vmatpush1.msra.mxu0 %v6069
  %6097 = vmatprep.subr.mxu0 0.0
  %6098 = vmatpush1.msra.mxu0 %v6070
  %6099 = vmatprep.subr.mxu0 0.0
  %6100 = vmatpush1.msra.mxu0 %v6071
  %6101 = vmatprep.subr.mxu0 0.0
  %6102 = vmatpush1.msra.mxu0 %v6072
  %6103 = vmatprep.subr.mxu0 0.0
  %6104 = vmatpush1.msra.mxu0 %v6073
  %6105 = vmatprep.subr.mxu0 0.0
  %6106 = vmatpush1.msra.mxu0 %v6074
  %6107 = vmatprep.subr.mxu0 0.0
  %6108 = vmatpush1.msra.mxu0 %v6075
  %6109 = vmatprep.subr.mxu0 0.0
  %6110 = vmatpush1.msra.mxu0 %v6076
  %6111 = vmatprep.subr.mxu0 0.0
  %6112 = vmatpush1.msra.mxu0 %v6077
  %6113 = vmatprep.subr.mxu0 0.0
  %6114 = vmatpush1.msra.mxu0 %v6078
  %6115 = vmatprep.subr.mxu0 0.0
  %6116 = vmatpush1.msra.mxu0 %v6079
  %6117 = vmatprep.subr.mxu0 0.0
  %6118 = vmatpush1.msra.mxu0 %v6080
  %6119 = vmatprep.subr.mxu0 0.0
  %6120 = vmatpush1.msra.mxu0 %v6081
  %6121 = vmatprep.subr.mxu0 0.0
  %6122 = vmatpush1.msra.mxu0 0.0
  %6123 = vmatprep.subr.mxu0 0.0
  %6124 = vmatpush1.msra.mxu0 0.0
  %6125 = vmatprep.subr.mxu0 0.0
  %6126 = vmatpush1.msra.mxu0 0.0
  %6127 = vmatprep.subr.mxu0 0.0
  %6128 = vmatpush1.msra.mxu0 0.0
  %6129 = vmatprep.subr.mxu0 0.0
  %6130 = vmatpush1.msra.mxu0 0.0
  %6131 = vmatprep.subr.mxu0 0.0
  %6132 = vmatpush1.msra.mxu0 0.0
  %6133 = vmatprep.subr.mxu0 0.0
  %6134 = vmatpush1.msra.mxu0 0.0
  %6135 = vmatprep.subr.mxu0 0.0
  %6136 = vmatpush1.msra.mxu0 0.0
  %6137 = vmatprep.subr.mxu0 0.0
  %6138 = vmatpush1.msra.mxu0 0.0
  %6139 = vmatprep.subr.mxu0 0.0
  %6140 = vmatpush1.msra.mxu0 0.0
  %6141 = vmatprep.subr.mxu0 0.0
  %6142 = vmatpush1.msra.mxu0 0.0
  %6143 = vmatprep.subr.mxu0 0.0
  %6144 = vmatpush1.msra.mxu0 0.0
  %6145 = vmatprep.subr.mxu0 0.0
  %6146 = vmatpush1.msra.mxu0 0.0
  %6147 = vmatprep.subr.mxu0 0.0
  %6148 = vmatpush1.msra.mxu0 0.0
  %6149 = vmatprep.subr.mxu0 0.0
  %6150 = vmatpush1.msra.mxu0 0.0
  %6151 = vmatprep.subr.mxu0 0.0
  %6152 = vmatpush1.msra.mxu0 0.0
  %6153 = vmatprep.mubr.f32.mxu0 0.0
  %6154 = vmatmul.mubr.f32.gmra.mrb[0].mxu0 %v6058
  %v6155 = vpop.f32.mrb[0].mxu0
  %v6156 = vadd.f32 %v6087, %v6155
  %v6157 = vpop.f32.mrb[0].mxu0
  %6158 = vmatprep.mubr.f32.mxu0 0.0
  %6159 = vmatmul.mubr.f32.gmra.mrb[0].mxu0 %v6059
  %v6160 = vpop.f32.mrb[0].mxu0
  %v6161 = vadd.f32 %v6087, %v6160
  %v6162 = vpop.f32.mrb[0].mxu0
  %6163 = vmatprep.mubr.f32.mxu0 0.0
  %6164 = vmatmul.mubr.f32.gmra.mrb[0].mxu0 %v6060
  %v6165 = vpop.f32.mrb[0].mxu0
  %v6166 = vadd.f32 %v6087, %v6165
  %v6167 = vpop.f32.mrb[0].mxu0
  %6168 = vmatprep.mubr.f32.mxu0 0.0
  %6169 = vmatmul.mubr.f32.gmra.mrb[0].mxu0 %v6061
  %v6170 = vpop.f32.mrb[0].mxu0
  %v6171 = vadd.f32 %v6087, %v6170
  %v6172 = vpop.f32.mrb[0].mxu0
  %6173 = vmatprep.mubr.f32.mxu0 0.0
  %6174 = vmatmul.mubr.f32.gmra.mrb[0].mxu0 %v6062
  %v6175 = vpop.f32.mrb[0].mxu0
  %v6176 = vadd.f32 %v6087, %v6175
  %v6177 = vpop.f32.mrb[0].mxu0
  %6178 = vmatprep.mubr.f32.mxu0 0.0
  %6179 = vmatmul.mubr.f32.gmra.mrb[0].mxu0 %v6063
  %v6180 = vpop.f32.mrb[0].mxu0
  %v6181 = vadd.f32 %v6087, %v6180
  %v6182 = vpop.f32.mrb[0].mxu0
  %6183 = vmatprep.mubr.f32.mxu0 0.0
  %6184 = vmatmul.mubr.f32.gmra.mrb[0].mxu0 %v6064
  %v6185 = vpop.f32.mrb[0].mxu0
  %v6186 = vadd.f32 %v6087, %v6185
  %v6187 = vpop.f32.mrb[0].mxu0
  %6188 = vmatprep.mubr.f32.mxu0 0.0
  %6189 = vmatmul.mubr.f32.gmra.mrb[0].mxu0 %v6065
  %v6190 = vpop.f32.mrb[0].mxu0
  %v6191 = vadd.f32 %v6087, %v6190
  %v6192 = vpop.f32.mrb[0].mxu0
  %6193 = vdwg.mxu0
  %6194 = vst [vmem:[%s10] sm:$0xff] %v6156
  %6195 = vst [vmem:[%s10 + $0x8] sm:$0xff] %v6161
  %6196 = vst [vmem:[%s10 + $0x10] sm:$0xff] %v6166
  %6197 = vst [vmem:[%s10 + $0x18] sm:$0xff] %v6171
  %6198 = vst [vmem:[%s10 + $0x20] sm:$0xff] %v6176
  %6199 = vst [vmem:[%s10 + $0x28] sm:$0xff] %v6181
  %6200 = vst [vmem:[%s10 + $0x30] sm:$0xff] %v6186
  %6201 = vst [vmem:[%s10 + $0x38] sm:$0xff] %v6191
  // Predicated region
  $region196: #{pr_network_forward.3} parent=0 // pred_check
    _
  $region197: #{pr_network_forward.3} parent=0 // pred_check_branch
    %6203 = sbr.rel (0) target = $region199
  $region198: #{pr_network_forward.3} parent=0 // pred_region
    _
  $region199: #{pr_network_forward.3} parent=0 // pred_fallthru
    _
  // Predicated region
  $region200: #{pr_network_forward.3} parent=0 // pred_check
    _
  $region201: #{pr_network_forward.3} parent=0 // pred_check_branch
    %6205 = sbr.rel (0) target = $region203
  $region202: #{pr_network_forward.3} parent=0 // pred_region
    _
  $region203: #{pr_network_forward.3} parent=0 // pred_fallthru
    _
  %6206 = vsyncmov [#allocation7]
  %s6207 = vpop.sfrf %6206
  %p6208 = scmp.eq.s32.totalorder %s6207, 0
  %p6209 = pneg %p6208
  %6211 = shalt.err (%p6209)
  %s6212 = scalar_lea.sflag [#allocation7], 1
  %6213 = vsyncmov %s6212
  %s6214 = vpop.sfrf %6213
  %p6215 = scmp.eq.s32.totalorder %s6214, 0
  %p6216 = pneg %p6215
  %6218 = shalt.err (%p6216)
  %s6219 = scalar_lea.sflag [#allocation7], 2
  %6220 = vsyncmov %s6219
  %s6221 = vpop.sfrf %6220
  %p6222 = scmp.eq.s32.totalorder %s6221, 0
  %p6223 = pneg %p6222
  %6225 = shalt.err (%p6223)
  %s6226 = scalar_lea.sflag [#allocation7], 3
  %6227 = vsyncmov %s6226
  %s6228 = vpop.sfrf %6227
  %p6229 = scmp.eq.s32.totalorder %s6228, 0
  %p6230 = pneg %p6229
  %6232 = shalt.err (%p6230)
  %s6233 = scalar_lea.sflag [#allocation7], 4
  %6234 = vsyncmov %s6233
  %s6235 = vpop.sfrf %6234
  %p6236 = scmp.eq.s32.totalorder %s6235, 0
  %p6237 = pneg %p6236
  %6239 = shalt.err (%p6237)

</llo_original>
